<compile_context>
chip_gen: v6e
topology: v6e:2x2x1
jax: 0.10.0
libtpu: 0.0.40
codegen_flags: <defaults>
</compile_context>

<pallas_src>
import jax
import jax.numpy as jnp
from jax import lax
from jax.experimental import pallas as pl
from jax.experimental.pallas import tpu as pltpu

D_IN = 384           # fixed by the module: nn.Linear(384, 512, bias=False)
D_MODEL = 512
D_INNER = 128        # PositionwiseFeedForward hidden size
N_HEAD = 2
D_K = 64
D_V = 64
N_LAYERS = 2
D_QKV = N_HEAD * (D_K + D_K + D_V)   # 384 fused q|k|v columns
D_CTX = N_HEAD * D_V                 # 128 concatenated head contexts
EPS = 1e-6           # LayerNorm eps used by the MHA / FFN sub-modules
NEG_INF = -1e9       # masked_fill(mask == 0, -1e9)


# ----------------------------- kernel helpers ------------------------------ #

def _layernorm(y, gamma, beta):
    mu = jnp.mean(y, axis=-1, keepdims=True)
    var = jnp.mean((y - mu) ** 2, axis=-1, keepdims=True)
    return (y - mu) * lax.rsqrt(var + EPS) * gamma + beta


# ------------------------------ fused kernel ------------------------------- #

def encoder_kernel(src_ref, maskadd_ref, wemb_ref,
                   b1_ref, b2_ref, ln1_g_ref, ln1_b_ref, ln2_g_ref, ln2_b_ref,
                   wqkv_hbm, wo_hbm, w1_hbm, w2_hbm,
                   out_ref,
                   wqkv_buf, wo_buf, w1_buf, w2_buf, sem):
    B, L, _ = src_ref.shape
    M = B * L
    scale = 1.0 / (D_K ** 0.5)

    # Issue ALL per-layer weight DMAs up front (layer 0 first).  The emb matmul
    # below overlaps the layer-0 copies; layer-0 compute overlaps the layer-1
    # copies (static N_LAYERS=2 acts as its own double buffer).
    copies = []
    for l in range(N_LAYERS):
        cps = (pltpu.make_async_copy(wqkv_hbm.at[l], wqkv_buf.at[l], sem.at[l, 0]),
               pltpu.make_async_copy(wo_hbm.at[l],   wo_buf.at[l],   sem.at[l, 1]),
               pltpu.make_async_copy(w1_hbm.at[l],   w1_buf.at[l],   sem.at[l, 2]),
               pltpu.make_async_copy(w2_hbm.at[l],   w2_buf.at[l],   sem.at[l, 3]))
        for c in cps:
            c.start()
        copies.append(cps)

    mask_add = maskadd_ref[...]                              # (M, M) additive mask

    # emb: Linear(384 -> 512, bias=False); rows collapsed to (M, 384)
    x = jnp.dot(src_ref[...].reshape(M, D_IN).astype(jnp.bfloat16),
                wemb_ref[...], preferred_element_type=jnp.float32)   # (M, 512) f32

    for layer in range(N_LAYERS):                            # static (unrolled)
        for c in copies[layer]:                              # weights now needed
            c.wait()

        # ---------------- self-attention sub-layer (residual + post-LN) ----
        x_bf = x.astype(jnp.bfloat16)                        # hoisted cast

        # one lane-dense (M,512)x(512,384) projection for both heads' q|k|v
        qkv = jnp.dot(x_bf, wqkv_buf[layer],
                      preferred_element_type=jnp.float32)    # (M, 384) f32
        q = qkv[:, 0:N_HEAD * D_K] * scale                   # 1/sqrt(d_k) in f32
        k = qkv[:, N_HEAD * D_K:2 * N_HEAD * D_K]
        v = qkv[:, 2 * N_HEAD * D_K:]
        q_bf = q.astype(jnp.bfloat16)
        k_bf = k.astype(jnp.bfloat16)
        v_bf = v.astype(jnp.bfloat16)

        ctx_heads = []
        for h in range(N_HEAD):                              # static head loop
            qh = q_bf[:, h * D_K:(h + 1) * D_K]              # (M, 64)
            kh = k_bf[:, h * D_K:(h + 1) * D_K]              # (M, 64)
            vh = v_bf[:, h * D_V:(h + 1) * D_V]              # (M, 64)

            # flattened-batch scores: one (M, M) matmul per head
            s = lax.dot_general(qh, kh, (((1,), (1,)), ((), ())),
                                preferred_element_type=jnp.float32)  # (M, M)
            s = s + mask_add                                  # block + padding mask
            s = s - jnp.max(s, axis=-1, keepdims=True)
            p = jnp.exp(s)
            p = p * pl.reciprocal(jnp.sum(p, axis=-1, keepdims=True),
                                  approx=False)               # exact softmax denom
            ctx_heads.append(jnp.dot(p.astype(jnp.bfloat16), vh,
                                     preferred_element_type=jnp.float32))

        ctx = jnp.concatenate(ctx_heads, axis=-1)             # (M, 128) lane concat
        attn_out = x + jnp.dot(ctx.astype(jnp.bfloat16), wo_buf[layer],
                               preferred_element_type=jnp.float32)
        x = _layernorm(attn_out, ln1_g_ref[layer], ln1_b_ref[layer])

        # ---------------- position-wise FFN sub-layer (residual + post-LN) -
        x_bf = x.astype(jnp.bfloat16)                         # hoisted cast
        hdn = jnp.maximum(jnp.dot(x_bf, w1_buf[layer],
                                  preferred_element_type=jnp.float32)
                          + b1_ref[layer], 0.0)
        y = (jnp.dot(hdn.astype(jnp.bfloat16), w2_buf[layer],
                     preferred_element_type=jnp.float32)
             + b2_ref[layer] + x)
        x = _layernorm(y, ln2_g_ref[layer], ln2_b_ref[layer])

    out_ref[...] = x.reshape(B, L, D_MODEL)


# -------------------------------- wrapper ---------------------------------- #

def encoder_forward(params, src_seq, src_mask):
    B, L, _ = src_seq.shape
    M = B * L

    # Additive attention mask for the flattened (M, M) score matrix:
    # block-diagonal over batch (no cross-sequence attention) + key padding.
    keep = (src_mask[:, 0, :] > 0).reshape(M)                 # (M,) key keep
    bid = jnp.repeat(jnp.arange(B), L)                        # (M,) batch id
    allowed = (bid[:, None] == bid[None, :]) & keep[None, :]
    mask_add = jnp.where(allowed, 0.0, NEG_INF).astype(jnp.float32)   # (M, M)

    vmem = pl.BlockSpec(memory_space=pltpu.MemorySpace.VMEM)
    hbm = pl.BlockSpec(memory_space=pl.ANY)

    vmem_args = (src_seq, mask_add, params["w_emb"],
                 params["b1"], params["b2"],
                 params["ln1_g"], params["ln1_b"],
                 params["ln2_g"], params["ln2_b"])
    hbm_args = (params["wqkv"], params["wo"], params["w1"], params["w2"])

    # Total resident footprint: ~1.6 MiB bf16 weights + <0.5 MiB activations —
    # far below the scoped VMEM limit on v5e/v6e/v7x, so no tiling is needed.
    return pl.pallas_call(
        encoder_kernel,
        out_shape=jax.ShapeDtypeStruct((B, L, D_MODEL), jnp.float32),
        in_specs=[vmem] * len(vmem_args) + [hbm] * len(hbm_args),
        out_specs=vmem,
        scratch_shapes=[
            pltpu.VMEM((N_LAYERS, D_MODEL, D_QKV), jnp.bfloat16),   # wqkv buf
            pltpu.VMEM((N_LAYERS, D_CTX, D_MODEL), jnp.bfloat16),   # wo buf
            pltpu.VMEM((N_LAYERS, D_MODEL, D_INNER), jnp.bfloat16), # w1 buf
            pltpu.VMEM((N_LAYERS, D_INNER, D_MODEL), jnp.bfloat16), # w2 buf
            pltpu.SemaphoreType.DMA((N_LAYERS, 4)),
        ],
    )(*vmem_args, *hbm_args)


# -------------------------------- params ----------------------------------- #

def init_params(key):
    ks = iter(jax.random.split(key, 32))

    def nrm(shape, scale=0.02):
        return scale * jax.random.normal(next(ks), shape, dtype=jnp.float32)

    # (in, out) layout = transpose of torch nn.Linear.weight.
    # wqkv columns: [q_h0 | q_h1 | k_h0 | k_h1 | v_h0 | v_h1]; wo rows: [ctx_h0; ctx_h1].
    return dict(
        w_emb=nrm((D_IN, D_MODEL)).astype(jnp.bfloat16),
        wqkv=nrm((N_LAYERS, D_MODEL, D_QKV)).astype(jnp.bfloat16),
        wo=nrm((N_LAYERS, D_CTX, D_MODEL)).astype(jnp.bfloat16),
        ln1_g=jnp.ones((N_LAYERS, 1, D_MODEL), jnp.float32),
        ln1_b=jnp.zeros((N_LAYERS, 1, D_MODEL), jnp.float32),
        w1=nrm((N_LAYERS, D_MODEL, D_INNER)).astype(jnp.bfloat16),
        b1=nrm((N_LAYERS, 1, D_INNER)),
        w2=nrm((N_LAYERS, D_INNER, D_MODEL)).astype(jnp.bfloat16),
        b2=nrm((N_LAYERS, 1, D_MODEL)),
        ln2_g=jnp.ones((N_LAYERS, 1, D_MODEL), jnp.float32),
        ln2_b=jnp.zeros((N_LAYERS, 1, D_MODEL), jnp.float32),
    )


# --------------------------------- main ------------------------------------ #

if __name__ == "__main__":
    key = jax.random.PRNGKey(0)
    kp, kx = jax.random.split(key)

    B, L = 2, 16
    params = init_params(kp)
    src_seq = jax.random.normal(kx, (B, L, D_IN), jnp.float32)

    # key-padding mask: 1 = keep, 0 = mask (PyTorch: masked_fill(mask == 0, -1e9))
    src_mask = (jnp.ones((B, 1, L), jnp.float32)
                .at[0, 0, -4:].set(0.0)
                .at[1, 0, -2:].set(0.0))

    # TODO(synk): on v7x, a leading "parallel" grid axis over requests would use
    # both TensorCores; at B*L=32 a single core is the right choice.
    fwd = jax.jit(encoder_forward)
    out = fwd(params, src_seq, src_mask)
    jax.block_until_ready(out)

    assert out.shape == (B, L, D_MODEL)
    assert bool(jnp.all(jnp.isfinite(out)))
    print("KERNEL_OK")
</pallas_src>

<mosaic_0001>
module attributes {stable_mosaic.version = 11 : i64} {
  func.func @encoder_kernel(%arg0: memref<2x16x384xf32, #tpu.memory_space<vmem>>, %arg1: memref<32x32xf32, #tpu.memory_space<vmem>>, %arg2: memref<384x512xbf16, #tpu.memory_space<vmem>>, %arg3: memref<2x1x128xf32, #tpu.memory_space<vmem>>, %arg4: memref<2x1x512xf32, #tpu.memory_space<vmem>>, %arg5: memref<2x1x512xf32, #tpu.memory_space<vmem>>, %arg6: memref<2x1x512xf32, #tpu.memory_space<vmem>>, %arg7: memref<2x1x512xf32, #tpu.memory_space<vmem>>, %arg8: memref<2x1x512xf32, #tpu.memory_space<vmem>>, %arg9: memref<2x512x384xbf16, #tpu.memory_space<any>>, %arg10: memref<2x128x512xbf16, #tpu.memory_space<any>>, %arg11: memref<2x512x128xbf16, #tpu.memory_space<any>>, %arg12: memref<2x128x512xbf16, #tpu.memory_space<any>>, %arg13: memref<2x16x512xf32, #tpu.memory_space<vmem>>, %arg14: memref<2x512x384xbf16, #tpu.memory_space<vmem>>, %arg15: memref<2x128x512xbf16, #tpu.memory_space<vmem>>, %arg16: memref<2x512x128xbf16, #tpu.memory_space<vmem>>, %arg17: memref<2x128x512xbf16, #tpu.memory_space<vmem>>, %arg18: memref<2x4x!tpu.dma_semaphore, #tpu.memory_space<semaphore_mem>>) attributes {dimension_semantics = [], scalar_prefetch = 0 : i64, scratch_operands = 5 : i64, tpu.core_type = #tpu.core_type<tc>} {
    %c0_i32 = arith.constant 0 : i32
    %c0_i32_0 = arith.constant 0 : i32
    %c0_i32_1 = arith.constant 0 : i32
    %c0_i32_2 = arith.constant 0 : i32
    %c0_i32_3 = arith.constant 0 : i32
    %c0_i32_4 = arith.constant 0 : i32
    %0 = tpu.memref_slice %arg9[%c0_i32, %c0_i32_3, %c0_i32_4] : memref<2x512x384xbf16, #tpu.memory_space<any>> -> memref<1x512x384xbf16, #tpu.memory_space<any>>
    %1 = tpu.memref_squeeze %0 : memref<1x512x384xbf16, #tpu.memory_space<any>> -> memref<512x384xbf16, #tpu.memory_space<any>>
    %c0_i32_5 = arith.constant 0 : i32
    %c0_i32_6 = arith.constant 0 : i32
    %2 = tpu.memref_slice %arg14[%c0_i32_0, %c0_i32_5, %c0_i32_6] : memref<2x512x384xbf16, #tpu.memory_space<vmem>> -> memref<1x512x384xbf16, #tpu.memory_space<vmem>>
    %3 = tpu.memref_squeeze %2 : memref<1x512x384xbf16, #tpu.memory_space<vmem>> -> memref<512x384xbf16, #tpu.memory_space<vmem>>
    %4 = tpu.memref_slice %arg18[%c0_i32_1, %c0_i32_2] : memref<2x4x!tpu.dma_semaphore, #tpu.memory_space<semaphore_mem>> -> memref<1x1x!tpu.dma_semaphore, #tpu.memory_space<semaphore_mem>>
    %5 = tpu.memref_squeeze %4 : memref<1x1x!tpu.dma_semaphore, #tpu.memory_space<semaphore_mem>> -> memref<!tpu.dma_semaphore, #tpu.memory_space<semaphore_mem>>
    tpu.enqueue_dma source(%1 : memref<512x384xbf16, #tpu.memory_space<any>>) target(%3 : memref<512x384xbf16, #tpu.memory_space<vmem>>) target_semaphore(%5 : memref<!tpu.dma_semaphore, #tpu.memory_space<semaphore_mem>>)
    %c0_i32_7 = arith.constant 0 : i32
    %c0_i32_8 = arith.constant 0 : i32
    %c0_i32_9 = arith.constant 0 : i32
    %c1_i32 = arith.constant 1 : i32
    %c0_i32_10 = arith.constant 0 : i32
    %c0_i32_11 = arith.constant 0 : i32
    %6 = tpu.memref_slice %arg10[%c0_i32_7, %c0_i32_10, %c0_i32_11] : memref<2x128x512xbf16, #tpu.memory_space<any>> -> memref<1x128x512xbf16, #tpu.memory_space<any>>
    %7 = tpu.memref_squeeze %6 : memref<1x128x512xbf16, #tpu.memory_space<any>> -> memref<128x512xbf16, #tpu.memory_space<any>>
    %c0_i32_12 = arith.constant 0 : i32
    %c0_i32_13 = arith.constant 0 : i32
    %8 = tpu.memref_slice %arg15[%c0_i32_8, %c0_i32_12, %c0_i32_13] : memref<2x128x512xbf16, #tpu.memory_space<vmem>> -> memref<1x128x512xbf16, #tpu.memory_space<vmem>>
    %9 = tpu.memref_squeeze %8 : memref<1x128x512xbf16, #tpu.memory_space<vmem>> -> memref<128x512xbf16, #tpu.memory_space<vmem>>
    %10 = tpu.memref_slice %arg18[%c0_i32_9, %c1_i32] : memref<2x4x!tpu.dma_semaphore, #tpu.memory_space<semaphore_mem>> -> memref<1x1x!tpu.dma_semaphore, #tpu.memory_space<semaphore_mem>>
    %11 = tpu.memref_squeeze %10 : memref<1x1x!tpu.dma_semaphore, #tpu.memory_space<semaphore_mem>> -> memref<!tpu.dma_semaphore, #tpu.memory_space<semaphore_mem>>
    tpu.enqueue_dma source(%7 : memref<128x512xbf16, #tpu.memory_space<any>>) target(%9 : memref<128x512xbf16, #tpu.memory_space<vmem>>) target_semaphore(%11 : memref<!tpu.dma_semaphore, #tpu.memory_space<semaphore_mem>>)
    %c0_i32_14 = arith.constant 0 : i32
    %c0_i32_15 = arith.constant 0 : i32
    %c0_i32_16 = arith.constant 0 : i32
    %c2_i32 = arith.constant 2 : i32
    %c0_i32_17 = arith.constant 0 : i32
    %c0_i32_18 = arith.constant 0 : i32
    %12 = tpu.memref_slice %arg11[%c0_i32_14, %c0_i32_17, %c0_i32_18] : memref<2x512x128xbf16, #tpu.memory_space<any>> -> memref<1x512x128xbf16, #tpu.memory_space<any>>
    %13 = tpu.memref_squeeze %12 : memref<1x512x128xbf16, #tpu.memory_space<any>> -> memref<512x128xbf16, #tpu.memory_space<any>>
    %c0_i32_19 = arith.constant 0 : i32
    %c0_i32_20 = arith.constant 0 : i32
    %14 = tpu.memref_slice %arg16[%c0_i32_15, %c0_i32_19, %c0_i32_20] : memref<2x512x128xbf16, #tpu.memory_space<vmem>> -> memref<1x512x128xbf16, #tpu.memory_space<vmem>>
    %15 = tpu.memref_squeeze %14 : memref<1x512x128xbf16, #tpu.memory_space<vmem>> -> memref<512x128xbf16, #tpu.memory_space<vmem>>
    %16 = tpu.memref_slice %arg18[%c0_i32_16, %c2_i32] : memref<2x4x!tpu.dma_semaphore, #tpu.memory_space<semaphore_mem>> -> memref<1x1x!tpu.dma_semaphore, #tpu.memory_space<semaphore_mem>>
    %17 = tpu.memref_squeeze %16 : memref<1x1x!tpu.dma_semaphore, #tpu.memory_space<semaphore_mem>> -> memref<!tpu.dma_semaphore, #tpu.memory_space<semaphore_mem>>
    tpu.enqueue_dma source(%13 : memref<512x128xbf16, #tpu.memory_space<any>>) target(%15 : memref<512x128xbf16, #tpu.memory_space<vmem>>) target_semaphore(%17 : memref<!tpu.dma_semaphore, #tpu.memory_space<semaphore_mem>>)
    %c0_i32_21 = arith.constant 0 : i32
    %c0_i32_22 = arith.constant 0 : i32
    %c0_i32_23 = arith.constant 0 : i32
    %c3_i32 = arith.constant 3 : i32
    %c0_i32_24 = arith.constant 0 : i32
    %c0_i32_25 = arith.constant 0 : i32
    %18 = tpu.memref_slice %arg12[%c0_i32_21, %c0_i32_24, %c0_i32_25] : memref<2x128x512xbf16, #tpu.memory_space<any>> -> memref<1x128x512xbf16, #tpu.memory_space<any>>
    %19 = tpu.memref_squeeze %18 : memref<1x128x512xbf16, #tpu.memory_space<any>> -> memref<128x512xbf16, #tpu.memory_space<any>>
    %c0_i32_26 = arith.constant 0 : i32
    %c0_i32_27 = arith.constant 0 : i32
    %20 = tpu.memref_slice %arg17[%c0_i32_22, %c0_i32_26, %c0_i32_27] : memref<2x128x512xbf16, #tpu.memory_space<vmem>> -> memref<1x128x512xbf16, #tpu.memory_space<vmem>>
    %21 = tpu.memref_squeeze %20 : memref<1x128x512xbf16, #tpu.memory_space<vmem>> -> memref<128x512xbf16, #tpu.memory_space<vmem>>
    %22 = tpu.memref_slice %arg18[%c0_i32_23, %c3_i32] : memref<2x4x!tpu.dma_semaphore, #tpu.memory_space<semaphore_mem>> -> memref<1x1x!tpu.dma_semaphore, #tpu.memory_space<semaphore_mem>>
    %23 = tpu.memref_squeeze %22 : memref<1x1x!tpu.dma_semaphore, #tpu.memory_space<semaphore_mem>> -> memref<!tpu.dma_semaphore, #tpu.memory_space<semaphore_mem>>
    tpu.enqueue_dma source(%19 : memref<128x512xbf16, #tpu.memory_space<any>>) target(%21 : memref<128x512xbf16, #tpu.memory_space<vmem>>) target_semaphore(%23 : memref<!tpu.dma_semaphore, #tpu.memory_space<semaphore_mem>>)
    %c1_i32_28 = arith.constant 1 : i32
    %c1_i32_29 = arith.constant 1 : i32
    %c1_i32_30 = arith.constant 1 : i32
    %c0_i32_31 = arith.constant 0 : i32
    %c0_i32_32 = arith.constant 0 : i32
    %c0_i32_33 = arith.constant 0 : i32
    %24 = tpu.memref_slice %arg9[%c1_i32_28, %c0_i32_32, %c0_i32_33] : memref<2x512x384xbf16, #tpu.memory_space<any>> -> memref<1x512x384xbf16, #tpu.memory_space<any>>
    %25 = tpu.memref_squeeze %24 : memref<1x512x384xbf16, #tpu.memory_space<any>> -> memref<512x384xbf16, #tpu.memory_space<any>>
    %c0_i32_34 = arith.constant 0 : i32
    %c0_i32_35 = arith.constant 0 : i32
    %26 = tpu.memref_slice %arg14[%c1_i32_29, %c0_i32_34, %c0_i32_35] : memref<2x512x384xbf16, #tpu.memory_space<vmem>> -> memref<1x512x384xbf16, #tpu.memory_space<vmem>>
    %27 = tpu.memref_squeeze %26 : memref<1x512x384xbf16, #tpu.memory_space<vmem>> -> memref<512x384xbf16, #tpu.memory_space<vmem>>
    %28 = tpu.memref_slice %arg18[%c1_i32_30, %c0_i32_31] : memref<2x4x!tpu.dma_semaphore, #tpu.memory_space<semaphore_mem>> -> memref<1x1x!tpu.dma_semaphore, #tpu.memory_space<semaphore_mem>>
    %29 = tpu.memref_squeeze %28 : memref<1x1x!tpu.dma_semaphore, #tpu.memory_space<semaphore_mem>> -> memref<!tpu.dma_semaphore, #tpu.memory_space<semaphore_mem>>
    tpu.enqueue_dma source(%25 : memref<512x384xbf16, #tpu.memory_space<any>>) target(%27 : memref<512x384xbf16, #tpu.memory_space<vmem>>) target_semaphore(%29 : memref<!tpu.dma_semaphore, #tpu.memory_space<semaphore_mem>>)
    %c1_i32_36 = arith.constant 1 : i32
    %c1_i32_37 = arith.constant 1 : i32
    %c1_i32_38 = arith.constant 1 : i32
    %c1_i32_39 = arith.constant 1 : i32
    %c0_i32_40 = arith.constant 0 : i32
    %c0_i32_41 = arith.constant 0 : i32
    %30 = tpu.memref_slice %arg10[%c1_i32_36, %c0_i32_40, %c0_i32_41] : memref<2x128x512xbf16, #tpu.memory_space<any>> -> memref<1x128x512xbf16, #tpu.memory_space<any>>
    %31 = tpu.memref_squeeze %30 : memref<1x128x512xbf16, #tpu.memory_space<any>> -> memref<128x512xbf16, #tpu.memory_space<any>>
    %c0_i32_42 = arith.constant 0 : i32
    %c0_i32_43 = arith.constant 0 : i32
    %32 = tpu.memref_slice %arg15[%c1_i32_37, %c0_i32_42, %c0_i32_43] : memref<2x128x512xbf16, #tpu.memory_space<vmem>> -> memref<1x128x512xbf16, #tpu.memory_space<vmem>>
    %33 = tpu.memref_squeeze %32 : memref<1x128x512xbf16, #tpu.memory_space<vmem>> -> memref<128x512xbf16, #tpu.memory_space<vmem>>
    %34 = tpu.memref_slice %arg18[%c1_i32_38, %c1_i32_39] : memref<2x4x!tpu.dma_semaphore, #tpu.memory_space<semaphore_mem>> -> memref<1x1x!tpu.dma_semaphore, #tpu.memory_space<semaphore_mem>>
    %35 = tpu.memref_squeeze %34 : memref<1x1x!tpu.dma_semaphore, #tpu.memory_space<semaphore_mem>> -> memref<!tpu.dma_semaphore, #tpu.memory_space<semaphore_mem>>
    tpu.enqueue_dma source(%31 : memref<128x512xbf16, #tpu.memory_space<any>>) target(%33 : memref<128x512xbf16, #tpu.memory_space<vmem>>) target_semaphore(%35 : memref<!tpu.dma_semaphore, #tpu.memory_space<semaphore_mem>>)
    %c1_i32_44 = arith.constant 1 : i32
    %c1_i32_45 = arith.constant 1 : i32
    %c1_i32_46 = arith.constant 1 : i32
    %c2_i32_47 = arith.constant 2 : i32
    %c0_i32_48 = arith.constant 0 : i32
    %c0_i32_49 = arith.constant 0 : i32
    %36 = tpu.memref_slice %arg11[%c1_i32_44, %c0_i32_48, %c0_i32_49] : memref<2x512x128xbf16, #tpu.memory_space<any>> -> memref<1x512x128xbf16, #tpu.memory_space<any>>
    %37 = tpu.memref_squeeze %36 : memref<1x512x128xbf16, #tpu.memory_space<any>> -> memref<512x128xbf16, #tpu.memory_space<any>>
    %c0_i32_50 = arith.constant 0 : i32
    %c0_i32_51 = arith.constant 0 : i32
    %38 = tpu.memref_slice %arg16[%c1_i32_45, %c0_i32_50, %c0_i32_51] : memref<2x512x128xbf16, #tpu.memory_space<vmem>> -> memref<1x512x128xbf16, #tpu.memory_space<vmem>>
    %39 = tpu.memref_squeeze %38 : memref<1x512x128xbf16, #tpu.memory_space<vmem>> -> memref<512x128xbf16, #tpu.memory_space<vmem>>
    %40 = tpu.memref_slice %arg18[%c1_i32_46, %c2_i32_47] : memref<2x4x!tpu.dma_semaphore, #tpu.memory_space<semaphore_mem>> -> memref<1x1x!tpu.dma_semaphore, #tpu.memory_space<semaphore_mem>>
    %41 = tpu.memref_squeeze %40 : memref<1x1x!tpu.dma_semaphore, #tpu.memory_space<semaphore_mem>> -> memref<!tpu.dma_semaphore, #tpu.memory_space<semaphore_mem>>
    tpu.enqueue_dma source(%37 : memref<512x128xbf16, #tpu.memory_space<any>>) target(%39 : memref<512x128xbf16, #tpu.memory_space<vmem>>) target_semaphore(%41 : memref<!tpu.dma_semaphore, #tpu.memory_space<semaphore_mem>>)
    %c1_i32_52 = arith.constant 1 : i32
    %c1_i32_53 = arith.constant 1 : i32
    %c1_i32_54 = arith.constant 1 : i32
    %c3_i32_55 = arith.constant 3 : i32
    %c0_i32_56 = arith.constant 0 : i32
    %c0_i32_57 = arith.constant 0 : i32
    %42 = tpu.memref_slice %arg12[%c1_i32_52, %c0_i32_56, %c0_i32_57] : memref<2x128x512xbf16, #tpu.memory_space<any>> -> memref<1x128x512xbf16, #tpu.memory_space<any>>
    %43 = tpu.memref_squeeze %42 : memref<1x128x512xbf16, #tpu.memory_space<any>> -> memref<128x512xbf16, #tpu.memory_space<any>>
    %c0_i32_58 = arith.constant 0 : i32
    %c0_i32_59 = arith.constant 0 : i32
    %44 = tpu.memref_slice %arg17[%c1_i32_53, %c0_i32_58, %c0_i32_59] : memref<2x128x512xbf16, #tpu.memory_space<vmem>> -> memref<1x128x512xbf16, #tpu.memory_space<vmem>>
    %45 = tpu.memref_squeeze %44 : memref<1x128x512xbf16, #tpu.memory_space<vmem>> -> memref<128x512xbf16, #tpu.memory_space<vmem>>
    %46 = tpu.memref_slice %arg18[%c1_i32_54, %c3_i32_55] : memref<2x4x!tpu.dma_semaphore, #tpu.memory_space<semaphore_mem>> -> memref<1x1x!tpu.dma_semaphore, #tpu.memory_space<semaphore_mem>>
    %47 = tpu.memref_squeeze %46 : memref<1x1x!tpu.dma_semaphore, #tpu.memory_space<semaphore_mem>> -> memref<!tpu.dma_semaphore, #tpu.memory_space<semaphore_mem>>
    tpu.enqueue_dma source(%43 : memref<128x512xbf16, #tpu.memory_space<any>>) target(%45 : memref<128x512xbf16, #tpu.memory_space<vmem>>) target_semaphore(%47 : memref<!tpu.dma_semaphore, #tpu.memory_space<semaphore_mem>>)
    %c0 = arith.constant 0 : index
    %c0_60 = arith.constant 0 : index
    %48 = vector.load %arg1[%c0, %c0_60] : memref<32x32xf32, #tpu.memory_space<vmem>>, vector<32x32xf32>
    %c0_61 = arith.constant 0 : index
    %c0_62 = arith.constant 0 : index
    %c0_63 = arith.constant 0 : index
    %49 = vector.load %arg0[%c0_61, %c0_62, %c0_63] : memref<2x16x384xf32, #tpu.memory_space<vmem>>, vector<2x16x384xf32>
    %50 = vector.shape_cast %49 : vector<2x16x384xf32> to vector<32x384xf32>
    %51 = arith.truncf %50 : vector<32x384xf32> to vector<32x384xbf16>
    %c0_64 = arith.constant 0 : index
    %c0_65 = arith.constant 0 : index
    %52 = vector.load %arg2[%c0_64, %c0_65] : memref<384x512xbf16, #tpu.memory_space<vmem>>, vector<384x512xbf16>
    %cst = arith.constant dense<0.000000e+00> : vector<32x512xf32>
    %53 = tpu.matmul %51, %52, %cst {dimension_numbers = #tpu.dot_dimension_numbers<[1], [0], [0], [1], [0, 0, 1, 1], [], []>} : vector<32x384xbf16>, vector<384x512xbf16>, vector<32x512xf32> -> vector<32x512xf32>
    %c0_i32_66 = arith.constant 0 : i32
    %c0_i32_67 = arith.constant 0 : i32
    %c0_i32_68 = arith.constant 0 : i32
    %c0_i32_69 = arith.constant 0 : i32
    %c0_i32_70 = arith.constant 0 : i32
    %c0_i32_71 = arith.constant 0 : i32
    %54 = tpu.memref_slice %arg9[%c0_i32_66, %c0_i32_70, %c0_i32_71] : memref<2x512x384xbf16, #tpu.memory_space<any>> -> memref<1x512x384xbf16, #tpu.memory_space<any>>
    %55 = tpu.memref_squeeze %54 : memref<1x512x384xbf16, #tpu.memory_space<any>> -> memref<512x384xbf16, #tpu.memory_space<any>>
    %c0_i32_72 = arith.constant 0 : i32
    %c0_i32_73 = arith.constant 0 : i32
    %56 = tpu.memref_slice %arg14[%c0_i32_67, %c0_i32_72, %c0_i32_73] : memref<2x512x384xbf16, #tpu.memory_space<vmem>> -> memref<1x512x384xbf16, #tpu.memory_space<vmem>>
    %57 = tpu.memref_squeeze %56 : memref<1x512x384xbf16, #tpu.memory_space<vmem>> -> memref<512x384xbf16, #tpu.memory_space<vmem>>
    %58 = tpu.memref_slice %arg18[%c0_i32_68, %c0_i32_69] : memref<2x4x!tpu.dma_semaphore, #tpu.memory_space<semaphore_mem>> -> memref<1x1x!tpu.dma_semaphore, #tpu.memory_space<semaphore_mem>>
    %59 = tpu.memref_squeeze %58 : memref<1x1x!tpu.dma_semaphore, #tpu.memory_space<semaphore_mem>> -> memref<!tpu.dma_semaphore, #tpu.memory_space<semaphore_mem>>
    tpu.wait_dma2 semaphore(%59 : memref<!tpu.dma_semaphore, #tpu.memory_space<semaphore_mem>>) src(%55 : memref<512x384xbf16, #tpu.memory_space<any>>) dst(%57 : memref<512x384xbf16, #tpu.memory_space<vmem>>)
    %c0_i32_74 = arith.constant 0 : i32
    %c0_i32_75 = arith.constant 0 : i32
    %c0_i32_76 = arith.constant 0 : i32
    %c1_i32_77 = arith.constant 1 : i32
    %c0_i32_78 = arith.constant 0 : i32
    %c0_i32_79 = arith.constant 0 : i32
    %60 = tpu.memref_slice %arg10[%c0_i32_74, %c0_i32_78, %c0_i32_79] : memref<2x128x512xbf16, #tpu.memory_space<any>> -> memref<1x128x512xbf16, #tpu.memory_space<any>>
    %61 = tpu.memref_squeeze %60 : memref<1x128x512xbf16, #tpu.memory_space<any>> -> memref<128x512xbf16, #tpu.memory_space<any>>
    %c0_i32_80 = arith.constant 0 : i32
    %c0_i32_81 = arith.constant 0 : i32
    %62 = tpu.memref_slice %arg15[%c0_i32_75, %c0_i32_80, %c0_i32_81] : memref<2x128x512xbf16, #tpu.memory_space<vmem>> -> memref<1x128x512xbf16, #tpu.memory_space<vmem>>
    %63 = tpu.memref_squeeze %62 : memref<1x128x512xbf16, #tpu.memory_space<vmem>> -> memref<128x512xbf16, #tpu.memory_space<vmem>>
    %64 = tpu.memref_slice %arg18[%c0_i32_76, %c1_i32_77] : memref<2x4x!tpu.dma_semaphore, #tpu.memory_space<semaphore_mem>> -> memref<1x1x!tpu.dma_semaphore, #tpu.memory_space<semaphore_mem>>
    %65 = tpu.memref_squeeze %64 : memref<1x1x!tpu.dma_semaphore, #tpu.memory_space<semaphore_mem>> -> memref<!tpu.dma_semaphore, #tpu.memory_space<semaphore_mem>>
    tpu.wait_dma2 semaphore(%65 : memref<!tpu.dma_semaphore, #tpu.memory_space<semaphore_mem>>) src(%61 : memref<128x512xbf16, #tpu.memory_space<any>>) dst(%63 : memref<128x512xbf16, #tpu.memory_space<vmem>>)
    %c0_i32_82 = arith.constant 0 : i32
    %c0_i32_83 = arith.constant 0 : i32
    %c0_i32_84 = arith.constant 0 : i32
    %c2_i32_85 = arith.constant 2 : i32
    %c0_i32_86 = arith.constant 0 : i32
    %c0_i32_87 = arith.constant 0 : i32
    %66 = tpu.memref_slice %arg11[%c0_i32_82, %c0_i32_86, %c0_i32_87] : memref<2x512x128xbf16, #tpu.memory_space<any>> -> memref<1x512x128xbf16, #tpu.memory_space<any>>
    %67 = tpu.memref_squeeze %66 : memref<1x512x128xbf16, #tpu.memory_space<any>> -> memref<512x128xbf16, #tpu.memory_space<any>>
    %c0_i32_88 = arith.constant 0 : i32
    %c0_i32_89 = arith.constant 0 : i32
    %68 = tpu.memref_slice %arg16[%c0_i32_83, %c0_i32_88, %c0_i32_89] : memref<2x512x128xbf16, #tpu.memory_space<vmem>> -> memref<1x512x128xbf16, #tpu.memory_space<vmem>>
    %69 = tpu.memref_squeeze %68 : memref<1x512x128xbf16, #tpu.memory_space<vmem>> -> memref<512x128xbf16, #tpu.memory_space<vmem>>
    %70 = tpu.memref_slice %arg18[%c0_i32_84, %c2_i32_85] : memref<2x4x!tpu.dma_semaphore, #tpu.memory_space<semaphore_mem>> -> memref<1x1x!tpu.dma_semaphore, #tpu.memory_space<semaphore_mem>>
    %71 = tpu.memref_squeeze %70 : memref<1x1x!tpu.dma_semaphore, #tpu.memory_space<semaphore_mem>> -> memref<!tpu.dma_semaphore, #tpu.memory_space<semaphore_mem>>
    tpu.wait_dma2 semaphore(%71 : memref<!tpu.dma_semaphore, #tpu.memory_space<semaphore_mem>>) src(%67 : memref<512x128xbf16, #tpu.memory_space<any>>) dst(%69 : memref<512x128xbf16, #tpu.memory_space<vmem>>)
    %c0_i32_90 = arith.constant 0 : i32
    %c0_i32_91 = arith.constant 0 : i32
    %c0_i32_92 = arith.constant 0 : i32
    %c3_i32_93 = arith.constant 3 : i32
    %c0_i32_94 = arith.constant 0 : i32
    %c0_i32_95 = arith.constant 0 : i32
    %72 = tpu.memref_slice %arg12[%c0_i32_90, %c0_i32_94, %c0_i32_95] : memref<2x128x512xbf16, #tpu.memory_space<any>> -> memref<1x128x512xbf16, #tpu.memory_space<any>>
    %73 = tpu.memref_squeeze %72 : memref<1x128x512xbf16, #tpu.memory_space<any>> -> memref<128x512xbf16, #tpu.memory_space<any>>
    %c0_i32_96 = arith.constant 0 : i32
    %c0_i32_97 = arith.constant 0 : i32
    %74 = tpu.memref_slice %arg17[%c0_i32_91, %c0_i32_96, %c0_i32_97] : memref<2x128x512xbf16, #tpu.memory_space<vmem>> -> memref<1x128x512xbf16, #tpu.memory_space<vmem>>
    %75 = tpu.memref_squeeze %74 : memref<1x128x512xbf16, #tpu.memory_space<vmem>> -> memref<128x512xbf16, #tpu.memory_space<vmem>>
    %76 = tpu.memref_slice %arg18[%c0_i32_92, %c3_i32_93] : memref<2x4x!tpu.dma_semaphore, #tpu.memory_space<semaphore_mem>> -> memref<1x1x!tpu.dma_semaphore, #tpu.memory_space<semaphore_mem>>
    %77 = tpu.memref_squeeze %76 : memref<1x1x!tpu.dma_semaphore, #tpu.memory_space<semaphore_mem>> -> memref<!tpu.dma_semaphore, #tpu.memory_space<semaphore_mem>>
    tpu.wait_dma2 semaphore(%77 : memref<!tpu.dma_semaphore, #tpu.memory_space<semaphore_mem>>) src(%73 : memref<128x512xbf16, #tpu.memory_space<any>>) dst(%75 : memref<128x512xbf16, #tpu.memory_space<vmem>>)
    %78 = arith.truncf %53 : vector<32x512xf32> to vector<32x512xbf16>
    %c0_98 = arith.constant 0 : index
    %c0_99 = arith.constant 0 : index
    %c0_100 = arith.constant 0 : index
    %79 = vector.load %arg14[%c0_98, %c0_99, %c0_100] : memref<2x512x384xbf16, #tpu.memory_space<vmem>>, vector<1x512x384xbf16>
    %80 = vector.shape_cast %79 : vector<1x512x384xbf16> to vector<512x384xbf16>
    %cst_101 = arith.constant dense<0.000000e+00> : vector<32x384xf32>
    %81 = tpu.matmul %78, %80, %cst_101 {dimension_numbers = #tpu.dot_dimension_numbers<[1], [0], [0], [1], [0, 0, 1, 1], [], []>} : vector<32x512xbf16>, vector<512x384xbf16>, vector<32x384xf32> -> vector<32x384xf32>
    %82 = vector.extract_strided_slice %81 {offsets = [0, 0], sizes = [32, 128], strides = [1, 1]} : vector<32x384xf32> to vector<32x128xf32>
    %cst_102 = arith.constant 1.250000e-01 : f32
    %83 = vector.broadcast %cst_102 : f32 to vector<32x128xf32>
    %84 = arith.mulf %82, %83 : vector<32x128xf32>
    %85 = vector.extract_strided_slice %81 {offsets = [0, 128], sizes = [32, 128], strides = [1, 1]} : vector<32x384xf32> to vector<32x128xf32>
    %86 = vector.extract_strided_slice %81 {offsets = [0, 256], sizes = [32, 128], strides = [1, 1]} : vector<32x384xf32> to vector<32x128xf32>
    %87 = arith.truncf %84 : vector<32x128xf32> to vector<32x128xbf16>
    %88 = arith.truncf %85 : vector<32x128xf32> to vector<32x128xbf16>
    %89 = arith.truncf %86 : vector<32x128xf32> to vector<32x128xbf16>
    %90 = vector.extract_strided_slice %87 {offsets = [0, 0], sizes = [32, 64], strides = [1, 1]} : vector<32x128xbf16> to vector<32x64xbf16>
    %91 = vector.extract_strided_slice %88 {offsets = [0, 0], sizes = [32, 64], strides = [1, 1]} : vector<32x128xbf16> to vector<32x64xbf16>
    %92 = vector.extract_strided_slice %89 {offsets = [0, 0], sizes = [32, 64], strides = [1, 1]} : vector<32x128xbf16> to vector<32x64xbf16>
    %cst_103 = arith.constant dense<0.000000e+00> : vector<32x32xf32>
    %93 = tpu.matmul %90, %91, %cst_103 {dimension_numbers = #tpu.dot_dimension_numbers<[1], [1], [0], [0], [0, 0, 1, 0], [], []>} : vector<32x64xbf16>, vector<32x64xbf16>, vector<32x32xf32> -> vector<32x32xf32>
    %94 = arith.addf %93, %48 : vector<32x32xf32>
    %cst_104 = arith.constant dense<0xFF800000> : vector<32xf32>
    %95 = vector.multi_reduction <maximumf>, %94, %cst_104 [1] : vector<32x32xf32> to vector<32xf32>
    %96 = vector.shape_cast %95 : vector<32xf32> to vector<32x1xf32>
    %97 = vector.broadcast %96 : vector<32x1xf32> to vector<32x32xf32>
    %98 = arith.subf %94, %97 : vector<32x32xf32>
    %99 = math.exp %98 : vector<32x32xf32>
    %cst_105 = arith.constant dense<0.000000e+00> : vector<32xf32>
    %100 = vector.multi_reduction <add>, %99, %cst_105 [1] : vector<32x32xf32> to vector<32xf32>
    %101 = vector.shape_cast %100 : vector<32xf32> to vector<32x1xf32>
    %102 = tpu.reciprocal %101 : vector<32x1xf32> -> vector<32x1xf32>
    %103 = vector.broadcast %102 : vector<32x1xf32> to vector<32x32xf32>
    %104 = arith.mulf %99, %103 : vector<32x32xf32>
    %105 = arith.truncf %104 : vector<32x32xf32> to vector<32x32xbf16>
    %cst_106 = arith.constant dense<0.000000e+00> : vector<32x64xf32>
    %106 = tpu.matmul %105, %92, %cst_106 {dimension_numbers = #tpu.dot_dimension_numbers<[1], [0], [0], [1], [0, 0, 1, 1], [], []>} : vector<32x32xbf16>, vector<32x64xbf16>, vector<32x64xf32> -> vector<32x64xf32>
    %107 = vector.extract_strided_slice %87 {offsets = [0, 64], sizes = [32, 64], strides = [1, 1]} : vector<32x128xbf16> to vector<32x64xbf16>
    %108 = vector.extract_strided_slice %88 {offsets = [0, 64], sizes = [32, 64], strides = [1, 1]} : vector<32x128xbf16> to vector<32x64xbf16>
    %109 = vector.extract_strided_slice %89 {offsets = [0, 64], sizes = [32, 64], strides = [1, 1]} : vector<32x128xbf16> to vector<32x64xbf16>
    %cst_107 = arith.constant dense<0.000000e+00> : vector<32x32xf32>
    %110 = tpu.matmul %107, %108, %cst_107 {dimension_numbers = #tpu.dot_dimension_numbers<[1], [1], [0], [0], [0, 0, 1, 0], [], []>} : vector<32x64xbf16>, vector<32x64xbf16>, vector<32x32xf32> -> vector<32x32xf32>
    %111 = arith.addf %110, %48 : vector<32x32xf32>
    %cst_108 = arith.constant dense<0xFF800000> : vector<32xf32>
    %112 = vector.multi_reduction <maximumf>, %111, %cst_108 [1] : vector<32x32xf32> to vector<32xf32>
    %113 = vector.shape_cast %112 : vector<32xf32> to vector<32x1xf32>
    %114 = vector.broadcast %113 : vector<32x1xf32> to vector<32x32xf32>
    %115 = arith.subf %111, %114 : vector<32x32xf32>
    %116 = math.exp %115 : vector<32x32xf32>
    %cst_109 = arith.constant dense<0.000000e+00> : vector<32xf32>
    %117 = vector.multi_reduction <add>, %116, %cst_109 [1] : vector<32x32xf32> to vector<32xf32>
    %118 = vector.shape_cast %117 : vector<32xf32> to vector<32x1xf32>
    %119 = tpu.reciprocal %118 : vector<32x1xf32> -> vector<32x1xf32>
    %120 = vector.broadcast %119 : vector<32x1xf32> to vector<32x32xf32>
    %121 = arith.mulf %116, %120 : vector<32x32xf32>
    %122 = arith.truncf %121 : vector<32x32xf32> to vector<32x32xbf16>
    %cst_110 = arith.constant dense<0.000000e+00> : vector<32x64xf32>
    %123 = tpu.matmul %122, %109, %cst_110 {dimension_numbers = #tpu.dot_dimension_numbers<[1], [0], [0], [1], [0, 0, 1, 1], [], []>} : vector<32x32xbf16>, vector<32x64xbf16>, vector<32x64xf32> -> vector<32x64xf32>
    %124 = tpu.concatenate %106, %123 in 1 : vector<32x64xf32>, vector<32x64xf32> -> vector<32x128xf32>
    %125 = arith.truncf %124 : vector<32x128xf32> to vector<32x128xbf16>
    %c0_111 = arith.constant 0 : index
    %c0_112 = arith.constant 0 : index
    %c0_113 = arith.constant 0 : index
    %126 = vector.load %arg15[%c0_111, %c0_112, %c0_113] : memref<2x128x512xbf16, #tpu.memory_space<vmem>>, vector<1x128x512xbf16>
    %127 = vector.shape_cast %126 : vector<1x128x512xbf16> to vector<128x512xbf16>
    %cst_114 = arith.constant dense<0.000000e+00> : vector<32x512xf32>
    %128 = tpu.matmul %125, %127, %cst_114 {dimension_numbers = #tpu.dot_dimension_numbers<[1], [0], [0], [1], [0, 0, 1, 1], [], []>} : vector<32x128xbf16>, vector<128x512xbf16>, vector<32x512xf32> -> vector<32x512xf32>
    %129 = arith.addf %53, %128 : vector<32x512xf32>
    %c0_115 = arith.constant 0 : index
    %c0_116 = arith.constant 0 : index
    %c0_117 = arith.constant 0 : index
    %130 = vector.load %arg5[%c0_115, %c0_116, %c0_117] : memref<2x1x512xf32, #tpu.memory_space<vmem>>, vector<1x1x512xf32>
    %131 = vector.shape_cast %130 : vector<1x1x512xf32> to vector<1x512xf32>
    %c0_118 = arith.constant 0 : index
    %c0_119 = arith.constant 0 : index
    %c0_120 = arith.constant 0 : index
    %132 = vector.load %arg6[%c0_118, %c0_119, %c0_120] : memref<2x1x512xf32, #tpu.memory_space<vmem>>, vector<1x1x512xf32>
    %133 = vector.shape_cast %132 : vector<1x1x512xf32> to vector<1x512xf32>
    %cst_121 = arith.constant dense<0.000000e+00> : vector<32xf32>
    %134 = vector.multi_reduction <add>, %129, %cst_121 [1] : vector<32x512xf32> to vector<32xf32>
    %135 = vector.shape_cast %134 : vector<32xf32> to vector<32x1xf32>
    %cst_122 = arith.constant 5.120000e+02 : f32
    %136 = vector.broadcast %cst_122 : f32 to vector<32x1xf32>
    %137 = arith.divf %135, %136 : vector<32x1xf32>
    %138 = vector.broadcast %137 : vector<32x1xf32> to vector<32x512xf32>
    %139 = arith.subf %129, %138 : vector<32x512xf32>
    %140 = arith.mulf %139, %139 : vector<32x512xf32>
    %cst_123 = arith.constant dense<0.000000e+00> : vector<32xf32>
    %141 = vector.multi_reduction <add>, %140, %cst_123 [1] : vector<32x512xf32> to vector<32xf32>
    %142 = vector.shape_cast %141 : vector<32xf32> to vector<32x1xf32>
    %cst_124 = arith.constant 5.120000e+02 : f32
    %143 = vector.broadcast %cst_124 : f32 to vector<32x1xf32>
    %144 = arith.divf %142, %143 : vector<32x1xf32>
    %145 = vector.broadcast %137 : vector<32x1xf32> to vector<32x512xf32>
    %146 = arith.subf %129, %145 : vector<32x512xf32>
    %cst_125 = arith.constant 9.99999997E-7 : f32
    %147 = vector.broadcast %cst_125 : f32 to vector<32x1xf32>
    %148 = arith.addf %144, %147 : vector<32x1xf32>
    %149 = math.rsqrt %148 : vector<32x1xf32>
    %150 = vector.broadcast %149 : vector<32x1xf32> to vector<32x512xf32>
    %151 = arith.mulf %146, %150 : vector<32x512xf32>
    %152 = vector.broadcast %131 : vector<1x512xf32> to vector<32x512xf32>
    %153 = arith.mulf %151, %152 : vector<32x512xf32>
    %154 = vector.broadcast %133 : vector<1x512xf32> to vector<32x512xf32>
    %155 = arith.addf %153, %154 : vector<32x512xf32>
    %156 = arith.truncf %155 : vector<32x512xf32> to vector<32x512xbf16>
    %c0_126 = arith.constant 0 : index
    %c0_127 = arith.constant 0 : index
    %c0_128 = arith.constant 0 : index
    %157 = vector.load %arg16[%c0_126, %c0_127, %c0_128] : memref<2x512x128xbf16, #tpu.memory_space<vmem>>, vector<1x512x128xbf16>
    %158 = vector.shape_cast %157 : vector<1x512x128xbf16> to vector<512x128xbf16>
    %cst_129 = arith.constant dense<0.000000e+00> : vector<32x128xf32>
    %159 = tpu.matmul %156, %158, %cst_129 {dimension_numbers = #tpu.dot_dimension_numbers<[1], [0], [0], [1], [0, 0, 1, 1], [], []>} : vector<32x512xbf16>, vector<512x128xbf16>, vector<32x128xf32> -> vector<32x128xf32>
    %c0_130 = arith.constant 0 : index
    %c0_131 = arith.constant 0 : index
    %c0_132 = arith.constant 0 : index
    %160 = vector.load %arg3[%c0_130, %c0_131, %c0_132] : memref<2x1x128xf32, #tpu.memory_space<vmem>>, vector<1x1x128xf32>
    %161 = vector.shape_cast %160 : vector<1x1x128xf32> to vector<1x128xf32>
    %162 = vector.broadcast %161 : vector<1x128xf32> to vector<32x128xf32>
    %163 = arith.addf %159, %162 : vector<32x128xf32>
    %cst_133 = arith.constant 0.000000e+00 : f32
    %164 = vector.broadcast %cst_133 : f32 to vector<32x128xf32>
    %165 = arith.maximumf %163, %164 : vector<32x128xf32>
    %166 = arith.truncf %165 : vector<32x128xf32> to vector<32x128xbf16>
    %c0_134 = arith.constant 0 : index
    %c0_135 = arith.constant 0 : index
    %c0_136 = arith.constant 0 : index
    %167 = vector.load %arg17[%c0_134, %c0_135, %c0_136] : memref<2x128x512xbf16, #tpu.memory_space<vmem>>, vector<1x128x512xbf16>
    %168 = vector.shape_cast %167 : vector<1x128x512xbf16> to vector<128x512xbf16>
    %cst_137 = arith.constant dense<0.000000e+00> : vector<32x512xf32>
    %169 = tpu.matmul %166, %168, %cst_137 {dimension_numbers = #tpu.dot_dimension_numbers<[1], [0], [0], [1], [0, 0, 1, 1], [], []>} : vector<32x128xbf16>, vector<128x512xbf16>, vector<32x512xf32> -> vector<32x512xf32>
    %c0_138 = arith.constant 0 : index
    %c0_139 = arith.constant 0 : index
    %c0_140 = arith.constant 0 : index
    %170 = vector.load %arg4[%c0_138, %c0_139, %c0_140] : memref<2x1x512xf32, #tpu.memory_space<vmem>>, vector<1x1x512xf32>
    %171 = vector.shape_cast %170 : vector<1x1x512xf32> to vector<1x512xf32>
    %172 = vector.broadcast %171 : vector<1x512xf32> to vector<32x512xf32>
    %173 = arith.addf %169, %172 : vector<32x512xf32>
    %174 = arith.addf %173, %155 : vector<32x512xf32>
    %c0_141 = arith.constant 0 : index
    %c0_142 = arith.constant 0 : index
    %c0_143 = arith.constant 0 : index
    %175 = vector.load %arg7[%c0_141, %c0_142, %c0_143] : memref<2x1x512xf32, #tpu.memory_space<vmem>>, vector<1x1x512xf32>
    %176 = vector.shape_cast %175 : vector<1x1x512xf32> to vector<1x512xf32>
    %c0_144 = arith.constant 0 : index
    %c0_145 = arith.constant 0 : index
    %c0_146 = arith.constant 0 : index
    %177 = vector.load %arg8[%c0_144, %c0_145, %c0_146] : memref<2x1x512xf32, #tpu.memory_space<vmem>>, vector<1x1x512xf32>
    %178 = vector.shape_cast %177 : vector<1x1x512xf32> to vector<1x512xf32>
    %cst_147 = arith.constant dense<0.000000e+00> : vector<32xf32>
    %179 = vector.multi_reduction <add>, %174, %cst_147 [1] : vector<32x512xf32> to vector<32xf32>
    %180 = vector.shape_cast %179 : vector<32xf32> to vector<32x1xf32>
    %cst_148 = arith.constant 5.120000e+02 : f32
    %181 = vector.broadcast %cst_148 : f32 to vector<32x1xf32>
    %182 = arith.divf %180, %181 : vector<32x1xf32>
    %183 = vector.broadcast %182 : vector<32x1xf32> to vector<32x512xf32>
    %184 = arith.subf %174, %183 : vector<32x512xf32>
    %185 = arith.mulf %184, %184 : vector<32x512xf32>
    %cst_149 = arith.constant dense<0.000000e+00> : vector<32xf32>
    %186 = vector.multi_reduction <add>, %185, %cst_149 [1] : vector<32x512xf32> to vector<32xf32>
    %187 = vector.shape_cast %186 : vector<32xf32> to vector<32x1xf32>
    %cst_150 = arith.constant 5.120000e+02 : f32
    %188 = vector.broadcast %cst_150 : f32 to vector<32x1xf32>
    %189 = arith.divf %187, %188 : vector<32x1xf32>
    %190 = vector.broadcast %182 : vector<32x1xf32> to vector<32x512xf32>
    %191 = arith.subf %174, %190 : vector<32x512xf32>
    %cst_151 = arith.constant 9.99999997E-7 : f32
    %192 = vector.broadcast %cst_151 : f32 to vector<32x1xf32>
    %193 = arith.addf %189, %192 : vector<32x1xf32>
    %194 = math.rsqrt %193 : vector<32x1xf32>
    %195 = vector.broadcast %194 : vector<32x1xf32> to vector<32x512xf32>
    %196 = arith.mulf %191, %195 : vector<32x512xf32>
    %197 = vector.broadcast %176 : vector<1x512xf32> to vector<32x512xf32>
    %198 = arith.mulf %196, %197 : vector<32x512xf32>
    %199 = vector.broadcast %178 : vector<1x512xf32> to vector<32x512xf32>
    %200 = arith.addf %198, %199 : vector<32x512xf32>
    %c1_i32_152 = arith.constant 1 : i32
    %c1_i32_153 = arith.constant 1 : i32
    %c1_i32_154 = arith.constant 1 : i32
    %c0_i32_155 = arith.constant 0 : i32
    %c0_i32_156 = arith.constant 0 : i32
    %c0_i32_157 = arith.constant 0 : i32
    %201 = tpu.memref_slice %arg9[%c1_i32_152, %c0_i32_156, %c0_i32_157] : memref<2x512x384xbf16, #tpu.memory_space<any>> -> memref<1x512x384xbf16, #tpu.memory_space<any>>
    %202 = tpu.memref_squeeze %201 : memref<1x512x384xbf16, #tpu.memory_space<any>> -> memref<512x384xbf16, #tpu.memory_space<any>>
    %c0_i32_158 = arith.constant 0 : i32
    %c0_i32_159 = arith.constant 0 : i32
    %203 = tpu.memref_slice %arg14[%c1_i32_153, %c0_i32_158, %c0_i32_159] : memref<2x512x384xbf16, #tpu.memory_space<vmem>> -> memref<1x512x384xbf16, #tpu.memory_space<vmem>>
    %204 = tpu.memref_squeeze %203 : memref<1x512x384xbf16, #tpu.memory_space<vmem>> -> memref<512x384xbf16, #tpu.memory_space<vmem>>
    %205 = tpu.memref_slice %arg18[%c1_i32_154, %c0_i32_155] : memref<2x4x!tpu.dma_semaphore, #tpu.memory_space<semaphore_mem>> -> memref<1x1x!tpu.dma_semaphore, #tpu.memory_space<semaphore_mem>>
    %206 = tpu.memref_squeeze %205 : memref<1x1x!tpu.dma_semaphore, #tpu.memory_space<semaphore_mem>> -> memref<!tpu.dma_semaphore, #tpu.memory_space<semaphore_mem>>
    tpu.wait_dma2 semaphore(%206 : memref<!tpu.dma_semaphore, #tpu.memory_space<semaphore_mem>>) src(%202 : memref<512x384xbf16, #tpu.memory_space<any>>) dst(%204 : memref<512x384xbf16, #tpu.memory_space<vmem>>)
    %c1_i32_160 = arith.constant 1 : i32
    %c1_i32_161 = arith.constant 1 : i32
    %c1_i32_162 = arith.constant 1 : i32
    %c1_i32_163 = arith.constant 1 : i32
    %c0_i32_164 = arith.constant 0 : i32
    %c0_i32_165 = arith.constant 0 : i32
    %207 = tpu.memref_slice %arg10[%c1_i32_160, %c0_i32_164, %c0_i32_165] : memref<2x128x512xbf16, #tpu.memory_space<any>> -> memref<1x128x512xbf16, #tpu.memory_space<any>>
    %208 = tpu.memref_squeeze %207 : memref<1x128x512xbf16, #tpu.memory_space<any>> -> memref<128x512xbf16, #tpu.memory_space<any>>
    %c0_i32_166 = arith.constant 0 : i32
    %c0_i32_167 = arith.constant 0 : i32
    %209 = tpu.memref_slice %arg15[%c1_i32_161, %c0_i32_166, %c0_i32_167] : memref<2x128x512xbf16, #tpu.memory_space<vmem>> -> memref<1x128x512xbf16, #tpu.memory_space<vmem>>
    %210 = tpu.memref_squeeze %209 : memref<1x128x512xbf16, #tpu.memory_space<vmem>> -> memref<128x512xbf16, #tpu.memory_space<vmem>>
    %211 = tpu.memref_slice %arg18[%c1_i32_162, %c1_i32_163] : memref<2x4x!tpu.dma_semaphore, #tpu.memory_space<semaphore_mem>> -> memref<1x1x!tpu.dma_semaphore, #tpu.memory_space<semaphore_mem>>
    %212 = tpu.memref_squeeze %211 : memref<1x1x!tpu.dma_semaphore, #tpu.memory_space<semaphore_mem>> -> memref<!tpu.dma_semaphore, #tpu.memory_space<semaphore_mem>>
    tpu.wait_dma2 semaphore(%212 : memref<!tpu.dma_semaphore, #tpu.memory_space<semaphore_mem>>) src(%208 : memref<128x512xbf16, #tpu.memory_space<any>>) dst(%210 : memref<128x512xbf16, #tpu.memory_space<vmem>>)
    %c1_i32_168 = arith.constant 1 : i32
    %c1_i32_169 = arith.constant 1 : i32
    %c1_i32_170 = arith.constant 1 : i32
    %c2_i32_171 = arith.constant 2 : i32
    %c0_i32_172 = arith.constant 0 : i32
    %c0_i32_173 = arith.constant 0 : i32
    %213 = tpu.memref_slice %arg11[%c1_i32_168, %c0_i32_172, %c0_i32_173] : memref<2x512x128xbf16, #tpu.memory_space<any>> -> memref<1x512x128xbf16, #tpu.memory_space<any>>
    %214 = tpu.memref_squeeze %213 : memref<1x512x128xbf16, #tpu.memory_space<any>> -> memref<512x128xbf16, #tpu.memory_space<any>>
    %c0_i32_174 = arith.constant 0 : i32
    %c0_i32_175 = arith.constant 0 : i32
    %215 = tpu.memref_slice %arg16[%c1_i32_169, %c0_i32_174, %c0_i32_175] : memref<2x512x128xbf16, #tpu.memory_space<vmem>> -> memref<1x512x128xbf16, #tpu.memory_space<vmem>>
    %216 = tpu.memref_squeeze %215 : memref<1x512x128xbf16, #tpu.memory_space<vmem>> -> memref<512x128xbf16, #tpu.memory_space<vmem>>
    %217 = tpu.memref_slice %arg18[%c1_i32_170, %c2_i32_171] : memref<2x4x!tpu.dma_semaphore, #tpu.memory_space<semaphore_mem>> -> memref<1x1x!tpu.dma_semaphore, #tpu.memory_space<semaphore_mem>>
    %218 = tpu.memref_squeeze %217 : memref<1x1x!tpu.dma_semaphore, #tpu.memory_space<semaphore_mem>> -> memref<!tpu.dma_semaphore, #tpu.memory_space<semaphore_mem>>
    tpu.wait_dma2 semaphore(%218 : memref<!tpu.dma_semaphore, #tpu.memory_space<semaphore_mem>>) src(%214 : memref<512x128xbf16, #tpu.memory_space<any>>) dst(%216 : memref<512x128xbf16, #tpu.memory_space<vmem>>)
    %c1_i32_176 = arith.constant 1 : i32
    %c1_i32_177 = arith.constant 1 : i32
    %c1_i32_178 = arith.constant 1 : i32
    %c3_i32_179 = arith.constant 3 : i32
    %c0_i32_180 = arith.constant 0 : i32
    %c0_i32_181 = arith.constant 0 : i32
    %219 = tpu.memref_slice %arg12[%c1_i32_176, %c0_i32_180, %c0_i32_181] : memref<2x128x512xbf16, #tpu.memory_space<any>> -> memref<1x128x512xbf16, #tpu.memory_space<any>>
    %220 = tpu.memref_squeeze %219 : memref<1x128x512xbf16, #tpu.memory_space<any>> -> memref<128x512xbf16, #tpu.memory_space<any>>
    %c0_i32_182 = arith.constant 0 : i32
    %c0_i32_183 = arith.constant 0 : i32
    %221 = tpu.memref_slice %arg17[%c1_i32_177, %c0_i32_182, %c0_i32_183] : memref<2x128x512xbf16, #tpu.memory_space<vmem>> -> memref<1x128x512xbf16, #tpu.memory_space<vmem>>
    %222 = tpu.memref_squeeze %221 : memref<1x128x512xbf16, #tpu.memory_space<vmem>> -> memref<128x512xbf16, #tpu.memory_space<vmem>>
    %223 = tpu.memref_slice %arg18[%c1_i32_178, %c3_i32_179] : memref<2x4x!tpu.dma_semaphore, #tpu.memory_space<semaphore_mem>> -> memref<1x1x!tpu.dma_semaphore, #tpu.memory_space<semaphore_mem>>
    %224 = tpu.memref_squeeze %223 : memref<1x1x!tpu.dma_semaphore, #tpu.memory_space<semaphore_mem>> -> memref<!tpu.dma_semaphore, #tpu.memory_space<semaphore_mem>>
    tpu.wait_dma2 semaphore(%224 : memref<!tpu.dma_semaphore, #tpu.memory_space<semaphore_mem>>) src(%220 : memref<128x512xbf16, #tpu.memory_space<any>>) dst(%222 : memref<128x512xbf16, #tpu.memory_space<vmem>>)
    %225 = arith.truncf %200 : vector<32x512xf32> to vector<32x512xbf16>
    %c1 = arith.constant 1 : index
    %c0_184 = arith.constant 0 : index
    %c0_185 = arith.constant 0 : index
    %226 = vector.load %arg14[%c1, %c0_184, %c0_185] : memref<2x512x384xbf16, #tpu.memory_space<vmem>>, vector<1x512x384xbf16>
    %227 = vector.shape_cast %226 : vector<1x512x384xbf16> to vector<512x384xbf16>
    %cst_186 = arith.constant dense<0.000000e+00> : vector<32x384xf32>
    %228 = tpu.matmul %225, %227, %cst_186 {dimension_numbers = #tpu.dot_dimension_numbers<[1], [0], [0], [1], [0, 0, 1, 1], [], []>} : vector<32x512xbf16>, vector<512x384xbf16>, vector<32x384xf32> -> vector<32x384xf32>
    %229 = vector.extract_strided_slice %228 {offsets = [0, 0], sizes = [32, 128], strides = [1, 1]} : vector<32x384xf32> to vector<32x128xf32>
    %cst_187 = arith.constant 1.250000e-01 : f32
    %230 = vector.broadcast %cst_187 : f32 to vector<32x128xf32>
    %231 = arith.mulf %229, %230 : vector<32x128xf32>
    %232 = vector.extract_strided_slice %228 {offsets = [0, 128], sizes = [32, 128], strides = [1, 1]} : vector<32x384xf32> to vector<32x128xf32>
    %233 = vector.extract_strided_slice %228 {offsets = [0, 256], sizes = [32, 128], strides = [1, 1]} : vector<32x384xf32> to vector<32x128xf32>
    %234 = arith.truncf %231 : vector<32x128xf32> to vector<32x128xbf16>
    %235 = arith.truncf %232 : vector<32x128xf32> to vector<32x128xbf16>
    %236 = arith.truncf %233 : vector<32x128xf32> to vector<32x128xbf16>
    %237 = vector.extract_strided_slice %234 {offsets = [0, 0], sizes = [32, 64], strides = [1, 1]} : vector<32x128xbf16> to vector<32x64xbf16>
    %238 = vector.extract_strided_slice %235 {offsets = [0, 0], sizes = [32, 64], strides = [1, 1]} : vector<32x128xbf16> to vector<32x64xbf16>
    %239 = vector.extract_strided_slice %236 {offsets = [0, 0], sizes = [32, 64], strides = [1, 1]} : vector<32x128xbf16> to vector<32x64xbf16>
    %cst_188 = arith.constant dense<0.000000e+00> : vector<32x32xf32>
    %240 = tpu.matmul %237, %238, %cst_188 {dimension_numbers = #tpu.dot_dimension_numbers<[1], [1], [0], [0], [0, 0, 1, 0], [], []>} : vector<32x64xbf16>, vector<32x64xbf16>, vector<32x32xf32> -> vector<32x32xf32>
    %241 = arith.addf %240, %48 : vector<32x32xf32>
    %cst_189 = arith.constant dense<0xFF800000> : vector<32xf32>
    %242 = vector.multi_reduction <maximumf>, %241, %cst_189 [1] : vector<32x32xf32> to vector<32xf32>
    %243 = vector.shape_cast %242 : vector<32xf32> to vector<32x1xf32>
    %244 = vector.broadcast %243 : vector<32x1xf32> to vector<32x32xf32>
    %245 = arith.subf %241, %244 : vector<32x32xf32>
    %246 = math.exp %245 : vector<32x32xf32>
    %cst_190 = arith.constant dense<0.000000e+00> : vector<32xf32>
    %247 = vector.multi_reduction <add>, %246, %cst_190 [1] : vector<32x32xf32> to vector<32xf32>
    %248 = vector.shape_cast %247 : vector<32xf32> to vector<32x1xf32>
    %249 = tpu.reciprocal %248 : vector<32x1xf32> -> vector<32x1xf32>
    %250 = vector.broadcast %249 : vector<32x1xf32> to vector<32x32xf32>
    %251 = arith.mulf %246, %250 : vector<32x32xf32>
    %252 = arith.truncf %251 : vector<32x32xf32> to vector<32x32xbf16>
    %cst_191 = arith.constant dense<0.000000e+00> : vector<32x64xf32>
    %253 = tpu.matmul %252, %239, %cst_191 {dimension_numbers = #tpu.dot_dimension_numbers<[1], [0], [0], [1], [0, 0, 1, 1], [], []>} : vector<32x32xbf16>, vector<32x64xbf16>, vector<32x64xf32> -> vector<32x64xf32>
    %254 = vector.extract_strided_slice %234 {offsets = [0, 64], sizes = [32, 64], strides = [1, 1]} : vector<32x128xbf16> to vector<32x64xbf16>
    %255 = vector.extract_strided_slice %235 {offsets = [0, 64], sizes = [32, 64], strides = [1, 1]} : vector<32x128xbf16> to vector<32x64xbf16>
    %256 = vector.extract_strided_slice %236 {offsets = [0, 64], sizes = [32, 64], strides = [1, 1]} : vector<32x128xbf16> to vector<32x64xbf16>
    %cst_192 = arith.constant dense<0.000000e+00> : vector<32x32xf32>
    %257 = tpu.matmul %254, %255, %cst_192 {dimension_numbers = #tpu.dot_dimension_numbers<[1], [1], [0], [0], [0, 0, 1, 0], [], []>} : vector<32x64xbf16>, vector<32x64xbf16>, vector<32x32xf32> -> vector<32x32xf32>
    %258 = arith.addf %257, %48 : vector<32x32xf32>
    %cst_193 = arith.constant dense<0xFF800000> : vector<32xf32>
    %259 = vector.multi_reduction <maximumf>, %258, %cst_193 [1] : vector<32x32xf32> to vector<32xf32>
    %260 = vector.shape_cast %259 : vector<32xf32> to vector<32x1xf32>
    %261 = vector.broadcast %260 : vector<32x1xf32> to vector<32x32xf32>
    %262 = arith.subf %258, %261 : vector<32x32xf32>
    %263 = math.exp %262 : vector<32x32xf32>
    %cst_194 = arith.constant dense<0.000000e+00> : vector<32xf32>
    %264 = vector.multi_reduction <add>, %263, %cst_194 [1] : vector<32x32xf32> to vector<32xf32>
    %265 = vector.shape_cast %264 : vector<32xf32> to vector<32x1xf32>
    %266 = tpu.reciprocal %265 : vector<32x1xf32> -> vector<32x1xf32>
    %267 = vector.broadcast %266 : vector<32x1xf32> to vector<32x32xf32>
    %268 = arith.mulf %263, %267 : vector<32x32xf32>
    %269 = arith.truncf %268 : vector<32x32xf32> to vector<32x32xbf16>
    %cst_195 = arith.constant dense<0.000000e+00> : vector<32x64xf32>
    %270 = tpu.matmul %269, %256, %cst_195 {dimension_numbers = #tpu.dot_dimension_numbers<[1], [0], [0], [1], [0, 0, 1, 1], [], []>} : vector<32x32xbf16>, vector<32x64xbf16>, vector<32x64xf32> -> vector<32x64xf32>
    %271 = tpu.concatenate %253, %270 in 1 : vector<32x64xf32>, vector<32x64xf32> -> vector<32x128xf32>
    %272 = arith.truncf %271 : vector<32x128xf32> to vector<32x128xbf16>
    %c1_196 = arith.constant 1 : index
    %c0_197 = arith.constant 0 : index
    %c0_198 = arith.constant 0 : index
    %273 = vector.load %arg15[%c1_196, %c0_197, %c0_198] : memref<2x128x512xbf16, #tpu.memory_space<vmem>>, vector<1x128x512xbf16>
    %274 = vector.shape_cast %273 : vector<1x128x512xbf16> to vector<128x512xbf16>
    %cst_199 = arith.constant dense<0.000000e+00> : vector<32x512xf32>
    %275 = tpu.matmul %272, %274, %cst_199 {dimension_numbers = #tpu.dot_dimension_numbers<[1], [0], [0], [1], [0, 0, 1, 1], [], []>} : vector<32x128xbf16>, vector<128x512xbf16>, vector<32x512xf32> -> vector<32x512xf32>
    %276 = arith.addf %200, %275 : vector<32x512xf32>
    %c1_200 = arith.constant 1 : index
    %c0_201 = arith.constant 0 : index
    %c0_202 = arith.constant 0 : index
    %277 = vector.load %arg5[%c1_200, %c0_201, %c0_202] : memref<2x1x512xf32, #tpu.memory_space<vmem>>, vector<1x1x512xf32>
    %278 = vector.shape_cast %277 : vector<1x1x512xf32> to vector<1x512xf32>
    %c1_203 = arith.constant 1 : index
    %c0_204 = arith.constant 0 : index
    %c0_205 = arith.constant 0 : index
    %279 = vector.load %arg6[%c1_203, %c0_204, %c0_205] : memref<2x1x512xf32, #tpu.memory_space<vmem>>, vector<1x1x512xf32>
    %280 = vector.shape_cast %279 : vector<1x1x512xf32> to vector<1x512xf32>
    %cst_206 = arith.constant dense<0.000000e+00> : vector<32xf32>
    %281 = vector.multi_reduction <add>, %276, %cst_206 [1] : vector<32x512xf32> to vector<32xf32>
    %282 = vector.shape_cast %281 : vector<32xf32> to vector<32x1xf32>
    %cst_207 = arith.constant 5.120000e+02 : f32
    %283 = vector.broadcast %cst_207 : f32 to vector<32x1xf32>
    %284 = arith.divf %282, %283 : vector<32x1xf32>
    %285 = vector.broadcast %284 : vector<32x1xf32> to vector<32x512xf32>
    %286 = arith.subf %276, %285 : vector<32x512xf32>
    %287 = arith.mulf %286, %286 : vector<32x512xf32>
    %cst_208 = arith.constant dense<0.000000e+00> : vector<32xf32>
    %288 = vector.multi_reduction <add>, %287, %cst_208 [1] : vector<32x512xf32> to vector<32xf32>
    %289 = vector.shape_cast %288 : vector<32xf32> to vector<32x1xf32>
    %cst_209 = arith.constant 5.120000e+02 : f32
    %290 = vector.broadcast %cst_209 : f32 to vector<32x1xf32>
    %291 = arith.divf %289, %290 : vector<32x1xf32>
    %292 = vector.broadcast %284 : vector<32x1xf32> to vector<32x512xf32>
    %293 = arith.subf %276, %292 : vector<32x512xf32>
    %cst_210 = arith.constant 9.99999997E-7 : f32
    %294 = vector.broadcast %cst_210 : f32 to vector<32x1xf32>
    %295 = arith.addf %291, %294 : vector<32x1xf32>
    %296 = math.rsqrt %295 : vector<32x1xf32>
    %297 = vector.broadcast %296 : vector<32x1xf32> to vector<32x512xf32>
    %298 = arith.mulf %293, %297 : vector<32x512xf32>
    %299 = vector.broadcast %278 : vector<1x512xf32> to vector<32x512xf32>
    %300 = arith.mulf %298, %299 : vector<32x512xf32>
    %301 = vector.broadcast %280 : vector<1x512xf32> to vector<32x512xf32>
    %302 = arith.addf %300, %301 : vector<32x512xf32>
    %303 = arith.truncf %302 : vector<32x512xf32> to vector<32x512xbf16>
    %c1_211 = arith.constant 1 : index
    %c0_212 = arith.constant 0 : index
    %c0_213 = arith.constant 0 : index
    %304 = vector.load %arg16[%c1_211, %c0_212, %c0_213] : memref<2x512x128xbf16, #tpu.memory_space<vmem>>, vector<1x512x128xbf16>
    %305 = vector.shape_cast %304 : vector<1x512x128xbf16> to vector<512x128xbf16>
    %cst_214 = arith.constant dense<0.000000e+00> : vector<32x128xf32>
    %306 = tpu.matmul %303, %305, %cst_214 {dimension_numbers = #tpu.dot_dimension_numbers<[1], [0], [0], [1], [0, 0, 1, 1], [], []>} : vector<32x512xbf16>, vector<512x128xbf16>, vector<32x128xf32> -> vector<32x128xf32>
    %c1_215 = arith.constant 1 : index
    %c0_216 = arith.constant 0 : index
    %c0_217 = arith.constant 0 : index
    %307 = vector.load %arg3[%c1_215, %c0_216, %c0_217] : memref<2x1x128xf32, #tpu.memory_space<vmem>>, vector<1x1x128xf32>
    %308 = vector.shape_cast %307 : vector<1x1x128xf32> to vector<1x128xf32>
    %309 = vector.broadcast %308 : vector<1x128xf32> to vector<32x128xf32>
    %310 = arith.addf %306, %309 : vector<32x128xf32>
    %cst_218 = arith.constant 0.000000e+00 : f32
    %311 = vector.broadcast %cst_218 : f32 to vector<32x128xf32>
    %312 = arith.maximumf %310, %311 : vector<32x128xf32>
    %313 = arith.truncf %312 : vector<32x128xf32> to vector<32x128xbf16>
    %c1_219 = arith.constant 1 : index
    %c0_220 = arith.constant 0 : index
    %c0_221 = arith.constant 0 : index
    %314 = vector.load %arg17[%c1_219, %c0_220, %c0_221] : memref<2x128x512xbf16, #tpu.memory_space<vmem>>, vector<1x128x512xbf16>
    %315 = vector.shape_cast %314 : vector<1x128x512xbf16> to vector<128x512xbf16>
    %cst_222 = arith.constant dense<0.000000e+00> : vector<32x512xf32>
    %316 = tpu.matmul %313, %315, %cst_222 {dimension_numbers = #tpu.dot_dimension_numbers<[1], [0], [0], [1], [0, 0, 1, 1], [], []>} : vector<32x128xbf16>, vector<128x512xbf16>, vector<32x512xf32> -> vector<32x512xf32>
    %c1_223 = arith.constant 1 : index
    %c0_224 = arith.constant 0 : index
    %c0_225 = arith.constant 0 : index
    %317 = vector.load %arg4[%c1_223, %c0_224, %c0_225] : memref<2x1x512xf32, #tpu.memory_space<vmem>>, vector<1x1x512xf32>
    %318 = vector.shape_cast %317 : vector<1x1x512xf32> to vector<1x512xf32>
    %319 = vector.broadcast %318 : vector<1x512xf32> to vector<32x512xf32>
    %320 = arith.addf %316, %319 : vector<32x512xf32>
    %321 = arith.addf %320, %302 : vector<32x512xf32>
    %c1_226 = arith.constant 1 : index
    %c0_227 = arith.constant 0 : index
    %c0_228 = arith.constant 0 : index
    %322 = vector.load %arg7[%c1_226, %c0_227, %c0_228] : memref<2x1x512xf32, #tpu.memory_space<vmem>>, vector<1x1x512xf32>
    %323 = vector.shape_cast %322 : vector<1x1x512xf32> to vector<1x512xf32>
    %c1_229 = arith.constant 1 : index
    %c0_230 = arith.constant 0 : index
    %c0_231 = arith.constant 0 : index
    %324 = vector.load %arg8[%c1_229, %c0_230, %c0_231] : memref<2x1x512xf32, #tpu.memory_space<vmem>>, vector<1x1x512xf32>
    %325 = vector.shape_cast %324 : vector<1x1x512xf32> to vector<1x512xf32>
    %cst_232 = arith.constant dense<0.000000e+00> : vector<32xf32>
    %326 = vector.multi_reduction <add>, %321, %cst_232 [1] : vector<32x512xf32> to vector<32xf32>
    %327 = vector.shape_cast %326 : vector<32xf32> to vector<32x1xf32>
    %cst_233 = arith.constant 5.120000e+02 : f32
    %328 = vector.broadcast %cst_233 : f32 to vector<32x1xf32>
    %329 = arith.divf %327, %328 : vector<32x1xf32>
    %330 = vector.broadcast %329 : vector<32x1xf32> to vector<32x512xf32>
    %331 = arith.subf %321, %330 : vector<32x512xf32>
    %332 = arith.mulf %331, %331 : vector<32x512xf32>
    %cst_234 = arith.constant dense<0.000000e+00> : vector<32xf32>
    %333 = vector.multi_reduction <add>, %332, %cst_234 [1] : vector<32x512xf32> to vector<32xf32>
    %334 = vector.shape_cast %333 : vector<32xf32> to vector<32x1xf32>
    %cst_235 = arith.constant 5.120000e+02 : f32
    %335 = vector.broadcast %cst_235 : f32 to vector<32x1xf32>
    %336 = arith.divf %334, %335 : vector<32x1xf32>
    %337 = vector.broadcast %329 : vector<32x1xf32> to vector<32x512xf32>
    %338 = arith.subf %321, %337 : vector<32x512xf32>
    %cst_236 = arith.constant 9.99999997E-7 : f32
    %339 = vector.broadcast %cst_236 : f32 to vector<32x1xf32>
    %340 = arith.addf %336, %339 : vector<32x1xf32>
    %341 = math.rsqrt %340 : vector<32x1xf32>
    %342 = vector.broadcast %341 : vector<32x1xf32> to vector<32x512xf32>
    %343 = arith.mulf %338, %342 : vector<32x512xf32>
    %344 = vector.broadcast %323 : vector<1x512xf32> to vector<32x512xf32>
    %345 = arith.mulf %343, %344 : vector<32x512xf32>
    %346 = vector.broadcast %325 : vector<1x512xf32> to vector<32x512xf32>
    %347 = arith.addf %345, %346 : vector<32x512xf32>
    %348 = vector.shape_cast %347 : vector<32x512xf32> to vector<2x16x512xf32>
    %c0_237 = arith.constant 0 : index
    %c0_238 = arith.constant 0 : index
    %c0_239 = arith.constant 0 : index
    %349 = vector.load %arg13[%c0_237, %c0_238, %c0_239] : memref<2x16x512xf32, #tpu.memory_space<vmem>>, vector<2x16x512xf32>
    tpu.vector_store %arg13[%c0_237, %c0_238, %c0_239], %348 {strides = array<i32>} : memref<2x16x512xf32, #tpu.memory_space<vmem>>, vector<2x16x512xf32>,
    return
  }
}

</mosaic_0001>

<llo_original>
// kernel: eq.8
$region0: #{eq.8}
  %s0 = inlined_call_operand.vmem [shape: s32[2,16], index: 0, kind: input, shape index: {}]
  %s1 = inlined_call_operand.vmem [shape: s32[32], index: 1, kind: output, shape index: {}]
  $region1: #{eq.8} parent=0
    #allocation0 [shape = 'u8[4096]{0}', space=vmem, size = 0x1000, scoped, tag = 'scoped mem for output reshape']
    #allocation1 [shape = 'u8[4096]{0}', space=vmem, size = 0x1000, scoped, tag = 'scoped mem for input reshape']
    %s3 = sshll.u32 1, 2
    %s4 = ssub.s32 %s3, 1
    %v5 = vld [vmem:[%s0] sm:%s4]
    %6 = vst [vmem:[#allocation1] sm:%s4] %v5
    %v7 = vld [vmem:[#allocation1] sm:$0x1]
    %vm8 = vcmask 130048
    %9 = vst.msk [vmem:[#allocation0] sm:$0x1] %vm8, %v7
    %s10 = scalar_lea.vmem [#allocation1], 1
    %v11 = vld [vmem:[%s10] sm:$0x1]
    %12 = vrot.lane.b32.xlu0 %v11, 16
    %v13 = vpop.permute.xlu0 %12
    %vm14 = vcmask 261248
    %15 = vst.msk [vmem:[#allocation0] sm:$0x1] %vm14, %v13
    %s17 = sshll.u32 1, 1
    %s18 = ssub.s32 %s17, 1
    %v20 = vld [vmem:[#allocation0] sm:%s18]
    %s21 = sshll.u32 1, 1
    %s22 = ssub.s32 %s21, 1
    %23 = vst [vmem:[%s1] sm:%s22] %v20

// kernel: encoder_forward.1
$region0: #{encoder_forward.1}
  #allocation0 [shape = 'u32[]', space=smem, size = 0x4, offset = 0x4, fixed_abs, tag = 'smem constant byte address 0x4 - core index']
  #allocation1 [shape = 'u32[144,128]{1,0:T(1,128)}', space=vmem, size = 0x12000, scoped, tag = 'internal scratch']
  #allocation2 [shape = 'bf16[2,512,384]{2,1,0:T(8,128)(2,1)}', space=vmem, size = 0xc0000, scoped, tag = 'scratch operand']
  #allocation3 [shape = 'bf16[2,128,512]{2,1,0:T(8,128)(2,1)}', space=vmem, size = 0x40000, scoped, tag = 'scratch operand']
  #allocation4 [shape = 'bf16[2,512,128]{2,1,0:T(8,128)(2,1)}', space=vmem, size = 0x40000, scoped, tag = 'scratch operand']
  #allocation5 [shape = 'bf16[2,128,512]{2,1,0:T(8,128)(2,1)}', space=vmem, size = 0x40000, scoped, tag = 'scratch operand']
  #allocation6 [shape = 's32[8]{0}', space=sflag, size = 0x20, scoped, tag = 'scratch operand']
  #allocation13 [shape = 's32[]', space=sflag, size = 0x4, offset = 0, fixed_abs, tag = 'sflag constant byte address 0x0 - dummy sync flag']
  #allocation14 [shape = 's32[]', space=sflag, size = 0x4, offset = 0, fixed_abs, tag = 'sflag constant byte address 0x0 - dummy sync flag']
  #allocation15 [shape = 'u32[]', space=smem, size = 0x4, offset = 0x44, fixed_abs, tag = 'smem constant byte address 0x44 - assertion arg 0']
  #allocation16 [shape = 'u32[]', space=smem, size = 0x4, offset = 0x48, fixed_abs, tag = 'smem constant byte address 0x48 - assertion arg 1']
  #allocation17 [shape = 's32[]', space=sflag, size = 0x4, offset = 0, fixed_abs, tag = 'sflag constant byte address 0x0 - dummy sync flag']
  #allocation18 [shape = 's32[]', space=sflag, size = 0x4, offset = 0, fixed_abs, tag = 'sflag constant byte address 0x0 - dummy sync flag']
  #allocation19 [shape = 's32[]', space=sflag, size = 0x4, offset = 0, fixed_abs, tag = 'sflag constant byte address 0x0 - dummy sync flag']
  #allocation20 [shape = 's32[]', space=sflag, size = 0x4, offset = 0, fixed_abs, tag = 'sflag constant byte address 0x0 - dummy sync flag']
  #allocation21 [shape = 's32[]', space=sflag, size = 0x4, offset = 0, fixed_abs, tag = 'sflag constant byte address 0x0 - dummy sync flag']
  #allocation22 [shape = 's32[]', space=sflag, size = 0x4, offset = 0, fixed_abs, tag = 'sflag constant byte address 0x0 - dummy sync flag']
  #allocation23 [shape = 's32[]', space=sflag, size = 0x4, offset = 0, fixed_abs, tag = 'sflag constant byte address 0x0 - dummy sync flag']
  #allocation24 [shape = 's32[]', space=sflag, size = 0x4, offset = 0, fixed_abs, tag = 'sflag constant byte address 0x0 - dummy sync flag']
  #allocation25 [shape = 's32[]', space=sflag, size = 0x4, offset = 0, fixed_abs, tag = 'sflag constant byte address 0x0 - dummy sync flag']
  #allocation26 [shape = 's32[]', space=sflag, size = 0x4, offset = 0, fixed_abs, tag = 'sflag constant byte address 0x0 - dummy sync flag']
  #allocation27 [shape = 's32[]', space=sflag, size = 0x4, offset = 0, fixed_abs, tag = 'sflag constant byte address 0x0 - dummy sync flag']
  #allocation28 [shape = 's32[]', space=sflag, size = 0x4, offset = 0, fixed_abs, tag = 'sflag constant byte address 0x0 - dummy sync flag']
  #allocation29 [shape = 's32[]', space=sflag, size = 0x4, offset = 0, fixed_abs, tag = 'sflag constant byte address 0x0 - dummy sync flag']
  #allocation30 [shape = 's32[]', space=sflag, size = 0x4, offset = 0, fixed_abs, tag = 'sflag constant byte address 0x0 - dummy sync flag']
  %s0 = inlined_call_operand.hbm [shape: f32[2,16,384], index: 0, kind: input, shape index: {}]
  %s1 = inlined_call_operand.vmem [shape: f32[32,32], index: 1, kind: input, shape index: {}]
  %s2 = inlined_call_operand.hbm [shape: bf16[384,512], index: 2, kind: input, shape index: {}]
  %s3 = inlined_call_operand.vmem [shape: f32[2,1,128], index: 3, kind: input, shape index: {}]
  %s4 = inlined_call_operand.vmem [shape: f32[2,1,512], index: 4, kind: input, shape index: {}]
  %s5 = inlined_call_operand.vmem [shape: f32[2,1,512], index: 5, kind: input, shape index: {}]
  %s6 = inlined_call_operand.vmem [shape: f32[2,1,512], index: 6, kind: input, shape index: {}]
  %s7 = inlined_call_operand.vmem [shape: f32[2,1,512], index: 7, kind: input, shape index: {}]
  %s8 = inlined_call_operand.vmem [shape: f32[2,1,512], index: 8, kind: input, shape index: {}]
  %s9 = inlined_call_operand.hbm [shape: bf16[2,512,384], index: 9, kind: input, shape index: {}]
  %s10 = inlined_call_operand.hbm [shape: bf16[2,128,512], index: 10, kind: input, shape index: {}]
  %s11 = inlined_call_operand.hbm [shape: bf16[2,512,128], index: 11, kind: input, shape index: {}]
  %s12 = inlined_call_operand.hbm [shape: bf16[2,128,512], index: 12, kind: input, shape index: {}]
  %s13 = inlined_call_operand.hbm [shape: f32[2,16,512], index: 13, kind: output, shape index: {}]
  %s14 = sld [smem:[#allocation0]]
  $region86: #{encoder_forward.1} parent=0
    _
  %s16 = ssub.s32 1, %s14
  %s17 = scalar_select 0, %s16, %s14
  $region1: #{encoder_forward.1} parent=0
    #allocation7 [shape = 'u8[49152]{0}', space=vmem, size = 0xc000, scoped, tag = 'input window, operand 0, single buffered']
    #allocation8 [shape = 's32[1]{0}', space=sflag, size = 0x4, scoped, tag = 'scoped memory for encoder_forward.1']
    #allocation9 [shape = 's32[1]{0}', space=sflag, size = 0x4, scoped, tag = 'scoped memory for encoder_forward.1']
    #allocation10 [shape = 'u8[393216]{0}', space=vmem, size = 0x60000, scoped, tag = 'input window, operand 2, single buffered']
    #allocation11 [shape = 's32[1]{0}', space=sflag, size = 0x4, scoped, tag = 'scoped memory for encoder_forward.1']
    #allocation12 [shape = 'u8[65536]{0}', space=vmem, size = 0x10000, scoped, tag = 'output window, operand 0, single buffered']
    %18 = vsyncpa [#allocation8], 0
    %19 = vsyncpa [#allocation11], 0
    %20 = vsyncpa [#allocation9], 0
    // Predicated region
    $region2: #{encoder_forward.1} parent=1 // pred_check
      _
    $region3: #{encoder_forward.1} parent=1 // pred_check_branch
      %22 = sbr.rel (0) target = $region5
    $region4: #{encoder_forward.1} parent=1 // pred_region
      %s24 = ssub.s32 1536, 1536
      %25 = vsyncadd [#allocation8], %s24
      %s26 = sshll.u32 [#allocation7], 4
      %s27 = int_to_ptr.vmem [resolvable:$true] %s26
      %32 = dma.hbm_to_vmem [thread:$0]  %s0, 1536, %s27, [#allocation8], 384, 384, 24
    $region5: #{encoder_forward.1} parent=1 // pred_fallthru
      _
    // Predicated region
    $region6: #{encoder_forward.1} parent=1 // pred_check
      _
    $region7: #{encoder_forward.1} parent=1 // pred_check_branch
      %34 = sbr.rel (0) target = $region9
    $region8: #{encoder_forward.1} parent=1 // pred_region
      _
    $region9: #{encoder_forward.1} parent=1 // pred_fallthru
      _
    // Predicated region
    $region10: #{encoder_forward.1} parent=1 // pred_check
      _
    $region11: #{encoder_forward.1} parent=1 // pred_check_branch
      %36 = sbr.rel (0) target = $region13
    $region12: #{encoder_forward.1} parent=1 // pred_region
      %s38 = ssub.s32 12288, 12288
      %39 = vsyncadd [#allocation11], %s38
      %s40 = sshll.u32 [#allocation10], 4
      %s41 = int_to_ptr.vmem [resolvable:$true] %s40
      %46 = dma.hbm_to_vmem [thread:$0]  %s2, 12288, %s41, [#allocation11], 256, 256, 16
    $region13: #{encoder_forward.1} parent=1 // pred_fallthru
      _
    // Predicated region
    $region14: #{encoder_forward.1} parent=1 // pred_check
      _
    $region15: #{encoder_forward.1} parent=1 // pred_check_branch
      %48 = sbr.rel (0) target = $region17
    $region16: #{encoder_forward.1} parent=1 // pred_region
      _
    $region17: #{encoder_forward.1} parent=1 // pred_fallthru
      _
    // Predicated region
    $region18: #{encoder_forward.1} parent=1 // pred_check
      _
    $region19: #{encoder_forward.1} parent=1 // pred_check_branch
      %50 = sbr.rel (0) target = $region21
    $region20: #{encoder_forward.1} parent=1 // pred_region
      _
    $region21: #{encoder_forward.1} parent=1 // pred_fallthru
      _
    // Predicated region
    $region22: #{encoder_forward.1} parent=1 // pred_check
      _
    $region23: #{encoder_forward.1} parent=1 // pred_check_branch
      %52 = sbr.rel (0) target = $region25
    $region24: #{encoder_forward.1} parent=1 // pred_region
      _
    $region25: #{encoder_forward.1} parent=1 // pred_fallthru
      _
    // Predicated region
    $region26: #{encoder_forward.1} parent=1 // pred_check
      _
    $region27: #{encoder_forward.1} parent=1 // pred_check_branch
      %54 = sbr.rel (0) target = $region29
    $region28: #{encoder_forward.1} parent=1 // pred_region
      _
    $region29: #{encoder_forward.1} parent=1 // pred_fallthru
      _
    // Predicated region
    $region30: #{encoder_forward.1} parent=1 // pred_check
      _
    $region31: #{encoder_forward.1} parent=1 // pred_check_branch
      %56 = sbr.rel (0) target = $region33
    $region32: #{encoder_forward.1} parent=1 // pred_region
      _
    $region33: #{encoder_forward.1} parent=1 // pred_fallthru
      _
    // Predicated region
    $region34: #{encoder_forward.1} parent=1 // pred_check
      _
    $region35: #{encoder_forward.1} parent=1 // pred_check_branch
      %58 = sbr.rel (0) target = $region37
    $region36: #{encoder_forward.1} parent=1 // pred_region
      _
    $region37: #{encoder_forward.1} parent=1 // pred_fallthru
      _
    // Predicated region
    $region38: #{encoder_forward.1} parent=1 // pred_check
      _
    $region39: #{encoder_forward.1} parent=1 // pred_check_branch
      %60 = sbr.rel (0) target = $region41
    $region40: #{encoder_forward.1} parent=1 // pred_region
      %61 = dma.done [#allocation8], 1536
    $region41: #{encoder_forward.1} parent=1 // pred_fallthru
      _
    // Predicated region
    $region42: #{encoder_forward.1} parent=1 // pred_check
      _
    $region43: #{encoder_forward.1} parent=1 // pred_check_branch
      %63 = sbr.rel (0) target = $region45
    $region44: #{encoder_forward.1} parent=1 // pred_region
      %64 = dma.done [#allocation11], 12288
    $region45: #{encoder_forward.1} parent=1 // pred_fallthru
      _
    // Predicated region
    $region46: #{encoder_forward.1} parent=1 // pred_check
      _
    $region47: #{encoder_forward.1} parent=1 // pred_check_branch
      %67 = sbr.rel target = $region49
    $region48: #{encoder_forward.1} parent=1 // pred_region
      %68 = sst [smem:[#allocation15]] [#allocation14]
      %69 = sst [smem:[#allocation16]] [#allocation13]
    $region49: #{encoder_forward.1} parent=1 // pred_fallthru
      _
    %71 = shalt.err (0)
    %s73 = sshll.u32 [#allocation2], 4
    %s74 = int_to_ptr.vmem [resolvable:$true] %s73
    %76 = dma.hbm_to_vmem [thread:$0]  %s9, 12288, %s74, [#allocation6]
    %s77 = scalar_lea.sflag [#allocation6], 1
    // Predicated region
    $region50: #{encoder_forward.1} parent=1 // pred_check
      _
    $region51: #{encoder_forward.1} parent=1 // pred_check_branch
      %79 = sbr.rel target = $region53
    $region52: #{encoder_forward.1} parent=1 // pred_region
      %80 = sst [smem:[#allocation15]] [#allocation18]
      %81 = sst [smem:[#allocation16]] [#allocation17]
    $region53: #{encoder_forward.1} parent=1 // pred_fallthru
      _
    %83 = shalt.err (0)
    %s85 = sshll.u32 [#allocation3], 4
    %s86 = int_to_ptr.vmem [resolvable:$true] %s85
    %88 = dma.hbm_to_vmem [thread:$0]  %s10, 4096, %s86, %s77
    %s89 = scalar_lea.sflag [#allocation6], 2
    // Predicated region
    $region54: #{encoder_forward.1} parent=1 // pred_check
      _
    $region55: #{encoder_forward.1} parent=1 // pred_check_branch
      %91 = sbr.rel target = $region57
    $region56: #{encoder_forward.1} parent=1 // pred_region
      %92 = sst [smem:[#allocation15]] [#allocation20]
      %93 = sst [smem:[#allocation16]] [#allocation19]
    $region57: #{encoder_forward.1} parent=1 // pred_fallthru
      _
    %95 = shalt.err (0)
    %s97 = sshll.u32 [#allocation4], 4
    %s98 = int_to_ptr.vmem [resolvable:$true] %s97
    %100 = dma.hbm_to_vmem [thread:$0]  %s11, 4096, %s98, %s89
    %s101 = scalar_lea.sflag [#allocation6], 3
    // Predicated region
    $region58: #{encoder_forward.1} parent=1 // pred_check
      _
    $region59: #{encoder_forward.1} parent=1 // pred_check_branch
      %103 = sbr.rel target = $region61
    $region60: #{encoder_forward.1} parent=1 // pred_region
      %104 = sst [smem:[#allocation15]] [#allocation22]
      %105 = sst [smem:[#allocation16]] [#allocation21]
    $region61: #{encoder_forward.1} parent=1 // pred_fallthru
      _
    %107 = shalt.err (0)
    %s109 = sshll.u32 [#allocation5], 4
    %s110 = int_to_ptr.vmem [resolvable:$true] %s109
    %112 = dma.hbm_to_vmem [thread:$0]  %s12, 4096, %s110, %s101
    %s113 = scalar_lea.hbm %s9, 12288
    %s114 = scalar_lea.vmem [#allocation2], 768
    %s115 = scalar_lea.sflag [#allocation6], 4
    // Predicated region
    $region62: #{encoder_forward.1} parent=1 // pred_check
      _
    $region63: #{encoder_forward.1} parent=1 // pred_check_branch
      %117 = sbr.rel target = $region65
    $region64: #{encoder_forward.1} parent=1 // pred_region
      %118 = sst [smem:[#allocation15]] [#allocation24]
      %119 = sst [smem:[#allocation16]] [#allocation23]
    $region65: #{encoder_forward.1} parent=1 // pred_fallthru
      _
    %121 = shalt.err (0)
    %s123 = sshll.u32 %s114, 4
    %s124 = int_to_ptr.vmem [resolvable:$true] %s123
    %126 = dma.hbm_to_vmem [thread:$0]  %s113, 12288, %s124, %s115
    %s127 = scalar_lea.hbm %s10, 4096
    %s128 = scalar_lea.vmem [#allocation3], 256
    %s129 = scalar_lea.sflag [#allocation6], 5
    // Predicated region
    $region66: #{encoder_forward.1} parent=1 // pred_check
      _
    $region67: #{encoder_forward.1} parent=1 // pred_check_branch
      %131 = sbr.rel target = $region69
    $region68: #{encoder_forward.1} parent=1 // pred_region
      %132 = sst [smem:[#allocation15]] [#allocation26]
      %133 = sst [smem:[#allocation16]] [#allocation25]
    $region69: #{encoder_forward.1} parent=1 // pred_fallthru
      _
    %135 = shalt.err (0)
    %s137 = sshll.u32 %s128, 4
    %s138 = int_to_ptr.vmem [resolvable:$true] %s137
    %140 = dma.hbm_to_vmem [thread:$0]  %s127, 4096, %s138, %s129
    %s141 = scalar_lea.hbm %s11, 4096
    %s142 = scalar_lea.vmem [#allocation4], 256
    %s143 = scalar_lea.sflag [#allocation6], 6
    // Predicated region
    $region70: #{encoder_forward.1} parent=1 // pred_check
      _
    $region71: #{encoder_forward.1} parent=1 // pred_check_branch
      %145 = sbr.rel target = $region73
    $region72: #{encoder_forward.1} parent=1 // pred_region
      %146 = sst [smem:[#allocation15]] [#allocation28]
      %147 = sst [smem:[#allocation16]] [#allocation27]
    $region73: #{encoder_forward.1} parent=1 // pred_fallthru
      _
    %149 = shalt.err (0)
    %s151 = sshll.u32 %s142, 4
    %s152 = int_to_ptr.vmem [resolvable:$true] %s151
    %154 = dma.hbm_to_vmem [thread:$0]  %s141, 4096, %s152, %s143
    %s155 = scalar_lea.hbm %s12, 4096
    %s156 = scalar_lea.vmem [#allocation5], 256
    %s157 = scalar_lea.sflag [#allocation6], 7
    // Predicated region
    $region74: #{encoder_forward.1} parent=1 // pred_check
      _
    $region75: #{encoder_forward.1} parent=1 // pred_check_branch
      %159 = sbr.rel target = $region77
    $region76: #{encoder_forward.1} parent=1 // pred_region
      %160 = sst [smem:[#allocation15]] [#allocation30]
      %161 = sst [smem:[#allocation16]] [#allocation29]
    $region77: #{encoder_forward.1} parent=1 // pred_fallthru
      _
    %163 = shalt.err (0)
    %s165 = sshll.u32 %s156, 4
    %s166 = int_to_ptr.vmem [resolvable:$true] %s165
    %168 = dma.hbm_to_vmem [thread:$0]  %s155, 4096, %s166, %s157
    %v169 = vld [vmem:[%s1] sm:$0xff]
    %v170 = vld [vmem:[%s1 + $0x8] sm:$0xff]
    %v171 = vld [vmem:[%s1 + $0x10] sm:$0xff]
    %v172 = vld [vmem:[%s1 + $0x18] sm:$0xff]
    %v173 = vld [vmem:[#allocation7] sm:$0xff]
    %v174 = vld [vmem:[#allocation7 + $0x8] sm:$0xff]
    %v175 = vld [vmem:[#allocation7 + $0x10] sm:$0xff]
    %v176 = vld [vmem:[#allocation7 + $0x18] sm:$0xff]
    %v177 = vld [vmem:[#allocation7 + $0x20] sm:$0xff]
    %v178 = vld [vmem:[#allocation7 + $0x28] sm:$0xff]
    %v179 = vld [vmem:[#allocation7 + $0x30] sm:$0xff]
    %v180 = vld [vmem:[#allocation7 + $0x38] sm:$0xff]
    %v181 = vld [vmem:[#allocation7 + $0x40] sm:$0xff]
    %v182 = vld [vmem:[#allocation7 + $0x48] sm:$0xff]
    %v183 = vld [vmem:[#allocation7 + $0x50] sm:$0xff]
    %v184 = vld [vmem:[#allocation7 + $0x58] sm:$0xff]
    %v185 = vpack.c.bf16 %v176, %v173
    %v186 = vpack.c.bf16 %v177, %v174
    %v187 = vpack.c.bf16 %v178, %v175
    %v188 = vpack.c.bf16 %v182, %v179
    %v189 = vpack.c.bf16 %v183, %v180
    %v190 = vpack.c.bf16 %v184, %v181
    %v191 = vld [vmem:[#allocation10] sm:$0xff]
    %v192 = vld [vmem:[#allocation10 + $0x8] sm:$0xff]
    %v193 = vld [vmem:[#allocation10 + $0x10] sm:$0xff]
    %v194 = vld [vmem:[#allocation10 + $0x18] sm:$0xff]
    %v195 = vld [vmem:[#allocation10 + $0x20] sm:$0xff]
    %v196 = vld [vmem:[#allocation10 + $0x28] sm:$0xff]
    %v197 = vld [vmem:[#allocation10 + $0x30] sm:$0xff]
    %v198 = vld [vmem:[#allocation10 + $0x38] sm:$0xff]
    %v199 = vld [vmem:[#allocation10 + $0x40] sm:$0xff]
    %v200 = vld [vmem:[#allocation10 + $0x48] sm:$0xff]
    %v201 = vld [vmem:[#allocation10 + $0x50] sm:$0xff]
    %v202 = vld [vmem:[#allocation10 + $0x58] sm:$0xff]
    %v203 = vld [vmem:[#allocation10 + $0x60] sm:$0xff]
    %v204 = vld [vmem:[#allocation10 + $0x68] sm:$0xff]
    %v205 = vld [vmem:[#allocation10 + $0x70] sm:$0xff]
    %v206 = vld [vmem:[#allocation10 + $0x78] sm:$0xff]
    %v207 = vld [vmem:[#allocation10 + $0x80] sm:$0xff]
    %v208 = vld [vmem:[#allocation10 + $0x88] sm:$0xff]
    %v209 = vld [vmem:[#allocation10 + $0x90] sm:$0xff]
    %v210 = vld [vmem:[#allocation10 + $0x98] sm:$0xff]
    %v211 = vld [vmem:[#allocation10 + $0xa0] sm:$0xff]
    %v212 = vld [vmem:[#allocation10 + $0xa8] sm:$0xff]
    %v213 = vld [vmem:[#allocation10 + $0xb0] sm:$0xff]
    %v214 = vld [vmem:[#allocation10 + $0xb8] sm:$0xff]
    %v215 = vld [vmem:[#allocation10 + $0xc0] sm:$0xff]
    %v216 = vld [vmem:[#allocation10 + $0xc8] sm:$0xff]
    %v217 = vld [vmem:[#allocation10 + $0xd0] sm:$0xff]
    %v218 = vld [vmem:[#allocation10 + $0xd8] sm:$0xff]
    %v219 = vld [vmem:[#allocation10 + $0xe0] sm:$0xff]
    %v220 = vld [vmem:[#allocation10 + $0xe8] sm:$0xff]
    %v221 = vld [vmem:[#allocation10 + $0xf0] sm:$0xff]
    %v222 = vld [vmem:[#allocation10 + $0xf8] sm:$0xff]
    %v223 = vld [vmem:[#allocation10 + $0x100] sm:$0xff]
    %v224 = vld [vmem:[#allocation10 + $0x108] sm:$0xff]
    %v225 = vld [vmem:[#allocation10 + $0x110] sm:$0xff]
    %v226 = vld [vmem:[#allocation10 + $0x118] sm:$0xff]
    %v227 = vld [vmem:[#allocation10 + $0x120] sm:$0xff]
    %v228 = vld [vmem:[#allocation10 + $0x128] sm:$0xff]
    %v229 = vld [vmem:[#allocation10 + $0x130] sm:$0xff]
    %v230 = vld [vmem:[#allocation10 + $0x138] sm:$0xff]
    %v231 = vld [vmem:[#allocation10 + $0x140] sm:$0xff]
    %v232 = vld [vmem:[#allocation10 + $0x148] sm:$0xff]
    %v233 = vld [vmem:[#allocation10 + $0x150] sm:$0xff]
    %v234 = vld [vmem:[#allocation10 + $0x158] sm:$0xff]
    %v235 = vld [vmem:[#allocation10 + $0x160] sm:$0xff]
    %v236 = vld [vmem:[#allocation10 + $0x168] sm:$0xff]
    %v237 = vld [vmem:[#allocation10 + $0x170] sm:$0xff]
    %v238 = vld [vmem:[#allocation10 + $0x178] sm:$0xff]
    %v239 = vld [vmem:[#allocation10 + $0x180] sm:$0xff]
    %v240 = vld [vmem:[#allocation10 + $0x188] sm:$0xff]
    %v241 = vld [vmem:[#allocation10 + $0x190] sm:$0xff]
    %v242 = vld [vmem:[#allocation10 + $0x198] sm:$0xff]
    %v243 = vld [vmem:[#allocation10 + $0x1a0] sm:$0xff]
    %v244 = vld [vmem:[#allocation10 + $0x1a8] sm:$0xff]
    %v245 = vld [vmem:[#allocation10 + $0x1b0] sm:$0xff]
    %v246 = vld [vmem:[#allocation10 + $0x1b8] sm:$0xff]
    %v247 = vld [vmem:[#allocation10 + $0x1c0] sm:$0xff]
    %v248 = vld [vmem:[#allocation10 + $0x1c8] sm:$0xff]
    %v249 = vld [vmem:[#allocation10 + $0x1d0] sm:$0xff]
    %v250 = vld [vmem:[#allocation10 + $0x1d8] sm:$0xff]
    %v251 = vld [vmem:[#allocation10 + $0x1e0] sm:$0xff]
    %v252 = vld [vmem:[#allocation10 + $0x1e8] sm:$0xff]
    %v253 = vld [vmem:[#allocation10 + $0x1f0] sm:$0xff]
    %v254 = vld [vmem:[#allocation10 + $0x1f8] sm:$0xff]
    %v255 = vld [vmem:[#allocation10 + $0x200] sm:$0xff]
    %v256 = vld [vmem:[#allocation10 + $0x208] sm:$0xff]
    %v257 = vld [vmem:[#allocation10 + $0x210] sm:$0xff]
    %v258 = vld [vmem:[#allocation10 + $0x218] sm:$0xff]
    %v259 = vld [vmem:[#allocation10 + $0x220] sm:$0xff]
    %v260 = vld [vmem:[#allocation10 + $0x228] sm:$0xff]
    %v261 = vld [vmem:[#allocation10 + $0x230] sm:$0xff]
    %v262 = vld [vmem:[#allocation10 + $0x238] sm:$0xff]
    %v263 = vld [vmem:[#allocation10 + $0x240] sm:$0xff]
    %v264 = vld [vmem:[#allocation10 + $0x248] sm:$0xff]
    %v265 = vld [vmem:[#allocation10 + $0x250] sm:$0xff]
    %v266 = vld [vmem:[#allocation10 + $0x258] sm:$0xff]
    %v267 = vld [vmem:[#allocation10 + $0x260] sm:$0xff]
    %v268 = vld [vmem:[#allocation10 + $0x268] sm:$0xff]
    %v269 = vld [vmem:[#allocation10 + $0x270] sm:$0xff]
    %v270 = vld [vmem:[#allocation10 + $0x278] sm:$0xff]
    %v271 = vld [vmem:[#allocation10 + $0x280] sm:$0xff]
    %v272 = vld [vmem:[#allocation10 + $0x288] sm:$0xff]
    %v273 = vld [vmem:[#allocation10 + $0x290] sm:$0xff]
    %v274 = vld [vmem:[#allocation10 + $0x298] sm:$0xff]
    %v275 = vld [vmem:[#allocation10 + $0x2a0] sm:$0xff]
    %v276 = vld [vmem:[#allocation10 + $0x2a8] sm:$0xff]
    %v277 = vld [vmem:[#allocation10 + $0x2b0] sm:$0xff]
    %v278 = vld [vmem:[#allocation10 + $0x2b8] sm:$0xff]
    %v279 = vld [vmem:[#allocation10 + $0x2c0] sm:$0xff]
    %v280 = vld [vmem:[#allocation10 + $0x2c8] sm:$0xff]
    %v281 = vld [vmem:[#allocation10 + $0x2d0] sm:$0xff]
    %v282 = vld [vmem:[#allocation10 + $0x2d8] sm:$0xff]
    %v283 = vld [vmem:[#allocation10 + $0x2e0] sm:$0xff]
    %v284 = vld [vmem:[#allocation10 + $0x2e8] sm:$0xff]
    %v285 = vld [vmem:[#allocation10 + $0x2f0] sm:$0xff]
    %v286 = vld [vmem:[#allocation10 + $0x2f8] sm:$0xff]
    %v383 = vunpack.c.l.b16 %v191
    %v384 = vunpack.c.h.b16 %v191
    %v385 = vunpack.c.l.b16 %v192
    %v386 = vunpack.c.h.b16 %v192
    %v387 = vunpack.c.l.b16 %v193
    %v388 = vunpack.c.h.b16 %v193
    %v389 = vunpack.c.l.b16 %v194
    %v390 = vunpack.c.h.b16 %v194
    %v391 = vunpack.c.l.b16 %v195
    %v392 = vunpack.c.h.b16 %v195
    %v393 = vunpack.c.l.b16 %v196
    %v394 = vunpack.c.h.b16 %v196
    %v395 = vunpack.c.l.b16 %v197
    %v396 = vunpack.c.h.b16 %v197
    %v397 = vunpack.c.l.b16 %v198
    %v398 = vunpack.c.h.b16 %v198
    %v399 = vunpack.c.l.b16 %v199
    %v400 = vunpack.c.h.b16 %v199
    %v401 = vunpack.c.l.b16 %v200
    %v402 = vunpack.c.h.b16 %v200
    %v403 = vunpack.c.l.b16 %v201
    %v404 = vunpack.c.h.b16 %v201
    %v405 = vunpack.c.l.b16 %v202
    %v406 = vunpack.c.h.b16 %v202
    %v407 = vunpack.c.l.b16 %v203
    %v408 = vunpack.c.h.b16 %v203
    %v409 = vunpack.c.l.b16 %v204
    %v410 = vunpack.c.h.b16 %v204
    %v411 = vunpack.c.l.b16 %v205
    %v412 = vunpack.c.h.b16 %v205
    %v413 = vunpack.c.l.b16 %v206
    %v414 = vunpack.c.h.b16 %v206
    %v415 = vunpack.c.l.b16 %v207
    %v416 = vunpack.c.h.b16 %v207
    %v417 = vunpack.c.l.b16 %v208
    %v418 = vunpack.c.h.b16 %v208
    %v419 = vunpack.c.l.b16 %v209
    %v420 = vunpack.c.h.b16 %v209
    %v421 = vunpack.c.l.b16 %v210
    %v422 = vunpack.c.h.b16 %v210
    %v423 = vunpack.c.l.b16 %v211
    %v424 = vunpack.c.h.b16 %v211
    %v425 = vunpack.c.l.b16 %v212
    %v426 = vunpack.c.h.b16 %v212
    %v427 = vunpack.c.l.b16 %v213
    %v428 = vunpack.c.h.b16 %v213
    %v429 = vunpack.c.l.b16 %v214
    %v430 = vunpack.c.h.b16 %v214
    %v431 = vunpack.c.l.b16 %v215
    %v432 = vunpack.c.h.b16 %v215
    %v433 = vunpack.c.l.b16 %v216
    %v434 = vunpack.c.h.b16 %v216
    %v435 = vunpack.c.l.b16 %v217
    %v436 = vunpack.c.h.b16 %v217
    %v437 = vunpack.c.l.b16 %v218
    %v438 = vunpack.c.h.b16 %v218
    %v439 = vunpack.c.l.b16 %v219
    %v440 = vunpack.c.h.b16 %v219
    %v441 = vunpack.c.l.b16 %v220
    %v442 = vunpack.c.h.b16 %v220
    %v443 = vunpack.c.l.b16 %v221
    %v444 = vunpack.c.h.b16 %v221
    %v445 = vunpack.c.l.b16 %v222
    %v446 = vunpack.c.h.b16 %v222
    %v447 = vunpack.c.l.b16 %v223
    %v448 = vunpack.c.h.b16 %v223
    %v449 = vunpack.c.l.b16 %v224
    %v450 = vunpack.c.h.b16 %v224
    %v451 = vunpack.c.l.b16 %v225
    %v452 = vunpack.c.h.b16 %v225
    %v453 = vunpack.c.l.b16 %v226
    %v454 = vunpack.c.h.b16 %v226
    %v455 = vunpack.c.l.b16 %v227
    %v456 = vunpack.c.h.b16 %v227
    %v457 = vunpack.c.l.b16 %v228
    %v458 = vunpack.c.h.b16 %v228
    %v459 = vunpack.c.l.b16 %v229
    %v460 = vunpack.c.h.b16 %v229
    %v461 = vunpack.c.l.b16 %v230
    %v462 = vunpack.c.h.b16 %v230
    %v463 = vunpack.c.l.b16 %v231
    %v464 = vunpack.c.h.b16 %v231
    %v465 = vunpack.c.l.b16 %v232
    %v466 = vunpack.c.h.b16 %v232
    %v467 = vunpack.c.l.b16 %v233
    %v468 = vunpack.c.h.b16 %v233
    %v469 = vunpack.c.l.b16 %v234
    %v470 = vunpack.c.h.b16 %v234
    %v471 = vunpack.c.l.b16 %v235
    %v472 = vunpack.c.h.b16 %v235
    %v473 = vunpack.c.l.b16 %v236
    %v474 = vunpack.c.h.b16 %v236
    %v475 = vunpack.c.l.b16 %v237
    %v476 = vunpack.c.h.b16 %v237
    %v477 = vunpack.c.l.b16 %v238
    %v478 = vunpack.c.h.b16 %v238
    %v479 = vunpack.c.l.b16 %v239
    %v480 = vunpack.c.h.b16 %v239
    %v481 = vunpack.c.l.b16 %v240
    %v482 = vunpack.c.h.b16 %v240
    %v483 = vunpack.c.l.b16 %v241
    %v484 = vunpack.c.h.b16 %v241
    %v485 = vunpack.c.l.b16 %v242
    %v486 = vunpack.c.h.b16 %v242
    %v487 = vunpack.c.l.b16 %v243
    %v488 = vunpack.c.h.b16 %v243
    %v489 = vunpack.c.l.b16 %v244
    %v490 = vunpack.c.h.b16 %v244
    %v491 = vunpack.c.l.b16 %v245
    %v492 = vunpack.c.h.b16 %v245
    %v493 = vunpack.c.l.b16 %v246
    %v494 = vunpack.c.h.b16 %v246
    %v495 = vunpack.c.l.b16 %v247
    %v496 = vunpack.c.h.b16 %v247
    %v497 = vunpack.c.l.b16 %v248
    %v498 = vunpack.c.h.b16 %v248
    %v499 = vunpack.c.l.b16 %v249
    %v500 = vunpack.c.h.b16 %v249
    %v501 = vunpack.c.l.b16 %v250
    %v502 = vunpack.c.h.b16 %v250
    %v503 = vunpack.c.l.b16 %v251
    %v504 = vunpack.c.h.b16 %v251
    %v505 = vunpack.c.l.b16 %v252
    %v506 = vunpack.c.h.b16 %v252
    %v507 = vunpack.c.l.b16 %v253
    %v508 = vunpack.c.h.b16 %v253
    %v509 = vunpack.c.l.b16 %v254
    %v510 = vunpack.c.h.b16 %v254
    %v511 = vunpack.c.l.b16 %v255
    %v512 = vunpack.c.h.b16 %v255
    %v513 = vunpack.c.l.b16 %v256
    %v514 = vunpack.c.h.b16 %v256
    %v515 = vunpack.c.l.b16 %v257
    %v516 = vunpack.c.h.b16 %v257
    %v517 = vunpack.c.l.b16 %v258
    %v518 = vunpack.c.h.b16 %v258
    %v519 = vunpack.c.l.b16 %v259
    %v520 = vunpack.c.h.b16 %v259
    %v521 = vunpack.c.l.b16 %v260
    %v522 = vunpack.c.h.b16 %v260
    %v523 = vunpack.c.l.b16 %v261
    %v524 = vunpack.c.h.b16 %v261
    %v525 = vunpack.c.l.b16 %v262
    %v526 = vunpack.c.h.b16 %v262
    %v527 = vunpack.c.l.b16 %v263
    %v528 = vunpack.c.h.b16 %v263
    %v529 = vunpack.c.l.b16 %v264
    %v530 = vunpack.c.h.b16 %v264
    %v531 = vunpack.c.l.b16 %v265
    %v532 = vunpack.c.h.b16 %v265
    %v533 = vunpack.c.l.b16 %v266
    %v534 = vunpack.c.h.b16 %v266
    %v535 = vunpack.c.l.b16 %v267
    %v536 = vunpack.c.h.b16 %v267
    %v537 = vunpack.c.l.b16 %v268
    %v538 = vunpack.c.h.b16 %v268
    %v539 = vunpack.c.l.b16 %v269
    %v540 = vunpack.c.h.b16 %v269
    %v541 = vunpack.c.l.b16 %v270
    %v542 = vunpack.c.h.b16 %v270
    %v543 = vunpack.c.l.b16 %v271
    %v544 = vunpack.c.h.b16 %v271
    %v545 = vunpack.c.l.b16 %v272
    %v546 = vunpack.c.h.b16 %v272
    %v547 = vunpack.c.l.b16 %v273
    %v548 = vunpack.c.h.b16 %v273
    %v549 = vunpack.c.l.b16 %v274
    %v550 = vunpack.c.h.b16 %v274
    %v551 = vunpack.c.l.b16 %v275
    %v552 = vunpack.c.h.b16 %v275
    %v553 = vunpack.c.l.b16 %v276
    %v554 = vunpack.c.h.b16 %v276
    %v555 = vunpack.c.l.b16 %v277
    %v556 = vunpack.c.h.b16 %v277
    %v557 = vunpack.c.l.b16 %v278
    %v558 = vunpack.c.h.b16 %v278
    %v559 = vunpack.c.l.b16 %v279
    %v560 = vunpack.c.h.b16 %v279
    %v561 = vunpack.c.l.b16 %v280
    %v562 = vunpack.c.h.b16 %v280
    %v563 = vunpack.c.l.b16 %v281
    %v564 = vunpack.c.h.b16 %v281
    %v565 = vunpack.c.l.b16 %v282
    %v566 = vunpack.c.h.b16 %v282
    %v567 = vunpack.c.l.b16 %v283
    %v568 = vunpack.c.h.b16 %v283
    %v569 = vunpack.c.l.b16 %v284
    %v570 = vunpack.c.h.b16 %v284
    %v571 = vunpack.c.l.b16 %v285
    %v572 = vunpack.c.h.b16 %v285
    %v573 = vunpack.c.l.b16 %v286
    %v574 = vunpack.c.h.b16 %v286
    %v575 = vpack.c.b16 %v387, %v383
    %v576 = vpack.c.b16 %v388, %v384
    %v577 = vpack.c.b16 %v389, %v385
    %v578 = vpack.c.b16 %v390, %v386
    %v579 = vpack.c.b16 %v395, %v391
    %v580 = vpack.c.b16 %v396, %v392
    %v581 = vpack.c.b16 %v397, %v393
    %v582 = vpack.c.b16 %v398, %v394
    %v583 = vpack.c.b16 %v403, %v399
    %v584 = vpack.c.b16 %v404, %v400
    %v585 = vpack.c.b16 %v405, %v401
    %v586 = vpack.c.b16 %v406, %v402
    %v587 = vpack.c.b16 %v411, %v407
    %v588 = vpack.c.b16 %v412, %v408
    %v589 = vpack.c.b16 %v413, %v409
    %v590 = vpack.c.b16 %v414, %v410
    %v591 = vpack.c.b16 %v419, %v415
    %v592 = vpack.c.b16 %v420, %v416
    %v593 = vpack.c.b16 %v421, %v417
    %v594 = vpack.c.b16 %v422, %v418
    %v595 = vpack.c.b16 %v427, %v423
    %v596 = vpack.c.b16 %v428, %v424
    %v597 = vpack.c.b16 %v429, %v425
    %v598 = vpack.c.b16 %v430, %v426
    %v599 = vpack.c.b16 %v435, %v431
    %v600 = vpack.c.b16 %v436, %v432
    %v601 = vpack.c.b16 %v437, %v433
    %v602 = vpack.c.b16 %v438, %v434
    %v603 = vpack.c.b16 %v443, %v439
    %v604 = vpack.c.b16 %v444, %v440
    %v605 = vpack.c.b16 %v445, %v441
    %v606 = vpack.c.b16 %v446, %v442
    %v607 = vpack.c.b16 %v451, %v447
    %v608 = vpack.c.b16 %v452, %v448
    %v609 = vpack.c.b16 %v453, %v449
    %v610 = vpack.c.b16 %v454, %v450
    %v611 = vpack.c.b16 %v459, %v455
    %v612 = vpack.c.b16 %v460, %v456
    %v613 = vpack.c.b16 %v461, %v457
    %v614 = vpack.c.b16 %v462, %v458
    %v615 = vpack.c.b16 %v467, %v463
    %v616 = vpack.c.b16 %v468, %v464
    %v617 = vpack.c.b16 %v469, %v465
    %v618 = vpack.c.b16 %v470, %v466
    %v619 = vpack.c.b16 %v475, %v471
    %v620 = vpack.c.b16 %v476, %v472
    %v621 = vpack.c.b16 %v477, %v473
    %v622 = vpack.c.b16 %v478, %v474
    %v623 = vpack.c.b16 %v483, %v479
    %v624 = vpack.c.b16 %v484, %v480
    %v625 = vpack.c.b16 %v485, %v481
    %v626 = vpack.c.b16 %v486, %v482
    %v627 = vpack.c.b16 %v491, %v487
    %v628 = vpack.c.b16 %v492, %v488
    %v629 = vpack.c.b16 %v493, %v489
    %v630 = vpack.c.b16 %v494, %v490
    %v631 = vpack.c.b16 %v499, %v495
    %v632 = vpack.c.b16 %v500, %v496
    %v633 = vpack.c.b16 %v501, %v497
    %v634 = vpack.c.b16 %v502, %v498
    %v635 = vpack.c.b16 %v507, %v503
    %v636 = vpack.c.b16 %v508, %v504
    %v637 = vpack.c.b16 %v509, %v505
    %v638 = vpack.c.b16 %v510, %v506
    %v639 = vpack.c.b16 %v515, %v511
    %v640 = vpack.c.b16 %v516, %v512
    %v641 = vpack.c.b16 %v517, %v513
    %v642 = vpack.c.b16 %v518, %v514
    %v643 = vpack.c.b16 %v523, %v519
    %v644 = vpack.c.b16 %v524, %v520
    %v645 = vpack.c.b16 %v525, %v521
    %v646 = vpack.c.b16 %v526, %v522
    %v647 = vpack.c.b16 %v531, %v527
    %v648 = vpack.c.b16 %v532, %v528
    %v649 = vpack.c.b16 %v533, %v529
    %v650 = vpack.c.b16 %v534, %v530
    %v651 = vpack.c.b16 %v539, %v535
    %v652 = vpack.c.b16 %v540, %v536
    %v653 = vpack.c.b16 %v541, %v537
    %v654 = vpack.c.b16 %v542, %v538
    %v655 = vpack.c.b16 %v547, %v543
    %v656 = vpack.c.b16 %v548, %v544
    %v657 = vpack.c.b16 %v549, %v545
    %v658 = vpack.c.b16 %v550, %v546
    %v659 = vpack.c.b16 %v555, %v551
    %v660 = vpack.c.b16 %v556, %v552
    %v661 = vpack.c.b16 %v557, %v553
    %v662 = vpack.c.b16 %v558, %v554
    %v663 = vpack.c.b16 %v563, %v559
    %v664 = vpack.c.b16 %v564, %v560
    %v665 = vpack.c.b16 %v565, %v561
    %v666 = vpack.c.b16 %v566, %v562
    %v667 = vpack.c.b16 %v571, %v567
    %v668 = vpack.c.b16 %v572, %v568
    %v669 = vpack.c.b16 %v573, %v569
    %v670 = vpack.c.b16 %v574, %v570
    %767 = vmatprep.subr.bf16.mxu0 %v604
    %768 = vmatpush1.bf16.msra.mxu0 %v603
    %769 = vmatprep.subr.bf16.mxu0 %v600
    %770 = vmatpush1.bf16.msra.mxu0 %v599
    %771 = vmatprep.subr.bf16.mxu0 %v596
    %772 = vmatpush1.bf16.msra.mxu0 %v595
    %773 = vmatprep.subr.bf16.mxu0 %v592
    %774 = vmatpush1.bf16.msra.mxu0 %v591
    %775 = vmatprep.subr.bf16.mxu0 %v588
    %776 = vmatpush1.bf16.msra.mxu0 %v587
    %777 = vmatprep.subr.bf16.mxu0 %v584
    %778 = vmatpush1.bf16.msra.mxu0 %v583
    %779 = vmatprep.subr.bf16.mxu0 %v580
    %780 = vmatpush1.bf16.msra.mxu0 %v579
    %781 = vmatprep.subr.bf16.mxu0 %v576
    %782 = vmatpush1.bf16.msra.mxu0 %v575
    %783 = vmatprep.subr.bf16.mxu0 %v636
    %784 = vmatpush2.bf16.msra.mxu0 %v635
    %785 = vmatprep.subr.bf16.mxu0 %v632
    %786 = vmatpush2.bf16.msra.mxu0 %v631
    %787 = vmatprep.subr.bf16.mxu0 %v628
    %788 = vmatpush2.bf16.msra.mxu0 %v627
    %789 = vmatprep.subr.bf16.mxu0 %v624
    %790 = vmatpush2.bf16.msra.mxu0 %v623
    %791 = vmatprep.subr.bf16.mxu0 %v620
    %792 = vmatpush2.bf16.msra.mxu0 %v619
    %793 = vmatprep.subr.bf16.mxu0 %v616
    %794 = vmatpush2.bf16.msra.mxu0 %v615
    %795 = vmatprep.subr.bf16.mxu0 %v612
    %796 = vmatpush2.bf16.msra.mxu0 %v611
    %797 = vmatprep.subr.bf16.mxu0 %v608
    %798 = vmatpush2.bf16.msra.mxu0 %v607
    %799 = vmatprep.mubr.bf16.mxu0 %v186
    %800 = vmatmul.mubr.bf16.gmra.mxu0 %v185
    %v801 = vpop.f32.mrf.mxu0
    %v802 = vadd.f32 0.0, %v801
    %v803 = vpop.f32.mrf.mxu0
    %v804 = vadd.f32 0.0, %v803
    %v805 = vpop.f32.mrf.mxu0
    %v806 = vadd.f32 0.0, %v805
    %v807 = vpop.f32.mrf.mxu0
    %v808 = vadd.f32 0.0, %v807
    %809 = vmatprep.mubr.bf16.mxu0 %v189
    %810 = vmatmul.mubr.bf16.gmra.mxu0 %v188
    %v811 = vpop.f32.mrf.mxu0
    %v812 = vadd.f32 0.0, %v811
    %v813 = vpop.f32.mrf.mxu0
    %v814 = vadd.f32 0.0, %v813
    %v815 = vpop.f32.mrf.mxu0
    %v816 = vadd.f32 0.0, %v815
    %v817 = vpop.f32.mrf.mxu0
    %v818 = vadd.f32 0.0, %v817
    %819 = vdwg.mxu0
    %820 = vmatprep.subr.bf16.mxu0 %v668
    %821 = vmatpush1.bf16.msra.mxu0 %v667
    %822 = vmatprep.subr.bf16.mxu0 %v664
    %823 = vmatpush1.bf16.msra.mxu0 %v663
    %824 = vmatprep.subr.bf16.mxu0 %v660
    %825 = vmatpush1.bf16.msra.mxu0 %v659
    %826 = vmatprep.subr.bf16.mxu0 %v656
    %827 = vmatpush1.bf16.msra.mxu0 %v655
    %828 = vmatprep.subr.bf16.mxu0 %v652
    %829 = vmatpush1.bf16.msra.mxu0 %v651
    %830 = vmatprep.subr.bf16.mxu0 %v648
    %831 = vmatpush1.bf16.msra.mxu0 %v647
    %832 = vmatprep.subr.bf16.mxu0 %v644
    %833 = vmatpush1.bf16.msra.mxu0 %v643
    %834 = vmatprep.subr.bf16.mxu0 %v640
    %835 = vmatpush1.bf16.msra.mxu0 %v639
    %836 = vmatprep.subr.bf16.mxu0 0
    %837 = vmatpush2.bf16.msra.mxu0 0
    %838 = vmatprep.subr.bf16.mxu0 0
    %839 = vmatpush2.bf16.msra.mxu0 0
    %840 = vmatprep.subr.bf16.mxu0 0
    %841 = vmatpush2.bf16.msra.mxu0 0
    %842 = vmatprep.subr.bf16.mxu0 0
    %843 = vmatpush2.bf16.msra.mxu0 0
    %844 = vmatprep.subr.bf16.mxu0 0
    %845 = vmatpush2.bf16.msra.mxu0 0
    %846 = vmatprep.subr.bf16.mxu0 0
    %847 = vmatpush2.bf16.msra.mxu0 0
    %848 = vmatprep.subr.bf16.mxu0 0
    %849 = vmatpush2.bf16.msra.mxu0 0
    %850 = vmatprep.subr.bf16.mxu0 0
    %851 = vmatpush2.bf16.msra.mxu0 0
    %852 = vmatprep.mubr.bf16.mxu0 0
    %853 = vmatmul.mubr.bf16.gmra.mxu0 %v187
    %v854 = vpop.f32.mrf.mxu0
    %v855 = vadd.f32 %v802, %v854
    %v856 = vpop.f32.mrf.mxu0
    %v857 = vadd.f32 %v804, %v856
    %v858 = vpop.f32.mrf.mxu0
    %v859 = vadd.f32 %v806, %v858
    %v860 = vpop.f32.mrf.mxu0
    %v861 = vadd.f32 %v808, %v860
    %862 = vmatprep.mubr.bf16.mxu0 0
    %863 = vmatmul.mubr.bf16.gmra.mxu0 %v190
    %v864 = vpop.f32.mrf.mxu0
    %v865 = vadd.f32 %v812, %v864
    %v866 = vpop.f32.mrf.mxu0
    %v867 = vadd.f32 %v814, %v866
    %v868 = vpop.f32.mrf.mxu0
    %v869 = vadd.f32 %v816, %v868
    %v870 = vpop.f32.mrf.mxu0
    %v871 = vadd.f32 %v818, %v870
    %872 = vdwg.mxu0
    %873 = vmatprep.subr.bf16.mxu0 %v606
    %874 = vmatpush1.bf16.msra.mxu0 %v605
    %875 = vmatprep.subr.bf16.mxu0 %v602
    %876 = vmatpush1.bf16.msra.mxu0 %v601
    %877 = vmatprep.subr.bf16.mxu0 %v598
    %878 = vmatpush1.bf16.msra.mxu0 %v597
    %879 = vmatprep.subr.bf16.mxu0 %v594
    %880 = vmatpush1.bf16.msra.mxu0 %v593
    %881 = vmatprep.subr.bf16.mxu0 %v590
    %882 = vmatpush1.bf16.msra.mxu0 %v589
    %883 = vmatprep.subr.bf16.mxu0 %v586
    %884 = vmatpush1.bf16.msra.mxu0 %v585
    %885 = vmatprep.subr.bf16.mxu0 %v582
    %886 = vmatpush1.bf16.msra.mxu0 %v581
    %887 = vmatprep.subr.bf16.mxu0 %v578
    %888 = vmatpush1.bf16.msra.mxu0 %v577
    %889 = vmatprep.subr.bf16.mxu0 %v638
    %890 = vmatpush2.bf16.msra.mxu0 %v637
    %891 = vmatprep.subr.bf16.mxu0 %v634
    %892 = vmatpush2.bf16.msra.mxu0 %v633
    %893 = vmatprep.subr.bf16.mxu0 %v630
    %894 = vmatpush2.bf16.msra.mxu0 %v629
    %895 = vmatprep.subr.bf16.mxu0 %v626
    %896 = vmatpush2.bf16.msra.mxu0 %v625
    %897 = vmatprep.subr.bf16.mxu0 %v622
    %898 = vmatpush2.bf16.msra.mxu0 %v621
    %899 = vmatprep.subr.bf16.mxu0 %v618
    %900 = vmatpush2.bf16.msra.mxu0 %v617
    %901 = vmatprep.subr.bf16.mxu0 %v614
    %902 = vmatpush2.bf16.msra.mxu0 %v613
    %903 = vmatprep.subr.bf16.mxu0 %v610
    %904 = vmatpush2.bf16.msra.mxu0 %v609
    %905 = vmatprep.mubr.bf16.mxu0 %v186
    %906 = vmatmul.mubr.bf16.gmra.mxu0 %v185
    %v907 = vpop.f32.mrf.mxu0
    %v908 = vadd.f32 0.0, %v907
    %v909 = vpop.f32.mrf.mxu0
    %v910 = vadd.f32 0.0, %v909
    %v911 = vpop.f32.mrf.mxu0
    %v912 = vadd.f32 0.0, %v911
    %v913 = vpop.f32.mrf.mxu0
    %v914 = vadd.f32 0.0, %v913
    %915 = vmatprep.mubr.bf16.mxu0 %v189
    %916 = vmatmul.mubr.bf16.gmra.mxu0 %v188
    %v917 = vpop.f32.mrf.mxu0
    %v918 = vadd.f32 0.0, %v917
    %v919 = vpop.f32.mrf.mxu0
    %v920 = vadd.f32 0.0, %v919
    %v921 = vpop.f32.mrf.mxu0
    %v922 = vadd.f32 0.0, %v921
    %v923 = vpop.f32.mrf.mxu0
    %v924 = vadd.f32 0.0, %v923
    %925 = vdwg.mxu0
    %926 = vmatprep.subr.bf16.mxu0 %v670
    %927 = vmatpush1.bf16.msra.mxu0 %v669
    %928 = vmatprep.subr.bf16.mxu0 %v666
    %929 = vmatpush1.bf16.msra.mxu0 %v665
    %930 = vmatprep.subr.bf16.mxu0 %v662
    %931 = vmatpush1.bf16.msra.mxu0 %v661
    %932 = vmatprep.subr.bf16.mxu0 %v658
    %933 = vmatpush1.bf16.msra.mxu0 %v657
    %934 = vmatprep.subr.bf16.mxu0 %v654
    %935 = vmatpush1.bf16.msra.mxu0 %v653
    %936 = vmatprep.subr.bf16.mxu0 %v650
    %937 = vmatpush1.bf16.msra.mxu0 %v649
    %938 = vmatprep.subr.bf16.mxu0 %v646
    %939 = vmatpush1.bf16.msra.mxu0 %v645
    %940 = vmatprep.subr.bf16.mxu0 %v642
    %941 = vmatpush1.bf16.msra.mxu0 %v641
    %942 = vmatprep.subr.bf16.mxu0 0
    %943 = vmatpush2.bf16.msra.mxu0 0
    %944 = vmatprep.subr.bf16.mxu0 0
    %945 = vmatpush2.bf16.msra.mxu0 0
    %946 = vmatprep.subr.bf16.mxu0 0
    %947 = vmatpush2.bf16.msra.mxu0 0
    %948 = vmatprep.subr.bf16.mxu0 0
    %949 = vmatpush2.bf16.msra.mxu0 0
    %950 = vmatprep.subr.bf16.mxu0 0
    %951 = vmatpush2.bf16.msra.mxu0 0
    %952 = vmatprep.subr.bf16.mxu0 0
    %953 = vmatpush2.bf16.msra.mxu0 0
    %954 = vmatprep.subr.bf16.mxu0 0
    %955 = vmatpush2.bf16.msra.mxu0 0
    %956 = vmatprep.subr.bf16.mxu0 0
    %957 = vmatpush2.bf16.msra.mxu0 0
    %958 = vmatprep.mubr.bf16.mxu0 0
    %959 = vmatmul.mubr.bf16.gmra.mxu0 %v187
    %v960 = vpop.f32.mrf.mxu0
    %v961 = vadd.f32 %v908, %v960
    %v962 = vpop.f32.mrf.mxu0
    %v963 = vadd.f32 %v910, %v962
    %v964 = vpop.f32.mrf.mxu0
    %v965 = vadd.f32 %v912, %v964
    %v966 = vpop.f32.mrf.mxu0
    %v967 = vadd.f32 %v914, %v966
    %968 = vmatprep.mubr.bf16.mxu0 0
    %969 = vmatmul.mubr.bf16.gmra.mxu0 %v190
    %v970 = vpop.f32.mrf.mxu0
    %v971 = vadd.f32 %v918, %v970
    %v972 = vpop.f32.mrf.mxu0
    %v973 = vadd.f32 %v920, %v972
    %v974 = vpop.f32.mrf.mxu0
    %v975 = vadd.f32 %v922, %v974
    %v976 = vpop.f32.mrf.mxu0
    %v977 = vadd.f32 %v924, %v976
    %978 = vdwg.mxu0
    %s979 = smul.u32 4, 64
    %s980 = smul.u32 %s979, 3
    %s981 = sshll.u32 %s980, 4
    %982 = dma.done [#allocation6], %s981
    %s983 = smul.u32 4, 16
    %s984 = smul.u32 %s983, 4
    %s985 = sshll.u32 %s984, 4
    %986 = dma.done %s77, %s985
    %s987 = smul.u32 %s979, 1
    %s988 = sshll.u32 %s987, 4
    %989 = dma.done %s89, %s988
    %s990 = sshll.u32 %s984, 4
    %991 = dma.done %s101, %s990
    %v992 = vpack.c.bf16 %v859, %v855
    %v993 = vpack.c.bf16 %v861, %v857
    %v994 = vpack.c.bf16 %v965, %v961
    %v995 = vpack.c.bf16 %v967, %v963
    %v996 = vpack.c.bf16 %v869, %v865
    %v997 = vpack.c.bf16 %v871, %v867
    %v998 = vpack.c.bf16 %v975, %v971
    %v999 = vpack.c.bf16 %v977, %v973
    %v1000 = vld [vmem:[#allocation2] sm:$0xff]
    %v1001 = vld [vmem:[#allocation2 + $0x8] sm:$0xf]
    %v1002 = vld [vmem:[#allocation2 + $0xc] sm:$0xff]
    %v1003 = vld [vmem:[#allocation2 + $0x14] sm:$0xf]
    %v1004 = vld [vmem:[#allocation2 + $0x18] sm:$0xff]
    %v1005 = vld [vmem:[#allocation2 + $0x20] sm:$0xf]
    %v1006 = vld [vmem:[#allocation2 + $0x24] sm:$0xff]
    %v1007 = vld [vmem:[#allocation2 + $0x2c] sm:$0xf]
    %v1008 = vld [vmem:[#allocation2 + $0x30] sm:$0xff]
    %v1009 = vld [vmem:[#allocation2 + $0x38] sm:$0xf]
    %v1010 = vld [vmem:[#allocation2 + $0x3c] sm:$0xff]
    %v1011 = vld [vmem:[#allocation2 + $0x44] sm:$0xf]
    %v1012 = vld [vmem:[#allocation2 + $0x48] sm:$0xff]
    %v1013 = vld [vmem:[#allocation2 + $0x50] sm:$0xf]
    %v1014 = vld [vmem:[#allocation2 + $0x54] sm:$0xff]
    %v1015 = vld [vmem:[#allocation2 + $0x5c] sm:$0xf]
    %v1016 = vld [vmem:[#allocation2 + $0x60] sm:$0xff]
    %v1017 = vld [vmem:[#allocation2 + $0x68] sm:$0xf]
    %v1018 = vld [vmem:[#allocation2 + $0x6c] sm:$0xff]
    %v1019 = vld [vmem:[#allocation2 + $0x74] sm:$0xf]
    %v1020 = vld [vmem:[#allocation2 + $0x78] sm:$0xff]
    %v1021 = vld [vmem:[#allocation2 + $0x80] sm:$0xf]
    %v1022 = vld [vmem:[#allocation2 + $0x84] sm:$0xff]
    %v1023 = vld [vmem:[#allocation2 + $0x8c] sm:$0xf]
    %v1024 = vld [vmem:[#allocation2 + $0x90] sm:$0xff]
    %v1025 = vld [vmem:[#allocation2 + $0x98] sm:$0xf]
    %v1026 = vld [vmem:[#allocation2 + $0x9c] sm:$0xff]
    %v1027 = vld [vmem:[#allocation2 + $0xa4] sm:$0xf]
    %v1028 = vld [vmem:[#allocation2 + $0xa8] sm:$0xff]
    %v1029 = vld [vmem:[#allocation2 + $0xb0] sm:$0xf]
    %v1030 = vld [vmem:[#allocation2 + $0xb4] sm:$0xff]
    %v1031 = vld [vmem:[#allocation2 + $0xbc] sm:$0xf]
    %v1032 = vld [vmem:[#allocation2 + $0xc0] sm:$0xff]
    %v1033 = vld [vmem:[#allocation2 + $0xc8] sm:$0xf]
    %v1034 = vld [vmem:[#allocation2 + $0xcc] sm:$0xff]
    %v1035 = vld [vmem:[#allocation2 + $0xd4] sm:$0xf]
    %v1036 = vld [vmem:[#allocation2 + $0xd8] sm:$0xff]
    %v1037 = vld [vmem:[#allocation2 + $0xe0] sm:$0xf]
    %v1038 = vld [vmem:[#allocation2 + $0xe4] sm:$0xff]
    %v1039 = vld [vmem:[#allocation2 + $0xec] sm:$0xf]
    %v1040 = vld [vmem:[#allocation2 + $0xf0] sm:$0xff]
    %v1041 = vld [vmem:[#allocation2 + $0xf8] sm:$0xf]
    %v1042 = vld [vmem:[#allocation2 + $0xfc] sm:$0xff]
    %v1043 = vld [vmem:[#allocation2 + $0x104] sm:$0xf]
    %v1044 = vld [vmem:[#allocation2 + $0x108] sm:$0xff]
    %v1045 = vld [vmem:[#allocation2 + $0x110] sm:$0xf]
    %v1046 = vld [vmem:[#allocation2 + $0x114] sm:$0xff]
    %v1047 = vld [vmem:[#allocation2 + $0x11c] sm:$0xf]
    %v1048 = vld [vmem:[#allocation2 + $0x120] sm:$0xff]
    %v1049 = vld [vmem:[#allocation2 + $0x128] sm:$0xf]
    %v1050 = vld [vmem:[#allocation2 + $0x12c] sm:$0xff]
    %v1051 = vld [vmem:[#allocation2 + $0x134] sm:$0xf]
    %v1052 = vld [vmem:[#allocation2 + $0x138] sm:$0xff]
    %v1053 = vld [vmem:[#allocation2 + $0x140] sm:$0xf]
    %v1054 = vld [vmem:[#allocation2 + $0x144] sm:$0xff]
    %v1055 = vld [vmem:[#allocation2 + $0x14c] sm:$0xf]
    %v1056 = vld [vmem:[#allocation2 + $0x150] sm:$0xff]
    %v1057 = vld [vmem:[#allocation2 + $0x158] sm:$0xf]
    %v1058 = vld [vmem:[#allocation2 + $0x15c] sm:$0xff]
    %v1059 = vld [vmem:[#allocation2 + $0x164] sm:$0xf]
    %v1060 = vld [vmem:[#allocation2 + $0x168] sm:$0xff]
    %v1061 = vld [vmem:[#allocation2 + $0x170] sm:$0xf]
    %v1062 = vld [vmem:[#allocation2 + $0x174] sm:$0xff]
    %v1063 = vld [vmem:[#allocation2 + $0x17c] sm:$0xf]
    %v1064 = vld [vmem:[#allocation2 + $0x180] sm:$0xff]
    %v1065 = vld [vmem:[#allocation2 + $0x188] sm:$0xf]
    %v1066 = vld [vmem:[#allocation2 + $0x18c] sm:$0xff]
    %v1067 = vld [vmem:[#allocation2 + $0x194] sm:$0xf]
    %v1068 = vld [vmem:[#allocation2 + $0x198] sm:$0xff]
    %v1069 = vld [vmem:[#allocation2 + $0x1a0] sm:$0xf]
    %v1070 = vld [vmem:[#allocation2 + $0x1a4] sm:$0xff]
    %v1071 = vld [vmem:[#allocation2 + $0x1ac] sm:$0xf]
    %v1072 = vld [vmem:[#allocation2 + $0x1b0] sm:$0xff]
    %v1073 = vld [vmem:[#allocation2 + $0x1b8] sm:$0xf]
    %v1074 = vld [vmem:[#allocation2 + $0x1bc] sm:$0xff]
    %v1075 = vld [vmem:[#allocation2 + $0x1c4] sm:$0xf]
    %v1076 = vld [vmem:[#allocation2 + $0x1c8] sm:$0xff]
    %v1077 = vld [vmem:[#allocation2 + $0x1d0] sm:$0xf]
    %v1078 = vld [vmem:[#allocation2 + $0x1d4] sm:$0xff]
    %v1079 = vld [vmem:[#allocation2 + $0x1dc] sm:$0xf]
    %v1080 = vld [vmem:[#allocation2 + $0x1e0] sm:$0xff]
    %v1081 = vld [vmem:[#allocation2 + $0x1e8] sm:$0xf]
    %v1082 = vld [vmem:[#allocation2 + $0x1ec] sm:$0xff]
    %v1083 = vld [vmem:[#allocation2 + $0x1f4] sm:$0xf]
    %v1084 = vld [vmem:[#allocation2 + $0x1f8] sm:$0xff]
    %v1085 = vld [vmem:[#allocation2 + $0x200] sm:$0xf]
    %v1086 = vld [vmem:[#allocation2 + $0x204] sm:$0xff]
    %v1087 = vld [vmem:[#allocation2 + $0x20c] sm:$0xf]
    %v1088 = vld [vmem:[#allocation2 + $0x210] sm:$0xff]
    %v1089 = vld [vmem:[#allocation2 + $0x218] sm:$0xf]
    %v1090 = vld [vmem:[#allocation2 + $0x21c] sm:$0xff]
    %v1091 = vld [vmem:[#allocation2 + $0x224] sm:$0xf]
    %v1092 = vld [vmem:[#allocation2 + $0x228] sm:$0xff]
    %v1093 = vld [vmem:[#allocation2 + $0x230] sm:$0xf]
    %v1094 = vld [vmem:[#allocation2 + $0x234] sm:$0xff]
    %v1095 = vld [vmem:[#allocation2 + $0x23c] sm:$0xf]
    %v1096 = vld [vmem:[#allocation2 + $0x240] sm:$0xff]
    %v1097 = vld [vmem:[#allocation2 + $0x248] sm:$0xf]
    %v1098 = vld [vmem:[#allocation2 + $0x24c] sm:$0xff]
    %v1099 = vld [vmem:[#allocation2 + $0x254] sm:$0xf]
    %v1100 = vld [vmem:[#allocation2 + $0x258] sm:$0xff]
    %v1101 = vld [vmem:[#allocation2 + $0x260] sm:$0xf]
    %v1102 = vld [vmem:[#allocation2 + $0x264] sm:$0xff]
    %v1103 = vld [vmem:[#allocation2 + $0x26c] sm:$0xf]
    %v1104 = vld [vmem:[#allocation2 + $0x270] sm:$0xff]
    %v1105 = vld [vmem:[#allocation2 + $0x278] sm:$0xf]
    %v1106 = vld [vmem:[#allocation2 + $0x27c] sm:$0xff]
    %v1107 = vld [vmem:[#allocation2 + $0x284] sm:$0xf]
    %v1108 = vld [vmem:[#allocation2 + $0x288] sm:$0xff]
    %v1109 = vld [vmem:[#allocation2 + $0x290] sm:$0xf]
    %v1110 = vld [vmem:[#allocation2 + $0x294] sm:$0xff]
    %v1111 = vld [vmem:[#allocation2 + $0x29c] sm:$0xf]
    %v1112 = vld [vmem:[#allocation2 + $0x2a0] sm:$0xff]
    %v1113 = vld [vmem:[#allocation2 + $0x2a8] sm:$0xf]
    %v1114 = vld [vmem:[#allocation2 + $0x2ac] sm:$0xff]
    %v1115 = vld [vmem:[#allocation2 + $0x2b4] sm:$0xf]
    %v1116 = vld [vmem:[#allocation2 + $0x2b8] sm:$0xff]
    %v1117 = vld [vmem:[#allocation2 + $0x2c0] sm:$0xf]
    %v1118 = vld [vmem:[#allocation2 + $0x2c4] sm:$0xff]
    %v1119 = vld [vmem:[#allocation2 + $0x2cc] sm:$0xf]
    %v1120 = vld [vmem:[#allocation2 + $0x2d0] sm:$0xff]
    %v1121 = vld [vmem:[#allocation2 + $0x2d8] sm:$0xf]
    %v1122 = vld [vmem:[#allocation2 + $0x2dc] sm:$0xff]
    %v1123 = vld [vmem:[#allocation2 + $0x2e4] sm:$0xf]
    %v1124 = vld [vmem:[#allocation2 + $0x2e8] sm:$0xff]
    %v1125 = vld [vmem:[#allocation2 + $0x2f0] sm:$0xf]
    %v1126 = vld [vmem:[#allocation2 + $0x2f4] sm:$0xff]
    %v1127 = vld [vmem:[#allocation2 + $0x2fc] sm:$0xf]
    %v1256 = vunpack.c.l.b16 %v1000
    %v1257 = vunpack.c.h.b16 %v1000
    %v1258 = vunpack.c.l.b16 %v1001
    %v1259 = vunpack.c.l.b16 %v1002
    %v1260 = vunpack.c.h.b16 %v1002
    %v1261 = vunpack.c.l.b16 %v1003
    %v1262 = vunpack.c.l.b16 %v1004
    %v1263 = vunpack.c.h.b16 %v1004
    %v1264 = vunpack.c.l.b16 %v1005
    %v1265 = vunpack.c.l.b16 %v1006
    %v1266 = vunpack.c.h.b16 %v1006
    %v1267 = vunpack.c.l.b16 %v1007
    %v1268 = vunpack.c.l.b16 %v1008
    %v1269 = vunpack.c.h.b16 %v1008
    %v1270 = vunpack.c.l.b16 %v1009
    %v1271 = vunpack.c.l.b16 %v1010
    %v1272 = vunpack.c.h.b16 %v1010
    %v1273 = vunpack.c.l.b16 %v1011
    %v1274 = vunpack.c.l.b16 %v1012
    %v1275 = vunpack.c.h.b16 %v1012
    %v1276 = vunpack.c.l.b16 %v1013
    %v1277 = vunpack.c.l.b16 %v1014
    %v1278 = vunpack.c.h.b16 %v1014
    %v1279 = vunpack.c.l.b16 %v1015
    %v1280 = vunpack.c.l.b16 %v1016
    %v1281 = vunpack.c.h.b16 %v1016
    %v1282 = vunpack.c.l.b16 %v1017
    %v1283 = vunpack.c.l.b16 %v1018
    %v1284 = vunpack.c.h.b16 %v1018
    %v1285 = vunpack.c.l.b16 %v1019
    %v1286 = vunpack.c.l.b16 %v1020
    %v1287 = vunpack.c.h.b16 %v1020
    %v1288 = vunpack.c.l.b16 %v1021
    %v1289 = vunpack.c.l.b16 %v1022
    %v1290 = vunpack.c.h.b16 %v1022
    %v1291 = vunpack.c.l.b16 %v1023
    %v1292 = vunpack.c.l.b16 %v1024
    %v1293 = vunpack.c.h.b16 %v1024
    %v1294 = vunpack.c.l.b16 %v1025
    %v1295 = vunpack.c.l.b16 %v1026
    %v1296 = vunpack.c.h.b16 %v1026
    %v1297 = vunpack.c.l.b16 %v1027
    %v1298 = vunpack.c.l.b16 %v1028
    %v1299 = vunpack.c.h.b16 %v1028
    %v1300 = vunpack.c.l.b16 %v1029
    %v1301 = vunpack.c.l.b16 %v1030
    %v1302 = vunpack.c.h.b16 %v1030
    %v1303 = vunpack.c.l.b16 %v1031
    %v1304 = vunpack.c.l.b16 %v1032
    %v1305 = vunpack.c.h.b16 %v1032
    %v1306 = vunpack.c.l.b16 %v1033
    %v1307 = vunpack.c.l.b16 %v1034
    %v1308 = vunpack.c.h.b16 %v1034
    %v1309 = vunpack.c.l.b16 %v1035
    %v1310 = vunpack.c.l.b16 %v1036
    %v1311 = vunpack.c.h.b16 %v1036
    %v1312 = vunpack.c.l.b16 %v1037
    %v1313 = vunpack.c.l.b16 %v1038
    %v1314 = vunpack.c.h.b16 %v1038
    %v1315 = vunpack.c.l.b16 %v1039
    %v1316 = vunpack.c.l.b16 %v1040
    %v1317 = vunpack.c.h.b16 %v1040
    %v1318 = vunpack.c.l.b16 %v1041
    %v1319 = vunpack.c.l.b16 %v1042
    %v1320 = vunpack.c.h.b16 %v1042
    %v1321 = vunpack.c.l.b16 %v1043
    %v1322 = vunpack.c.l.b16 %v1044
    %v1323 = vunpack.c.h.b16 %v1044
    %v1324 = vunpack.c.l.b16 %v1045
    %v1325 = vunpack.c.l.b16 %v1046
    %v1326 = vunpack.c.h.b16 %v1046
    %v1327 = vunpack.c.l.b16 %v1047
    %v1328 = vunpack.c.l.b16 %v1048
    %v1329 = vunpack.c.h.b16 %v1048
    %v1330 = vunpack.c.l.b16 %v1049
    %v1331 = vunpack.c.l.b16 %v1050
    %v1332 = vunpack.c.h.b16 %v1050
    %v1333 = vunpack.c.l.b16 %v1051
    %v1334 = vunpack.c.l.b16 %v1052
    %v1335 = vunpack.c.h.b16 %v1052
    %v1336 = vunpack.c.l.b16 %v1053
    %v1337 = vunpack.c.l.b16 %v1054
    %v1338 = vunpack.c.h.b16 %v1054
    %v1339 = vunpack.c.l.b16 %v1055
    %v1340 = vunpack.c.l.b16 %v1056
    %v1341 = vunpack.c.h.b16 %v1056
    %v1342 = vunpack.c.l.b16 %v1057
    %v1343 = vunpack.c.l.b16 %v1058
    %v1344 = vunpack.c.h.b16 %v1058
    %v1345 = vunpack.c.l.b16 %v1059
    %v1346 = vunpack.c.l.b16 %v1060
    %v1347 = vunpack.c.h.b16 %v1060
    %v1348 = vunpack.c.l.b16 %v1061
    %v1349 = vunpack.c.l.b16 %v1062
    %v1350 = vunpack.c.h.b16 %v1062
    %v1351 = vunpack.c.l.b16 %v1063
    %v1352 = vunpack.c.l.b16 %v1064
    %v1353 = vunpack.c.h.b16 %v1064
    %v1354 = vunpack.c.l.b16 %v1065
    %v1355 = vunpack.c.l.b16 %v1066
    %v1356 = vunpack.c.h.b16 %v1066
    %v1357 = vunpack.c.l.b16 %v1067
    %v1358 = vunpack.c.l.b16 %v1068
    %v1359 = vunpack.c.h.b16 %v1068
    %v1360 = vunpack.c.l.b16 %v1069
    %v1361 = vunpack.c.l.b16 %v1070
    %v1362 = vunpack.c.h.b16 %v1070
    %v1363 = vunpack.c.l.b16 %v1071
    %v1364 = vunpack.c.l.b16 %v1072
    %v1365 = vunpack.c.h.b16 %v1072
    %v1366 = vunpack.c.l.b16 %v1073
    %v1367 = vunpack.c.l.b16 %v1074
    %v1368 = vunpack.c.h.b16 %v1074
    %v1369 = vunpack.c.l.b16 %v1075
    %v1370 = vunpack.c.l.b16 %v1076
    %v1371 = vunpack.c.h.b16 %v1076
    %v1372 = vunpack.c.l.b16 %v1077
    %v1373 = vunpack.c.l.b16 %v1078
    %v1374 = vunpack.c.h.b16 %v1078
    %v1375 = vunpack.c.l.b16 %v1079
    %v1376 = vunpack.c.l.b16 %v1080
    %v1377 = vunpack.c.h.b16 %v1080
    %v1378 = vunpack.c.l.b16 %v1081
    %v1379 = vunpack.c.l.b16 %v1082
    %v1380 = vunpack.c.h.b16 %v1082
    %v1381 = vunpack.c.l.b16 %v1083
    %v1382 = vunpack.c.l.b16 %v1084
    %v1383 = vunpack.c.h.b16 %v1084
    %v1384 = vunpack.c.l.b16 %v1085
    %v1385 = vunpack.c.l.b16 %v1086
    %v1386 = vunpack.c.h.b16 %v1086
    %v1387 = vunpack.c.l.b16 %v1087
    %v1388 = vunpack.c.l.b16 %v1088
    %v1389 = vunpack.c.h.b16 %v1088
    %v1390 = vunpack.c.l.b16 %v1089
    %v1391 = vunpack.c.l.b16 %v1090
    %v1392 = vunpack.c.h.b16 %v1090
    %v1393 = vunpack.c.l.b16 %v1091
    %v1394 = vunpack.c.l.b16 %v1092
    %v1395 = vunpack.c.h.b16 %v1092
    %v1396 = vunpack.c.l.b16 %v1093
    %v1397 = vunpack.c.l.b16 %v1094
    %v1398 = vunpack.c.h.b16 %v1094
    %v1399 = vunpack.c.l.b16 %v1095
    %v1400 = vunpack.c.l.b16 %v1096
    %v1401 = vunpack.c.h.b16 %v1096
    %v1402 = vunpack.c.l.b16 %v1097
    %v1403 = vunpack.c.l.b16 %v1098
    %v1404 = vunpack.c.h.b16 %v1098
    %v1405 = vunpack.c.l.b16 %v1099
    %v1406 = vunpack.c.l.b16 %v1100
    %v1407 = vunpack.c.h.b16 %v1100
    %v1408 = vunpack.c.l.b16 %v1101
    %v1409 = vunpack.c.l.b16 %v1102
    %v1410 = vunpack.c.h.b16 %v1102
    %v1411 = vunpack.c.l.b16 %v1103
    %v1412 = vunpack.c.l.b16 %v1104
    %v1413 = vunpack.c.h.b16 %v1104
    %v1414 = vunpack.c.l.b16 %v1105
    %v1415 = vunpack.c.l.b16 %v1106
    %v1416 = vunpack.c.h.b16 %v1106
    %v1417 = vunpack.c.l.b16 %v1107
    %v1418 = vunpack.c.l.b16 %v1108
    %v1419 = vunpack.c.h.b16 %v1108
    %v1420 = vunpack.c.l.b16 %v1109
    %v1421 = vunpack.c.l.b16 %v1110
    %v1422 = vunpack.c.h.b16 %v1110
    %v1423 = vunpack.c.l.b16 %v1111
    %v1424 = vunpack.c.l.b16 %v1112
    %v1425 = vunpack.c.h.b16 %v1112
    %v1426 = vunpack.c.l.b16 %v1113
    %v1427 = vunpack.c.l.b16 %v1114
    %v1428 = vunpack.c.h.b16 %v1114
    %v1429 = vunpack.c.l.b16 %v1115
    %v1430 = vunpack.c.l.b16 %v1116
    %v1431 = vunpack.c.h.b16 %v1116
    %v1432 = vunpack.c.l.b16 %v1117
    %v1433 = vunpack.c.l.b16 %v1118
    %v1434 = vunpack.c.h.b16 %v1118
    %v1435 = vunpack.c.l.b16 %v1119
    %v1436 = vunpack.c.l.b16 %v1120
    %v1437 = vunpack.c.h.b16 %v1120
    %v1438 = vunpack.c.l.b16 %v1121
    %v1439 = vunpack.c.l.b16 %v1122
    %v1440 = vunpack.c.h.b16 %v1122
    %v1441 = vunpack.c.l.b16 %v1123
    %v1442 = vunpack.c.l.b16 %v1124
    %v1443 = vunpack.c.h.b16 %v1124
    %v1444 = vunpack.c.l.b16 %v1125
    %v1445 = vunpack.c.l.b16 %v1126
    %v1446 = vunpack.c.h.b16 %v1126
    %v1447 = vunpack.c.l.b16 %v1127
    %v1448 = vpack.c.b16 %v1259, %v1256
    %v1449 = vpack.c.b16 %v1260, %v1257
    %v1450 = vpack.c.b16 %v1261, %v1258
    %v1451 = vpack.c.b16 %v1265, %v1262
    %v1452 = vpack.c.b16 %v1266, %v1263
    %v1453 = vpack.c.b16 %v1267, %v1264
    %v1454 = vpack.c.b16 %v1271, %v1268
    %v1455 = vpack.c.b16 %v1272, %v1269
    %v1456 = vpack.c.b16 %v1273, %v1270
    %v1457 = vpack.c.b16 %v1277, %v1274
    %v1458 = vpack.c.b16 %v1278, %v1275
    %v1459 = vpack.c.b16 %v1279, %v1276
    %v1460 = vpack.c.b16 %v1283, %v1280
    %v1461 = vpack.c.b16 %v1284, %v1281
    %v1462 = vpack.c.b16 %v1285, %v1282
    %v1463 = vpack.c.b16 %v1289, %v1286
    %v1464 = vpack.c.b16 %v1290, %v1287
    %v1465 = vpack.c.b16 %v1291, %v1288
    %v1466 = vpack.c.b16 %v1295, %v1292
    %v1467 = vpack.c.b16 %v1296, %v1293
    %v1468 = vpack.c.b16 %v1297, %v1294
    %v1469 = vpack.c.b16 %v1301, %v1298
    %v1470 = vpack.c.b16 %v1302, %v1299
    %v1471 = vpack.c.b16 %v1303, %v1300
    %v1472 = vpack.c.b16 %v1307, %v1304
    %v1473 = vpack.c.b16 %v1308, %v1305
    %v1474 = vpack.c.b16 %v1309, %v1306
    %v1475 = vpack.c.b16 %v1313, %v1310
    %v1476 = vpack.c.b16 %v1314, %v1311
    %v1477 = vpack.c.b16 %v1315, %v1312
    %v1478 = vpack.c.b16 %v1319, %v1316
    %v1479 = vpack.c.b16 %v1320, %v1317
    %v1480 = vpack.c.b16 %v1321, %v1318
    %v1481 = vpack.c.b16 %v1325, %v1322
    %v1482 = vpack.c.b16 %v1326, %v1323
    %v1483 = vpack.c.b16 %v1327, %v1324
    %v1484 = vpack.c.b16 %v1331, %v1328
    %v1485 = vpack.c.b16 %v1332, %v1329
    %v1486 = vpack.c.b16 %v1333, %v1330
    %v1487 = vpack.c.b16 %v1337, %v1334
    %v1488 = vpack.c.b16 %v1338, %v1335
    %v1489 = vpack.c.b16 %v1339, %v1336
    %v1490 = vpack.c.b16 %v1343, %v1340
    %v1491 = vpack.c.b16 %v1344, %v1341
    %v1492 = vpack.c.b16 %v1345, %v1342
    %v1493 = vpack.c.b16 %v1349, %v1346
    %v1494 = vpack.c.b16 %v1350, %v1347
    %v1495 = vpack.c.b16 %v1351, %v1348
    %v1496 = vpack.c.b16 %v1355, %v1352
    %v1497 = vpack.c.b16 %v1356, %v1353
    %v1498 = vpack.c.b16 %v1357, %v1354
    %v1499 = vpack.c.b16 %v1361, %v1358
    %v1500 = vpack.c.b16 %v1362, %v1359
    %v1501 = vpack.c.b16 %v1363, %v1360
    %v1502 = vpack.c.b16 %v1367, %v1364
    %v1503 = vpack.c.b16 %v1368, %v1365
    %v1504 = vpack.c.b16 %v1369, %v1366
    %v1505 = vpack.c.b16 %v1373, %v1370
    %v1506 = vpack.c.b16 %v1374, %v1371
    %v1507 = vpack.c.b16 %v1375, %v1372
    %v1508 = vpack.c.b16 %v1379, %v1376
    %v1509 = vpack.c.b16 %v1380, %v1377
    %v1510 = vpack.c.b16 %v1381, %v1378
    %v1511 = vpack.c.b16 %v1385, %v1382
    %v1512 = vpack.c.b16 %v1386, %v1383
    %v1513 = vpack.c.b16 %v1387, %v1384
    %v1514 = vpack.c.b16 %v1391, %v1388
    %v1515 = vpack.c.b16 %v1392, %v1389
    %v1516 = vpack.c.b16 %v1393, %v1390
    %v1517 = vpack.c.b16 %v1397, %v1394
    %v1518 = vpack.c.b16 %v1398, %v1395
    %v1519 = vpack.c.b16 %v1399, %v1396
    %v1520 = vpack.c.b16 %v1403, %v1400
    %v1521 = vpack.c.b16 %v1404, %v1401
    %v1522 = vpack.c.b16 %v1405, %v1402
    %v1523 = vpack.c.b16 %v1409, %v1406
    %v1524 = vpack.c.b16 %v1410, %v1407
    %v1525 = vpack.c.b16 %v1411, %v1408
    %v1526 = vpack.c.b16 %v1415, %v1412
    %v1527 = vpack.c.b16 %v1416, %v1413
    %v1528 = vpack.c.b16 %v1417, %v1414
    %v1529 = vpack.c.b16 %v1421, %v1418
    %v1530 = vpack.c.b16 %v1422, %v1419
    %v1531 = vpack.c.b16 %v1423, %v1420
    %v1532 = vpack.c.b16 %v1427, %v1424
    %v1533 = vpack.c.b16 %v1428, %v1425
    %v1534 = vpack.c.b16 %v1429, %v1426
    %v1535 = vpack.c.b16 %v1433, %v1430
    %v1536 = vpack.c.b16 %v1434, %v1431
    %v1537 = vpack.c.b16 %v1435, %v1432
    %v1538 = vpack.c.b16 %v1439, %v1436
    %v1539 = vpack.c.b16 %v1440, %v1437
    %v1540 = vpack.c.b16 %v1441, %v1438
    %v1541 = vpack.c.b16 %v1445, %v1442
    %v1542 = vpack.c.b16 %v1446, %v1443
    %v1543 = vpack.c.b16 %v1447, %v1444
    %1640 = vmatprep.subr.bf16.mxu0 %v1470
    %1641 = vmatpush1.bf16.msra.mxu0 %v1469
    %1642 = vmatprep.subr.bf16.mxu0 %v1467
    %1643 = vmatpush1.bf16.msra.mxu0 %v1466
    %1644 = vmatprep.subr.bf16.mxu0 %v1464
    %1645 = vmatpush1.bf16.msra.mxu0 %v1463
    %1646 = vmatprep.subr.bf16.mxu0 %v1461
    %1647 = vmatpush1.bf16.msra.mxu0 %v1460
    %1648 = vmatprep.subr.bf16.mxu0 %v1458
    %1649 = vmatpush1.bf16.msra.mxu0 %v1457
    %1650 = vmatprep.subr.bf16.mxu0 %v1455
    %1651 = vmatpush1.bf16.msra.mxu0 %v1454
    %1652 = vmatprep.subr.bf16.mxu0 %v1452
    %1653 = vmatpush1.bf16.msra.mxu0 %v1451
    %1654 = vmatprep.subr.bf16.mxu0 %v1449
    %1655 = vmatpush1.bf16.msra.mxu0 %v1448
    %1656 = vmatprep.subr.bf16.mxu0 %v1494
    %1657 = vmatpush2.bf16.msra.mxu0 %v1493
    %1658 = vmatprep.subr.bf16.mxu0 %v1491
    %1659 = vmatpush2.bf16.msra.mxu0 %v1490
    %1660 = vmatprep.subr.bf16.mxu0 %v1488
    %1661 = vmatpush2.bf16.msra.mxu0 %v1487
    %1662 = vmatprep.subr.bf16.mxu0 %v1485
    %1663 = vmatpush2.bf16.msra.mxu0 %v1484
    %1664 = vmatprep.subr.bf16.mxu0 %v1482
    %1665 = vmatpush2.bf16.msra.mxu0 %v1481
    %1666 = vmatprep.subr.bf16.mxu0 %v1479
    %1667 = vmatpush2.bf16.msra.mxu0 %v1478
    %1668 = vmatprep.subr.bf16.mxu0 %v1476
    %1669 = vmatpush2.bf16.msra.mxu0 %v1475
    %1670 = vmatprep.subr.bf16.mxu0 %v1473
    %1671 = vmatpush2.bf16.msra.mxu0 %v1472
    %1672 = vmatprep.mubr.bf16.mxu0 %v993
    %1673 = vmatmul.mubr.bf16.gmra.mxu0 %v992
    %v1674 = vpop.f32.mrf.mxu0
    %v1675 = vadd.f32 0.0, %v1674
    %v1676 = vpop.f32.mrf.mxu0
    %v1677 = vadd.f32 0.0, %v1676
    %v1678 = vpop.f32.mrf.mxu0
    %v1679 = vadd.f32 0.0, %v1678
    %v1680 = vpop.f32.mrf.mxu0
    %v1681 = vadd.f32 0.0, %v1680
    %1682 = vmatprep.mubr.bf16.mxu0 %v997
    %1683 = vmatmul.mubr.bf16.gmra.mxu0 %v996
    %v1684 = vpop.f32.mrf.mxu0
    %v1685 = vadd.f32 0.0, %v1684
    %v1686 = vpop.f32.mrf.mxu0
    %v1687 = vadd.f32 0.0, %v1686
    %v1688 = vpop.f32.mrf.mxu0
    %v1689 = vadd.f32 0.0, %v1688
    %v1690 = vpop.f32.mrf.mxu0
    %v1691 = vadd.f32 0.0, %v1690
    %1692 = vdwg.mxu0
    %1693 = vmatprep.subr.bf16.mxu0 %v1518
    %1694 = vmatpush1.bf16.msra.mxu0 %v1517
    %1695 = vmatprep.subr.bf16.mxu0 %v1515
    %1696 = vmatpush1.bf16.msra.mxu0 %v1514
    %1697 = vmatprep.subr.bf16.mxu0 %v1512
    %1698 = vmatpush1.bf16.msra.mxu0 %v1511
    %1699 = vmatprep.subr.bf16.mxu0 %v1509
    %1700 = vmatpush1.bf16.msra.mxu0 %v1508
    %1701 = vmatprep.subr.bf16.mxu0 %v1506
    %1702 = vmatpush1.bf16.msra.mxu0 %v1505
    %1703 = vmatprep.subr.bf16.mxu0 %v1503
    %1704 = vmatpush1.bf16.msra.mxu0 %v1502
    %1705 = vmatprep.subr.bf16.mxu0 %v1500
    %1706 = vmatpush1.bf16.msra.mxu0 %v1499
    %1707 = vmatprep.subr.bf16.mxu0 %v1497
    %1708 = vmatpush1.bf16.msra.mxu0 %v1496
    %1709 = vmatprep.subr.bf16.mxu0 %v1542
    %1710 = vmatpush2.bf16.msra.mxu0 %v1541
    %1711 = vmatprep.subr.bf16.mxu0 %v1539
    %1712 = vmatpush2.bf16.msra.mxu0 %v1538
    %1713 = vmatprep.subr.bf16.mxu0 %v1536
    %1714 = vmatpush2.bf16.msra.mxu0 %v1535
    %1715 = vmatprep.subr.bf16.mxu0 %v1533
    %1716 = vmatpush2.bf16.msra.mxu0 %v1532
    %1717 = vmatprep.subr.bf16.mxu0 %v1530
    %1718 = vmatpush2.bf16.msra.mxu0 %v1529
    %1719 = vmatprep.subr.bf16.mxu0 %v1527
    %1720 = vmatpush2.bf16.msra.mxu0 %v1526
    %1721 = vmatprep.subr.bf16.mxu0 %v1524
    %1722 = vmatpush2.bf16.msra.mxu0 %v1523
    %1723 = vmatprep.subr.bf16.mxu0 %v1521
    %1724 = vmatpush2.bf16.msra.mxu0 %v1520
    %1725 = vmatprep.mubr.bf16.mxu0 %v995
    %1726 = vmatmul.mubr.bf16.gmra.mxu0 %v994
    %v1727 = vpop.f32.mrf.mxu0
    %v1728 = vadd.f32 %v1675, %v1727
    %v1729 = vpop.f32.mrf.mxu0
    %v1730 = vadd.f32 %v1677, %v1729
    %v1731 = vpop.f32.mrf.mxu0
    %v1732 = vadd.f32 %v1679, %v1731
    %v1733 = vpop.f32.mrf.mxu0
    %v1734 = vadd.f32 %v1681, %v1733
    %1735 = vmatprep.mubr.bf16.mxu0 %v999
    %1736 = vmatmul.mubr.bf16.gmra.mxu0 %v998
    %v1737 = vpop.f32.mrf.mxu0
    %v1738 = vadd.f32 %v1685, %v1737
    %v1739 = vpop.f32.mrf.mxu0
    %v1740 = vadd.f32 %v1687, %v1739
    %v1741 = vpop.f32.mrf.mxu0
    %v1742 = vadd.f32 %v1689, %v1741
    %v1743 = vpop.f32.mrf.mxu0
    %v1744 = vadd.f32 %v1691, %v1743
    %1745 = vdwg.mxu0
    %1746 = vmatprep.subr.bf16.mxu0 0
    %1747 = vmatpush1.bf16.msra.mxu0 %v1471
    %1748 = vmatprep.subr.bf16.mxu0 0
    %1749 = vmatpush1.bf16.msra.mxu0 %v1468
    %1750 = vmatprep.subr.bf16.mxu0 0
    %1751 = vmatpush1.bf16.msra.mxu0 %v1465
    %1752 = vmatprep.subr.bf16.mxu0 0
    %1753 = vmatpush1.bf16.msra.mxu0 %v1462
    %1754 = vmatprep.subr.bf16.mxu0 0
    %1755 = vmatpush1.bf16.msra.mxu0 %v1459
    %1756 = vmatprep.subr.bf16.mxu0 0
    %1757 = vmatpush1.bf16.msra.mxu0 %v1456
    %1758 = vmatprep.subr.bf16.mxu0 0
    %1759 = vmatpush1.bf16.msra.mxu0 %v1453
    %1760 = vmatprep.subr.bf16.mxu0 0
    %1761 = vmatpush1.bf16.msra.mxu0 %v1450
    %1762 = vmatprep.subr.bf16.mxu0 0
    %1763 = vmatpush2.bf16.msra.mxu0 %v1495
    %1764 = vmatprep.subr.bf16.mxu0 0
    %1765 = vmatpush2.bf16.msra.mxu0 %v1492
    %1766 = vmatprep.subr.bf16.mxu0 0
    %1767 = vmatpush2.bf16.msra.mxu0 %v1489
    %1768 = vmatprep.subr.bf16.mxu0 0
    %1769 = vmatpush2.bf16.msra.mxu0 %v1486
    %1770 = vmatprep.subr.bf16.mxu0 0
    %1771 = vmatpush2.bf16.msra.mxu0 %v1483
    %1772 = vmatprep.subr.bf16.mxu0 0
    %1773 = vmatpush2.bf16.msra.mxu0 %v1480
    %1774 = vmatprep.subr.bf16.mxu0 0
    %1775 = vmatpush2.bf16.msra.mxu0 %v1477
    %1776 = vmatprep.subr.bf16.mxu0 0
    %1777 = vmatpush2.bf16.msra.mxu0 %v1474
    %1778 = vmatprep.mubr.bf16.mxu0 %v993
    %1779 = vmatmul.mubr.bf16.gmra.mxu0 %v992
    %v1780 = vpop.f32.mrf.mxu0
    %v1781 = vadd.f32 0.0, %v1780
    %v1782 = vpop.f32.mrf.mxu0
    %v1783 = vpop.f32.mrf.mxu0
    %v1784 = vadd.f32 0.0, %v1783
    %v1785 = vpop.f32.mrf.mxu0
    %1786 = vmatprep.mubr.bf16.mxu0 %v997
    %1787 = vmatmul.mubr.bf16.gmra.mxu0 %v996
    %v1788 = vpop.f32.mrf.mxu0
    %v1789 = vadd.f32 0.0, %v1788
    %v1790 = vpop.f32.mrf.mxu0
    %v1791 = vpop.f32.mrf.mxu0
    %v1792 = vadd.f32 0.0, %v1791
    %v1793 = vpop.f32.mrf.mxu0
    %1794 = vdwg.mxu0
    %1795 = vmatprep.subr.bf16.mxu0 0
    %1796 = vmatpush1.bf16.msra.mxu0 %v1519
    %1797 = vmatprep.subr.bf16.mxu0 0
    %1798 = vmatpush1.bf16.msra.mxu0 %v1516
    %1799 = vmatprep.subr.bf16.mxu0 0
    %1800 = vmatpush1.bf16.msra.mxu0 %v1513
    %1801 = vmatprep.subr.bf16.mxu0 0
    %1802 = vmatpush1.bf16.msra.mxu0 %v1510
    %1803 = vmatprep.subr.bf16.mxu0 0
    %1804 = vmatpush1.bf16.msra.mxu0 %v1507
    %1805 = vmatprep.subr.bf16.mxu0 0
    %1806 = vmatpush1.bf16.msra.mxu0 %v1504
    %1807 = vmatprep.subr.bf16.mxu0 0
    %1808 = vmatpush1.bf16.msra.mxu0 %v1501
    %1809 = vmatprep.subr.bf16.mxu0 0
    %1810 = vmatpush1.bf16.msra.mxu0 %v1498
    %1811 = vmatprep.subr.bf16.mxu0 0
    %1812 = vmatpush2.bf16.msra.mxu0 %v1543
    %1813 = vmatprep.subr.bf16.mxu0 0
    %1814 = vmatpush2.bf16.msra.mxu0 %v1540
    %1815 = vmatprep.subr.bf16.mxu0 0
    %1816 = vmatpush2.bf16.msra.mxu0 %v1537
    %1817 = vmatprep.subr.bf16.mxu0 0
    %1818 = vmatpush2.bf16.msra.mxu0 %v1534
    %1819 = vmatprep.subr.bf16.mxu0 0
    %1820 = vmatpush2.bf16.msra.mxu0 %v1531
    %1821 = vmatprep.subr.bf16.mxu0 0
    %1822 = vmatpush2.bf16.msra.mxu0 %v1528
    %1823 = vmatprep.subr.bf16.mxu0 0
    %1824 = vmatpush2.bf16.msra.mxu0 %v1525
    %1825 = vmatprep.subr.bf16.mxu0 0
    %1826 = vmatpush2.bf16.msra.mxu0 %v1522
    %1827 = vmatprep.mubr.bf16.mxu0 %v995
    %1828 = vmatmul.mubr.bf16.gmra.mxu0 %v994
    %v1829 = vpop.f32.mrf.mxu0
    %v1830 = vadd.f32 %v1781, %v1829
    %v1831 = vpop.f32.mrf.mxu0
    %v1832 = vpop.f32.mrf.mxu0
    %v1833 = vadd.f32 %v1784, %v1832
    %v1834 = vpop.f32.mrf.mxu0
    %1835 = vmatprep.mubr.bf16.mxu0 %v999
    %1836 = vmatmul.mubr.bf16.gmra.mxu0 %v998
    %v1837 = vpop.f32.mrf.mxu0
    %v1838 = vadd.f32 %v1789, %v1837
    %v1839 = vpop.f32.mrf.mxu0
    %v1840 = vpop.f32.mrf.mxu0
    %v1841 = vadd.f32 %v1792, %v1840
    %v1842 = vpop.f32.mrf.mxu0
    %1843 = vdwg.mxu0
    %v1844 = vmul.f32 %v1728, 0.125
    %v1845 = vmul.f32 %v1732, 0.125
    %v1846 = vmul.f32 %v1738, 0.125
    %v1847 = vmul.f32 %v1742, 0.125
    %v1848 = vpack.c.bf16 %v1845, %v1844
    %v1849 = vpack.c.bf16 %v1847, %v1846
    %v1850 = vpack.c.bf16 %v1734, %v1730
    %v1851 = vpack.c.bf16 %v1744, %v1740
    %v1852 = vpack.c.bf16 %v1833, %v1830
    %v1853 = vpack.c.bf16 %v1841, %v1838
    %vm1854 = vcmask 523264
    %v1856 = vsel %vm1854, %v1848, 0
    %v1859 = vsel %vm1854, %v1849, 0
    %v1862 = vsel %vm1854, %v1850, 0
    %v1865 = vsel %vm1854, %v1851, 0
    %1867 = vmatprep.subr.bf16.mxu0 0
    %1868 = vmatpush1.bf16.xpose.msra.mxu0 0
    %1869 = vmatprep.subr.bf16.mxu0 0
    %1870 = vmatpush1.bf16.xpose.msra.mxu0 0
    %1871 = vmatprep.subr.bf16.mxu0 0
    %1872 = vmatpush1.bf16.xpose.msra.mxu0 0
    %1873 = vmatprep.subr.bf16.mxu0 0
    %1874 = vmatpush1.bf16.xpose.msra.mxu0 0
    %1875 = vmatprep.subr.bf16.mxu0 0
    %1876 = vmatpush1.bf16.xpose.msra.mxu0 0
    %1877 = vmatprep.subr.bf16.mxu0 0
    %1878 = vmatpush1.bf16.xpose.msra.mxu0 0
    %1879 = vmatprep.subr.bf16.mxu0 0
    %1880 = vmatpush1.bf16.xpose.msra.mxu0 %v1865
    %1881 = vmatprep.subr.bf16.mxu0 0
    %1882 = vmatpush1.bf16.xpose.msra.mxu0 %v1862
    %1883 = vmatprep.subr.bf16.mxu0 0
    %1884 = vmatpush2.bf16.xpose.msra.mxu0 0
    %1885 = vmatprep.subr.bf16.mxu0 0
    %1886 = vmatpush2.bf16.xpose.msra.mxu0 0
    %1887 = vmatprep.subr.bf16.mxu0 0
    %1888 = vmatpush2.bf16.xpose.msra.mxu0 0
    %1889 = vmatprep.subr.bf16.mxu0 0
    %1890 = vmatpush2.bf16.xpose.msra.mxu0 0
    %1891 = vmatprep.subr.bf16.mxu0 0
    %1892 = vmatpush2.bf16.xpose.msra.mxu0 0
    %1893 = vmatprep.subr.bf16.mxu0 0
    %1894 = vmatpush2.bf16.xpose.msra.mxu0 0
    %1895 = vmatprep.subr.bf16.mxu0 0
    %1896 = vmatpush2.bf16.xpose.msra.mxu0 0
    %1897 = vmatprep.subr.bf16.mxu0 0
    %1898 = vmatpush2.bf16.xpose.msra.mxu0 0
    %1899 = vmatprep.mubr.bf16.mxu0 0
    %1900 = vmatmul.mubr.bf16.gmra.mxu0 %v1856
    %v1901 = vpop.f32.mrf.mxu0
    %v1902 = vadd.f32 %v169, %v1901
    %v1903 = vpop.f32.mrf.mxu0
    %v1904 = vpop.f32.mrf.mxu0
    %v1905 = vadd.f32 %v170, %v1904
    %v1906 = vpop.f32.mrf.mxu0
    %1907 = vmatprep.mubr.bf16.mxu0 0
    %1908 = vmatmul.mubr.bf16.gmra.mxu0 %v1859
    %v1909 = vpop.f32.mrf.mxu0
    %v1910 = vadd.f32 %v171, %v1909
    %v1911 = vpop.f32.mrf.mxu0
    %v1912 = vpop.f32.mrf.mxu0
    %v1913 = vadd.f32 %v172, %v1912
    %v1914 = vpop.f32.mrf.mxu0
    %1915 = vdwg.mxu0
    %vm1916 = vcmask 261120
    %v1917 = vsel %vm1916, %v1902, -inf
    %1918 = vmax.xlane.f32.xlu0 %v1917
    %v1919 = vpop.xlane.xlu0 %1918
    %v1920 = vsel %vm1916, %v1905, -inf
    %1921 = vmax.xlane.f32.xlu0 %v1920
    %v1922 = vpop.xlane.xlu0 %1921
    %v1923 = vsel %vm1916, %v1910, -inf
    %1924 = vmax.xlane.f32.xlu0 %v1923
    %v1925 = vpop.xlane.xlu0 %1924
    %v1926 = vsel %vm1916, %v1913, -inf
    %1927 = vmax.xlane.f32.xlu0 %v1926
    %v1928 = vpop.xlane.xlu0 %1927
    %v1929 = vsub.f32 %v1902, %v1919
    %v1930 = vsub.f32 %v1905, %v1922
    %v1931 = vsub.f32 %v1910, %v1925
    %v1932 = vsub.f32 %v1913, %v1928
    %v1933 = vmul.f32 %v1929, 1.442695
    %v1934 = vpow.pop %v1933
    %v1935 = vmul.f32 %v1930, 1.442695
    %v1936 = vpow.pop %v1935
    %v1937 = vmul.f32 %v1931, 1.442695
    %v1938 = vpow.pop %v1937
    %v1939 = vmul.f32 %v1932, 1.442695
    %v1940 = vpow.pop %v1939
    %v1941 = vsel %vm1916, %v1934, 0.0
    %1942 = vadd.xlane.f32.xlu0 %v1941
    %v1943 = vpop.xlane.xlu0 %1942
    %v1944 = vsel %vm1916, %v1936, 0.0
    %1945 = vadd.xlane.f32.xlu0 %v1944
    %v1946 = vpop.xlane.xlu0 %1945
    %v1947 = vsel %vm1916, %v1938, 0.0
    %1948 = vadd.xlane.f32.xlu0 %v1947
    %v1949 = vpop.xlane.xlu0 %1948
    %v1950 = vsel %vm1916, %v1940, 0.0
    %1951 = vadd.xlane.f32.xlu0 %v1950
    %v1952 = vpop.xlane.xlu0 %1951
    %v1953 = vrcp.pop %v1943
    %v1954 = vrcp.pop %v1946
    %v1955 = vrcp.pop %v1949
    %v1956 = vrcp.pop %v1952
    %v1957 = vmul.f32 %v1934, %v1953
    %v1958 = vmul.f32 %v1936, %v1954
    %v1959 = vmul.f32 %v1938, %v1955
    %v1960 = vmul.f32 %v1940, %v1956
    %v1961 = vpack.c.bf16 %v1958, %v1957
    %v1962 = vpack.c.bf16 %v1960, %v1959
    %v1964 = vsel %vm1916, %v1961, 0
    %v1967 = vsel %vm1916, %v1962, 0
    %1969 = vmatprep.subr.bf16.mxu0 0
    %1970 = vmatpush1.bf16.msra.mxu0 0
    %1971 = vmatprep.subr.bf16.mxu0 0
    %1972 = vmatpush1.bf16.msra.mxu0 0
    %1973 = vmatprep.subr.bf16.mxu0 0
    %1974 = vmatpush1.bf16.msra.mxu0 0
    %1975 = vmatprep.subr.bf16.mxu0 0
    %1976 = vmatpush1.bf16.msra.mxu0 0
    %1977 = vmatprep.subr.bf16.mxu0 0
    %1978 = vmatpush1.bf16.msra.mxu0 0
    %1979 = vmatprep.subr.bf16.mxu0 0
    %1980 = vmatpush1.bf16.msra.mxu0 0
    %1981 = vmatprep.subr.bf16.mxu0 0
    %1982 = vmatpush1.bf16.msra.mxu0 %v1853
    %1983 = vmatprep.subr.bf16.mxu0 0
    %1984 = vmatpush1.bf16.msra.mxu0 %v1852
    %1985 = vmatprep.subr.bf16.mxu0 0
    %1986 = vmatpush2.bf16.msra.mxu0 0
    %1987 = vmatprep.subr.bf16.mxu0 0
    %1988 = vmatpush2.bf16.msra.mxu0 0
    %1989 = vmatprep.subr.bf16.mxu0 0
    %1990 = vmatpush2.bf16.msra.mxu0 0
    %1991 = vmatprep.subr.bf16.mxu0 0
    %1992 = vmatpush2.bf16.msra.mxu0 0
    %1993 = vmatprep.subr.bf16.mxu0 0
    %1994 = vmatpush2.bf16.msra.mxu0 0
    %1995 = vmatprep.subr.bf16.mxu0 0
    %1996 = vmatpush2.bf16.msra.mxu0 0
    %1997 = vmatprep.subr.bf16.mxu0 0
    %1998 = vmatpush2.bf16.msra.mxu0 0
    %1999 = vmatprep.subr.bf16.mxu0 0
    %2000 = vmatpush2.bf16.msra.mxu0 0
    %2001 = vmatprep.mubr.bf16.mxu0 0
    %2002 = vmatmul.mubr.bf16.gmra.mxu0 %v1964
    %v2003 = vpop.f32.mrf.mxu0
    %v2004 = vadd.f32 0.0, %v2003
    %v2005 = vpop.f32.mrf.mxu0
    %v2006 = vpop.f32.mrf.mxu0
    %v2007 = vadd.f32 0.0, %v2006
    %v2008 = vpop.f32.mrf.mxu0
    %2009 = vmatprep.mubr.bf16.mxu0 0
    %2010 = vmatmul.mubr.bf16.gmra.mxu0 %v1967
    %v2011 = vpop.f32.mrf.mxu0
    %v2012 = vadd.f32 0.0, %v2011
    %v2013 = vpop.f32.mrf.mxu0
    %v2014 = vpop.f32.mrf.mxu0
    %v2015 = vadd.f32 0.0, %v2014
    %v2016 = vpop.f32.mrf.mxu0
    %2017 = vdwg.mxu0
    %2020 = vrot.lane.b32.xlu0 %v1848, 64
    %v2021 = vpop.permute.xlu0 %2020
    %2022 = vrot.lane.b32.xlu0 %v1849, 64
    %v2023 = vpop.permute.xlu0 %2022
    %2026 = vrot.lane.b32.xlu0 %v1850, 64
    %v2027 = vpop.permute.xlu0 %2026
    %2028 = vrot.lane.b32.xlu0 %v1851, 64
    %v2029 = vpop.permute.xlu0 %2028
    %v2031 = vsel %vm1854, %v2021, 0
    %v2034 = vsel %vm1854, %v2023, 0
    %v2037 = vsel %vm1854, %v2027, 0
    %v2040 = vsel %vm1854, %v2029, 0
    %2042 = vmatprep.subr.bf16.mxu0 0
    %2043 = vmatpush1.bf16.xpose.msra.mxu0 0
    %2044 = vmatprep.subr.bf16.mxu0 0
    %2045 = vmatpush1.bf16.xpose.msra.mxu0 0
    %2046 = vmatprep.subr.bf16.mxu0 0
    %2047 = vmatpush1.bf16.xpose.msra.mxu0 0
    %2048 = vmatprep.subr.bf16.mxu0 0
    %2049 = vmatpush1.bf16.xpose.msra.mxu0 0
    %2050 = vmatprep.subr.bf16.mxu0 0
    %2051 = vmatpush1.bf16.xpose.msra.mxu0 0
    %2052 = vmatprep.subr.bf16.mxu0 0
    %2053 = vmatpush1.bf16.xpose.msra.mxu0 0
    %2054 = vmatprep.subr.bf16.mxu0 0
    %2055 = vmatpush1.bf16.xpose.msra.mxu0 %v2040
    %2056 = vmatprep.subr.bf16.mxu0 0
    %2057 = vmatpush1.bf16.xpose.msra.mxu0 %v2037
    %2058 = vmatprep.subr.bf16.mxu0 0
    %2059 = vmatpush2.bf16.xpose.msra.mxu0 0
    %2060 = vmatprep.subr.bf16.mxu0 0
    %2061 = vmatpush2.bf16.xpose.msra.mxu0 0
    %2062 = vmatprep.subr.bf16.mxu0 0
    %2063 = vmatpush2.bf16.xpose.msra.mxu0 0
    %2064 = vmatprep.subr.bf16.mxu0 0
    %2065 = vmatpush2.bf16.xpose.msra.mxu0 0
    %2066 = vmatprep.subr.bf16.mxu0 0
    %2067 = vmatpush2.bf16.xpose.msra.mxu0 0
    %2068 = vmatprep.subr.bf16.mxu0 0
    %2069 = vmatpush2.bf16.xpose.msra.mxu0 0
    %2070 = vmatprep.subr.bf16.mxu0 0
    %2071 = vmatpush2.bf16.xpose.msra.mxu0 0
    %2072 = vmatprep.subr.bf16.mxu0 0
    %2073 = vmatpush2.bf16.xpose.msra.mxu0 0
    %2074 = vmatprep.mubr.bf16.mxu0 0
    %2075 = vmatmul.mubr.bf16.gmra.mxu0 %v2031
    %v2076 = vpop.f32.mrf.mxu0
    %v2077 = vadd.f32 %v169, %v2076
    %v2078 = vpop.f32.mrf.mxu0
    %v2079 = vpop.f32.mrf.mxu0
    %v2080 = vadd.f32 %v170, %v2079
    %v2081 = vpop.f32.mrf.mxu0
    %2082 = vmatprep.mubr.bf16.mxu0 0
    %2083 = vmatmul.mubr.bf16.gmra.mxu0 %v2034
    %v2084 = vpop.f32.mrf.mxu0
    %v2085 = vadd.f32 %v171, %v2084
    %v2086 = vpop.f32.mrf.mxu0
    %v2087 = vpop.f32.mrf.mxu0
    %v2088 = vadd.f32 %v172, %v2087
    %v2089 = vpop.f32.mrf.mxu0
    %2090 = vdwg.mxu0
    %v2091 = vsel %vm1916, %v2077, -inf
    %2092 = vmax.xlane.f32.xlu0 %v2091
    %v2093 = vpop.xlane.xlu0 %2092
    %v2094 = vsel %vm1916, %v2080, -inf
    %2095 = vmax.xlane.f32.xlu0 %v2094
    %v2096 = vpop.xlane.xlu0 %2095
    %v2097 = vsel %vm1916, %v2085, -inf
    %2098 = vmax.xlane.f32.xlu0 %v2097
    %v2099 = vpop.xlane.xlu0 %2098
    %v2100 = vsel %vm1916, %v2088, -inf
    %2101 = vmax.xlane.f32.xlu0 %v2100
    %v2102 = vpop.xlane.xlu0 %2101
    %v2103 = vsub.f32 %v2077, %v2093
    %v2104 = vsub.f32 %v2080, %v2096
    %v2105 = vsub.f32 %v2085, %v2099
    %v2106 = vsub.f32 %v2088, %v2102
    %v2107 = vmul.f32 %v2103, 1.442695
    %v2108 = vpow.pop %v2107
    %v2109 = vmul.f32 %v2104, 1.442695
    %v2110 = vpow.pop %v2109
    %v2111 = vmul.f32 %v2105, 1.442695
    %v2112 = vpow.pop %v2111
    %v2113 = vmul.f32 %v2106, 1.442695
    %v2114 = vpow.pop %v2113
    %v2115 = vsel %vm1916, %v2108, 0.0
    %2116 = vadd.xlane.f32.xlu0 %v2115
    %v2117 = vpop.xlane.xlu0 %2116
    %v2118 = vsel %vm1916, %v2110, 0.0
    %2119 = vadd.xlane.f32.xlu0 %v2118
    %v2120 = vpop.xlane.xlu0 %2119
    %v2121 = vsel %vm1916, %v2112, 0.0
    %2122 = vadd.xlane.f32.xlu0 %v2121
    %v2123 = vpop.xlane.xlu0 %2122
    %v2124 = vsel %vm1916, %v2114, 0.0
    %2125 = vadd.xlane.f32.xlu0 %v2124
    %v2126 = vpop.xlane.xlu0 %2125
    %v2127 = vrcp.pop %v2117
    %v2128 = vrcp.pop %v2120
    %v2129 = vrcp.pop %v2123
    %v2130 = vrcp.pop %v2126
    %v2131 = vmul.f32 %v2108, %v2127
    %v2132 = vmul.f32 %v2110, %v2128
    %v2133 = vmul.f32 %v2112, %v2129
    %v2134 = vmul.f32 %v2114, %v2130
    %v2135 = vpack.c.bf16 %v2132, %v2131
    %v2136 = vpack.c.bf16 %v2134, %v2133
    %2139 = vrot.lane.b32.xlu0 %v1852, 64
    %v2140 = vpop.permute.xlu0 %2139
    %2141 = vrot.lane.b32.xlu0 %v1853, 64
    %v2142 = vpop.permute.xlu0 %2141
    %v2146 = vsel %vm1916, %v2135, 0
    %v2149 = vsel %vm1916, %v2136, 0
    %2151 = vmatprep.subr.bf16.mxu0 0
    %2152 = vmatpush1.bf16.msra.mxu0 0
    %2153 = vmatprep.subr.bf16.mxu0 0
    %2154 = vmatpush1.bf16.msra.mxu0 0
    %2155 = vmatprep.subr.bf16.mxu0 0
    %2156 = vmatpush1.bf16.msra.mxu0 0
    %2157 = vmatprep.subr.bf16.mxu0 0
    %2158 = vmatpush1.bf16.msra.mxu0 0
    %2159 = vmatprep.subr.bf16.mxu0 0
    %2160 = vmatpush1.bf16.msra.mxu0 0
    %2161 = vmatprep.subr.bf16.mxu0 0
    %2162 = vmatpush1.bf16.msra.mxu0 0
    %2163 = vmatprep.subr.bf16.mxu0 0
    %2164 = vmatpush1.bf16.msra.mxu0 %v2142
    %2165 = vmatprep.subr.bf16.mxu0 0
    %2166 = vmatpush1.bf16.msra.mxu0 %v2140
    %2167 = vmatprep.subr.bf16.mxu0 0
    %2168 = vmatpush2.bf16.msra.mxu0 0
    %2169 = vmatprep.subr.bf16.mxu0 0
    %2170 = vmatpush2.bf16.msra.mxu0 0
    %2171 = vmatprep.subr.bf16.mxu0 0
    %2172 = vmatpush2.bf16.msra.mxu0 0
    %2173 = vmatprep.subr.bf16.mxu0 0
    %2174 = vmatpush2.bf16.msra.mxu0 0
    %2175 = vmatprep.subr.bf16.mxu0 0
    %2176 = vmatpush2.bf16.msra.mxu0 0
    %2177 = vmatprep.subr.bf16.mxu0 0
    %2178 = vmatpush2.bf16.msra.mxu0 0
    %2179 = vmatprep.subr.bf16.mxu0 0
    %2180 = vmatpush2.bf16.msra.mxu0 0
    %2181 = vmatprep.subr.bf16.mxu0 0
    %2182 = vmatpush2.bf16.msra.mxu0 0
    %2183 = vmatprep.mubr.bf16.mxu0 0
    %2184 = vmatmul.mubr.bf16.gmra.mxu0 %v2146
    %v2185 = vpop.f32.mrf.mxu0
    %v2186 = vadd.f32 0.0, %v2185
    %v2187 = vpop.f32.mrf.mxu0
    %v2188 = vpop.f32.mrf.mxu0
    %v2189 = vadd.f32 0.0, %v2188
    %v2190 = vpop.f32.mrf.mxu0
    %2191 = vmatprep.mubr.bf16.mxu0 0
    %2192 = vmatmul.mubr.bf16.gmra.mxu0 %v2149
    %v2193 = vpop.f32.mrf.mxu0
    %v2194 = vadd.f32 0.0, %v2193
    %v2195 = vpop.f32.mrf.mxu0
    %v2196 = vpop.f32.mrf.mxu0
    %v2197 = vadd.f32 0.0, %v2196
    %v2198 = vpop.f32.mrf.mxu0
    %2199 = vdwg.mxu0
    %2204 = vrot.lane.b32.xlu0 %v2186, 64
    %v2205 = vpop.permute.xlu0 %2204
    %2206 = vrot.lane.b32.xlu0 %v2189, 64
    %v2207 = vpop.permute.xlu0 %2206
    %2208 = vrot.lane.b32.xlu0 %v2194, 64
    %v2209 = vpop.permute.xlu0 %2208
    %2210 = vrot.lane.b32.xlu0 %v2197, 64
    %v2211 = vpop.permute.xlu0 %2210
    %v2216 = vsel %vm1854, %v2004, %v2205
    %v2217 = vsel %vm1854, %v2007, %v2207
    %v2218 = vsel %vm1854, %v2012, %v2209
    %v2219 = vsel %vm1854, %v2015, %v2211
    %v2220 = vpack.c.bf16 %v2217, %v2216
    %v2221 = vpack.c.bf16 %v2219, %v2218
    %v2222 = vld [vmem:[#allocation3] sm:$0xff]
    %v2223 = vld [vmem:[#allocation3 + $0x8] sm:$0xff]
    %v2224 = vld [vmem:[#allocation3 + $0x10] sm:$0xff]
    %v2225 = vld [vmem:[#allocation3 + $0x18] sm:$0xff]
    %v2226 = vld [vmem:[#allocation3 + $0x20] sm:$0xff]
    %v2227 = vld [vmem:[#allocation3 + $0x28] sm:$0xff]
    %v2228 = vld [vmem:[#allocation3 + $0x30] sm:$0xff]
    %v2229 = vld [vmem:[#allocation3 + $0x38] sm:$0xff]
    %v2230 = vld [vmem:[#allocation3 + $0x40] sm:$0xff]
    %v2231 = vld [vmem:[#allocation3 + $0x48] sm:$0xff]
    %v2232 = vld [vmem:[#allocation3 + $0x50] sm:$0xff]
    %v2233 = vld [vmem:[#allocation3 + $0x58] sm:$0xff]
    %v2234 = vld [vmem:[#allocation3 + $0x60] sm:$0xff]
    %v2235 = vld [vmem:[#allocation3 + $0x68] sm:$0xff]
    %v2236 = vld [vmem:[#allocation3 + $0x70] sm:$0xff]
    %v2237 = vld [vmem:[#allocation3 + $0x78] sm:$0xff]
    %v2238 = vld [vmem:[#allocation3 + $0x80] sm:$0xff]
    %v2239 = vld [vmem:[#allocation3 + $0x88] sm:$0xff]
    %v2240 = vld [vmem:[#allocation3 + $0x90] sm:$0xff]
    %v2241 = vld [vmem:[#allocation3 + $0x98] sm:$0xff]
    %v2242 = vld [vmem:[#allocation3 + $0xa0] sm:$0xff]
    %v2243 = vld [vmem:[#allocation3 + $0xa8] sm:$0xff]
    %v2244 = vld [vmem:[#allocation3 + $0xb0] sm:$0xff]
    %v2245 = vld [vmem:[#allocation3 + $0xb8] sm:$0xff]
    %v2246 = vld [vmem:[#allocation3 + $0xc0] sm:$0xff]
    %v2247 = vld [vmem:[#allocation3 + $0xc8] sm:$0xff]
    %v2248 = vld [vmem:[#allocation3 + $0xd0] sm:$0xff]
    %v2249 = vld [vmem:[#allocation3 + $0xd8] sm:$0xff]
    %v2250 = vld [vmem:[#allocation3 + $0xe0] sm:$0xff]
    %v2251 = vld [vmem:[#allocation3 + $0xe8] sm:$0xff]
    %v2252 = vld [vmem:[#allocation3 + $0xf0] sm:$0xff]
    %v2253 = vld [vmem:[#allocation3 + $0xf8] sm:$0xff]
    %v2286 = vunpack.c.l.b16 %v2222
    %v2287 = vunpack.c.h.b16 %v2222
    %v2288 = vunpack.c.l.b16 %v2223
    %v2289 = vunpack.c.h.b16 %v2223
    %v2290 = vunpack.c.l.b16 %v2224
    %v2291 = vunpack.c.h.b16 %v2224
    %v2292 = vunpack.c.l.b16 %v2225
    %v2293 = vunpack.c.h.b16 %v2225
    %v2294 = vunpack.c.l.b16 %v2226
    %v2295 = vunpack.c.h.b16 %v2226
    %v2296 = vunpack.c.l.b16 %v2227
    %v2297 = vunpack.c.h.b16 %v2227
    %v2298 = vunpack.c.l.b16 %v2228
    %v2299 = vunpack.c.h.b16 %v2228
    %v2300 = vunpack.c.l.b16 %v2229
    %v2301 = vunpack.c.h.b16 %v2229
    %v2302 = vunpack.c.l.b16 %v2230
    %v2303 = vunpack.c.h.b16 %v2230
    %v2304 = vunpack.c.l.b16 %v2231
    %v2305 = vunpack.c.h.b16 %v2231
    %v2306 = vunpack.c.l.b16 %v2232
    %v2307 = vunpack.c.h.b16 %v2232
    %v2308 = vunpack.c.l.b16 %v2233
    %v2309 = vunpack.c.h.b16 %v2233
    %v2310 = vunpack.c.l.b16 %v2234
    %v2311 = vunpack.c.h.b16 %v2234
    %v2312 = vunpack.c.l.b16 %v2235
    %v2313 = vunpack.c.h.b16 %v2235
    %v2314 = vunpack.c.l.b16 %v2236
    %v2315 = vunpack.c.h.b16 %v2236
    %v2316 = vunpack.c.l.b16 %v2237
    %v2317 = vunpack.c.h.b16 %v2237
    %v2318 = vunpack.c.l.b16 %v2238
    %v2319 = vunpack.c.h.b16 %v2238
    %v2320 = vunpack.c.l.b16 %v2239
    %v2321 = vunpack.c.h.b16 %v2239
    %v2322 = vunpack.c.l.b16 %v2240
    %v2323 = vunpack.c.h.b16 %v2240
    %v2324 = vunpack.c.l.b16 %v2241
    %v2325 = vunpack.c.h.b16 %v2241
    %v2326 = vunpack.c.l.b16 %v2242
    %v2327 = vunpack.c.h.b16 %v2242
    %v2328 = vunpack.c.l.b16 %v2243
    %v2329 = vunpack.c.h.b16 %v2243
    %v2330 = vunpack.c.l.b16 %v2244
    %v2331 = vunpack.c.h.b16 %v2244
    %v2332 = vunpack.c.l.b16 %v2245
    %v2333 = vunpack.c.h.b16 %v2245
    %v2334 = vunpack.c.l.b16 %v2246
    %v2335 = vunpack.c.h.b16 %v2246
    %v2336 = vunpack.c.l.b16 %v2247
    %v2337 = vunpack.c.h.b16 %v2247
    %v2338 = vunpack.c.l.b16 %v2248
    %v2339 = vunpack.c.h.b16 %v2248
    %v2340 = vunpack.c.l.b16 %v2249
    %v2341 = vunpack.c.h.b16 %v2249
    %v2342 = vunpack.c.l.b16 %v2250
    %v2343 = vunpack.c.h.b16 %v2250
    %v2344 = vunpack.c.l.b16 %v2251
    %v2345 = vunpack.c.h.b16 %v2251
    %v2346 = vunpack.c.l.b16 %v2252
    %v2347 = vunpack.c.h.b16 %v2252
    %v2348 = vunpack.c.l.b16 %v2253
    %v2349 = vunpack.c.h.b16 %v2253
    %v2350 = vpack.c.b16 %v2290, %v2286
    %v2351 = vpack.c.b16 %v2291, %v2287
    %v2352 = vpack.c.b16 %v2292, %v2288
    %v2353 = vpack.c.b16 %v2293, %v2289
    %v2354 = vpack.c.b16 %v2298, %v2294
    %v2355 = vpack.c.b16 %v2299, %v2295
    %v2356 = vpack.c.b16 %v2300, %v2296
    %v2357 = vpack.c.b16 %v2301, %v2297
    %v2358 = vpack.c.b16 %v2306, %v2302
    %v2359 = vpack.c.b16 %v2307, %v2303
    %v2360 = vpack.c.b16 %v2308, %v2304
    %v2361 = vpack.c.b16 %v2309, %v2305
    %v2362 = vpack.c.b16 %v2314, %v2310
    %v2363 = vpack.c.b16 %v2315, %v2311
    %v2364 = vpack.c.b16 %v2316, %v2312
    %v2365 = vpack.c.b16 %v2317, %v2313
    %v2366 = vpack.c.b16 %v2322, %v2318
    %v2367 = vpack.c.b16 %v2323, %v2319
    %v2368 = vpack.c.b16 %v2324, %v2320
    %v2369 = vpack.c.b16 %v2325, %v2321
    %v2370 = vpack.c.b16 %v2330, %v2326
    %v2371 = vpack.c.b16 %v2331, %v2327
    %v2372 = vpack.c.b16 %v2332, %v2328
    %v2373 = vpack.c.b16 %v2333, %v2329
    %v2374 = vpack.c.b16 %v2338, %v2334
    %v2375 = vpack.c.b16 %v2339, %v2335
    %v2376 = vpack.c.b16 %v2340, %v2336
    %v2377 = vpack.c.b16 %v2341, %v2337
    %v2378 = vpack.c.b16 %v2346, %v2342
    %v2379 = vpack.c.b16 %v2347, %v2343
    %v2380 = vpack.c.b16 %v2348, %v2344
    %v2381 = vpack.c.b16 %v2349, %v2345
    %2414 = vmatprep.subr.bf16.mxu0 %v2379
    %2415 = vmatpush1.bf16.msra.mxu0 %v2378
    %2416 = vmatprep.subr.bf16.mxu0 %v2375
    %2417 = vmatpush1.bf16.msra.mxu0 %v2374
    %2418 = vmatprep.subr.bf16.mxu0 %v2371
    %2419 = vmatpush1.bf16.msra.mxu0 %v2370
    %2420 = vmatprep.subr.bf16.mxu0 %v2367
    %2421 = vmatpush1.bf16.msra.mxu0 %v2366
    %2422 = vmatprep.subr.bf16.mxu0 %v2363
    %2423 = vmatpush1.bf16.msra.mxu0 %v2362
    %2424 = vmatprep.subr.bf16.mxu0 %v2359
    %2425 = vmatpush1.bf16.msra.mxu0 %v2358
    %2426 = vmatprep.subr.bf16.mxu0 %v2355
    %2427 = vmatpush1.bf16.msra.mxu0 %v2354
    %2428 = vmatprep.subr.bf16.mxu0 %v2351
    %2429 = vmatpush1.bf16.msra.mxu0 %v2350
    %2430 = vmatprep.subr.bf16.mxu0 0
    %2431 = vmatpush2.bf16.msra.mxu0 0
    %2432 = vmatprep.subr.bf16.mxu0 0
    %2433 = vmatpush2.bf16.msra.mxu0 0
    %2434 = vmatprep.subr.bf16.mxu0 0
    %2435 = vmatpush2.bf16.msra.mxu0 0
    %2436 = vmatprep.subr.bf16.mxu0 0
    %2437 = vmatpush2.bf16.msra.mxu0 0
    %2438 = vmatprep.subr.bf16.mxu0 0
    %2439 = vmatpush2.bf16.msra.mxu0 0
    %2440 = vmatprep.subr.bf16.mxu0 0
    %2441 = vmatpush2.bf16.msra.mxu0 0
    %2442 = vmatprep.subr.bf16.mxu0 0
    %2443 = vmatpush2.bf16.msra.mxu0 0
    %2444 = vmatprep.subr.bf16.mxu0 0
    %2445 = vmatpush2.bf16.msra.mxu0 0
    %2446 = vmatprep.mubr.bf16.mxu0 0
    %2447 = vmatmul.mubr.bf16.gmra.mxu0 %v2220
    %v2448 = vpop.f32.mrf.mxu0
    %v2449 = vadd.f32 0.0, %v2448
    %v2450 = vpop.f32.mrf.mxu0
    %v2451 = vadd.f32 0.0, %v2450
    %v2452 = vpop.f32.mrf.mxu0
    %v2453 = vadd.f32 0.0, %v2452
    %v2454 = vpop.f32.mrf.mxu0
    %v2455 = vadd.f32 0.0, %v2454
    %2456 = vmatprep.mubr.bf16.mxu0 0
    %2457 = vmatmul.mubr.bf16.gmra.mxu0 %v2221
    %v2458 = vpop.f32.mrf.mxu0
    %v2459 = vadd.f32 0.0, %v2458
    %v2460 = vpop.f32.mrf.mxu0
    %v2461 = vadd.f32 0.0, %v2460
    %v2462 = vpop.f32.mrf.mxu0
    %v2463 = vadd.f32 0.0, %v2462
    %v2464 = vpop.f32.mrf.mxu0
    %v2465 = vadd.f32 0.0, %v2464
    %2466 = vdwg.mxu0
    %2467 = vmatprep.subr.bf16.mxu0 %v2381
    %2468 = vmatpush1.bf16.msra.mxu0 %v2380
    %2469 = vmatprep.subr.bf16.mxu0 %v2377
    %2470 = vmatpush1.bf16.msra.mxu0 %v2376
    %2471 = vmatprep.subr.bf16.mxu0 %v2373
    %2472 = vmatpush1.bf16.msra.mxu0 %v2372
    %2473 = vmatprep.subr.bf16.mxu0 %v2369
    %2474 = vmatpush1.bf16.msra.mxu0 %v2368
    %2475 = vmatprep.subr.bf16.mxu0 %v2365
    %2476 = vmatpush1.bf16.msra.mxu0 %v2364
    %2477 = vmatprep.subr.bf16.mxu0 %v2361
    %2478 = vmatpush1.bf16.msra.mxu0 %v2360
    %2479 = vmatprep.subr.bf16.mxu0 %v2357
    %2480 = vmatpush1.bf16.msra.mxu0 %v2356
    %2481 = vmatprep.subr.bf16.mxu0 %v2353
    %2482 = vmatpush1.bf16.msra.mxu0 %v2352
    %2483 = vmatprep.subr.bf16.mxu0 0
    %2484 = vmatpush2.bf16.msra.mxu0 0
    %2485 = vmatprep.subr.bf16.mxu0 0
    %2486 = vmatpush2.bf16.msra.mxu0 0
    %2487 = vmatprep.subr.bf16.mxu0 0
    %2488 = vmatpush2.bf16.msra.mxu0 0
    %2489 = vmatprep.subr.bf16.mxu0 0
    %2490 = vmatpush2.bf16.msra.mxu0 0
    %2491 = vmatprep.subr.bf16.mxu0 0
    %2492 = vmatpush2.bf16.msra.mxu0 0
    %2493 = vmatprep.subr.bf16.mxu0 0
    %2494 = vmatpush2.bf16.msra.mxu0 0
    %2495 = vmatprep.subr.bf16.mxu0 0
    %2496 = vmatpush2.bf16.msra.mxu0 0
    %2497 = vmatprep.subr.bf16.mxu0 0
    %2498 = vmatpush2.bf16.msra.mxu0 0
    %2499 = vmatprep.mubr.bf16.mxu0 0
    %2500 = vmatmul.mubr.bf16.gmra.mxu0 %v2220
    %v2501 = vpop.f32.mrf.mxu0
    %v2502 = vadd.f32 0.0, %v2501
    %v2503 = vpop.f32.mrf.mxu0
    %v2504 = vadd.f32 0.0, %v2503
    %v2505 = vpop.f32.mrf.mxu0
    %v2506 = vadd.f32 0.0, %v2505
    %v2507 = vpop.f32.mrf.mxu0
    %v2508 = vadd.f32 0.0, %v2507
    %2509 = vmatprep.mubr.bf16.mxu0 0
    %2510 = vmatmul.mubr.bf16.gmra.mxu0 %v2221
    %v2511 = vpop.f32.mrf.mxu0
    %v2512 = vadd.f32 0.0, %v2511
    %v2513 = vpop.f32.mrf.mxu0
    %v2514 = vadd.f32 0.0, %v2513
    %v2515 = vpop.f32.mrf.mxu0
    %v2516 = vadd.f32 0.0, %v2515
    %v2517 = vpop.f32.mrf.mxu0
    %v2518 = vadd.f32 0.0, %v2517
    %2519 = vdwg.mxu0
    %v2520 = vadd.f32 %v855, %v2449
    %v2521 = vadd.f32 %v857, %v2451
    %v2522 = vadd.f32 %v961, %v2502
    %v2523 = vadd.f32 %v963, %v2504
    %v2524 = vadd.f32 %v859, %v2453
    %v2525 = vadd.f32 %v861, %v2455
    %v2526 = vadd.f32 %v965, %v2506
    %v2527 = vadd.f32 %v967, %v2508
    %v2528 = vadd.f32 %v865, %v2459
    %v2529 = vadd.f32 %v867, %v2461
    %v2530 = vadd.f32 %v971, %v2512
    %v2531 = vadd.f32 %v973, %v2514
    %v2532 = vadd.f32 %v869, %v2463
    %v2533 = vadd.f32 %v871, %v2465
    %v2534 = vadd.f32 %v975, %v2516
    %v2535 = vadd.f32 %v977, %v2518
    %v2536 = vld [vmem:[%s5] sm:$0xf]
    %v2537 = vld [vmem:[%s6] sm:$0xf]
    %v2538 = vadd.f32 %v2520, %v2521
    %v2539 = vadd.f32 %v2538, %v2522
    %v2540 = vadd.f32 %v2539, %v2523
    %2541 = vadd.xlane.f32.xlu0 %v2540
    %v2542 = vpop.xlane.xlu0 %2541
    %v2543 = vadd.f32 %v2524, %v2525
    %v2544 = vadd.f32 %v2543, %v2526
    %v2545 = vadd.f32 %v2544, %v2527
    %2546 = vadd.xlane.f32.xlu0 %v2545
    %v2547 = vpop.xlane.xlu0 %2546
    %v2548 = vadd.f32 %v2528, %v2529
    %v2549 = vadd.f32 %v2548, %v2530
    %v2550 = vadd.f32 %v2549, %v2531
    %2551 = vadd.xlane.f32.xlu0 %v2550
    %v2552 = vpop.xlane.xlu0 %2551
    %v2553 = vadd.f32 %v2532, %v2533
    %v2554 = vadd.f32 %v2553, %v2534
    %v2555 = vadd.f32 %v2554, %v2535
    %2556 = vadd.xlane.f32.xlu0 %v2555
    %v2557 = vpop.xlane.xlu0 %2556
    %v2558 = vrcp.pop 512.0
    %v2559 = vmul.f32 %v2542, %v2558
    %v2560 = vmul.f32 %v2547, %v2558
    %v2561 = vmul.f32 %v2552, %v2558
    %v2562 = vmul.f32 %v2557, %v2558
    %v2563 = vsub.f32 %v2520, %v2559
    %v2564 = vsub.f32 %v2521, %v2559
    %v2565 = vsub.f32 %v2522, %v2559
    %v2566 = vsub.f32 %v2523, %v2559
    %v2567 = vsub.f32 %v2524, %v2560
    %v2568 = vsub.f32 %v2525, %v2560
    %v2569 = vsub.f32 %v2526, %v2560
    %v2570 = vsub.f32 %v2527, %v2560
    %v2571 = vsub.f32 %v2528, %v2561
    %v2572 = vsub.f32 %v2529, %v2561
    %v2573 = vsub.f32 %v2530, %v2561
    %v2574 = vsub.f32 %v2531, %v2561
    %v2575 = vsub.f32 %v2532, %v2562
    %v2576 = vsub.f32 %v2533, %v2562
    %v2577 = vsub.f32 %v2534, %v2562
    %v2578 = vsub.f32 %v2535, %v2562
    %v2579 = vmul.f32 %v2563, %v2563
    %v2580 = vmul.f32 %v2564, %v2564
    %v2581 = vmul.f32 %v2565, %v2565
    %v2582 = vmul.f32 %v2566, %v2566
    %v2583 = vmul.f32 %v2567, %v2567
    %v2584 = vmul.f32 %v2568, %v2568
    %v2585 = vmul.f32 %v2569, %v2569
    %v2586 = vmul.f32 %v2570, %v2570
    %v2587 = vmul.f32 %v2571, %v2571
    %v2588 = vmul.f32 %v2572, %v2572
    %v2589 = vmul.f32 %v2573, %v2573
    %v2590 = vmul.f32 %v2574, %v2574
    %v2591 = vmul.f32 %v2575, %v2575
    %v2592 = vmul.f32 %v2576, %v2576
    %v2593 = vmul.f32 %v2577, %v2577
    %v2594 = vmul.f32 %v2578, %v2578
    %v2595 = vadd.f32 %v2579, %v2580
    %v2596 = vadd.f32 %v2595, %v2581
    %v2597 = vadd.f32 %v2596, %v2582
    %2598 = vadd.xlane.f32.xlu0 %v2597
    %v2599 = vpop.xlane.xlu0 %2598
    %v2600 = vadd.f32 %v2583, %v2584
    %v2601 = vadd.f32 %v2600, %v2585
    %v2602 = vadd.f32 %v2601, %v2586
    %2603 = vadd.xlane.f32.xlu0 %v2602
    %v2604 = vpop.xlane.xlu0 %2603
    %v2605 = vadd.f32 %v2587, %v2588
    %v2606 = vadd.f32 %v2605, %v2589
    %v2607 = vadd.f32 %v2606, %v2590
    %2608 = vadd.xlane.f32.xlu0 %v2607
    %v2609 = vpop.xlane.xlu0 %2608
    %v2610 = vadd.f32 %v2591, %v2592
    %v2611 = vadd.f32 %v2610, %v2593
    %v2612 = vadd.f32 %v2611, %v2594
    %2613 = vadd.xlane.f32.xlu0 %v2612
    %v2614 = vpop.xlane.xlu0 %2613
    %v2615 = vmul.f32 %v2599, %v2558
    %v2616 = vmul.f32 %v2604, %v2558
    %v2617 = vmul.f32 %v2609, %v2558
    %v2618 = vmul.f32 %v2614, %v2558
    %v2619 = vadd.f32 %v2615, 1e-06
    %v2620 = vadd.f32 %v2616, 1e-06
    %v2621 = vadd.f32 %v2617, 1e-06
    %v2622 = vadd.f32 %v2618, 1e-06
    %v2623 = vrsqrt.pop %v2619
    %v2624 = vrsqrt.pop %v2620
    %v2625 = vrsqrt.pop %v2621
    %v2626 = vrsqrt.pop %v2622
    %v2627 = vmul.f32 %v2563, %v2623
    %v2628 = vmul.f32 %v2564, %v2623
    %v2629 = vmul.f32 %v2565, %v2623
    %v2630 = vmul.f32 %v2566, %v2623
    %v2631 = vmul.f32 %v2567, %v2624
    %v2632 = vmul.f32 %v2568, %v2624
    %v2633 = vmul.f32 %v2569, %v2624
    %v2634 = vmul.f32 %v2570, %v2624
    %v2635 = vmul.f32 %v2571, %v2625
    %v2636 = vmul.f32 %v2572, %v2625
    %v2637 = vmul.f32 %v2573, %v2625
    %v2638 = vmul.f32 %v2574, %v2625
    %v2639 = vmul.f32 %v2575, %v2626
    %v2640 = vmul.f32 %v2576, %v2626
    %v2641 = vmul.f32 %v2577, %v2626
    %v2642 = vmul.f32 %v2578, %v2626
    %v2644 = vlaneseq
    %v2645 = vshrl.u32 %v2644, 7
    %v2646 = vsub.s32 0, %v2645
    %v2647 = vrot.slane %v2536, %v2646
    %v2648 = vlaneseq
    %v2649 = vshrl.u32 %v2648, 7
    %v2650 = vsub.s32 1, %v2649
    %v2651 = vrot.slane %v2536, %v2650
    %v2652 = vlaneseq
    %v2653 = vshrl.u32 %v2652, 7
    %v2654 = vsub.s32 2, %v2653
    %v2655 = vrot.slane %v2536, %v2654
    %v2656 = vlaneseq
    %v2657 = vshrl.u32 %v2656, 7
    %v2658 = vsub.s32 3, %v2657
    %v2659 = vrot.slane %v2536, %v2658
    %v2664 = vmul.f32 %v2627, %v2647
    %v2665 = vmul.f32 %v2628, %v2651
    %v2666 = vmul.f32 %v2629, %v2655
    %v2667 = vmul.f32 %v2630, %v2659
    %v2668 = vmul.f32 %v2631, %v2647
    %v2669 = vmul.f32 %v2632, %v2651
    %v2670 = vmul.f32 %v2633, %v2655
    %v2671 = vmul.f32 %v2634, %v2659
    %v2672 = vmul.f32 %v2635, %v2647
    %v2673 = vmul.f32 %v2636, %v2651
    %v2674 = vmul.f32 %v2637, %v2655
    %v2675 = vmul.f32 %v2638, %v2659
    %v2676 = vmul.f32 %v2639, %v2647
    %v2677 = vmul.f32 %v2640, %v2651
    %v2678 = vmul.f32 %v2641, %v2655
    %v2679 = vmul.f32 %v2642, %v2659
    %v2681 = vlaneseq
    %v2682 = vshrl.u32 %v2681, 7
    %v2683 = vsub.s32 0, %v2682
    %v2684 = vrot.slane %v2537, %v2683
    %v2685 = vlaneseq
    %v2686 = vshrl.u32 %v2685, 7
    %v2687 = vsub.s32 1, %v2686
    %v2688 = vrot.slane %v2537, %v2687
    %v2689 = vlaneseq
    %v2690 = vshrl.u32 %v2689, 7
    %v2691 = vsub.s32 2, %v2690
    %v2692 = vrot.slane %v2537, %v2691
    %v2693 = vlaneseq
    %v2694 = vshrl.u32 %v2693, 7
    %v2695 = vsub.s32 3, %v2694
    %v2696 = vrot.slane %v2537, %v2695
    %v2701 = vadd.f32 %v2664, %v2684
    %v2702 = vadd.f32 %v2665, %v2688
    %v2703 = vadd.f32 %v2666, %v2692
    %v2704 = vadd.f32 %v2667, %v2696
    %v2705 = vadd.f32 %v2668, %v2684
    %v2706 = vadd.f32 %v2669, %v2688
    %v2707 = vadd.f32 %v2670, %v2692
    %v2708 = vadd.f32 %v2671, %v2696
    %v2709 = vadd.f32 %v2672, %v2684
    %v2710 = vadd.f32 %v2673, %v2688
    %v2711 = vadd.f32 %v2674, %v2692
    %v2712 = vadd.f32 %v2675, %v2696
    %v2713 = vadd.f32 %v2676, %v2684
    %v2714 = vadd.f32 %v2677, %v2688
    %v2715 = vadd.f32 %v2678, %v2692
    %v2716 = vadd.f32 %v2679, %v2696
    %v2717 = vpack.c.bf16 %v2705, %v2701
    %v2718 = vpack.c.bf16 %v2706, %v2702
    %v2719 = vpack.c.bf16 %v2707, %v2703
    %v2720 = vpack.c.bf16 %v2708, %v2704
    %v2721 = vpack.c.bf16 %v2713, %v2709
    %v2722 = vpack.c.bf16 %v2714, %v2710
    %v2723 = vpack.c.bf16 %v2715, %v2711
    %v2724 = vpack.c.bf16 %v2716, %v2712
    %v2725 = vld [vmem:[#allocation4] sm:$0xf]
    %v2726 = vld [vmem:[#allocation4 + $0x4] sm:$0xf]
    %v2727 = vld [vmem:[#allocation4 + $0x8] sm:$0xf]
    %v2728 = vld [vmem:[#allocation4 + $0xc] sm:$0xf]
    %v2729 = vld [vmem:[#allocation4 + $0x10] sm:$0xf]
    %v2730 = vld [vmem:[#allocation4 + $0x14] sm:$0xf]
    %v2731 = vld [vmem:[#allocation4 + $0x18] sm:$0xf]
    %v2732 = vld [vmem:[#allocation4 + $0x1c] sm:$0xf]
    %v2733 = vld [vmem:[#allocation4 + $0x20] sm:$0xf]
    %v2734 = vld [vmem:[#allocation4 + $0x24] sm:$0xf]
    %v2735 = vld [vmem:[#allocation4 + $0x28] sm:$0xf]
    %v2736 = vld [vmem:[#allocation4 + $0x2c] sm:$0xf]
    %v2737 = vld [vmem:[#allocation4 + $0x30] sm:$0xf]
    %v2738 = vld [vmem:[#allocation4 + $0x34] sm:$0xf]
    %v2739 = vld [vmem:[#allocation4 + $0x38] sm:$0xf]
    %v2740 = vld [vmem:[#allocation4 + $0x3c] sm:$0xf]
    %v2741 = vld [vmem:[#allocation4 + $0x40] sm:$0xf]
    %v2742 = vld [vmem:[#allocation4 + $0x44] sm:$0xf]
    %v2743 = vld [vmem:[#allocation4 + $0x48] sm:$0xf]
    %v2744 = vld [vmem:[#allocation4 + $0x4c] sm:$0xf]
    %v2745 = vld [vmem:[#allocation4 + $0x50] sm:$0xf]
    %v2746 = vld [vmem:[#allocation4 + $0x54] sm:$0xf]
    %v2747 = vld [vmem:[#allocation4 + $0x58] sm:$0xf]
    %v2748 = vld [vmem:[#allocation4 + $0x5c] sm:$0xf]
    %v2749 = vld [vmem:[#allocation4 + $0x60] sm:$0xf]
    %v2750 = vld [vmem:[#allocation4 + $0x64] sm:$0xf]
    %v2751 = vld [vmem:[#allocation4 + $0x68] sm:$0xf]
    %v2752 = vld [vmem:[#allocation4 + $0x6c] sm:$0xf]
    %v2753 = vld [vmem:[#allocation4 + $0x70] sm:$0xf]
    %v2754 = vld [vmem:[#allocation4 + $0x74] sm:$0xf]
    %v2755 = vld [vmem:[#allocation4 + $0x78] sm:$0xf]
    %v2756 = vld [vmem:[#allocation4 + $0x7c] sm:$0xf]
    %v2757 = vld [vmem:[#allocation4 + $0x80] sm:$0xf]
    %v2758 = vld [vmem:[#allocation4 + $0x84] sm:$0xf]
    %v2759 = vld [vmem:[#allocation4 + $0x88] sm:$0xf]
    %v2760 = vld [vmem:[#allocation4 + $0x8c] sm:$0xf]
    %v2761 = vld [vmem:[#allocation4 + $0x90] sm:$0xf]
    %v2762 = vld [vmem:[#allocation4 + $0x94] sm:$0xf]
    %v2763 = vld [vmem:[#allocation4 + $0x98] sm:$0xf]
    %v2764 = vld [vmem:[#allocation4 + $0x9c] sm:$0xf]
    %v2765 = vld [vmem:[#allocation4 + $0xa0] sm:$0xf]
    %v2766 = vld [vmem:[#allocation4 + $0xa4] sm:$0xf]
    %v2767 = vld [vmem:[#allocation4 + $0xa8] sm:$0xf]
    %v2768 = vld [vmem:[#allocation4 + $0xac] sm:$0xf]
    %v2769 = vld [vmem:[#allocation4 + $0xb0] sm:$0xf]
    %v2770 = vld [vmem:[#allocation4 + $0xb4] sm:$0xf]
    %v2771 = vld [vmem:[#allocation4 + $0xb8] sm:$0xf]
    %v2772 = vld [vmem:[#allocation4 + $0xbc] sm:$0xf]
    %v2773 = vld [vmem:[#allocation4 + $0xc0] sm:$0xf]
    %v2774 = vld [vmem:[#allocation4 + $0xc4] sm:$0xf]
    %v2775 = vld [vmem:[#allocation4 + $0xc8] sm:$0xf]
    %v2776 = vld [vmem:[#allocation4 + $0xcc] sm:$0xf]
    %v2777 = vld [vmem:[#allocation4 + $0xd0] sm:$0xf]
    %v2778 = vld [vmem:[#allocation4 + $0xd4] sm:$0xf]
    %v2779 = vld [vmem:[#allocation4 + $0xd8] sm:$0xf]
    %v2780 = vld [vmem:[#allocation4 + $0xdc] sm:$0xf]
    %v2781 = vld [vmem:[#allocation4 + $0xe0] sm:$0xf]
    %v2782 = vld [vmem:[#allocation4 + $0xe4] sm:$0xf]
    %v2783 = vld [vmem:[#allocation4 + $0xe8] sm:$0xf]
    %v2784 = vld [vmem:[#allocation4 + $0xec] sm:$0xf]
    %v2785 = vld [vmem:[#allocation4 + $0xf0] sm:$0xf]
    %v2786 = vld [vmem:[#allocation4 + $0xf4] sm:$0xf]
    %v2787 = vld [vmem:[#allocation4 + $0xf8] sm:$0xf]
    %v2788 = vld [vmem:[#allocation4 + $0xfc] sm:$0xf]
    %v2789 = vld [vmem:[%s3] sm:$0x1]
    %v2791 = vlaneseq
    %v2792 = vshrl.u32 %v2791, 7
    %v2793 = vsub.s32 0, %v2792
    %v2794 = vrot.slane %v2789, %v2793
    %v2860 = vunpack.c.l.b16 %v2725
    %v2861 = vunpack.c.l.b16 %v2726
    %v2862 = vunpack.c.l.b16 %v2727
    %v2863 = vunpack.c.l.b16 %v2728
    %v2864 = vunpack.c.l.b16 %v2729
    %v2865 = vunpack.c.l.b16 %v2730
    %v2866 = vunpack.c.l.b16 %v2731
    %v2867 = vunpack.c.l.b16 %v2732
    %v2868 = vunpack.c.l.b16 %v2733
    %v2869 = vunpack.c.l.b16 %v2734
    %v2870 = vunpack.c.l.b16 %v2735
    %v2871 = vunpack.c.l.b16 %v2736
    %v2872 = vunpack.c.l.b16 %v2737
    %v2873 = vunpack.c.l.b16 %v2738
    %v2874 = vunpack.c.l.b16 %v2739
    %v2875 = vunpack.c.l.b16 %v2740
    %v2876 = vunpack.c.l.b16 %v2741
    %v2877 = vunpack.c.l.b16 %v2742
    %v2878 = vunpack.c.l.b16 %v2743
    %v2879 = vunpack.c.l.b16 %v2744
    %v2880 = vunpack.c.l.b16 %v2745
    %v2881 = vunpack.c.l.b16 %v2746
    %v2882 = vunpack.c.l.b16 %v2747
    %v2883 = vunpack.c.l.b16 %v2748
    %v2884 = vunpack.c.l.b16 %v2749
    %v2885 = vunpack.c.l.b16 %v2750
    %v2886 = vunpack.c.l.b16 %v2751
    %v2887 = vunpack.c.l.b16 %v2752
    %v2888 = vunpack.c.l.b16 %v2753
    %v2889 = vunpack.c.l.b16 %v2754
    %v2890 = vunpack.c.l.b16 %v2755
    %v2891 = vunpack.c.l.b16 %v2756
    %v2892 = vunpack.c.l.b16 %v2757
    %v2893 = vunpack.c.l.b16 %v2758
    %v2894 = vunpack.c.l.b16 %v2759
    %v2895 = vunpack.c.l.b16 %v2760
    %v2896 = vunpack.c.l.b16 %v2761
    %v2897 = vunpack.c.l.b16 %v2762
    %v2898 = vunpack.c.l.b16 %v2763
    %v2899 = vunpack.c.l.b16 %v2764
    %v2900 = vunpack.c.l.b16 %v2765
    %v2901 = vunpack.c.l.b16 %v2766
    %v2902 = vunpack.c.l.b16 %v2767
    %v2903 = vunpack.c.l.b16 %v2768
    %v2904 = vunpack.c.l.b16 %v2769
    %v2905 = vunpack.c.l.b16 %v2770
    %v2906 = vunpack.c.l.b16 %v2771
    %v2907 = vunpack.c.l.b16 %v2772
    %v2908 = vunpack.c.l.b16 %v2773
    %v2909 = vunpack.c.l.b16 %v2774
    %v2910 = vunpack.c.l.b16 %v2775
    %v2911 = vunpack.c.l.b16 %v2776
    %v2912 = vunpack.c.l.b16 %v2777
    %v2913 = vunpack.c.l.b16 %v2778
    %v2914 = vunpack.c.l.b16 %v2779
    %v2915 = vunpack.c.l.b16 %v2780
    %v2916 = vunpack.c.l.b16 %v2781
    %v2917 = vunpack.c.l.b16 %v2782
    %v2918 = vunpack.c.l.b16 %v2783
    %v2919 = vunpack.c.l.b16 %v2784
    %v2920 = vunpack.c.l.b16 %v2785
    %v2921 = vunpack.c.l.b16 %v2786
    %v2922 = vunpack.c.l.b16 %v2787
    %v2923 = vunpack.c.l.b16 %v2788
    %v2924 = vpack.c.b16 %v2861, %v2860
    %v2925 = vpack.c.b16 %v2863, %v2862
    %v2926 = vpack.c.b16 %v2865, %v2864
    %v2927 = vpack.c.b16 %v2867, %v2866
    %v2928 = vpack.c.b16 %v2869, %v2868
    %v2929 = vpack.c.b16 %v2871, %v2870
    %v2930 = vpack.c.b16 %v2873, %v2872
    %v2931 = vpack.c.b16 %v2875, %v2874
    %v2932 = vpack.c.b16 %v2877, %v2876
    %v2933 = vpack.c.b16 %v2879, %v2878
    %v2934 = vpack.c.b16 %v2881, %v2880
    %v2935 = vpack.c.b16 %v2883, %v2882
    %v2936 = vpack.c.b16 %v2885, %v2884
    %v2937 = vpack.c.b16 %v2887, %v2886
    %v2938 = vpack.c.b16 %v2889, %v2888
    %v2939 = vpack.c.b16 %v2891, %v2890
    %v2940 = vpack.c.b16 %v2893, %v2892
    %v2941 = vpack.c.b16 %v2895, %v2894
    %v2942 = vpack.c.b16 %v2897, %v2896
    %v2943 = vpack.c.b16 %v2899, %v2898
    %v2944 = vpack.c.b16 %v2901, %v2900
    %v2945 = vpack.c.b16 %v2903, %v2902
    %v2946 = vpack.c.b16 %v2905, %v2904
    %v2947 = vpack.c.b16 %v2907, %v2906
    %v2948 = vpack.c.b16 %v2909, %v2908
    %v2949 = vpack.c.b16 %v2911, %v2910
    %v2950 = vpack.c.b16 %v2913, %v2912
    %v2951 = vpack.c.b16 %v2915, %v2914
    %v2952 = vpack.c.b16 %v2917, %v2916
    %v2953 = vpack.c.b16 %v2919, %v2918
    %v2954 = vpack.c.b16 %v2921, %v2920
    %v2955 = vpack.c.b16 %v2923, %v2922
    %2988 = vmatprep.subr.bf16.mxu0 0
    %2989 = vmatpush1.bf16.msra.mxu0 %v2931
    %2990 = vmatprep.subr.bf16.mxu0 0
    %2991 = vmatpush1.bf16.msra.mxu0 %v2930
    %2992 = vmatprep.subr.bf16.mxu0 0
    %2993 = vmatpush1.bf16.msra.mxu0 %v2929
    %2994 = vmatprep.subr.bf16.mxu0 0
    %2995 = vmatpush1.bf16.msra.mxu0 %v2928
    %2996 = vmatprep.subr.bf16.mxu0 0
    %2997 = vmatpush1.bf16.msra.mxu0 %v2927
    %2998 = vmatprep.subr.bf16.mxu0 0
    %2999 = vmatpush1.bf16.msra.mxu0 %v2926
    %3000 = vmatprep.subr.bf16.mxu0 0
    %3001 = vmatpush1.bf16.msra.mxu0 %v2925
    %3002 = vmatprep.subr.bf16.mxu0 0
    %3003 = vmatpush1.bf16.msra.mxu0 %v2924
    %3004 = vmatprep.subr.bf16.mxu0 0
    %3005 = vmatpush2.bf16.msra.mxu0 %v2939
    %3006 = vmatprep.subr.bf16.mxu0 0
    %3007 = vmatpush2.bf16.msra.mxu0 %v2938
    %3008 = vmatprep.subr.bf16.mxu0 0
    %3009 = vmatpush2.bf16.msra.mxu0 %v2937
    %3010 = vmatprep.subr.bf16.mxu0 0
    %3011 = vmatpush2.bf16.msra.mxu0 %v2936
    %3012 = vmatprep.subr.bf16.mxu0 0
    %3013 = vmatpush2.bf16.msra.mxu0 %v2935
    %3014 = vmatprep.subr.bf16.mxu0 0
    %3015 = vmatpush2.bf16.msra.mxu0 %v2934
    %3016 = vmatprep.subr.bf16.mxu0 0
    %3017 = vmatpush2.bf16.msra.mxu0 %v2933
    %3018 = vmatprep.subr.bf16.mxu0 0
    %3019 = vmatpush2.bf16.msra.mxu0 %v2932
    %3020 = vmatprep.mubr.bf16.mxu0 %v2718
    %3021 = vmatmul.mubr.bf16.gmra.mxu0 %v2717
    %v3022 = vpop.f32.mrf.mxu0
    %v3023 = vadd.f32 %v2794, %v3022
    %v3024 = vpop.f32.mrf.mxu0
    %v3025 = vpop.f32.mrf.mxu0
    %v3026 = vadd.f32 %v2794, %v3025
    %v3027 = vpop.f32.mrf.mxu0
    %3028 = vmatprep.mubr.bf16.mxu0 %v2722
    %3029 = vmatmul.mubr.bf16.gmra.mxu0 %v2721
    %v3030 = vpop.f32.mrf.mxu0
    %v3031 = vadd.f32 %v2794, %v3030
    %v3032 = vpop.f32.mrf.mxu0
    %v3033 = vpop.f32.mrf.mxu0
    %v3034 = vadd.f32 %v2794, %v3033
    %v3035 = vpop.f32.mrf.mxu0
    %3036 = vdwg.mxu0
    %3037 = vmatprep.subr.bf16.mxu0 0
    %3038 = vmatpush1.bf16.msra.mxu0 %v2947
    %3039 = vmatprep.subr.bf16.mxu0 0
    %3040 = vmatpush1.bf16.msra.mxu0 %v2946
    %3041 = vmatprep.subr.bf16.mxu0 0
    %3042 = vmatpush1.bf16.msra.mxu0 %v2945
    %3043 = vmatprep.subr.bf16.mxu0 0
    %3044 = vmatpush1.bf16.msra.mxu0 %v2944
    %3045 = vmatprep.subr.bf16.mxu0 0
    %3046 = vmatpush1.bf16.msra.mxu0 %v2943
    %3047 = vmatprep.subr.bf16.mxu0 0
    %3048 = vmatpush1.bf16.msra.mxu0 %v2942
    %3049 = vmatprep.subr.bf16.mxu0 0
    %3050 = vmatpush1.bf16.msra.mxu0 %v2941
    %3051 = vmatprep.subr.bf16.mxu0 0
    %3052 = vmatpush1.bf16.msra.mxu0 %v2940
    %3053 = vmatprep.subr.bf16.mxu0 0
    %3054 = vmatpush2.bf16.msra.mxu0 %v2955
    %3055 = vmatprep.subr.bf16.mxu0 0
    %3056 = vmatpush2.bf16.msra.mxu0 %v2954
    %3057 = vmatprep.subr.bf16.mxu0 0
    %3058 = vmatpush2.bf16.msra.mxu0 %v2953
    %3059 = vmatprep.subr.bf16.mxu0 0
    %3060 = vmatpush2.bf16.msra.mxu0 %v2952
    %3061 = vmatprep.subr.bf16.mxu0 0
    %3062 = vmatpush2.bf16.msra.mxu0 %v2951
    %3063 = vmatprep.subr.bf16.mxu0 0
    %3064 = vmatpush2.bf16.msra.mxu0 %v2950
    %3065 = vmatprep.subr.bf16.mxu0 0
    %3066 = vmatpush2.bf16.msra.mxu0 %v2949
    %3067 = vmatprep.subr.bf16.mxu0 0
    %3068 = vmatpush2.bf16.msra.mxu0 %v2948
    %3069 = vmatprep.mubr.bf16.mxu0 %v2720
    %3070 = vmatmul.mubr.bf16.gmra.mxu0 %v2719
    %v3071 = vpop.f32.mrf.mxu0
    %v3072 = vadd.f32 %v3023, %v3071
    %v3073 = vpop.f32.mrf.mxu0
    %v3074 = vpop.f32.mrf.mxu0
    %v3075 = vadd.f32 %v3026, %v3074
    %v3076 = vpop.f32.mrf.mxu0
    %3077 = vmatprep.mubr.bf16.mxu0 %v2724
    %3078 = vmatmul.mubr.bf16.gmra.mxu0 %v2723
    %v3079 = vpop.f32.mrf.mxu0
    %v3080 = vadd.f32 %v3031, %v3079
    %v3081 = vpop.f32.mrf.mxu0
    %v3082 = vpop.f32.mrf.mxu0
    %v3083 = vadd.f32 %v3034, %v3082
    %v3084 = vpop.f32.mrf.mxu0
    %3085 = vdwg.mxu0
    %v3086 = vmax.f32 %v3072, 0.0
    %v3087 = vmax.f32 %v3075, 0.0
    %v3088 = vmax.f32 %v3080, 0.0
    %v3089 = vmax.f32 %v3083, 0.0
    %v3090 = vpack.c.bf16 %v3087, %v3086
    %v3091 = vpack.c.bf16 %v3089, %v3088
    %v3092 = vld [vmem:[#allocation5] sm:$0xff]
    %v3093 = vld [vmem:[#allocation5 + $0x8] sm:$0xff]
    %v3094 = vld [vmem:[#allocation5 + $0x10] sm:$0xff]
    %v3095 = vld [vmem:[#allocation5 + $0x18] sm:$0xff]
    %v3096 = vld [vmem:[#allocation5 + $0x20] sm:$0xff]
    %v3097 = vld [vmem:[#allocation5 + $0x28] sm:$0xff]
    %v3098 = vld [vmem:[#allocation5 + $0x30] sm:$0xff]
    %v3099 = vld [vmem:[#allocation5 + $0x38] sm:$0xff]
    %v3100 = vld [vmem:[#allocation5 + $0x40] sm:$0xff]
    %v3101 = vld [vmem:[#allocation5 + $0x48] sm:$0xff]
    %v3102 = vld [vmem:[#allocation5 + $0x50] sm:$0xff]
    %v3103 = vld [vmem:[#allocation5 + $0x58] sm:$0xff]
    %v3104 = vld [vmem:[#allocation5 + $0x60] sm:$0xff]
    %v3105 = vld [vmem:[#allocation5 + $0x68] sm:$0xff]
    %v3106 = vld [vmem:[#allocation5 + $0x70] sm:$0xff]
    %v3107 = vld [vmem:[#allocation5 + $0x78] sm:$0xff]
    %v3108 = vld [vmem:[#allocation5 + $0x80] sm:$0xff]
    %v3109 = vld [vmem:[#allocation5 + $0x88] sm:$0xff]
    %v3110 = vld [vmem:[#allocation5 + $0x90] sm:$0xff]
    %v3111 = vld [vmem:[#allocation5 + $0x98] sm:$0xff]
    %v3112 = vld [vmem:[#allocation5 + $0xa0] sm:$0xff]
    %v3113 = vld [vmem:[#allocation5 + $0xa8] sm:$0xff]
    %v3114 = vld [vmem:[#allocation5 + $0xb0] sm:$0xff]
    %v3115 = vld [vmem:[#allocation5 + $0xb8] sm:$0xff]
    %v3116 = vld [vmem:[#allocation5 + $0xc0] sm:$0xff]
    %v3117 = vld [vmem:[#allocation5 + $0xc8] sm:$0xff]
    %v3118 = vld [vmem:[#allocation5 + $0xd0] sm:$0xff]
    %v3119 = vld [vmem:[#allocation5 + $0xd8] sm:$0xff]
    %v3120 = vld [vmem:[#allocation5 + $0xe0] sm:$0xff]
    %v3121 = vld [vmem:[#allocation5 + $0xe8] sm:$0xff]
    %v3122 = vld [vmem:[#allocation5 + $0xf0] sm:$0xff]
    %v3123 = vld [vmem:[#allocation5 + $0xf8] sm:$0xff]
    %v3124 = vld [vmem:[%s4] sm:$0xf]
    %v3126 = vlaneseq
    %v3127 = vshrl.u32 %v3126, 7
    %v3128 = vsub.s32 0, %v3127
    %v3129 = vrot.slane %v3124, %v3128
    %v3130 = vlaneseq
    %v3131 = vshrl.u32 %v3130, 7
    %v3132 = vsub.s32 1, %v3131
    %v3133 = vrot.slane %v3124, %v3132
    %v3134 = vlaneseq
    %v3135 = vshrl.u32 %v3134, 7
    %v3136 = vsub.s32 2, %v3135
    %v3137 = vrot.slane %v3124, %v3136
    %v3138 = vlaneseq
    %v3139 = vshrl.u32 %v3138, 7
    %v3140 = vsub.s32 3, %v3139
    %v3141 = vrot.slane %v3124, %v3140
    %v3178 = vunpack.c.l.b16 %v3092
    %v3179 = vunpack.c.h.b16 %v3092
    %v3180 = vunpack.c.l.b16 %v3093
    %v3181 = vunpack.c.h.b16 %v3093
    %v3182 = vunpack.c.l.b16 %v3094
    %v3183 = vunpack.c.h.b16 %v3094
    %v3184 = vunpack.c.l.b16 %v3095
    %v3185 = vunpack.c.h.b16 %v3095
    %v3186 = vunpack.c.l.b16 %v3096
    %v3187 = vunpack.c.h.b16 %v3096
    %v3188 = vunpack.c.l.b16 %v3097
    %v3189 = vunpack.c.h.b16 %v3097
    %v3190 = vunpack.c.l.b16 %v3098
    %v3191 = vunpack.c.h.b16 %v3098
    %v3192 = vunpack.c.l.b16 %v3099
    %v3193 = vunpack.c.h.b16 %v3099
    %v3194 = vunpack.c.l.b16 %v3100
    %v3195 = vunpack.c.h.b16 %v3100
    %v3196 = vunpack.c.l.b16 %v3101
    %v3197 = vunpack.c.h.b16 %v3101
    %v3198 = vunpack.c.l.b16 %v3102
    %v3199 = vunpack.c.h.b16 %v3102
    %v3200 = vunpack.c.l.b16 %v3103
    %v3201 = vunpack.c.h.b16 %v3103
    %v3202 = vunpack.c.l.b16 %v3104
    %v3203 = vunpack.c.h.b16 %v3104
    %v3204 = vunpack.c.l.b16 %v3105
    %v3205 = vunpack.c.h.b16 %v3105
    %v3206 = vunpack.c.l.b16 %v3106
    %v3207 = vunpack.c.h.b16 %v3106
    %v3208 = vunpack.c.l.b16 %v3107
    %v3209 = vunpack.c.h.b16 %v3107
    %v3210 = vunpack.c.l.b16 %v3108
    %v3211 = vunpack.c.h.b16 %v3108
    %v3212 = vunpack.c.l.b16 %v3109
    %v3213 = vunpack.c.h.b16 %v3109
    %v3214 = vunpack.c.l.b16 %v3110
    %v3215 = vunpack.c.h.b16 %v3110
    %v3216 = vunpack.c.l.b16 %v3111
    %v3217 = vunpack.c.h.b16 %v3111
    %v3218 = vunpack.c.l.b16 %v3112
    %v3219 = vunpack.c.h.b16 %v3112
    %v3220 = vunpack.c.l.b16 %v3113
    %v3221 = vunpack.c.h.b16 %v3113
    %v3222 = vunpack.c.l.b16 %v3114
    %v3223 = vunpack.c.h.b16 %v3114
    %v3224 = vunpack.c.l.b16 %v3115
    %v3225 = vunpack.c.h.b16 %v3115
    %v3226 = vunpack.c.l.b16 %v3116
    %v3227 = vunpack.c.h.b16 %v3116
    %v3228 = vunpack.c.l.b16 %v3117
    %v3229 = vunpack.c.h.b16 %v3117
    %v3230 = vunpack.c.l.b16 %v3118
    %v3231 = vunpack.c.h.b16 %v3118
    %v3232 = vunpack.c.l.b16 %v3119
    %v3233 = vunpack.c.h.b16 %v3119
    %v3234 = vunpack.c.l.b16 %v3120
    %v3235 = vunpack.c.h.b16 %v3120
    %v3236 = vunpack.c.l.b16 %v3121
    %v3237 = vunpack.c.h.b16 %v3121
    %v3238 = vunpack.c.l.b16 %v3122
    %v3239 = vunpack.c.h.b16 %v3122
    %v3240 = vunpack.c.l.b16 %v3123
    %v3241 = vunpack.c.h.b16 %v3123
    %v3242 = vpack.c.b16 %v3182, %v3178
    %v3243 = vpack.c.b16 %v3183, %v3179
    %v3244 = vpack.c.b16 %v3184, %v3180
    %v3245 = vpack.c.b16 %v3185, %v3181
    %v3246 = vpack.c.b16 %v3190, %v3186
    %v3247 = vpack.c.b16 %v3191, %v3187
    %v3248 = vpack.c.b16 %v3192, %v3188
    %v3249 = vpack.c.b16 %v3193, %v3189
    %v3250 = vpack.c.b16 %v3198, %v3194
    %v3251 = vpack.c.b16 %v3199, %v3195
    %v3252 = vpack.c.b16 %v3200, %v3196
    %v3253 = vpack.c.b16 %v3201, %v3197
    %v3254 = vpack.c.b16 %v3206, %v3202
    %v3255 = vpack.c.b16 %v3207, %v3203
    %v3256 = vpack.c.b16 %v3208, %v3204
    %v3257 = vpack.c.b16 %v3209, %v3205
    %v3258 = vpack.c.b16 %v3214, %v3210
    %v3259 = vpack.c.b16 %v3215, %v3211
    %v3260 = vpack.c.b16 %v3216, %v3212
    %v3261 = vpack.c.b16 %v3217, %v3213
    %v3262 = vpack.c.b16 %v3222, %v3218
    %v3263 = vpack.c.b16 %v3223, %v3219
    %v3264 = vpack.c.b16 %v3224, %v3220
    %v3265 = vpack.c.b16 %v3225, %v3221
    %v3266 = vpack.c.b16 %v3230, %v3226
    %v3267 = vpack.c.b16 %v3231, %v3227
    %v3268 = vpack.c.b16 %v3232, %v3228
    %v3269 = vpack.c.b16 %v3233, %v3229
    %v3270 = vpack.c.b16 %v3238, %v3234
    %v3271 = vpack.c.b16 %v3239, %v3235
    %v3272 = vpack.c.b16 %v3240, %v3236
    %v3273 = vpack.c.b16 %v3241, %v3237
    %3306 = vmatprep.subr.bf16.mxu0 %v3271
    %3307 = vmatpush1.bf16.msra.mxu0 %v3270
    %3308 = vmatprep.subr.bf16.mxu0 %v3267
    %3309 = vmatpush1.bf16.msra.mxu0 %v3266
    %3310 = vmatprep.subr.bf16.mxu0 %v3263
    %3311 = vmatpush1.bf16.msra.mxu0 %v3262
    %3312 = vmatprep.subr.bf16.mxu0 %v3259
    %3313 = vmatpush1.bf16.msra.mxu0 %v3258
    %3314 = vmatprep.subr.bf16.mxu0 %v3255
    %3315 = vmatpush1.bf16.msra.mxu0 %v3254
    %3316 = vmatprep.subr.bf16.mxu0 %v3251
    %3317 = vmatpush1.bf16.msra.mxu0 %v3250
    %3318 = vmatprep.subr.bf16.mxu0 %v3247
    %3319 = vmatpush1.bf16.msra.mxu0 %v3246
    %3320 = vmatprep.subr.bf16.mxu0 %v3243
    %3321 = vmatpush1.bf16.msra.mxu0 %v3242
    %3322 = vmatprep.subr.bf16.mxu0 0
    %3323 = vmatpush2.bf16.msra.mxu0 0
    %3324 = vmatprep.subr.bf16.mxu0 0
    %3325 = vmatpush2.bf16.msra.mxu0 0
    %3326 = vmatprep.subr.bf16.mxu0 0
    %3327 = vmatpush2.bf16.msra.mxu0 0
    %3328 = vmatprep.subr.bf16.mxu0 0
    %3329 = vmatpush2.bf16.msra.mxu0 0
    %3330 = vmatprep.subr.bf16.mxu0 0
    %3331 = vmatpush2.bf16.msra.mxu0 0
    %3332 = vmatprep.subr.bf16.mxu0 0
    %3333 = vmatpush2.bf16.msra.mxu0 0
    %3334 = vmatprep.subr.bf16.mxu0 0
    %3335 = vmatpush2.bf16.msra.mxu0 0
    %3336 = vmatprep.subr.bf16.mxu0 0
    %3337 = vmatpush2.bf16.msra.mxu0 0
    %3338 = vmatprep.mubr.bf16.mxu0 0
    %3339 = vmatmul.mubr.bf16.gmra.mxu0 %v3090
    %v3340 = vpop.f32.mrf.mxu0
    %v3341 = vadd.f32 %v3129, %v3340
    %v3342 = vpop.f32.mrf.mxu0
    %v3343 = vadd.f32 %v3133, %v3342
    %v3344 = vpop.f32.mrf.mxu0
    %v3345 = vadd.f32 %v3129, %v3344
    %v3346 = vpop.f32.mrf.mxu0
    %v3347 = vadd.f32 %v3133, %v3346
    %3348 = vmatprep.mubr.bf16.mxu0 0
    %3349 = vmatmul.mubr.bf16.gmra.mxu0 %v3091
    %v3350 = vpop.f32.mrf.mxu0
    %v3351 = vadd.f32 %v3129, %v3350
    %v3352 = vpop.f32.mrf.mxu0
    %v3353 = vadd.f32 %v3133, %v3352
    %v3354 = vpop.f32.mrf.mxu0
    %v3355 = vadd.f32 %v3129, %v3354
    %v3356 = vpop.f32.mrf.mxu0
    %v3357 = vadd.f32 %v3133, %v3356
    %3358 = vdwg.mxu0
    %3359 = vmatprep.subr.bf16.mxu0 %v3273
    %3360 = vmatpush1.bf16.msra.mxu0 %v3272
    %3361 = vmatprep.subr.bf16.mxu0 %v3269
    %3362 = vmatpush1.bf16.msra.mxu0 %v3268
    %3363 = vmatprep.subr.bf16.mxu0 %v3265
    %3364 = vmatpush1.bf16.msra.mxu0 %v3264
    %3365 = vmatprep.subr.bf16.mxu0 %v3261
    %3366 = vmatpush1.bf16.msra.mxu0 %v3260
    %3367 = vmatprep.subr.bf16.mxu0 %v3257
    %3368 = vmatpush1.bf16.msra.mxu0 %v3256
    %3369 = vmatprep.subr.bf16.mxu0 %v3253
    %3370 = vmatpush1.bf16.msra.mxu0 %v3252
    %3371 = vmatprep.subr.bf16.mxu0 %v3249
    %3372 = vmatpush1.bf16.msra.mxu0 %v3248
    %3373 = vmatprep.subr.bf16.mxu0 %v3245
    %3374 = vmatpush1.bf16.msra.mxu0 %v3244
    %3375 = vmatprep.subr.bf16.mxu0 0
    %3376 = vmatpush2.bf16.msra.mxu0 0
    %3377 = vmatprep.subr.bf16.mxu0 0
    %3378 = vmatpush2.bf16.msra.mxu0 0
    %3379 = vmatprep.subr.bf16.mxu0 0
    %3380 = vmatpush2.bf16.msra.mxu0 0
    %3381 = vmatprep.subr.bf16.mxu0 0
    %3382 = vmatpush2.bf16.msra.mxu0 0
    %3383 = vmatprep.subr.bf16.mxu0 0
    %3384 = vmatpush2.bf16.msra.mxu0 0
    %3385 = vmatprep.subr.bf16.mxu0 0
    %3386 = vmatpush2.bf16.msra.mxu0 0
    %3387 = vmatprep.subr.bf16.mxu0 0
    %3388 = vmatpush2.bf16.msra.mxu0 0
    %3389 = vmatprep.subr.bf16.mxu0 0
    %3390 = vmatpush2.bf16.msra.mxu0 0
    %3391 = vmatprep.mubr.bf16.mxu0 0
    %3392 = vmatmul.mubr.bf16.gmra.mxu0 %v3090
    %v3393 = vpop.f32.mrf.mxu0
    %v3394 = vadd.f32 %v3137, %v3393
    %v3395 = vpop.f32.mrf.mxu0
    %v3396 = vadd.f32 %v3141, %v3395
    %v3397 = vpop.f32.mrf.mxu0
    %v3398 = vadd.f32 %v3137, %v3397
    %v3399 = vpop.f32.mrf.mxu0
    %v3400 = vadd.f32 %v3141, %v3399
    %3401 = vmatprep.mubr.bf16.mxu0 0
    %3402 = vmatmul.mubr.bf16.gmra.mxu0 %v3091
    %v3403 = vpop.f32.mrf.mxu0
    %v3404 = vadd.f32 %v3137, %v3403
    %v3405 = vpop.f32.mrf.mxu0
    %v3406 = vadd.f32 %v3141, %v3405
    %v3407 = vpop.f32.mrf.mxu0
    %v3408 = vadd.f32 %v3137, %v3407
    %v3409 = vpop.f32.mrf.mxu0
    %v3410 = vadd.f32 %v3141, %v3409
    %3411 = vdwg.mxu0
    %v3412 = vadd.f32 %v3341, %v2701
    %v3413 = vadd.f32 %v3343, %v2702
    %v3414 = vadd.f32 %v3394, %v2703
    %v3415 = vadd.f32 %v3396, %v2704
    %v3416 = vadd.f32 %v3345, %v2705
    %v3417 = vadd.f32 %v3347, %v2706
    %v3418 = vadd.f32 %v3398, %v2707
    %v3419 = vadd.f32 %v3400, %v2708
    %v3420 = vadd.f32 %v3351, %v2709
    %v3421 = vadd.f32 %v3353, %v2710
    %v3422 = vadd.f32 %v3404, %v2711
    %v3423 = vadd.f32 %v3406, %v2712
    %v3424 = vadd.f32 %v3355, %v2713
    %v3425 = vadd.f32 %v3357, %v2714
    %v3426 = vadd.f32 %v3408, %v2715
    %v3427 = vadd.f32 %v3410, %v2716
    %v3428 = vld [vmem:[%s7] sm:$0xf]
    %v3429 = vld [vmem:[%s8] sm:$0xf]
    %v3430 = vadd.f32 %v3412, %v3413
    %v3431 = vadd.f32 %v3430, %v3414
    %v3432 = vadd.f32 %v3431, %v3415
    %3433 = vadd.xlane.f32.xlu0 %v3432
    %v3434 = vpop.xlane.xlu0 %3433
    %v3435 = vadd.f32 %v3416, %v3417
    %v3436 = vadd.f32 %v3435, %v3418
    %v3437 = vadd.f32 %v3436, %v3419
    %3438 = vadd.xlane.f32.xlu0 %v3437
    %v3439 = vpop.xlane.xlu0 %3438
    %v3440 = vadd.f32 %v3420, %v3421
    %v3441 = vadd.f32 %v3440, %v3422
    %v3442 = vadd.f32 %v3441, %v3423
    %3443 = vadd.xlane.f32.xlu0 %v3442
    %v3444 = vpop.xlane.xlu0 %3443
    %v3445 = vadd.f32 %v3424, %v3425
    %v3446 = vadd.f32 %v3445, %v3426
    %v3447 = vadd.f32 %v3446, %v3427
    %3448 = vadd.xlane.f32.xlu0 %v3447
    %v3449 = vpop.xlane.xlu0 %3448
    %v3450 = vmul.f32 %v3434, %v2558
    %v3451 = vmul.f32 %v3439, %v2558
    %v3452 = vmul.f32 %v3444, %v2558
    %v3453 = vmul.f32 %v3449, %v2558
    %v3454 = vsub.f32 %v3412, %v3450
    %v3455 = vsub.f32 %v3413, %v3450
    %v3456 = vsub.f32 %v3414, %v3450
    %v3457 = vsub.f32 %v3415, %v3450
    %v3458 = vsub.f32 %v3416, %v3451
    %v3459 = vsub.f32 %v3417, %v3451
    %v3460 = vsub.f32 %v3418, %v3451
    %v3461 = vsub.f32 %v3419, %v3451
    %v3462 = vsub.f32 %v3420, %v3452
    %v3463 = vsub.f32 %v3421, %v3452
    %v3464 = vsub.f32 %v3422, %v3452
    %v3465 = vsub.f32 %v3423, %v3452
    %v3466 = vsub.f32 %v3424, %v3453
    %v3467 = vsub.f32 %v3425, %v3453
    %v3468 = vsub.f32 %v3426, %v3453
    %v3469 = vsub.f32 %v3427, %v3453
    %v3470 = vmul.f32 %v3454, %v3454
    %v3471 = vmul.f32 %v3455, %v3455
    %v3472 = vmul.f32 %v3456, %v3456
    %v3473 = vmul.f32 %v3457, %v3457
    %v3474 = vmul.f32 %v3458, %v3458
    %v3475 = vmul.f32 %v3459, %v3459
    %v3476 = vmul.f32 %v3460, %v3460
    %v3477 = vmul.f32 %v3461, %v3461
    %v3478 = vmul.f32 %v3462, %v3462
    %v3479 = vmul.f32 %v3463, %v3463
    %v3480 = vmul.f32 %v3464, %v3464
    %v3481 = vmul.f32 %v3465, %v3465
    %v3482 = vmul.f32 %v3466, %v3466
    %v3483 = vmul.f32 %v3467, %v3467
    %v3484 = vmul.f32 %v3468, %v3468
    %v3485 = vmul.f32 %v3469, %v3469
    %v3486 = vadd.f32 %v3470, %v3471
    %v3487 = vadd.f32 %v3486, %v3472
    %v3488 = vadd.f32 %v3487, %v3473
    %3489 = vadd.xlane.f32.xlu0 %v3488
    %v3490 = vpop.xlane.xlu0 %3489
    %v3491 = vadd.f32 %v3474, %v3475
    %v3492 = vadd.f32 %v3491, %v3476
    %v3493 = vadd.f32 %v3492, %v3477
    %3494 = vadd.xlane.f32.xlu0 %v3493
    %v3495 = vpop.xlane.xlu0 %3494
    %v3496 = vadd.f32 %v3478, %v3479
    %v3497 = vadd.f32 %v3496, %v3480
    %v3498 = vadd.f32 %v3497, %v3481
    %3499 = vadd.xlane.f32.xlu0 %v3498
    %v3500 = vpop.xlane.xlu0 %3499
    %v3501 = vadd.f32 %v3482, %v3483
    %v3502 = vadd.f32 %v3501, %v3484
    %v3503 = vadd.f32 %v3502, %v3485
    %3504 = vadd.xlane.f32.xlu0 %v3503
    %v3505 = vpop.xlane.xlu0 %3504
    %v3506 = vmul.f32 %v3490, %v2558
    %v3507 = vmul.f32 %v3495, %v2558
    %v3508 = vmul.f32 %v3500, %v2558
    %v3509 = vmul.f32 %v3505, %v2558
    %v3510 = vadd.f32 %v3506, 1e-06
    %v3511 = vadd.f32 %v3507, 1e-06
    %v3512 = vadd.f32 %v3508, 1e-06
    %v3513 = vadd.f32 %v3509, 1e-06
    %v3514 = vrsqrt.pop %v3510
    %v3515 = vrsqrt.pop %v3511
    %v3516 = vrsqrt.pop %v3512
    %v3517 = vrsqrt.pop %v3513
    %v3518 = vmul.f32 %v3454, %v3514
    %v3519 = vmul.f32 %v3455, %v3514
    %v3520 = vmul.f32 %v3456, %v3514
    %v3521 = vmul.f32 %v3457, %v3514
    %v3522 = vmul.f32 %v3458, %v3515
    %v3523 = vmul.f32 %v3459, %v3515
    %v3524 = vmul.f32 %v3460, %v3515
    %v3525 = vmul.f32 %v3461, %v3515
    %v3526 = vmul.f32 %v3462, %v3516
    %v3527 = vmul.f32 %v3463, %v3516
    %v3528 = vmul.f32 %v3464, %v3516
    %v3529 = vmul.f32 %v3465, %v3516
    %v3530 = vmul.f32 %v3466, %v3517
    %v3531 = vmul.f32 %v3467, %v3517
    %v3532 = vmul.f32 %v3468, %v3517
    %v3533 = vmul.f32 %v3469, %v3517
    %v3535 = vlaneseq
    %v3536 = vshrl.u32 %v3535, 7
    %v3537 = vsub.s32 0, %v3536
    %v3538 = vrot.slane %v3428, %v3537
    %v3539 = vlaneseq
    %v3540 = vshrl.u32 %v3539, 7
    %v3541 = vsub.s32 1, %v3540
    %v3542 = vrot.slane %v3428, %v3541
    %v3543 = vlaneseq
    %v3544 = vshrl.u32 %v3543, 7
    %v3545 = vsub.s32 2, %v3544
    %v3546 = vrot.slane %v3428, %v3545
    %v3547 = vlaneseq
    %v3548 = vshrl.u32 %v3547, 7
    %v3549 = vsub.s32 3, %v3548
    %v3550 = vrot.slane %v3428, %v3549
    %v3555 = vmul.f32 %v3518, %v3538
    %v3556 = vmul.f32 %v3519, %v3542
    %v3557 = vmul.f32 %v3520, %v3546
    %v3558 = vmul.f32 %v3521, %v3550
    %v3559 = vmul.f32 %v3522, %v3538
    %v3560 = vmul.f32 %v3523, %v3542
    %v3561 = vmul.f32 %v3524, %v3546
    %v3562 = vmul.f32 %v3525, %v3550
    %v3563 = vmul.f32 %v3526, %v3538
    %v3564 = vmul.f32 %v3527, %v3542
    %v3565 = vmul.f32 %v3528, %v3546
    %v3566 = vmul.f32 %v3529, %v3550
    %v3567 = vmul.f32 %v3530, %v3538
    %v3568 = vmul.f32 %v3531, %v3542
    %v3569 = vmul.f32 %v3532, %v3546
    %v3570 = vmul.f32 %v3533, %v3550
    %v3572 = vlaneseq
    %v3573 = vshrl.u32 %v3572, 7
    %v3574 = vsub.s32 0, %v3573
    %v3575 = vrot.slane %v3429, %v3574
    %v3576 = vlaneseq
    %v3577 = vshrl.u32 %v3576, 7
    %v3578 = vsub.s32 1, %v3577
    %v3579 = vrot.slane %v3429, %v3578
    %v3580 = vlaneseq
    %v3581 = vshrl.u32 %v3580, 7
    %v3582 = vsub.s32 2, %v3581
    %v3583 = vrot.slane %v3429, %v3582
    %v3584 = vlaneseq
    %v3585 = vshrl.u32 %v3584, 7
    %v3586 = vsub.s32 3, %v3585
    %v3587 = vrot.slane %v3429, %v3586
    %v3592 = vadd.f32 %v3555, %v3575
    %v3593 = vadd.f32 %v3556, %v3579
    %v3594 = vadd.f32 %v3557, %v3583
    %v3595 = vadd.f32 %v3558, %v3587
    %v3596 = vadd.f32 %v3559, %v3575
    %v3597 = vadd.f32 %v3560, %v3579
    %v3598 = vadd.f32 %v3561, %v3583
    %v3599 = vadd.f32 %v3562, %v3587
    %v3600 = vadd.f32 %v3563, %v3575
    %v3601 = vadd.f32 %v3564, %v3579
    %v3602 = vadd.f32 %v3565, %v3583
    %v3603 = vadd.f32 %v3566, %v3587
    %v3604 = vadd.f32 %v3567, %v3575
    %v3605 = vadd.f32 %v3568, %v3579
    %v3606 = vadd.f32 %v3569, %v3583
    %v3607 = vadd.f32 %v3570, %v3587
    %s3608 = sshll.u32 %s980, 4
    %3609 = dma.done %s115, %s3608
    %s3610 = sshll.u32 %s984, 4
    %3611 = dma.done %s129, %s3610
    %s3612 = sshll.u32 %s987, 4
    %3613 = dma.done %s143, %s3612
    %s3614 = sshll.u32 %s984, 4
    %3615 = dma.done %s157, %s3614
    %v3616 = vpack.c.bf16 %v3596, %v3592
    %v3617 = vpack.c.bf16 %v3597, %v3593
    %v3618 = vpack.c.bf16 %v3598, %v3594
    %v3619 = vpack.c.bf16 %v3599, %v3595
    %v3620 = vpack.c.bf16 %v3604, %v3600
    %v3621 = vpack.c.bf16 %v3605, %v3601
    %v3622 = vpack.c.bf16 %v3606, %v3602
    %v3623 = vpack.c.bf16 %v3607, %v3603
    %v3624 = vld [vmem:[%s114] sm:$0xff]
    %v3625 = vld [vmem:[%s114 + $0x8] sm:$0xf]
    %v3626 = vld [vmem:[%s114 + $0xc] sm:$0xff]
    %v3627 = vld [vmem:[%s114 + $0x14] sm:$0xf]
    %v3628 = vld [vmem:[%s114 + $0x18] sm:$0xff]
    %v3629 = vld [vmem:[%s114 + $0x20] sm:$0xf]
    %v3630 = vld [vmem:[%s114 + $0x24] sm:$0xff]
    %v3631 = vld [vmem:[%s114 + $0x2c] sm:$0xf]
    %v3632 = vld [vmem:[%s114 + $0x30] sm:$0xff]
    %v3633 = vld [vmem:[%s114 + $0x38] sm:$0xf]
    %v3634 = vld [vmem:[%s114 + $0x3c] sm:$0xff]
    %v3635 = vld [vmem:[%s114 + $0x44] sm:$0xf]
    %v3636 = vld [vmem:[%s114 + $0x48] sm:$0xff]
    %v3637 = vld [vmem:[%s114 + $0x50] sm:$0xf]
    %v3638 = vld [vmem:[%s114 + $0x54] sm:$0xff]
    %v3639 = vld [vmem:[%s114 + $0x5c] sm:$0xf]
    %v3640 = vld [vmem:[%s114 + $0x60] sm:$0xff]
    %v3641 = vld [vmem:[%s114 + $0x68] sm:$0xf]
    %v3642 = vld [vmem:[%s114 + $0x6c] sm:$0xff]
    %v3643 = vld [vmem:[%s114 + $0x74] sm:$0xf]
    %v3644 = vld [vmem:[%s114 + $0x78] sm:$0xff]
    %v3645 = vld [vmem:[%s114 + $0x80] sm:$0xf]
    %v3646 = vld [vmem:[%s114 + $0x84] sm:$0xff]
    %v3647 = vld [vmem:[%s114 + $0x8c] sm:$0xf]
    %v3648 = vld [vmem:[%s114 + $0x90] sm:$0xff]
    %v3649 = vld [vmem:[%s114 + $0x98] sm:$0xf]
    %v3650 = vld [vmem:[%s114 + $0x9c] sm:$0xff]
    %v3651 = vld [vmem:[%s114 + $0xa4] sm:$0xf]
    %v3652 = vld [vmem:[%s114 + $0xa8] sm:$0xff]
    %v3653 = vld [vmem:[%s114 + $0xb0] sm:$0xf]
    %v3654 = vld [vmem:[%s114 + $0xb4] sm:$0xff]
    %v3655 = vld [vmem:[%s114 + $0xbc] sm:$0xf]
    %v3656 = vld [vmem:[%s114 + $0xc0] sm:$0xff]
    %v3657 = vld [vmem:[%s114 + $0xc8] sm:$0xf]
    %v3658 = vld [vmem:[%s114 + $0xcc] sm:$0xff]
    %v3659 = vld [vmem:[%s114 + $0xd4] sm:$0xf]
    %v3660 = vld [vmem:[%s114 + $0xd8] sm:$0xff]
    %v3661 = vld [vmem:[%s114 + $0xe0] sm:$0xf]
    %v3662 = vld [vmem:[%s114 + $0xe4] sm:$0xff]
    %v3663 = vld [vmem:[%s114 + $0xec] sm:$0xf]
    %v3664 = vld [vmem:[%s114 + $0xf0] sm:$0xff]
    %v3665 = vld [vmem:[%s114 + $0xf8] sm:$0xf]
    %v3666 = vld [vmem:[%s114 + $0xfc] sm:$0xff]
    %v3667 = vld [vmem:[%s114 + $0x104] sm:$0xf]
    %v3668 = vld [vmem:[%s114 + $0x108] sm:$0xff]
    %v3669 = vld [vmem:[%s114 + $0x110] sm:$0xf]
    %v3670 = vld [vmem:[%s114 + $0x114] sm:$0xff]
    %v3671 = vld [vmem:[%s114 + $0x11c] sm:$0xf]
    %v3672 = vld [vmem:[%s114 + $0x120] sm:$0xff]
    %v3673 = vld [vmem:[%s114 + $0x128] sm:$0xf]
    %v3674 = vld [vmem:[%s114 + $0x12c] sm:$0xff]
    %v3675 = vld [vmem:[%s114 + $0x134] sm:$0xf]
    %v3676 = vld [vmem:[%s114 + $0x138] sm:$0xff]
    %v3677 = vld [vmem:[%s114 + $0x140] sm:$0xf]
    %v3678 = vld [vmem:[%s114 + $0x144] sm:$0xff]
    %v3679 = vld [vmem:[%s114 + $0x14c] sm:$0xf]
    %v3680 = vld [vmem:[%s114 + $0x150] sm:$0xff]
    %v3681 = vld [vmem:[%s114 + $0x158] sm:$0xf]
    %v3682 = vld [vmem:[%s114 + $0x15c] sm:$0xff]
    %v3683 = vld [vmem:[%s114 + $0x164] sm:$0xf]
    %v3684 = vld [vmem:[%s114 + $0x168] sm:$0xff]
    %v3685 = vld [vmem:[%s114 + $0x170] sm:$0xf]
    %v3686 = vld [vmem:[%s114 + $0x174] sm:$0xff]
    %v3687 = vld [vmem:[%s114 + $0x17c] sm:$0xf]
    %v3688 = vld [vmem:[%s114 + $0x180] sm:$0xff]
    %v3689 = vld [vmem:[%s114 + $0x188] sm:$0xf]
    %v3690 = vld [vmem:[%s114 + $0x18c] sm:$0xff]
    %v3691 = vld [vmem:[%s114 + $0x194] sm:$0xf]
    %v3692 = vld [vmem:[%s114 + $0x198] sm:$0xff]
    %v3693 = vld [vmem:[%s114 + $0x1a0] sm:$0xf]
    %v3694 = vld [vmem:[%s114 + $0x1a4] sm:$0xff]
    %v3695 = vld [vmem:[%s114 + $0x1ac] sm:$0xf]
    %v3696 = vld [vmem:[%s114 + $0x1b0] sm:$0xff]
    %v3697 = vld [vmem:[%s114 + $0x1b8] sm:$0xf]
    %v3698 = vld [vmem:[%s114 + $0x1bc] sm:$0xff]
    %v3699 = vld [vmem:[%s114 + $0x1c4] sm:$0xf]
    %v3700 = vld [vmem:[%s114 + $0x1c8] sm:$0xff]
    %v3701 = vld [vmem:[%s114 + $0x1d0] sm:$0xf]
    %v3702 = vld [vmem:[%s114 + $0x1d4] sm:$0xff]
    %v3703 = vld [vmem:[%s114 + $0x1dc] sm:$0xf]
    %v3704 = vld [vmem:[%s114 + $0x1e0] sm:$0xff]
    %v3705 = vld [vmem:[%s114 + $0x1e8] sm:$0xf]
    %v3706 = vld [vmem:[%s114 + $0x1ec] sm:$0xff]
    %v3707 = vld [vmem:[%s114 + $0x1f4] sm:$0xf]
    %v3708 = vld [vmem:[%s114 + $0x1f8] sm:$0xff]
    %v3709 = vld [vmem:[%s114 + $0x200] sm:$0xf]
    %v3710 = vld [vmem:[%s114 + $0x204] sm:$0xff]
    %v3711 = vld [vmem:[%s114 + $0x20c] sm:$0xf]
    %v3712 = vld [vmem:[%s114 + $0x210] sm:$0xff]
    %v3713 = vld [vmem:[%s114 + $0x218] sm:$0xf]
    %v3714 = vld [vmem:[%s114 + $0x21c] sm:$0xff]
    %v3715 = vld [vmem:[%s114 + $0x224] sm:$0xf]
    %v3716 = vld [vmem:[%s114 + $0x228] sm:$0xff]
    %v3717 = vld [vmem:[%s114 + $0x230] sm:$0xf]
    %v3718 = vld [vmem:[%s114 + $0x234] sm:$0xff]
    %v3719 = vld [vmem:[%s114 + $0x23c] sm:$0xf]
    %v3720 = vld [vmem:[%s114 + $0x240] sm:$0xff]
    %v3721 = vld [vmem:[%s114 + $0x248] sm:$0xf]
    %v3722 = vld [vmem:[%s114 + $0x24c] sm:$0xff]
    %v3723 = vld [vmem:[%s114 + $0x254] sm:$0xf]
    %v3724 = vld [vmem:[%s114 + $0x258] sm:$0xff]
    %v3725 = vld [vmem:[%s114 + $0x260] sm:$0xf]
    %v3726 = vld [vmem:[%s114 + $0x264] sm:$0xff]
    %v3727 = vld [vmem:[%s114 + $0x26c] sm:$0xf]
    %v3728 = vld [vmem:[%s114 + $0x270] sm:$0xff]
    %v3729 = vld [vmem:[%s114 + $0x278] sm:$0xf]
    %v3730 = vld [vmem:[%s114 + $0x27c] sm:$0xff]
    %v3731 = vld [vmem:[%s114 + $0x284] sm:$0xf]
    %v3732 = vld [vmem:[%s114 + $0x288] sm:$0xff]
    %v3733 = vld [vmem:[%s114 + $0x290] sm:$0xf]
    %v3734 = vld [vmem:[%s114 + $0x294] sm:$0xff]
    %v3735 = vld [vmem:[%s114 + $0x29c] sm:$0xf]
    %v3736 = vld [vmem:[%s114 + $0x2a0] sm:$0xff]
    %v3737 = vld [vmem:[%s114 + $0x2a8] sm:$0xf]
    %v3738 = vld [vmem:[%s114 + $0x2ac] sm:$0xff]
    %v3739 = vld [vmem:[%s114 + $0x2b4] sm:$0xf]
    %v3740 = vld [vmem:[%s114 + $0x2b8] sm:$0xff]
    %v3741 = vld [vmem:[%s114 + $0x2c0] sm:$0xf]
    %v3742 = vld [vmem:[%s114 + $0x2c4] sm:$0xff]
    %v3743 = vld [vmem:[%s114 + $0x2cc] sm:$0xf]
    %v3744 = vld [vmem:[%s114 + $0x2d0] sm:$0xff]
    %v3745 = vld [vmem:[%s114 + $0x2d8] sm:$0xf]
    %v3746 = vld [vmem:[%s114 + $0x2dc] sm:$0xff]
    %v3747 = vld [vmem:[%s114 + $0x2e4] sm:$0xf]
    %v3748 = vld [vmem:[%s114 + $0x2e8] sm:$0xff]
    %v3749 = vld [vmem:[%s114 + $0x2f0] sm:$0xf]
    %v3750 = vld [vmem:[%s114 + $0x2f4] sm:$0xff]
    %v3751 = vld [vmem:[%s114 + $0x2fc] sm:$0xf]
    %v3880 = vunpack.c.l.b16 %v3624
    %v3881 = vunpack.c.h.b16 %v3624
    %v3882 = vunpack.c.l.b16 %v3625
    %v3883 = vunpack.c.l.b16 %v3626
    %v3884 = vunpack.c.h.b16 %v3626
    %v3885 = vunpack.c.l.b16 %v3627
    %v3886 = vunpack.c.l.b16 %v3628
    %v3887 = vunpack.c.h.b16 %v3628
    %v3888 = vunpack.c.l.b16 %v3629
    %v3889 = vunpack.c.l.b16 %v3630
    %v3890 = vunpack.c.h.b16 %v3630
    %v3891 = vunpack.c.l.b16 %v3631
    %v3892 = vunpack.c.l.b16 %v3632
    %v3893 = vunpack.c.h.b16 %v3632
    %v3894 = vunpack.c.l.b16 %v3633
    %v3895 = vunpack.c.l.b16 %v3634
    %v3896 = vunpack.c.h.b16 %v3634
    %v3897 = vunpack.c.l.b16 %v3635
    %v3898 = vunpack.c.l.b16 %v3636
    %v3899 = vunpack.c.h.b16 %v3636
    %v3900 = vunpack.c.l.b16 %v3637
    %v3901 = vunpack.c.l.b16 %v3638
    %v3902 = vunpack.c.h.b16 %v3638
    %v3903 = vunpack.c.l.b16 %v3639
    %v3904 = vunpack.c.l.b16 %v3640
    %v3905 = vunpack.c.h.b16 %v3640
    %v3906 = vunpack.c.l.b16 %v3641
    %v3907 = vunpack.c.l.b16 %v3642
    %v3908 = vunpack.c.h.b16 %v3642
    %v3909 = vunpack.c.l.b16 %v3643
    %v3910 = vunpack.c.l.b16 %v3644
    %v3911 = vunpack.c.h.b16 %v3644
    %v3912 = vunpack.c.l.b16 %v3645
    %v3913 = vunpack.c.l.b16 %v3646
    %v3914 = vunpack.c.h.b16 %v3646
    %v3915 = vunpack.c.l.b16 %v3647
    %v3916 = vunpack.c.l.b16 %v3648
    %v3917 = vunpack.c.h.b16 %v3648
    %v3918 = vunpack.c.l.b16 %v3649
    %v3919 = vunpack.c.l.b16 %v3650
    %v3920 = vunpack.c.h.b16 %v3650
    %v3921 = vunpack.c.l.b16 %v3651
    %v3922 = vunpack.c.l.b16 %v3652
    %v3923 = vunpack.c.h.b16 %v3652
    %v3924 = vunpack.c.l.b16 %v3653
    %v3925 = vunpack.c.l.b16 %v3654
    %v3926 = vunpack.c.h.b16 %v3654
    %v3927 = vunpack.c.l.b16 %v3655
    %v3928 = vunpack.c.l.b16 %v3656
    %v3929 = vunpack.c.h.b16 %v3656
    %v3930 = vunpack.c.l.b16 %v3657
    %v3931 = vunpack.c.l.b16 %v3658
    %v3932 = vunpack.c.h.b16 %v3658
    %v3933 = vunpack.c.l.b16 %v3659
    %v3934 = vunpack.c.l.b16 %v3660
    %v3935 = vunpack.c.h.b16 %v3660
    %v3936 = vunpack.c.l.b16 %v3661
    %v3937 = vunpack.c.l.b16 %v3662
    %v3938 = vunpack.c.h.b16 %v3662
    %v3939 = vunpack.c.l.b16 %v3663
    %v3940 = vunpack.c.l.b16 %v3664
    %v3941 = vunpack.c.h.b16 %v3664
    %v3942 = vunpack.c.l.b16 %v3665
    %v3943 = vunpack.c.l.b16 %v3666
    %v3944 = vunpack.c.h.b16 %v3666
    %v3945 = vunpack.c.l.b16 %v3667
    %v3946 = vunpack.c.l.b16 %v3668
    %v3947 = vunpack.c.h.b16 %v3668
    %v3948 = vunpack.c.l.b16 %v3669
    %v3949 = vunpack.c.l.b16 %v3670
    %v3950 = vunpack.c.h.b16 %v3670
    %v3951 = vunpack.c.l.b16 %v3671
    %v3952 = vunpack.c.l.b16 %v3672
    %v3953 = vunpack.c.h.b16 %v3672
    %v3954 = vunpack.c.l.b16 %v3673
    %v3955 = vunpack.c.l.b16 %v3674
    %v3956 = vunpack.c.h.b16 %v3674
    %v3957 = vunpack.c.l.b16 %v3675
    %v3958 = vunpack.c.l.b16 %v3676
    %v3959 = vunpack.c.h.b16 %v3676
    %v3960 = vunpack.c.l.b16 %v3677
    %v3961 = vunpack.c.l.b16 %v3678
    %v3962 = vunpack.c.h.b16 %v3678
    %v3963 = vunpack.c.l.b16 %v3679
    %v3964 = vunpack.c.l.b16 %v3680
    %v3965 = vunpack.c.h.b16 %v3680
    %v3966 = vunpack.c.l.b16 %v3681
    %v3967 = vunpack.c.l.b16 %v3682
    %v3968 = vunpack.c.h.b16 %v3682
    %v3969 = vunpack.c.l.b16 %v3683
    %v3970 = vunpack.c.l.b16 %v3684
    %v3971 = vunpack.c.h.b16 %v3684
    %v3972 = vunpack.c.l.b16 %v3685
    %v3973 = vunpack.c.l.b16 %v3686
    %v3974 = vunpack.c.h.b16 %v3686
    %v3975 = vunpack.c.l.b16 %v3687
    %v3976 = vunpack.c.l.b16 %v3688
    %v3977 = vunpack.c.h.b16 %v3688
    %v3978 = vunpack.c.l.b16 %v3689
    %v3979 = vunpack.c.l.b16 %v3690
    %v3980 = vunpack.c.h.b16 %v3690
    %v3981 = vunpack.c.l.b16 %v3691
    %v3982 = vunpack.c.l.b16 %v3692
    %v3983 = vunpack.c.h.b16 %v3692
    %v3984 = vunpack.c.l.b16 %v3693
    %v3985 = vunpack.c.l.b16 %v3694
    %v3986 = vunpack.c.h.b16 %v3694
    %v3987 = vunpack.c.l.b16 %v3695
    %v3988 = vunpack.c.l.b16 %v3696
    %v3989 = vunpack.c.h.b16 %v3696
    %v3990 = vunpack.c.l.b16 %v3697
    %v3991 = vunpack.c.l.b16 %v3698
    %v3992 = vunpack.c.h.b16 %v3698
    %v3993 = vunpack.c.l.b16 %v3699
    %v3994 = vunpack.c.l.b16 %v3700
    %v3995 = vunpack.c.h.b16 %v3700
    %v3996 = vunpack.c.l.b16 %v3701
    %v3997 = vunpack.c.l.b16 %v3702
    %v3998 = vunpack.c.h.b16 %v3702
    %v3999 = vunpack.c.l.b16 %v3703
    %v4000 = vunpack.c.l.b16 %v3704
    %v4001 = vunpack.c.h.b16 %v3704
    %v4002 = vunpack.c.l.b16 %v3705
    %v4003 = vunpack.c.l.b16 %v3706
    %v4004 = vunpack.c.h.b16 %v3706
    %v4005 = vunpack.c.l.b16 %v3707
    %v4006 = vunpack.c.l.b16 %v3708
    %v4007 = vunpack.c.h.b16 %v3708
    %v4008 = vunpack.c.l.b16 %v3709
    %v4009 = vunpack.c.l.b16 %v3710
    %v4010 = vunpack.c.h.b16 %v3710
    %v4011 = vunpack.c.l.b16 %v3711
    %v4012 = vunpack.c.l.b16 %v3712
    %v4013 = vunpack.c.h.b16 %v3712
    %v4014 = vunpack.c.l.b16 %v3713
    %v4015 = vunpack.c.l.b16 %v3714
    %v4016 = vunpack.c.h.b16 %v3714
    %v4017 = vunpack.c.l.b16 %v3715
    %v4018 = vunpack.c.l.b16 %v3716
    %v4019 = vunpack.c.h.b16 %v3716
    %v4020 = vunpack.c.l.b16 %v3717
    %v4021 = vunpack.c.l.b16 %v3718
    %v4022 = vunpack.c.h.b16 %v3718
    %v4023 = vunpack.c.l.b16 %v3719
    %v4024 = vunpack.c.l.b16 %v3720
    %v4025 = vunpack.c.h.b16 %v3720
    %v4026 = vunpack.c.l.b16 %v3721
    %v4027 = vunpack.c.l.b16 %v3722
    %v4028 = vunpack.c.h.b16 %v3722
    %v4029 = vunpack.c.l.b16 %v3723
    %v4030 = vunpack.c.l.b16 %v3724
    %v4031 = vunpack.c.h.b16 %v3724
    %v4032 = vunpack.c.l.b16 %v3725
    %v4033 = vunpack.c.l.b16 %v3726
    %v4034 = vunpack.c.h.b16 %v3726
    %v4035 = vunpack.c.l.b16 %v3727
    %v4036 = vunpack.c.l.b16 %v3728
    %v4037 = vunpack.c.h.b16 %v3728
    %v4038 = vunpack.c.l.b16 %v3729
    %v4039 = vunpack.c.l.b16 %v3730
    %v4040 = vunpack.c.h.b16 %v3730
    %v4041 = vunpack.c.l.b16 %v3731
    %v4042 = vunpack.c.l.b16 %v3732
    %v4043 = vunpack.c.h.b16 %v3732
    %v4044 = vunpack.c.l.b16 %v3733
    %v4045 = vunpack.c.l.b16 %v3734
    %v4046 = vunpack.c.h.b16 %v3734
    %v4047 = vunpack.c.l.b16 %v3735
    %v4048 = vunpack.c.l.b16 %v3736
    %v4049 = vunpack.c.h.b16 %v3736
    %v4050 = vunpack.c.l.b16 %v3737
    %v4051 = vunpack.c.l.b16 %v3738
    %v4052 = vunpack.c.h.b16 %v3738
    %v4053 = vunpack.c.l.b16 %v3739
    %v4054 = vunpack.c.l.b16 %v3740
    %v4055 = vunpack.c.h.b16 %v3740
    %v4056 = vunpack.c.l.b16 %v3741
    %v4057 = vunpack.c.l.b16 %v3742
    %v4058 = vunpack.c.h.b16 %v3742
    %v4059 = vunpack.c.l.b16 %v3743
    %v4060 = vunpack.c.l.b16 %v3744
    %v4061 = vunpack.c.h.b16 %v3744
    %v4062 = vunpack.c.l.b16 %v3745
    %v4063 = vunpack.c.l.b16 %v3746
    %v4064 = vunpack.c.h.b16 %v3746
    %v4065 = vunpack.c.l.b16 %v3747
    %v4066 = vunpack.c.l.b16 %v3748
    %v4067 = vunpack.c.h.b16 %v3748
    %v4068 = vunpack.c.l.b16 %v3749
    %v4069 = vunpack.c.l.b16 %v3750
    %v4070 = vunpack.c.h.b16 %v3750
    %v4071 = vunpack.c.l.b16 %v3751
    %v4072 = vpack.c.b16 %v3883, %v3880
    %v4073 = vpack.c.b16 %v3884, %v3881
    %v4074 = vpack.c.b16 %v3885, %v3882
    %v4075 = vpack.c.b16 %v3889, %v3886
    %v4076 = vpack.c.b16 %v3890, %v3887
    %v4077 = vpack.c.b16 %v3891, %v3888
    %v4078 = vpack.c.b16 %v3895, %v3892
    %v4079 = vpack.c.b16 %v3896, %v3893
    %v4080 = vpack.c.b16 %v3897, %v3894
    %v4081 = vpack.c.b16 %v3901, %v3898
    %v4082 = vpack.c.b16 %v3902, %v3899
    %v4083 = vpack.c.b16 %v3903, %v3900
    %v4084 = vpack.c.b16 %v3907, %v3904
    %v4085 = vpack.c.b16 %v3908, %v3905
    %v4086 = vpack.c.b16 %v3909, %v3906
    %v4087 = vpack.c.b16 %v3913, %v3910
    %v4088 = vpack.c.b16 %v3914, %v3911
    %v4089 = vpack.c.b16 %v3915, %v3912
    %v4090 = vpack.c.b16 %v3919, %v3916
    %v4091 = vpack.c.b16 %v3920, %v3917
    %v4092 = vpack.c.b16 %v3921, %v3918
    %v4093 = vpack.c.b16 %v3925, %v3922
    %v4094 = vpack.c.b16 %v3926, %v3923
    %v4095 = vpack.c.b16 %v3927, %v3924
    %v4096 = vpack.c.b16 %v3931, %v3928
    %v4097 = vpack.c.b16 %v3932, %v3929
    %v4098 = vpack.c.b16 %v3933, %v3930
    %v4099 = vpack.c.b16 %v3937, %v3934
    %v4100 = vpack.c.b16 %v3938, %v3935
    %v4101 = vpack.c.b16 %v3939, %v3936
    %v4102 = vpack.c.b16 %v3943, %v3940
    %v4103 = vpack.c.b16 %v3944, %v3941
    %v4104 = vpack.c.b16 %v3945, %v3942
    %v4105 = vpack.c.b16 %v3949, %v3946
    %v4106 = vpack.c.b16 %v3950, %v3947
    %v4107 = vpack.c.b16 %v3951, %v3948
    %v4108 = vpack.c.b16 %v3955, %v3952
    %v4109 = vpack.c.b16 %v3956, %v3953
    %v4110 = vpack.c.b16 %v3957, %v3954
    %v4111 = vpack.c.b16 %v3961, %v3958
    %v4112 = vpack.c.b16 %v3962, %v3959
    %v4113 = vpack.c.b16 %v3963, %v3960
    %v4114 = vpack.c.b16 %v3967, %v3964
    %v4115 = vpack.c.b16 %v3968, %v3965
    %v4116 = vpack.c.b16 %v3969, %v3966
    %v4117 = vpack.c.b16 %v3973, %v3970
    %v4118 = vpack.c.b16 %v3974, %v3971
    %v4119 = vpack.c.b16 %v3975, %v3972
    %v4120 = vpack.c.b16 %v3979, %v3976
    %v4121 = vpack.c.b16 %v3980, %v3977
    %v4122 = vpack.c.b16 %v3981, %v3978
    %v4123 = vpack.c.b16 %v3985, %v3982
    %v4124 = vpack.c.b16 %v3986, %v3983
    %v4125 = vpack.c.b16 %v3987, %v3984
    %v4126 = vpack.c.b16 %v3991, %v3988
    %v4127 = vpack.c.b16 %v3992, %v3989
    %v4128 = vpack.c.b16 %v3993, %v3990
    %v4129 = vpack.c.b16 %v3997, %v3994
    %v4130 = vpack.c.b16 %v3998, %v3995
    %v4131 = vpack.c.b16 %v3999, %v3996
    %v4132 = vpack.c.b16 %v4003, %v4000
    %v4133 = vpack.c.b16 %v4004, %v4001
    %v4134 = vpack.c.b16 %v4005, %v4002
    %v4135 = vpack.c.b16 %v4009, %v4006
    %v4136 = vpack.c.b16 %v4010, %v4007
    %v4137 = vpack.c.b16 %v4011, %v4008
    %v4138 = vpack.c.b16 %v4015, %v4012
    %v4139 = vpack.c.b16 %v4016, %v4013
    %v4140 = vpack.c.b16 %v4017, %v4014
    %v4141 = vpack.c.b16 %v4021, %v4018
    %v4142 = vpack.c.b16 %v4022, %v4019
    %v4143 = vpack.c.b16 %v4023, %v4020
    %v4144 = vpack.c.b16 %v4027, %v4024
    %v4145 = vpack.c.b16 %v4028, %v4025
    %v4146 = vpack.c.b16 %v4029, %v4026
    %v4147 = vpack.c.b16 %v4033, %v4030
    %v4148 = vpack.c.b16 %v4034, %v4031
    %v4149 = vpack.c.b16 %v4035, %v4032
    %v4150 = vpack.c.b16 %v4039, %v4036
    %v4151 = vpack.c.b16 %v4040, %v4037
    %v4152 = vpack.c.b16 %v4041, %v4038
    %v4153 = vpack.c.b16 %v4045, %v4042
    %v4154 = vpack.c.b16 %v4046, %v4043
    %v4155 = vpack.c.b16 %v4047, %v4044
    %v4156 = vpack.c.b16 %v4051, %v4048
    %v4157 = vpack.c.b16 %v4052, %v4049
    %v4158 = vpack.c.b16 %v4053, %v4050
    %v4159 = vpack.c.b16 %v4057, %v4054
    %v4160 = vpack.c.b16 %v4058, %v4055
    %v4161 = vpack.c.b16 %v4059, %v4056
    %v4162 = vpack.c.b16 %v4063, %v4060
    %v4163 = vpack.c.b16 %v4064, %v4061
    %v4164 = vpack.c.b16 %v4065, %v4062
    %v4165 = vpack.c.b16 %v4069, %v4066
    %v4166 = vpack.c.b16 %v4070, %v4067
    %v4167 = vpack.c.b16 %v4071, %v4068
    %4264 = vmatprep.subr.bf16.mxu0 %v4094
    %4265 = vmatpush1.bf16.msra.mxu0 %v4093
    %4266 = vmatprep.subr.bf16.mxu0 %v4091
    %4267 = vmatpush1.bf16.msra.mxu0 %v4090
    %4268 = vmatprep.subr.bf16.mxu0 %v4088
    %4269 = vmatpush1.bf16.msra.mxu0 %v4087
    %4270 = vmatprep.subr.bf16.mxu0 %v4085
    %4271 = vmatpush1.bf16.msra.mxu0 %v4084
    %4272 = vmatprep.subr.bf16.mxu0 %v4082
    %4273 = vmatpush1.bf16.msra.mxu0 %v4081
    %4274 = vmatprep.subr.bf16.mxu0 %v4079
    %4275 = vmatpush1.bf16.msra.mxu0 %v4078
    %4276 = vmatprep.subr.bf16.mxu0 %v4076
    %4277 = vmatpush1.bf16.msra.mxu0 %v4075
    %4278 = vmatprep.subr.bf16.mxu0 %v4073
    %4279 = vmatpush1.bf16.msra.mxu0 %v4072
    %4280 = vmatprep.subr.bf16.mxu0 %v4118
    %4281 = vmatpush2.bf16.msra.mxu0 %v4117
    %4282 = vmatprep.subr.bf16.mxu0 %v4115
    %4283 = vmatpush2.bf16.msra.mxu0 %v4114
    %4284 = vmatprep.subr.bf16.mxu0 %v4112
    %4285 = vmatpush2.bf16.msra.mxu0 %v4111
    %4286 = vmatprep.subr.bf16.mxu0 %v4109
    %4287 = vmatpush2.bf16.msra.mxu0 %v4108
    %4288 = vmatprep.subr.bf16.mxu0 %v4106
    %4289 = vmatpush2.bf16.msra.mxu0 %v4105
    %4290 = vmatprep.subr.bf16.mxu0 %v4103
    %4291 = vmatpush2.bf16.msra.mxu0 %v4102
    %4292 = vmatprep.subr.bf16.mxu0 %v4100
    %4293 = vmatpush2.bf16.msra.mxu0 %v4099
    %4294 = vmatprep.subr.bf16.mxu0 %v4097
    %4295 = vmatpush2.bf16.msra.mxu0 %v4096
    %4296 = vmatprep.mubr.bf16.mxu0 %v3617
    %4297 = vmatmul.mubr.bf16.gmra.mxu0 %v3616
    %v4298 = vpop.f32.mrf.mxu0
    %v4299 = vadd.f32 0.0, %v4298
    %v4300 = vpop.f32.mrf.mxu0
    %v4301 = vadd.f32 0.0, %v4300
    %v4302 = vpop.f32.mrf.mxu0
    %v4303 = vadd.f32 0.0, %v4302
    %v4304 = vpop.f32.mrf.mxu0
    %v4305 = vadd.f32 0.0, %v4304
    %4306 = vmatprep.mubr.bf16.mxu0 %v3621
    %4307 = vmatmul.mubr.bf16.gmra.mxu0 %v3620
    %v4308 = vpop.f32.mrf.mxu0
    %v4309 = vadd.f32 0.0, %v4308
    %v4310 = vpop.f32.mrf.mxu0
    %v4311 = vadd.f32 0.0, %v4310
    %v4312 = vpop.f32.mrf.mxu0
    %v4313 = vadd.f32 0.0, %v4312
    %v4314 = vpop.f32.mrf.mxu0
    %v4315 = vadd.f32 0.0, %v4314
    %4316 = vdwg.mxu0
    %4317 = vmatprep.subr.bf16.mxu0 %v4142
    %4318 = vmatpush1.bf16.msra.mxu0 %v4141
    %4319 = vmatprep.subr.bf16.mxu0 %v4139
    %4320 = vmatpush1.bf16.msra.mxu0 %v4138
    %4321 = vmatprep.subr.bf16.mxu0 %v4136
    %4322 = vmatpush1.bf16.msra.mxu0 %v4135
    %4323 = vmatprep.subr.bf16.mxu0 %v4133
    %4324 = vmatpush1.bf16.msra.mxu0 %v4132
    %4325 = vmatprep.subr.bf16.mxu0 %v4130
    %4326 = vmatpush1.bf16.msra.mxu0 %v4129
    %4327 = vmatprep.subr.bf16.mxu0 %v4127
    %4328 = vmatpush1.bf16.msra.mxu0 %v4126
    %4329 = vmatprep.subr.bf16.mxu0 %v4124
    %4330 = vmatpush1.bf16.msra.mxu0 %v4123
    %4331 = vmatprep.subr.bf16.mxu0 %v4121
    %4332 = vmatpush1.bf16.msra.mxu0 %v4120
    %4333 = vmatprep.subr.bf16.mxu0 %v4166
    %4334 = vmatpush2.bf16.msra.mxu0 %v4165
    %4335 = vmatprep.subr.bf16.mxu0 %v4163
    %4336 = vmatpush2.bf16.msra.mxu0 %v4162
    %4337 = vmatprep.subr.bf16.mxu0 %v4160
    %4338 = vmatpush2.bf16.msra.mxu0 %v4159
    %4339 = vmatprep.subr.bf16.mxu0 %v4157
    %4340 = vmatpush2.bf16.msra.mxu0 %v4156
    %4341 = vmatprep.subr.bf16.mxu0 %v4154
    %4342 = vmatpush2.bf16.msra.mxu0 %v4153
    %4343 = vmatprep.subr.bf16.mxu0 %v4151
    %4344 = vmatpush2.bf16.msra.mxu0 %v4150
    %4345 = vmatprep.subr.bf16.mxu0 %v4148
    %4346 = vmatpush2.bf16.msra.mxu0 %v4147
    %4347 = vmatprep.subr.bf16.mxu0 %v4145
    %4348 = vmatpush2.bf16.msra.mxu0 %v4144
    %4349 = vmatprep.mubr.bf16.mxu0 %v3619
    %4350 = vmatmul.mubr.bf16.gmra.mxu0 %v3618
    %v4351 = vpop.f32.mrf.mxu0
    %v4352 = vadd.f32 %v4299, %v4351
    %v4353 = vpop.f32.mrf.mxu0
    %v4354 = vadd.f32 %v4301, %v4353
    %v4355 = vpop.f32.mrf.mxu0
    %v4356 = vadd.f32 %v4303, %v4355
    %v4357 = vpop.f32.mrf.mxu0
    %v4358 = vadd.f32 %v4305, %v4357
    %4359 = vmatprep.mubr.bf16.mxu0 %v3623
    %4360 = vmatmul.mubr.bf16.gmra.mxu0 %v3622
    %v4361 = vpop.f32.mrf.mxu0
    %v4362 = vadd.f32 %v4309, %v4361
    %v4363 = vpop.f32.mrf.mxu0
    %v4364 = vadd.f32 %v4311, %v4363
    %v4365 = vpop.f32.mrf.mxu0
    %v4366 = vadd.f32 %v4313, %v4365
    %v4367 = vpop.f32.mrf.mxu0
    %v4368 = vadd.f32 %v4315, %v4367
    %4369 = vdwg.mxu0
    %4370 = vmatprep.subr.bf16.mxu0 0
    %4371 = vmatpush1.bf16.msra.mxu0 %v4095
    %4372 = vmatprep.subr.bf16.mxu0 0
    %4373 = vmatpush1.bf16.msra.mxu0 %v4092
    %4374 = vmatprep.subr.bf16.mxu0 0
    %4375 = vmatpush1.bf16.msra.mxu0 %v4089
    %4376 = vmatprep.subr.bf16.mxu0 0
    %4377 = vmatpush1.bf16.msra.mxu0 %v4086
    %4378 = vmatprep.subr.bf16.mxu0 0
    %4379 = vmatpush1.bf16.msra.mxu0 %v4083
    %4380 = vmatprep.subr.bf16.mxu0 0
    %4381 = vmatpush1.bf16.msra.mxu0 %v4080
    %4382 = vmatprep.subr.bf16.mxu0 0
    %4383 = vmatpush1.bf16.msra.mxu0 %v4077
    %4384 = vmatprep.subr.bf16.mxu0 0
    %4385 = vmatpush1.bf16.msra.mxu0 %v4074
    %4386 = vmatprep.subr.bf16.mxu0 0
    %4387 = vmatpush2.bf16.msra.mxu0 %v4119
    %4388 = vmatprep.subr.bf16.mxu0 0
    %4389 = vmatpush2.bf16.msra.mxu0 %v4116
    %4390 = vmatprep.subr.bf16.mxu0 0
    %4391 = vmatpush2.bf16.msra.mxu0 %v4113
    %4392 = vmatprep.subr.bf16.mxu0 0
    %4393 = vmatpush2.bf16.msra.mxu0 %v4110
    %4394 = vmatprep.subr.bf16.mxu0 0
    %4395 = vmatpush2.bf16.msra.mxu0 %v4107
    %4396 = vmatprep.subr.bf16.mxu0 0
    %4397 = vmatpush2.bf16.msra.mxu0 %v4104
    %4398 = vmatprep.subr.bf16.mxu0 0
    %4399 = vmatpush2.bf16.msra.mxu0 %v4101
    %4400 = vmatprep.subr.bf16.mxu0 0
    %4401 = vmatpush2.bf16.msra.mxu0 %v4098
    %4402 = vmatprep.mubr.bf16.mxu0 %v3617
    %4403 = vmatmul.mubr.bf16.gmra.mxu0 %v3616
    %v4404 = vpop.f32.mrf.mxu0
    %v4405 = vadd.f32 0.0, %v4404
    %v4406 = vpop.f32.mrf.mxu0
    %v4407 = vpop.f32.mrf.mxu0
    %v4408 = vadd.f32 0.0, %v4407
    %v4409 = vpop.f32.mrf.mxu0
    %4410 = vmatprep.mubr.bf16.mxu0 %v3621
    %4411 = vmatmul.mubr.bf16.gmra.mxu0 %v3620
    %v4412 = vpop.f32.mrf.mxu0
    %v4413 = vadd.f32 0.0, %v4412
    %v4414 = vpop.f32.mrf.mxu0
    %v4415 = vpop.f32.mrf.mxu0
    %v4416 = vadd.f32 0.0, %v4415
    %v4417 = vpop.f32.mrf.mxu0
    %4418 = vdwg.mxu0
    %4419 = vmatprep.subr.bf16.mxu0 0
    %4420 = vmatpush1.bf16.msra.mxu0 %v4143
    %4421 = vmatprep.subr.bf16.mxu0 0
    %4422 = vmatpush1.bf16.msra.mxu0 %v4140
    %4423 = vmatprep.subr.bf16.mxu0 0
    %4424 = vmatpush1.bf16.msra.mxu0 %v4137
    %4425 = vmatprep.subr.bf16.mxu0 0
    %4426 = vmatpush1.bf16.msra.mxu0 %v4134
    %4427 = vmatprep.subr.bf16.mxu0 0
    %4428 = vmatpush1.bf16.msra.mxu0 %v4131
    %4429 = vmatprep.subr.bf16.mxu0 0
    %4430 = vmatpush1.bf16.msra.mxu0 %v4128
    %4431 = vmatprep.subr.bf16.mxu0 0
    %4432 = vmatpush1.bf16.msra.mxu0 %v4125
    %4433 = vmatprep.subr.bf16.mxu0 0
    %4434 = vmatpush1.bf16.msra.mxu0 %v4122
    %4435 = vmatprep.subr.bf16.mxu0 0
    %4436 = vmatpush2.bf16.msra.mxu0 %v4167
    %4437 = vmatprep.subr.bf16.mxu0 0
    %4438 = vmatpush2.bf16.msra.mxu0 %v4164
    %4439 = vmatprep.subr.bf16.mxu0 0
    %4440 = vmatpush2.bf16.msra.mxu0 %v4161
    %4441 = vmatprep.subr.bf16.mxu0 0
    %4442 = vmatpush2.bf16.msra.mxu0 %v4158
    %4443 = vmatprep.subr.bf16.mxu0 0
    %4444 = vmatpush2.bf16.msra.mxu0 %v4155
    %4445 = vmatprep.subr.bf16.mxu0 0
    %4446 = vmatpush2.bf16.msra.mxu0 %v4152
    %4447 = vmatprep.subr.bf16.mxu0 0
    %4448 = vmatpush2.bf16.msra.mxu0 %v4149
    %4449 = vmatprep.subr.bf16.mxu0 0
    %4450 = vmatpush2.bf16.msra.mxu0 %v4146
    %4451 = vmatprep.mubr.bf16.mxu0 %v3619
    %4452 = vmatmul.mubr.bf16.gmra.mxu0 %v3618
    %v4453 = vpop.f32.mrf.mxu0
    %v4454 = vadd.f32 %v4405, %v4453
    %v4455 = vpop.f32.mrf.mxu0
    %v4456 = vpop.f32.mrf.mxu0
    %v4457 = vadd.f32 %v4408, %v4456
    %v4458 = vpop.f32.mrf.mxu0
    %4459 = vmatprep.mubr.bf16.mxu0 %v3623
    %4460 = vmatmul.mubr.bf16.gmra.mxu0 %v3622
    %v4461 = vpop.f32.mrf.mxu0
    %v4462 = vadd.f32 %v4413, %v4461
    %v4463 = vpop.f32.mrf.mxu0
    %v4464 = vpop.f32.mrf.mxu0
    %v4465 = vadd.f32 %v4416, %v4464
    %v4466 = vpop.f32.mrf.mxu0
    %4467 = vdwg.mxu0
    %v4468 = vmul.f32 %v4352, 0.125
    %v4469 = vmul.f32 %v4356, 0.125
    %v4470 = vmul.f32 %v4362, 0.125
    %v4471 = vmul.f32 %v4366, 0.125
    %v4472 = vpack.c.bf16 %v4469, %v4468
    %v4473 = vpack.c.bf16 %v4471, %v4470
    %v4474 = vpack.c.bf16 %v4358, %v4354
    %v4475 = vpack.c.bf16 %v4368, %v4364
    %v4476 = vpack.c.bf16 %v4457, %v4454
    %v4477 = vpack.c.bf16 %v4465, %v4462
    %v4479 = vsel %vm1854, %v4472, 0
    %v4482 = vsel %vm1854, %v4473, 0
    %v4485 = vsel %vm1854, %v4474, 0
    %v4488 = vsel %vm1854, %v4475, 0
    %4490 = vmatprep.subr.bf16.mxu0 0
    %4491 = vmatpush1.bf16.xpose.msra.mxu0 0
    %4492 = vmatprep.subr.bf16.mxu0 0
    %4493 = vmatpush1.bf16.xpose.msra.mxu0 0
    %4494 = vmatprep.subr.bf16.mxu0 0
    %4495 = vmatpush1.bf16.xpose.msra.mxu0 0
    %4496 = vmatprep.subr.bf16.mxu0 0
    %4497 = vmatpush1.bf16.xpose.msra.mxu0 0
    %4498 = vmatprep.subr.bf16.mxu0 0
    %4499 = vmatpush1.bf16.xpose.msra.mxu0 0
    %4500 = vmatprep.subr.bf16.mxu0 0
    %4501 = vmatpush1.bf16.xpose.msra.mxu0 0
    %4502 = vmatprep.subr.bf16.mxu0 0
    %4503 = vmatpush1.bf16.xpose.msra.mxu0 %v4488
    %4504 = vmatprep.subr.bf16.mxu0 0
    %4505 = vmatpush1.bf16.xpose.msra.mxu0 %v4485
    %4506 = vmatprep.subr.bf16.mxu0 0
    %4507 = vmatpush2.bf16.xpose.msra.mxu0 0
    %4508 = vmatprep.subr.bf16.mxu0 0
    %4509 = vmatpush2.bf16.xpose.msra.mxu0 0
    %4510 = vmatprep.subr.bf16.mxu0 0
    %4511 = vmatpush2.bf16.xpose.msra.mxu0 0
    %4512 = vmatprep.subr.bf16.mxu0 0
    %4513 = vmatpush2.bf16.xpose.msra.mxu0 0
    %4514 = vmatprep.subr.bf16.mxu0 0
    %4515 = vmatpush2.bf16.xpose.msra.mxu0 0
    %4516 = vmatprep.subr.bf16.mxu0 0
    %4517 = vmatpush2.bf16.xpose.msra.mxu0 0
    %4518 = vmatprep.subr.bf16.mxu0 0
    %4519 = vmatpush2.bf16.xpose.msra.mxu0 0
    %4520 = vmatprep.subr.bf16.mxu0 0
    %4521 = vmatpush2.bf16.xpose.msra.mxu0 0
    %4522 = vmatprep.mubr.bf16.mxu0 0
    %4523 = vmatmul.mubr.bf16.gmra.mxu0 %v4479
    %v4524 = vpop.f32.mrf.mxu0
    %v4525 = vadd.f32 %v169, %v4524
    %v4526 = vpop.f32.mrf.mxu0
    %v4527 = vpop.f32.mrf.mxu0
    %v4528 = vadd.f32 %v170, %v4527
    %v4529 = vpop.f32.mrf.mxu0
    %4530 = vmatprep.mubr.bf16.mxu0 0
    %4531 = vmatmul.mubr.bf16.gmra.mxu0 %v4482
    %v4532 = vpop.f32.mrf.mxu0
    %v4533 = vadd.f32 %v171, %v4532
    %v4534 = vpop.f32.mrf.mxu0
    %v4535 = vpop.f32.mrf.mxu0
    %v4536 = vadd.f32 %v172, %v4535
    %v4537 = vpop.f32.mrf.mxu0
    %4538 = vdwg.mxu0
    %v4539 = vsel %vm1916, %v4525, -inf
    %4540 = vmax.xlane.f32.xlu0 %v4539
    %v4541 = vpop.xlane.xlu0 %4540
    %v4542 = vsel %vm1916, %v4528, -inf
    %4543 = vmax.xlane.f32.xlu0 %v4542
    %v4544 = vpop.xlane.xlu0 %4543
    %v4545 = vsel %vm1916, %v4533, -inf
    %4546 = vmax.xlane.f32.xlu0 %v4545
    %v4547 = vpop.xlane.xlu0 %4546
    %v4548 = vsel %vm1916, %v4536, -inf
    %4549 = vmax.xlane.f32.xlu0 %v4548
    %v4550 = vpop.xlane.xlu0 %4549
    %v4551 = vsub.f32 %v4525, %v4541
    %v4552 = vsub.f32 %v4528, %v4544
    %v4553 = vsub.f32 %v4533, %v4547
    %v4554 = vsub.f32 %v4536, %v4550
    %v4555 = vmul.f32 %v4551, 1.442695
    %v4556 = vpow.pop %v4555
    %v4557 = vmul.f32 %v4552, 1.442695
    %v4558 = vpow.pop %v4557
    %v4559 = vmul.f32 %v4553, 1.442695
    %v4560 = vpow.pop %v4559
    %v4561 = vmul.f32 %v4554, 1.442695
    %v4562 = vpow.pop %v4561
    %v4563 = vsel %vm1916, %v4556, 0.0
    %4564 = vadd.xlane.f32.xlu0 %v4563
    %v4565 = vpop.xlane.xlu0 %4564
    %v4566 = vsel %vm1916, %v4558, 0.0
    %4567 = vadd.xlane.f32.xlu0 %v4566
    %v4568 = vpop.xlane.xlu0 %4567
    %v4569 = vsel %vm1916, %v4560, 0.0
    %4570 = vadd.xlane.f32.xlu0 %v4569
    %v4571 = vpop.xlane.xlu0 %4570
    %v4572 = vsel %vm1916, %v4562, 0.0
    %4573 = vadd.xlane.f32.xlu0 %v4572
    %v4574 = vpop.xlane.xlu0 %4573
    %v4575 = vrcp.pop %v4565
    %v4576 = vrcp.pop %v4568
    %v4577 = vrcp.pop %v4571
    %v4578 = vrcp.pop %v4574
    %v4579 = vmul.f32 %v4556, %v4575
    %v4580 = vmul.f32 %v4558, %v4576
    %v4581 = vmul.f32 %v4560, %v4577
    %v4582 = vmul.f32 %v4562, %v4578
    %v4583 = vpack.c.bf16 %v4580, %v4579
    %v4584 = vpack.c.bf16 %v4582, %v4581
    %v4586 = vsel %vm1916, %v4583, 0
    %v4589 = vsel %vm1916, %v4584, 0
    %4591 = vmatprep.subr.bf16.mxu0 0
    %4592 = vmatpush1.bf16.msra.mxu0 0
    %4593 = vmatprep.subr.bf16.mxu0 0
    %4594 = vmatpush1.bf16.msra.mxu0 0
    %4595 = vmatprep.subr.bf16.mxu0 0
    %4596 = vmatpush1.bf16.msra.mxu0 0
    %4597 = vmatprep.subr.bf16.mxu0 0
    %4598 = vmatpush1.bf16.msra.mxu0 0
    %4599 = vmatprep.subr.bf16.mxu0 0
    %4600 = vmatpush1.bf16.msra.mxu0 0
    %4601 = vmatprep.subr.bf16.mxu0 0
    %4602 = vmatpush1.bf16.msra.mxu0 0
    %4603 = vmatprep.subr.bf16.mxu0 0
    %4604 = vmatpush1.bf16.msra.mxu0 %v4477
    %4605 = vmatprep.subr.bf16.mxu0 0
    %4606 = vmatpush1.bf16.msra.mxu0 %v4476
    %4607 = vmatprep.subr.bf16.mxu0 0
    %4608 = vmatpush2.bf16.msra.mxu0 0
    %4609 = vmatprep.subr.bf16.mxu0 0
    %4610 = vmatpush2.bf16.msra.mxu0 0
    %4611 = vmatprep.subr.bf16.mxu0 0
    %4612 = vmatpush2.bf16.msra.mxu0 0
    %4613 = vmatprep.subr.bf16.mxu0 0
    %4614 = vmatpush2.bf16.msra.mxu0 0
    %4615 = vmatprep.subr.bf16.mxu0 0
    %4616 = vmatpush2.bf16.msra.mxu0 0
    %4617 = vmatprep.subr.bf16.mxu0 0
    %4618 = vmatpush2.bf16.msra.mxu0 0
    %4619 = vmatprep.subr.bf16.mxu0 0
    %4620 = vmatpush2.bf16.msra.mxu0 0
    %4621 = vmatprep.subr.bf16.mxu0 0
    %4622 = vmatpush2.bf16.msra.mxu0 0
    %4623 = vmatprep.mubr.bf16.mxu0 0
    %4624 = vmatmul.mubr.bf16.gmra.mxu0 %v4586
    %v4625 = vpop.f32.mrf.mxu0
    %v4626 = vadd.f32 0.0, %v4625
    %v4627 = vpop.f32.mrf.mxu0
    %v4628 = vpop.f32.mrf.mxu0
    %v4629 = vadd.f32 0.0, %v4628
    %v4630 = vpop.f32.mrf.mxu0
    %4631 = vmatprep.mubr.bf16.mxu0 0
    %4632 = vmatmul.mubr.bf16.gmra.mxu0 %v4589
    %v4633 = vpop.f32.mrf.mxu0
    %v4634 = vadd.f32 0.0, %v4633
    %v4635 = vpop.f32.mrf.mxu0
    %v4636 = vpop.f32.mrf.mxu0
    %v4637 = vadd.f32 0.0, %v4636
    %v4638 = vpop.f32.mrf.mxu0
    %4639 = vdwg.mxu0
    %4642 = vrot.lane.b32.xlu0 %v4472, 64
    %v4643 = vpop.permute.xlu0 %4642
    %4644 = vrot.lane.b32.xlu0 %v4473, 64
    %v4645 = vpop.permute.xlu0 %4644
    %4648 = vrot.lane.b32.xlu0 %v4474, 64
    %v4649 = vpop.permute.xlu0 %4648
    %4650 = vrot.lane.b32.xlu0 %v4475, 64
    %v4651 = vpop.permute.xlu0 %4650
    %v4653 = vsel %vm1854, %v4643, 0
    %v4656 = vsel %vm1854, %v4645, 0
    %v4659 = vsel %vm1854, %v4649, 0
    %v4662 = vsel %vm1854, %v4651, 0
    %4664 = vmatprep.subr.bf16.mxu0 0
    %4665 = vmatpush1.bf16.xpose.msra.mxu0 0
    %4666 = vmatprep.subr.bf16.mxu0 0
    %4667 = vmatpush1.bf16.xpose.msra.mxu0 0
    %4668 = vmatprep.subr.bf16.mxu0 0
    %4669 = vmatpush1.bf16.xpose.msra.mxu0 0
    %4670 = vmatprep.subr.bf16.mxu0 0
    %4671 = vmatpush1.bf16.xpose.msra.mxu0 0
    %4672 = vmatprep.subr.bf16.mxu0 0
    %4673 = vmatpush1.bf16.xpose.msra.mxu0 0
    %4674 = vmatprep.subr.bf16.mxu0 0
    %4675 = vmatpush1.bf16.xpose.msra.mxu0 0
    %4676 = vmatprep.subr.bf16.mxu0 0
    %4677 = vmatpush1.bf16.xpose.msra.mxu0 %v4662
    %4678 = vmatprep.subr.bf16.mxu0 0
    %4679 = vmatpush1.bf16.xpose.msra.mxu0 %v4659
    %4680 = vmatprep.subr.bf16.mxu0 0
    %4681 = vmatpush2.bf16.xpose.msra.mxu0 0
    %4682 = vmatprep.subr.bf16.mxu0 0
    %4683 = vmatpush2.bf16.xpose.msra.mxu0 0
    %4684 = vmatprep.subr.bf16.mxu0 0
    %4685 = vmatpush2.bf16.xpose.msra.mxu0 0
    %4686 = vmatprep.subr.bf16.mxu0 0
    %4687 = vmatpush2.bf16.xpose.msra.mxu0 0
    %4688 = vmatprep.subr.bf16.mxu0 0
    %4689 = vmatpush2.bf16.xpose.msra.mxu0 0
    %4690 = vmatprep.subr.bf16.mxu0 0
    %4691 = vmatpush2.bf16.xpose.msra.mxu0 0
    %4692 = vmatprep.subr.bf16.mxu0 0
    %4693 = vmatpush2.bf16.xpose.msra.mxu0 0
    %4694 = vmatprep.subr.bf16.mxu0 0
    %4695 = vmatpush2.bf16.xpose.msra.mxu0 0
    %4696 = vmatprep.mubr.bf16.mxu0 0
    %4697 = vmatmul.mubr.bf16.gmra.mxu0 %v4653
    %v4698 = vpop.f32.mrf.mxu0
    %v4699 = vadd.f32 %v169, %v4698
    %v4700 = vpop.f32.mrf.mxu0
    %v4701 = vpop.f32.mrf.mxu0
    %v4702 = vadd.f32 %v170, %v4701
    %v4703 = vpop.f32.mrf.mxu0
    %4704 = vmatprep.mubr.bf16.mxu0 0
    %4705 = vmatmul.mubr.bf16.gmra.mxu0 %v4656
    %v4706 = vpop.f32.mrf.mxu0
    %v4707 = vadd.f32 %v171, %v4706
    %v4708 = vpop.f32.mrf.mxu0
    %v4709 = vpop.f32.mrf.mxu0
    %v4710 = vadd.f32 %v172, %v4709
    %v4711 = vpop.f32.mrf.mxu0
    %4712 = vdwg.mxu0
    %v4713 = vsel %vm1916, %v4699, -inf
    %4714 = vmax.xlane.f32.xlu0 %v4713
    %v4715 = vpop.xlane.xlu0 %4714
    %v4716 = vsel %vm1916, %v4702, -inf
    %4717 = vmax.xlane.f32.xlu0 %v4716
    %v4718 = vpop.xlane.xlu0 %4717
    %v4719 = vsel %vm1916, %v4707, -inf
    %4720 = vmax.xlane.f32.xlu0 %v4719
    %v4721 = vpop.xlane.xlu0 %4720
    %v4722 = vsel %vm1916, %v4710, -inf
    %4723 = vmax.xlane.f32.xlu0 %v4722
    %v4724 = vpop.xlane.xlu0 %4723
    %v4725 = vsub.f32 %v4699, %v4715
    %v4726 = vsub.f32 %v4702, %v4718
    %v4727 = vsub.f32 %v4707, %v4721
    %v4728 = vsub.f32 %v4710, %v4724
    %v4729 = vmul.f32 %v4725, 1.442695
    %v4730 = vpow.pop %v4729
    %v4731 = vmul.f32 %v4726, 1.442695
    %v4732 = vpow.pop %v4731
    %v4733 = vmul.f32 %v4727, 1.442695
    %v4734 = vpow.pop %v4733
    %v4735 = vmul.f32 %v4728, 1.442695
    %v4736 = vpow.pop %v4735
    %v4737 = vsel %vm1916, %v4730, 0.0
    %4738 = vadd.xlane.f32.xlu0 %v4737
    %v4739 = vpop.xlane.xlu0 %4738
    %v4740 = vsel %vm1916, %v4732, 0.0
    %4741 = vadd.xlane.f32.xlu0 %v4740
    %v4742 = vpop.xlane.xlu0 %4741
    %v4743 = vsel %vm1916, %v4734, 0.0
    %4744 = vadd.xlane.f32.xlu0 %v4743
    %v4745 = vpop.xlane.xlu0 %4744
    %v4746 = vsel %vm1916, %v4736, 0.0
    %4747 = vadd.xlane.f32.xlu0 %v4746
    %v4748 = vpop.xlane.xlu0 %4747
    %v4749 = vrcp.pop %v4739
    %v4750 = vrcp.pop %v4742
    %v4751 = vrcp.pop %v4745
    %v4752 = vrcp.pop %v4748
    %v4753 = vmul.f32 %v4730, %v4749
    %v4754 = vmul.f32 %v4732, %v4750
    %v4755 = vmul.f32 %v4734, %v4751
    %v4756 = vmul.f32 %v4736, %v4752
    %v4757 = vpack.c.bf16 %v4754, %v4753
    %v4758 = vpack.c.bf16 %v4756, %v4755
    %4761 = vrot.lane.b32.xlu0 %v4476, 64
    %v4762 = vpop.permute.xlu0 %4761
    %4763 = vrot.lane.b32.xlu0 %v4477, 64
    %v4764 = vpop.permute.xlu0 %4763
    %v4768 = vsel %vm1916, %v4757, 0
    %v4771 = vsel %vm1916, %v4758, 0
    %4773 = vmatprep.subr.bf16.mxu0 0
    %4774 = vmatpush1.bf16.msra.mxu0 0
    %4775 = vmatprep.subr.bf16.mxu0 0
    %4776 = vmatpush1.bf16.msra.mxu0 0
    %4777 = vmatprep.subr.bf16.mxu0 0
    %4778 = vmatpush1.bf16.msra.mxu0 0
    %4779 = vmatprep.subr.bf16.mxu0 0
    %4780 = vmatpush1.bf16.msra.mxu0 0
    %4781 = vmatprep.subr.bf16.mxu0 0
    %4782 = vmatpush1.bf16.msra.mxu0 0
    %4783 = vmatprep.subr.bf16.mxu0 0
    %4784 = vmatpush1.bf16.msra.mxu0 0
    %4785 = vmatprep.subr.bf16.mxu0 0
    %4786 = vmatpush1.bf16.msra.mxu0 %v4764
    %4787 = vmatprep.subr.bf16.mxu0 0
    %4788 = vmatpush1.bf16.msra.mxu0 %v4762
    %4789 = vmatprep.subr.bf16.mxu0 0
    %4790 = vmatpush2.bf16.msra.mxu0 0
    %4791 = vmatprep.subr.bf16.mxu0 0
    %4792 = vmatpush2.bf16.msra.mxu0 0
    %4793 = vmatprep.subr.bf16.mxu0 0
    %4794 = vmatpush2.bf16.msra.mxu0 0
    %4795 = vmatprep.subr.bf16.mxu0 0
    %4796 = vmatpush2.bf16.msra.mxu0 0
    %4797 = vmatprep.subr.bf16.mxu0 0
    %4798 = vmatpush2.bf16.msra.mxu0 0
    %4799 = vmatprep.subr.bf16.mxu0 0
    %4800 = vmatpush2.bf16.msra.mxu0 0
    %4801 = vmatprep.subr.bf16.mxu0 0
    %4802 = vmatpush2.bf16.msra.mxu0 0
    %4803 = vmatprep.subr.bf16.mxu0 0
    %4804 = vmatpush2.bf16.msra.mxu0 0
    %4805 = vmatprep.mubr.bf16.mxu0 0
    %4806 = vmatmul.mubr.bf16.gmra.mxu0 %v4768
    %v4807 = vpop.f32.mrf.mxu0
    %v4808 = vadd.f32 0.0, %v4807
    %v4809 = vpop.f32.mrf.mxu0
    %v4810 = vpop.f32.mrf.mxu0
    %v4811 = vadd.f32 0.0, %v4810
    %v4812 = vpop.f32.mrf.mxu0
    %4813 = vmatprep.mubr.bf16.mxu0 0
    %4814 = vmatmul.mubr.bf16.gmra.mxu0 %v4771
    %v4815 = vpop.f32.mrf.mxu0
    %v4816 = vadd.f32 0.0, %v4815
    %v4817 = vpop.f32.mrf.mxu0
    %v4818 = vpop.f32.mrf.mxu0
    %v4819 = vadd.f32 0.0, %v4818
    %v4820 = vpop.f32.mrf.mxu0
    %4821 = vdwg.mxu0
    %4826 = vrot.lane.b32.xlu0 %v4808, 64
    %v4827 = vpop.permute.xlu0 %4826
    %4828 = vrot.lane.b32.xlu0 %v4811, 64
    %v4829 = vpop.permute.xlu0 %4828
    %4830 = vrot.lane.b32.xlu0 %v4816, 64
    %v4831 = vpop.permute.xlu0 %4830
    %4832 = vrot.lane.b32.xlu0 %v4819, 64
    %v4833 = vpop.permute.xlu0 %4832
    %v4838 = vsel %vm1854, %v4626, %v4827
    %v4839 = vsel %vm1854, %v4629, %v4829
    %v4840 = vsel %vm1854, %v4634, %v4831
    %v4841 = vsel %vm1854, %v4637, %v4833
    %v4842 = vpack.c.bf16 %v4839, %v4838
    %v4843 = vpack.c.bf16 %v4841, %v4840
    %v4844 = vld [vmem:[%s128] sm:$0xff]
    %v4845 = vld [vmem:[%s128 + $0x8] sm:$0xff]
    %v4846 = vld [vmem:[%s128 + $0x10] sm:$0xff]
    %v4847 = vld [vmem:[%s128 + $0x18] sm:$0xff]
    %v4848 = vld [vmem:[%s128 + $0x20] sm:$0xff]
    %v4849 = vld [vmem:[%s128 + $0x28] sm:$0xff]
    %v4850 = vld [vmem:[%s128 + $0x30] sm:$0xff]
    %v4851 = vld [vmem:[%s128 + $0x38] sm:$0xff]
    %v4852 = vld [vmem:[%s128 + $0x40] sm:$0xff]
    %v4853 = vld [vmem:[%s128 + $0x48] sm:$0xff]
    %v4854 = vld [vmem:[%s128 + $0x50] sm:$0xff]
    %v4855 = vld [vmem:[%s128 + $0x58] sm:$0xff]
    %v4856 = vld [vmem:[%s128 + $0x60] sm:$0xff]
    %v4857 = vld [vmem:[%s128 + $0x68] sm:$0xff]
    %v4858 = vld [vmem:[%s128 + $0x70] sm:$0xff]
    %v4859 = vld [vmem:[%s128 + $0x78] sm:$0xff]
    %v4860 = vld [vmem:[%s128 + $0x80] sm:$0xff]
    %v4861 = vld [vmem:[%s128 + $0x88] sm:$0xff]
    %v4862 = vld [vmem:[%s128 + $0x90] sm:$0xff]
    %v4863 = vld [vmem:[%s128 + $0x98] sm:$0xff]
    %v4864 = vld [vmem:[%s128 + $0xa0] sm:$0xff]
    %v4865 = vld [vmem:[%s128 + $0xa8] sm:$0xff]
    %v4866 = vld [vmem:[%s128 + $0xb0] sm:$0xff]
    %v4867 = vld [vmem:[%s128 + $0xb8] sm:$0xff]
    %v4868 = vld [vmem:[%s128 + $0xc0] sm:$0xff]
    %v4869 = vld [vmem:[%s128 + $0xc8] sm:$0xff]
    %v4870 = vld [vmem:[%s128 + $0xd0] sm:$0xff]
    %v4871 = vld [vmem:[%s128 + $0xd8] sm:$0xff]
    %v4872 = vld [vmem:[%s128 + $0xe0] sm:$0xff]
    %v4873 = vld [vmem:[%s128 + $0xe8] sm:$0xff]
    %v4874 = vld [vmem:[%s128 + $0xf0] sm:$0xff]
    %v4875 = vld [vmem:[%s128 + $0xf8] sm:$0xff]
    %v4908 = vunpack.c.l.b16 %v4844
    %v4909 = vunpack.c.h.b16 %v4844
    %v4910 = vunpack.c.l.b16 %v4845
    %v4911 = vunpack.c.h.b16 %v4845
    %v4912 = vunpack.c.l.b16 %v4846
    %v4913 = vunpack.c.h.b16 %v4846
    %v4914 = vunpack.c.l.b16 %v4847
    %v4915 = vunpack.c.h.b16 %v4847
    %v4916 = vunpack.c.l.b16 %v4848
    %v4917 = vunpack.c.h.b16 %v4848
    %v4918 = vunpack.c.l.b16 %v4849
    %v4919 = vunpack.c.h.b16 %v4849
    %v4920 = vunpack.c.l.b16 %v4850
    %v4921 = vunpack.c.h.b16 %v4850
    %v4922 = vunpack.c.l.b16 %v4851
    %v4923 = vunpack.c.h.b16 %v4851
    %v4924 = vunpack.c.l.b16 %v4852
    %v4925 = vunpack.c.h.b16 %v4852
    %v4926 = vunpack.c.l.b16 %v4853
    %v4927 = vunpack.c.h.b16 %v4853
    %v4928 = vunpack.c.l.b16 %v4854
    %v4929 = vunpack.c.h.b16 %v4854
    %v4930 = vunpack.c.l.b16 %v4855
    %v4931 = vunpack.c.h.b16 %v4855
    %v4932 = vunpack.c.l.b16 %v4856
    %v4933 = vunpack.c.h.b16 %v4856
    %v4934 = vunpack.c.l.b16 %v4857
    %v4935 = vunpack.c.h.b16 %v4857
    %v4936 = vunpack.c.l.b16 %v4858
    %v4937 = vunpack.c.h.b16 %v4858
    %v4938 = vunpack.c.l.b16 %v4859
    %v4939 = vunpack.c.h.b16 %v4859
    %v4940 = vunpack.c.l.b16 %v4860
    %v4941 = vunpack.c.h.b16 %v4860
    %v4942 = vunpack.c.l.b16 %v4861
    %v4943 = vunpack.c.h.b16 %v4861
    %v4944 = vunpack.c.l.b16 %v4862
    %v4945 = vunpack.c.h.b16 %v4862
    %v4946 = vunpack.c.l.b16 %v4863
    %v4947 = vunpack.c.h.b16 %v4863
    %v4948 = vunpack.c.l.b16 %v4864
    %v4949 = vunpack.c.h.b16 %v4864
    %v4950 = vunpack.c.l.b16 %v4865
    %v4951 = vunpack.c.h.b16 %v4865
    %v4952 = vunpack.c.l.b16 %v4866
    %v4953 = vunpack.c.h.b16 %v4866
    %v4954 = vunpack.c.l.b16 %v4867
    %v4955 = vunpack.c.h.b16 %v4867
    %v4956 = vunpack.c.l.b16 %v4868
    %v4957 = vunpack.c.h.b16 %v4868
    %v4958 = vunpack.c.l.b16 %v4869
    %v4959 = vunpack.c.h.b16 %v4869
    %v4960 = vunpack.c.l.b16 %v4870
    %v4961 = vunpack.c.h.b16 %v4870
    %v4962 = vunpack.c.l.b16 %v4871
    %v4963 = vunpack.c.h.b16 %v4871
    %v4964 = vunpack.c.l.b16 %v4872
    %v4965 = vunpack.c.h.b16 %v4872
    %v4966 = vunpack.c.l.b16 %v4873
    %v4967 = vunpack.c.h.b16 %v4873
    %v4968 = vunpack.c.l.b16 %v4874
    %v4969 = vunpack.c.h.b16 %v4874
    %v4970 = vunpack.c.l.b16 %v4875
    %v4971 = vunpack.c.h.b16 %v4875
    %v4972 = vpack.c.b16 %v4912, %v4908
    %v4973 = vpack.c.b16 %v4913, %v4909
    %v4974 = vpack.c.b16 %v4914, %v4910
    %v4975 = vpack.c.b16 %v4915, %v4911
    %v4976 = vpack.c.b16 %v4920, %v4916
    %v4977 = vpack.c.b16 %v4921, %v4917
    %v4978 = vpack.c.b16 %v4922, %v4918
    %v4979 = vpack.c.b16 %v4923, %v4919
    %v4980 = vpack.c.b16 %v4928, %v4924
    %v4981 = vpack.c.b16 %v4929, %v4925
    %v4982 = vpack.c.b16 %v4930, %v4926
    %v4983 = vpack.c.b16 %v4931, %v4927
    %v4984 = vpack.c.b16 %v4936, %v4932
    %v4985 = vpack.c.b16 %v4937, %v4933
    %v4986 = vpack.c.b16 %v4938, %v4934
    %v4987 = vpack.c.b16 %v4939, %v4935
    %v4988 = vpack.c.b16 %v4944, %v4940
    %v4989 = vpack.c.b16 %v4945, %v4941
    %v4990 = vpack.c.b16 %v4946, %v4942
    %v4991 = vpack.c.b16 %v4947, %v4943
    %v4992 = vpack.c.b16 %v4952, %v4948
    %v4993 = vpack.c.b16 %v4953, %v4949
    %v4994 = vpack.c.b16 %v4954, %v4950
    %v4995 = vpack.c.b16 %v4955, %v4951
    %v4996 = vpack.c.b16 %v4960, %v4956
    %v4997 = vpack.c.b16 %v4961, %v4957
    %v4998 = vpack.c.b16 %v4962, %v4958
    %v4999 = vpack.c.b16 %v4963, %v4959
    %v5000 = vpack.c.b16 %v4968, %v4964
    %v5001 = vpack.c.b16 %v4969, %v4965
    %v5002 = vpack.c.b16 %v4970, %v4966
    %v5003 = vpack.c.b16 %v4971, %v4967
    %5036 = vmatprep.subr.bf16.mxu0 %v5001
    %5037 = vmatpush1.bf16.msra.mxu0 %v5000
    %5038 = vmatprep.subr.bf16.mxu0 %v4997
    %5039 = vmatpush1.bf16.msra.mxu0 %v4996
    %5040 = vmatprep.subr.bf16.mxu0 %v4993
    %5041 = vmatpush1.bf16.msra.mxu0 %v4992
    %5042 = vmatprep.subr.bf16.mxu0 %v4989
    %5043 = vmatpush1.bf16.msra.mxu0 %v4988
    %5044 = vmatprep.subr.bf16.mxu0 %v4985
    %5045 = vmatpush1.bf16.msra.mxu0 %v4984
    %5046 = vmatprep.subr.bf16.mxu0 %v4981
    %5047 = vmatpush1.bf16.msra.mxu0 %v4980
    %5048 = vmatprep.subr.bf16.mxu0 %v4977
    %5049 = vmatpush1.bf16.msra.mxu0 %v4976
    %5050 = vmatprep.subr.bf16.mxu0 %v4973
    %5051 = vmatpush1.bf16.msra.mxu0 %v4972
    %5052 = vmatprep.subr.bf16.mxu0 0
    %5053 = vmatpush2.bf16.msra.mxu0 0
    %5054 = vmatprep.subr.bf16.mxu0 0
    %5055 = vmatpush2.bf16.msra.mxu0 0
    %5056 = vmatprep.subr.bf16.mxu0 0
    %5057 = vmatpush2.bf16.msra.mxu0 0
    %5058 = vmatprep.subr.bf16.mxu0 0
    %5059 = vmatpush2.bf16.msra.mxu0 0
    %5060 = vmatprep.subr.bf16.mxu0 0
    %5061 = vmatpush2.bf16.msra.mxu0 0
    %5062 = vmatprep.subr.bf16.mxu0 0
    %5063 = vmatpush2.bf16.msra.mxu0 0
    %5064 = vmatprep.subr.bf16.mxu0 0
    %5065 = vmatpush2.bf16.msra.mxu0 0
    %5066 = vmatprep.subr.bf16.mxu0 0
    %5067 = vmatpush2.bf16.msra.mxu0 0
    %5068 = vmatprep.mubr.bf16.mxu0 0
    %5069 = vmatmul.mubr.bf16.gmra.mxu0 %v4842
    %v5070 = vpop.f32.mrf.mxu0
    %v5071 = vadd.f32 0.0, %v5070
    %v5072 = vpop.f32.mrf.mxu0
    %v5073 = vadd.f32 0.0, %v5072
    %v5074 = vpop.f32.mrf.mxu0
    %v5075 = vadd.f32 0.0, %v5074
    %v5076 = vpop.f32.mrf.mxu0
    %v5077 = vadd.f32 0.0, %v5076
    %5078 = vmatprep.mubr.bf16.mxu0 0
    %5079 = vmatmul.mubr.bf16.gmra.mxu0 %v4843
    %v5080 = vpop.f32.mrf.mxu0
    %v5081 = vadd.f32 0.0, %v5080
    %v5082 = vpop.f32.mrf.mxu0
    %v5083 = vadd.f32 0.0, %v5082
    %v5084 = vpop.f32.mrf.mxu0
    %v5085 = vadd.f32 0.0, %v5084
    %v5086 = vpop.f32.mrf.mxu0
    %v5087 = vadd.f32 0.0, %v5086
    %5088 = vdwg.mxu0
    %5089 = vmatprep.subr.bf16.mxu0 %v5003
    %5090 = vmatpush1.bf16.msra.mxu0 %v5002
    %5091 = vmatprep.subr.bf16.mxu0 %v4999
    %5092 = vmatpush1.bf16.msra.mxu0 %v4998
    %5093 = vmatprep.subr.bf16.mxu0 %v4995
    %5094 = vmatpush1.bf16.msra.mxu0 %v4994
    %5095 = vmatprep.subr.bf16.mxu0 %v4991
    %5096 = vmatpush1.bf16.msra.mxu0 %v4990
    %5097 = vmatprep.subr.bf16.mxu0 %v4987
    %5098 = vmatpush1.bf16.msra.mxu0 %v4986
    %5099 = vmatprep.subr.bf16.mxu0 %v4983
    %5100 = vmatpush1.bf16.msra.mxu0 %v4982
    %5101 = vmatprep.subr.bf16.mxu0 %v4979
    %5102 = vmatpush1.bf16.msra.mxu0 %v4978
    %5103 = vmatprep.subr.bf16.mxu0 %v4975
    %5104 = vmatpush1.bf16.msra.mxu0 %v4974
    %5105 = vmatprep.subr.bf16.mxu0 0
    %5106 = vmatpush2.bf16.msra.mxu0 0
    %5107 = vmatprep.subr.bf16.mxu0 0
    %5108 = vmatpush2.bf16.msra.mxu0 0
    %5109 = vmatprep.subr.bf16.mxu0 0
    %5110 = vmatpush2.bf16.msra.mxu0 0
    %5111 = vmatprep.subr.bf16.mxu0 0
    %5112 = vmatpush2.bf16.msra.mxu0 0
    %5113 = vmatprep.subr.bf16.mxu0 0
    %5114 = vmatpush2.bf16.msra.mxu0 0
    %5115 = vmatprep.subr.bf16.mxu0 0
    %5116 = vmatpush2.bf16.msra.mxu0 0
    %5117 = vmatprep.subr.bf16.mxu0 0
    %5118 = vmatpush2.bf16.msra.mxu0 0
    %5119 = vmatprep.subr.bf16.mxu0 0
    %5120 = vmatpush2.bf16.msra.mxu0 0
    %5121 = vmatprep.mubr.bf16.mxu0 0
    %5122 = vmatmul.mubr.bf16.gmra.mxu0 %v4842
    %v5123 = vpop.f32.mrf.mxu0
    %v5124 = vadd.f32 0.0, %v5123
    %v5125 = vpop.f32.mrf.mxu0
    %v5126 = vadd.f32 0.0, %v5125
    %v5127 = vpop.f32.mrf.mxu0
    %v5128 = vadd.f32 0.0, %v5127
    %v5129 = vpop.f32.mrf.mxu0
    %v5130 = vadd.f32 0.0, %v5129
    %5131 = vmatprep.mubr.bf16.mxu0 0
    %5132 = vmatmul.mubr.bf16.gmra.mxu0 %v4843
    %v5133 = vpop.f32.mrf.mxu0
    %v5134 = vadd.f32 0.0, %v5133
    %v5135 = vpop.f32.mrf.mxu0
    %v5136 = vadd.f32 0.0, %v5135
    %v5137 = vpop.f32.mrf.mxu0
    %v5138 = vadd.f32 0.0, %v5137
    %v5139 = vpop.f32.mrf.mxu0
    %v5140 = vadd.f32 0.0, %v5139
    %5141 = vdwg.mxu0
    %v5142 = vadd.f32 %v3592, %v5071
    %v5143 = vadd.f32 %v3593, %v5073
    %v5144 = vadd.f32 %v3594, %v5124
    %v5145 = vadd.f32 %v3595, %v5126
    %v5146 = vadd.f32 %v3596, %v5075
    %v5147 = vadd.f32 %v3597, %v5077
    %v5148 = vadd.f32 %v3598, %v5128
    %v5149 = vadd.f32 %v3599, %v5130
    %v5150 = vadd.f32 %v3600, %v5081
    %v5151 = vadd.f32 %v3601, %v5083
    %v5152 = vadd.f32 %v3602, %v5134
    %v5153 = vadd.f32 %v3603, %v5136
    %v5154 = vadd.f32 %v3604, %v5085
    %v5155 = vadd.f32 %v3605, %v5087
    %v5156 = vadd.f32 %v3606, %v5138
    %v5157 = vadd.f32 %v3607, %v5140
    %s5158 = scalar_lea.vmem %s5, 4
    %v5159 = vld [vmem:[%s5158] sm:$0xf]
    %s5160 = scalar_lea.vmem %s6, 4
    %v5161 = vld [vmem:[%s5160] sm:$0xf]
    %v5162 = vadd.f32 %v5142, %v5143
    %v5163 = vadd.f32 %v5162, %v5144
    %v5164 = vadd.f32 %v5163, %v5145
    %5165 = vadd.xlane.f32.xlu0 %v5164
    %v5166 = vpop.xlane.xlu0 %5165
    %v5167 = vadd.f32 %v5146, %v5147
    %v5168 = vadd.f32 %v5167, %v5148
    %v5169 = vadd.f32 %v5168, %v5149
    %5170 = vadd.xlane.f32.xlu0 %v5169
    %v5171 = vpop.xlane.xlu0 %5170
    %v5172 = vadd.f32 %v5150, %v5151
    %v5173 = vadd.f32 %v5172, %v5152
    %v5174 = vadd.f32 %v5173, %v5153
    %5175 = vadd.xlane.f32.xlu0 %v5174
    %v5176 = vpop.xlane.xlu0 %5175
    %v5177 = vadd.f32 %v5154, %v5155
    %v5178 = vadd.f32 %v5177, %v5156
    %v5179 = vadd.f32 %v5178, %v5157
    %5180 = vadd.xlane.f32.xlu0 %v5179
    %v5181 = vpop.xlane.xlu0 %5180
    %v5182 = vmul.f32 %v5166, %v2558
    %v5183 = vmul.f32 %v5171, %v2558
    %v5184 = vmul.f32 %v5176, %v2558
    %v5185 = vmul.f32 %v5181, %v2558
    %v5186 = vsub.f32 %v5142, %v5182
    %v5187 = vsub.f32 %v5143, %v5182
    %v5188 = vsub.f32 %v5144, %v5182
    %v5189 = vsub.f32 %v5145, %v5182
    %v5190 = vsub.f32 %v5146, %v5183
    %v5191 = vsub.f32 %v5147, %v5183
    %v5192 = vsub.f32 %v5148, %v5183
    %v5193 = vsub.f32 %v5149, %v5183
    %v5194 = vsub.f32 %v5150, %v5184
    %v5195 = vsub.f32 %v5151, %v5184
    %v5196 = vsub.f32 %v5152, %v5184
    %v5197 = vsub.f32 %v5153, %v5184
    %v5198 = vsub.f32 %v5154, %v5185
    %v5199 = vsub.f32 %v5155, %v5185
    %v5200 = vsub.f32 %v5156, %v5185
    %v5201 = vsub.f32 %v5157, %v5185
    %v5202 = vmul.f32 %v5186, %v5186
    %v5203 = vmul.f32 %v5187, %v5187
    %v5204 = vmul.f32 %v5188, %v5188
    %v5205 = vmul.f32 %v5189, %v5189
    %v5206 = vmul.f32 %v5190, %v5190
    %v5207 = vmul.f32 %v5191, %v5191
    %v5208 = vmul.f32 %v5192, %v5192
    %v5209 = vmul.f32 %v5193, %v5193
    %v5210 = vmul.f32 %v5194, %v5194
    %v5211 = vmul.f32 %v5195, %v5195
    %v5212 = vmul.f32 %v5196, %v5196
    %v5213 = vmul.f32 %v5197, %v5197
    %v5214 = vmul.f32 %v5198, %v5198
    %v5215 = vmul.f32 %v5199, %v5199
    %v5216 = vmul.f32 %v5200, %v5200
    %v5217 = vmul.f32 %v5201, %v5201
    %v5218 = vadd.f32 %v5202, %v5203
    %v5219 = vadd.f32 %v5218, %v5204
    %v5220 = vadd.f32 %v5219, %v5205
    %5221 = vadd.xlane.f32.xlu0 %v5220
    %v5222 = vpop.xlane.xlu0 %5221
    %v5223 = vadd.f32 %v5206, %v5207
    %v5224 = vadd.f32 %v5223, %v5208
    %v5225 = vadd.f32 %v5224, %v5209
    %5226 = vadd.xlane.f32.xlu0 %v5225
    %v5227 = vpop.xlane.xlu0 %5226
    %v5228 = vadd.f32 %v5210, %v5211
    %v5229 = vadd.f32 %v5228, %v5212
    %v5230 = vadd.f32 %v5229, %v5213
    %5231 = vadd.xlane.f32.xlu0 %v5230
    %v5232 = vpop.xlane.xlu0 %5231
    %v5233 = vadd.f32 %v5214, %v5215
    %v5234 = vadd.f32 %v5233, %v5216
    %v5235 = vadd.f32 %v5234, %v5217
    %5236 = vadd.xlane.f32.xlu0 %v5235
    %v5237 = vpop.xlane.xlu0 %5236
    %v5238 = vmul.f32 %v5222, %v2558
    %v5239 = vmul.f32 %v5227, %v2558
    %v5240 = vmul.f32 %v5232, %v2558
    %v5241 = vmul.f32 %v5237, %v2558
    %v5242 = vadd.f32 %v5238, 1e-06
    %v5243 = vadd.f32 %v5239, 1e-06
    %v5244 = vadd.f32 %v5240, 1e-06
    %v5245 = vadd.f32 %v5241, 1e-06
    %v5246 = vrsqrt.pop %v5242
    %v5247 = vrsqrt.pop %v5243
    %v5248 = vrsqrt.pop %v5244
    %v5249 = vrsqrt.pop %v5245
    %v5250 = vmul.f32 %v5186, %v5246
    %v5251 = vmul.f32 %v5187, %v5246
    %v5252 = vmul.f32 %v5188, %v5246
    %v5253 = vmul.f32 %v5189, %v5246
    %v5254 = vmul.f32 %v5190, %v5247
    %v5255 = vmul.f32 %v5191, %v5247
    %v5256 = vmul.f32 %v5192, %v5247
    %v5257 = vmul.f32 %v5193, %v5247
    %v5258 = vmul.f32 %v5194, %v5248
    %v5259 = vmul.f32 %v5195, %v5248
    %v5260 = vmul.f32 %v5196, %v5248
    %v5261 = vmul.f32 %v5197, %v5248
    %v5262 = vmul.f32 %v5198, %v5249
    %v5263 = vmul.f32 %v5199, %v5249
    %v5264 = vmul.f32 %v5200, %v5249
    %v5265 = vmul.f32 %v5201, %v5249
    %v5267 = vlaneseq
    %v5268 = vshrl.u32 %v5267, 7
    %v5269 = vsub.s32 0, %v5268
    %v5270 = vrot.slane %v5159, %v5269
    %v5271 = vlaneseq
    %v5272 = vshrl.u32 %v5271, 7
    %v5273 = vsub.s32 1, %v5272
    %v5274 = vrot.slane %v5159, %v5273
    %v5275 = vlaneseq
    %v5276 = vshrl.u32 %v5275, 7
    %v5277 = vsub.s32 2, %v5276
    %v5278 = vrot.slane %v5159, %v5277
    %v5279 = vlaneseq
    %v5280 = vshrl.u32 %v5279, 7
    %v5281 = vsub.s32 3, %v5280
    %v5282 = vrot.slane %v5159, %v5281
    %v5287 = vmul.f32 %v5250, %v5270
    %v5288 = vmul.f32 %v5251, %v5274
    %v5289 = vmul.f32 %v5252, %v5278
    %v5290 = vmul.f32 %v5253, %v5282
    %v5291 = vmul.f32 %v5254, %v5270
    %v5292 = vmul.f32 %v5255, %v5274
    %v5293 = vmul.f32 %v5256, %v5278
    %v5294 = vmul.f32 %v5257, %v5282
    %v5295 = vmul.f32 %v5258, %v5270
    %v5296 = vmul.f32 %v5259, %v5274
    %v5297 = vmul.f32 %v5260, %v5278
    %v5298 = vmul.f32 %v5261, %v5282
    %v5299 = vmul.f32 %v5262, %v5270
    %v5300 = vmul.f32 %v5263, %v5274
    %v5301 = vmul.f32 %v5264, %v5278
    %v5302 = vmul.f32 %v5265, %v5282
    %v5304 = vlaneseq
    %v5305 = vshrl.u32 %v5304, 7
    %v5306 = vsub.s32 0, %v5305
    %v5307 = vrot.slane %v5161, %v5306
    %v5308 = vlaneseq
    %v5309 = vshrl.u32 %v5308, 7
    %v5310 = vsub.s32 1, %v5309
    %v5311 = vrot.slane %v5161, %v5310
    %v5312 = vlaneseq
    %v5313 = vshrl.u32 %v5312, 7
    %v5314 = vsub.s32 2, %v5313
    %v5315 = vrot.slane %v5161, %v5314
    %v5316 = vlaneseq
    %v5317 = vshrl.u32 %v5316, 7
    %v5318 = vsub.s32 3, %v5317
    %v5319 = vrot.slane %v5161, %v5318
    %v5324 = vadd.f32 %v5287, %v5307
    %v5325 = vadd.f32 %v5288, %v5311
    %v5326 = vadd.f32 %v5289, %v5315
    %v5327 = vadd.f32 %v5290, %v5319
    %v5328 = vadd.f32 %v5291, %v5307
    %v5329 = vadd.f32 %v5292, %v5311
    %v5330 = vadd.f32 %v5293, %v5315
    %v5331 = vadd.f32 %v5294, %v5319
    %v5332 = vadd.f32 %v5295, %v5307
    %v5333 = vadd.f32 %v5296, %v5311
    %v5334 = vadd.f32 %v5297, %v5315
    %v5335 = vadd.f32 %v5298, %v5319
    %v5336 = vadd.f32 %v5299, %v5307
    %v5337 = vadd.f32 %v5300, %v5311
    %v5338 = vadd.f32 %v5301, %v5315
    %v5339 = vadd.f32 %v5302, %v5319
    %v5340 = vpack.c.bf16 %v5328, %v5324
    %v5341 = vpack.c.bf16 %v5329, %v5325
    %v5342 = vpack.c.bf16 %v5330, %v5326
    %v5343 = vpack.c.bf16 %v5331, %v5327
    %v5344 = vpack.c.bf16 %v5336, %v5332
    %v5345 = vpack.c.bf16 %v5337, %v5333
    %v5346 = vpack.c.bf16 %v5338, %v5334
    %v5347 = vpack.c.bf16 %v5339, %v5335
    %v5348 = vld [vmem:[%s142] sm:$0xf]
    %v5349 = vld [vmem:[%s142 + $0x4] sm:$0xf]
    %v5350 = vld [vmem:[%s142 + $0x8] sm:$0xf]
    %v5351 = vld [vmem:[%s142 + $0xc] sm:$0xf]
    %v5352 = vld [vmem:[%s142 + $0x10] sm:$0xf]
    %v5353 = vld [vmem:[%s142 + $0x14] sm:$0xf]
    %v5354 = vld [vmem:[%s142 + $0x18] sm:$0xf]
    %v5355 = vld [vmem:[%s142 + $0x1c] sm:$0xf]
    %v5356 = vld [vmem:[%s142 + $0x20] sm:$0xf]
    %v5357 = vld [vmem:[%s142 + $0x24] sm:$0xf]
    %v5358 = vld [vmem:[%s142 + $0x28] sm:$0xf]
    %v5359 = vld [vmem:[%s142 + $0x2c] sm:$0xf]
    %v5360 = vld [vmem:[%s142 + $0x30] sm:$0xf]
    %v5361 = vld [vmem:[%s142 + $0x34] sm:$0xf]
    %v5362 = vld [vmem:[%s142 + $0x38] sm:$0xf]
    %v5363 = vld [vmem:[%s142 + $0x3c] sm:$0xf]
    %v5364 = vld [vmem:[%s142 + $0x40] sm:$0xf]
    %v5365 = vld [vmem:[%s142 + $0x44] sm:$0xf]
    %v5366 = vld [vmem:[%s142 + $0x48] sm:$0xf]
    %v5367 = vld [vmem:[%s142 + $0x4c] sm:$0xf]
    %v5368 = vld [vmem:[%s142 + $0x50] sm:$0xf]
    %v5369 = vld [vmem:[%s142 + $0x54] sm:$0xf]
    %v5370 = vld [vmem:[%s142 + $0x58] sm:$0xf]
    %v5371 = vld [vmem:[%s142 + $0x5c] sm:$0xf]
    %v5372 = vld [vmem:[%s142 + $0x60] sm:$0xf]
    %v5373 = vld [vmem:[%s142 + $0x64] sm:$0xf]
    %v5374 = vld [vmem:[%s142 + $0x68] sm:$0xf]
    %v5375 = vld [vmem:[%s142 + $0x6c] sm:$0xf]
    %v5376 = vld [vmem:[%s142 + $0x70] sm:$0xf]
    %v5377 = vld [vmem:[%s142 + $0x74] sm:$0xf]
    %v5378 = vld [vmem:[%s142 + $0x78] sm:$0xf]
    %v5379 = vld [vmem:[%s142 + $0x7c] sm:$0xf]
    %v5380 = vld [vmem:[%s142 + $0x80] sm:$0xf]
    %v5381 = vld [vmem:[%s142 + $0x84] sm:$0xf]
    %v5382 = vld [vmem:[%s142 + $0x88] sm:$0xf]
    %v5383 = vld [vmem:[%s142 + $0x8c] sm:$0xf]
    %v5384 = vld [vmem:[%s142 + $0x90] sm:$0xf]
    %v5385 = vld [vmem:[%s142 + $0x94] sm:$0xf]
    %v5386 = vld [vmem:[%s142 + $0x98] sm:$0xf]
    %v5387 = vld [vmem:[%s142 + $0x9c] sm:$0xf]
    %v5388 = vld [vmem:[%s142 + $0xa0] sm:$0xf]
    %v5389 = vld [vmem:[%s142 + $0xa4] sm:$0xf]
    %v5390 = vld [vmem:[%s142 + $0xa8] sm:$0xf]
    %v5391 = vld [vmem:[%s142 + $0xac] sm:$0xf]
    %v5392 = vld [vmem:[%s142 + $0xb0] sm:$0xf]
    %v5393 = vld [vmem:[%s142 + $0xb4] sm:$0xf]
    %v5394 = vld [vmem:[%s142 + $0xb8] sm:$0xf]
    %v5395 = vld [vmem:[%s142 + $0xbc] sm:$0xf]
    %v5396 = vld [vmem:[%s142 + $0xc0] sm:$0xf]
    %v5397 = vld [vmem:[%s142 + $0xc4] sm:$0xf]
    %v5398 = vld [vmem:[%s142 + $0xc8] sm:$0xf]
    %v5399 = vld [vmem:[%s142 + $0xcc] sm:$0xf]
    %v5400 = vld [vmem:[%s142 + $0xd0] sm:$0xf]
    %v5401 = vld [vmem:[%s142 + $0xd4] sm:$0xf]
    %v5402 = vld [vmem:[%s142 + $0xd8] sm:$0xf]
    %v5403 = vld [vmem:[%s142 + $0xdc] sm:$0xf]
    %v5404 = vld [vmem:[%s142 + $0xe0] sm:$0xf]
    %v5405 = vld [vmem:[%s142 + $0xe4] sm:$0xf]
    %v5406 = vld [vmem:[%s142 + $0xe8] sm:$0xf]
    %v5407 = vld [vmem:[%s142 + $0xec] sm:$0xf]
    %v5408 = vld [vmem:[%s142 + $0xf0] sm:$0xf]
    %v5409 = vld [vmem:[%s142 + $0xf4] sm:$0xf]
    %v5410 = vld [vmem:[%s142 + $0xf8] sm:$0xf]
    %v5411 = vld [vmem:[%s142 + $0xfc] sm:$0xf]
    %s5412 = scalar_lea.vmem %s3, 1
    %v5413 = vld [vmem:[%s5412] sm:$0x1]
    %v5415 = vlaneseq
    %v5416 = vshrl.u32 %v5415, 7
    %v5417 = vsub.s32 0, %v5416
    %v5418 = vrot.slane %v5413, %v5417
    %v5484 = vunpack.c.l.b16 %v5348
    %v5485 = vunpack.c.l.b16 %v5349
    %v5486 = vunpack.c.l.b16 %v5350
    %v5487 = vunpack.c.l.b16 %v5351
    %v5488 = vunpack.c.l.b16 %v5352
    %v5489 = vunpack.c.l.b16 %v5353
    %v5490 = vunpack.c.l.b16 %v5354
    %v5491 = vunpack.c.l.b16 %v5355
    %v5492 = vunpack.c.l.b16 %v5356
    %v5493 = vunpack.c.l.b16 %v5357
    %v5494 = vunpack.c.l.b16 %v5358
    %v5495 = vunpack.c.l.b16 %v5359
    %v5496 = vunpack.c.l.b16 %v5360
    %v5497 = vunpack.c.l.b16 %v5361
    %v5498 = vunpack.c.l.b16 %v5362
    %v5499 = vunpack.c.l.b16 %v5363
    %v5500 = vunpack.c.l.b16 %v5364
    %v5501 = vunpack.c.l.b16 %v5365
    %v5502 = vunpack.c.l.b16 %v5366
    %v5503 = vunpack.c.l.b16 %v5367
    %v5504 = vunpack.c.l.b16 %v5368
    %v5505 = vunpack.c.l.b16 %v5369
    %v5506 = vunpack.c.l.b16 %v5370
    %v5507 = vunpack.c.l.b16 %v5371
    %v5508 = vunpack.c.l.b16 %v5372
    %v5509 = vunpack.c.l.b16 %v5373
    %v5510 = vunpack.c.l.b16 %v5374
    %v5511 = vunpack.c.l.b16 %v5375
    %v5512 = vunpack.c.l.b16 %v5376
    %v5513 = vunpack.c.l.b16 %v5377
    %v5514 = vunpack.c.l.b16 %v5378
    %v5515 = vunpack.c.l.b16 %v5379
    %v5516 = vunpack.c.l.b16 %v5380
    %v5517 = vunpack.c.l.b16 %v5381
    %v5518 = vunpack.c.l.b16 %v5382
    %v5519 = vunpack.c.l.b16 %v5383
    %v5520 = vunpack.c.l.b16 %v5384
    %v5521 = vunpack.c.l.b16 %v5385
    %v5522 = vunpack.c.l.b16 %v5386
    %v5523 = vunpack.c.l.b16 %v5387
    %v5524 = vunpack.c.l.b16 %v5388
    %v5525 = vunpack.c.l.b16 %v5389
    %v5526 = vunpack.c.l.b16 %v5390
    %v5527 = vunpack.c.l.b16 %v5391
    %v5528 = vunpack.c.l.b16 %v5392
    %v5529 = vunpack.c.l.b16 %v5393
    %v5530 = vunpack.c.l.b16 %v5394
    %v5531 = vunpack.c.l.b16 %v5395
    %v5532 = vunpack.c.l.b16 %v5396
    %v5533 = vunpack.c.l.b16 %v5397
    %v5534 = vunpack.c.l.b16 %v5398
    %v5535 = vunpack.c.l.b16 %v5399
    %v5536 = vunpack.c.l.b16 %v5400
    %v5537 = vunpack.c.l.b16 %v5401
    %v5538 = vunpack.c.l.b16 %v5402
    %v5539 = vunpack.c.l.b16 %v5403
    %v5540 = vunpack.c.l.b16 %v5404
    %v5541 = vunpack.c.l.b16 %v5405
    %v5542 = vunpack.c.l.b16 %v5406
    %v5543 = vunpack.c.l.b16 %v5407
    %v5544 = vunpack.c.l.b16 %v5408
    %v5545 = vunpack.c.l.b16 %v5409
    %v5546 = vunpack.c.l.b16 %v5410
    %v5547 = vunpack.c.l.b16 %v5411
    %v5548 = vpack.c.b16 %v5485, %v5484
    %v5549 = vpack.c.b16 %v5487, %v5486
    %v5550 = vpack.c.b16 %v5489, %v5488
    %v5551 = vpack.c.b16 %v5491, %v5490
    %v5552 = vpack.c.b16 %v5493, %v5492
    %v5553 = vpack.c.b16 %v5495, %v5494
    %v5554 = vpack.c.b16 %v5497, %v5496
    %v5555 = vpack.c.b16 %v5499, %v5498
    %v5556 = vpack.c.b16 %v5501, %v5500
    %v5557 = vpack.c.b16 %v5503, %v5502
    %v5558 = vpack.c.b16 %v5505, %v5504
    %v5559 = vpack.c.b16 %v5507, %v5506
    %v5560 = vpack.c.b16 %v5509, %v5508
    %v5561 = vpack.c.b16 %v5511, %v5510
    %v5562 = vpack.c.b16 %v5513, %v5512
    %v5563 = vpack.c.b16 %v5515, %v5514
    %v5564 = vpack.c.b16 %v5517, %v5516
    %v5565 = vpack.c.b16 %v5519, %v5518
    %v5566 = vpack.c.b16 %v5521, %v5520
    %v5567 = vpack.c.b16 %v5523, %v5522
    %v5568 = vpack.c.b16 %v5525, %v5524
    %v5569 = vpack.c.b16 %v5527, %v5526
    %v5570 = vpack.c.b16 %v5529, %v5528
    %v5571 = vpack.c.b16 %v5531, %v5530
    %v5572 = vpack.c.b16 %v5533, %v5532
    %v5573 = vpack.c.b16 %v5535, %v5534
    %v5574 = vpack.c.b16 %v5537, %v5536
    %v5575 = vpack.c.b16 %v5539, %v5538
    %v5576 = vpack.c.b16 %v5541, %v5540
    %v5577 = vpack.c.b16 %v5543, %v5542
    %v5578 = vpack.c.b16 %v5545, %v5544
    %v5579 = vpack.c.b16 %v5547, %v5546
    %5612 = vmatprep.subr.bf16.mxu0 0
    %5613 = vmatpush1.bf16.msra.mxu0 %v5555
    %5614 = vmatprep.subr.bf16.mxu0 0
    %5615 = vmatpush1.bf16.msra.mxu0 %v5554
    %5616 = vmatprep.subr.bf16.mxu0 0
    %5617 = vmatpush1.bf16.msra.mxu0 %v5553
    %5618 = vmatprep.subr.bf16.mxu0 0
    %5619 = vmatpush1.bf16.msra.mxu0 %v5552
    %5620 = vmatprep.subr.bf16.mxu0 0
    %5621 = vmatpush1.bf16.msra.mxu0 %v5551
    %5622 = vmatprep.subr.bf16.mxu0 0
    %5623 = vmatpush1.bf16.msra.mxu0 %v5550
    %5624 = vmatprep.subr.bf16.mxu0 0
    %5625 = vmatpush1.bf16.msra.mxu0 %v5549
    %5626 = vmatprep.subr.bf16.mxu0 0
    %5627 = vmatpush1.bf16.msra.mxu0 %v5548
    %5628 = vmatprep.subr.bf16.mxu0 0
    %5629 = vmatpush2.bf16.msra.mxu0 %v5563
    %5630 = vmatprep.subr.bf16.mxu0 0
    %5631 = vmatpush2.bf16.msra.mxu0 %v5562
    %5632 = vmatprep.subr.bf16.mxu0 0
    %5633 = vmatpush2.bf16.msra.mxu0 %v5561
    %5634 = vmatprep.subr.bf16.mxu0 0
    %5635 = vmatpush2.bf16.msra.mxu0 %v5560
    %5636 = vmatprep.subr.bf16.mxu0 0
    %5637 = vmatpush2.bf16.msra.mxu0 %v5559
    %5638 = vmatprep.subr.bf16.mxu0 0
    %5639 = vmatpush2.bf16.msra.mxu0 %v5558
    %5640 = vmatprep.subr.bf16.mxu0 0
    %5641 = vmatpush2.bf16.msra.mxu0 %v5557
    %5642 = vmatprep.subr.bf16.mxu0 0
    %5643 = vmatpush2.bf16.msra.mxu0 %v5556
    %5644 = vmatprep.mubr.bf16.mxu0 %v5341
    %5645 = vmatmul.mubr.bf16.gmra.mxu0 %v5340
    %v5646 = vpop.f32.mrf.mxu0
    %v5647 = vadd.f32 %v5418, %v5646
    %v5648 = vpop.f32.mrf.mxu0
    %v5649 = vpop.f32.mrf.mxu0
    %v5650 = vadd.f32 %v5418, %v5649
    %v5651 = vpop.f32.mrf.mxu0
    %5652 = vmatprep.mubr.bf16.mxu0 %v5345
    %5653 = vmatmul.mubr.bf16.gmra.mxu0 %v5344
    %v5654 = vpop.f32.mrf.mxu0
    %v5655 = vadd.f32 %v5418, %v5654
    %v5656 = vpop.f32.mrf.mxu0
    %v5657 = vpop.f32.mrf.mxu0
    %v5658 = vadd.f32 %v5418, %v5657
    %v5659 = vpop.f32.mrf.mxu0
    %5660 = vdwg.mxu0
    %5661 = vmatprep.subr.bf16.mxu0 0
    %5662 = vmatpush1.bf16.msra.mxu0 %v5571
    %5663 = vmatprep.subr.bf16.mxu0 0
    %5664 = vmatpush1.bf16.msra.mxu0 %v5570
    %5665 = vmatprep.subr.bf16.mxu0 0
    %5666 = vmatpush1.bf16.msra.mxu0 %v5569
    %5667 = vmatprep.subr.bf16.mxu0 0
    %5668 = vmatpush1.bf16.msra.mxu0 %v5568
    %5669 = vmatprep.subr.bf16.mxu0 0
    %5670 = vmatpush1.bf16.msra.mxu0 %v5567
    %5671 = vmatprep.subr.bf16.mxu0 0
    %5672 = vmatpush1.bf16.msra.mxu0 %v5566
    %5673 = vmatprep.subr.bf16.mxu0 0
    %5674 = vmatpush1.bf16.msra.mxu0 %v5565
    %5675 = vmatprep.subr.bf16.mxu0 0
    %5676 = vmatpush1.bf16.msra.mxu0 %v5564
    %5677 = vmatprep.subr.bf16.mxu0 0
    %5678 = vmatpush2.bf16.msra.mxu0 %v5579
    %5679 = vmatprep.subr.bf16.mxu0 0
    %5680 = vmatpush2.bf16.msra.mxu0 %v5578
    %5681 = vmatprep.subr.bf16.mxu0 0
    %5682 = vmatpush2.bf16.msra.mxu0 %v5577
    %5683 = vmatprep.subr.bf16.mxu0 0
    %5684 = vmatpush2.bf16.msra.mxu0 %v5576
    %5685 = vmatprep.subr.bf16.mxu0 0
    %5686 = vmatpush2.bf16.msra.mxu0 %v5575
    %5687 = vmatprep.subr.bf16.mxu0 0
    %5688 = vmatpush2.bf16.msra.mxu0 %v5574
    %5689 = vmatprep.subr.bf16.mxu0 0
    %5690 = vmatpush2.bf16.msra.mxu0 %v5573
    %5691 = vmatprep.subr.bf16.mxu0 0
    %5692 = vmatpush2.bf16.msra.mxu0 %v5572
    %5693 = vmatprep.mubr.bf16.mxu0 %v5343
    %5694 = vmatmul.mubr.bf16.gmra.mxu0 %v5342
    %v5695 = vpop.f32.mrf.mxu0
    %v5696 = vadd.f32 %v5647, %v5695
    %v5697 = vpop.f32.mrf.mxu0
    %v5698 = vpop.f32.mrf.mxu0
    %v5699 = vadd.f32 %v5650, %v5698
    %v5700 = vpop.f32.mrf.mxu0
    %5701 = vmatprep.mubr.bf16.mxu0 %v5347
    %5702 = vmatmul.mubr.bf16.gmra.mxu0 %v5346
    %v5703 = vpop.f32.mrf.mxu0
    %v5704 = vadd.f32 %v5655, %v5703
    %v5705 = vpop.f32.mrf.mxu0
    %v5706 = vpop.f32.mrf.mxu0
    %v5707 = vadd.f32 %v5658, %v5706
    %v5708 = vpop.f32.mrf.mxu0
    %5709 = vdwg.mxu0
    %v5710 = vmax.f32 %v5696, 0.0
    %v5711 = vmax.f32 %v5699, 0.0
    %v5712 = vmax.f32 %v5704, 0.0
    %v5713 = vmax.f32 %v5707, 0.0
    %v5714 = vpack.c.bf16 %v5711, %v5710
    %v5715 = vpack.c.bf16 %v5713, %v5712
    %v5716 = vld [vmem:[%s156] sm:$0xff]
    %v5717 = vld [vmem:[%s156 + $0x8] sm:$0xff]
    %v5718 = vld [vmem:[%s156 + $0x10] sm:$0xff]
    %v5719 = vld [vmem:[%s156 + $0x18] sm:$0xff]
    %v5720 = vld [vmem:[%s156 + $0x20] sm:$0xff]
    %v5721 = vld [vmem:[%s156 + $0x28] sm:$0xff]
    %v5722 = vld [vmem:[%s156 + $0x30] sm:$0xff]
    %v5723 = vld [vmem:[%s156 + $0x38] sm:$0xff]
    %v5724 = vld [vmem:[%s156 + $0x40] sm:$0xff]
    %v5725 = vld [vmem:[%s156 + $0x48] sm:$0xff]
    %v5726 = vld [vmem:[%s156 + $0x50] sm:$0xff]
    %v5727 = vld [vmem:[%s156 + $0x58] sm:$0xff]
    %v5728 = vld [vmem:[%s156 + $0x60] sm:$0xff]
    %v5729 = vld [vmem:[%s156 + $0x68] sm:$0xff]
    %v5730 = vld [vmem:[%s156 + $0x70] sm:$0xff]
    %v5731 = vld [vmem:[%s156 + $0x78] sm:$0xff]
    %v5732 = vld [vmem:[%s156 + $0x80] sm:$0xff]
    %v5733 = vld [vmem:[%s156 + $0x88] sm:$0xff]
    %v5734 = vld [vmem:[%s156 + $0x90] sm:$0xff]
    %v5735 = vld [vmem:[%s156 + $0x98] sm:$0xff]
    %v5736 = vld [vmem:[%s156 + $0xa0] sm:$0xff]
    %v5737 = vld [vmem:[%s156 + $0xa8] sm:$0xff]
    %v5738 = vld [vmem:[%s156 + $0xb0] sm:$0xff]
    %v5739 = vld [vmem:[%s156 + $0xb8] sm:$0xff]
    %v5740 = vld [vmem:[%s156 + $0xc0] sm:$0xff]
    %v5741 = vld [vmem:[%s156 + $0xc8] sm:$0xff]
    %v5742 = vld [vmem:[%s156 + $0xd0] sm:$0xff]
    %v5743 = vld [vmem:[%s156 + $0xd8] sm:$0xff]
    %v5744 = vld [vmem:[%s156 + $0xe0] sm:$0xff]
    %v5745 = vld [vmem:[%s156 + $0xe8] sm:$0xff]
    %v5746 = vld [vmem:[%s156 + $0xf0] sm:$0xff]
    %v5747 = vld [vmem:[%s156 + $0xf8] sm:$0xff]
    %s5748 = scalar_lea.vmem %s4, 4
    %v5749 = vld [vmem:[%s5748] sm:$0xf]
    %v5751 = vlaneseq
    %v5752 = vshrl.u32 %v5751, 7
    %v5753 = vsub.s32 0, %v5752
    %v5754 = vrot.slane %v5749, %v5753
    %v5755 = vlaneseq
    %v5756 = vshrl.u32 %v5755, 7
    %v5757 = vsub.s32 1, %v5756
    %v5758 = vrot.slane %v5749, %v5757
    %v5759 = vlaneseq
    %v5760 = vshrl.u32 %v5759, 7
    %v5761 = vsub.s32 2, %v5760
    %v5762 = vrot.slane %v5749, %v5761
    %v5763 = vlaneseq
    %v5764 = vshrl.u32 %v5763, 7
    %v5765 = vsub.s32 3, %v5764
    %v5766 = vrot.slane %v5749, %v5765
    %v5803 = vunpack.c.l.b16 %v5716
    %v5804 = vunpack.c.h.b16 %v5716
    %v5805 = vunpack.c.l.b16 %v5717
    %v5806 = vunpack.c.h.b16 %v5717
    %v5807 = vunpack.c.l.b16 %v5718
    %v5808 = vunpack.c.h.b16 %v5718
    %v5809 = vunpack.c.l.b16 %v5719
    %v5810 = vunpack.c.h.b16 %v5719
    %v5811 = vunpack.c.l.b16 %v5720
    %v5812 = vunpack.c.h.b16 %v5720
    %v5813 = vunpack.c.l.b16 %v5721
    %v5814 = vunpack.c.h.b16 %v5721
    %v5815 = vunpack.c.l.b16 %v5722
    %v5816 = vunpack.c.h.b16 %v5722
    %v5817 = vunpack.c.l.b16 %v5723
    %v5818 = vunpack.c.h.b16 %v5723
    %v5819 = vunpack.c.l.b16 %v5724
    %v5820 = vunpack.c.h.b16 %v5724
    %v5821 = vunpack.c.l.b16 %v5725
    %v5822 = vunpack.c.h.b16 %v5725
    %v5823 = vunpack.c.l.b16 %v5726
    %v5824 = vunpack.c.h.b16 %v5726
    %v5825 = vunpack.c.l.b16 %v5727
    %v5826 = vunpack.c.h.b16 %v5727
    %v5827 = vunpack.c.l.b16 %v5728
    %v5828 = vunpack.c.h.b16 %v5728
    %v5829 = vunpack.c.l.b16 %v5729
    %v5830 = vunpack.c.h.b16 %v5729
    %v5831 = vunpack.c.l.b16 %v5730
    %v5832 = vunpack.c.h.b16 %v5730
    %v5833 = vunpack.c.l.b16 %v5731
    %v5834 = vunpack.c.h.b16 %v5731
    %v5835 = vunpack.c.l.b16 %v5732
    %v5836 = vunpack.c.h.b16 %v5732
    %v5837 = vunpack.c.l.b16 %v5733
    %v5838 = vunpack.c.h.b16 %v5733
    %v5839 = vunpack.c.l.b16 %v5734
    %v5840 = vunpack.c.h.b16 %v5734
    %v5841 = vunpack.c.l.b16 %v5735
    %v5842 = vunpack.c.h.b16 %v5735
    %v5843 = vunpack.c.l.b16 %v5736
    %v5844 = vunpack.c.h.b16 %v5736
    %v5845 = vunpack.c.l.b16 %v5737
    %v5846 = vunpack.c.h.b16 %v5737
    %v5847 = vunpack.c.l.b16 %v5738
    %v5848 = vunpack.c.h.b16 %v5738
    %v5849 = vunpack.c.l.b16 %v5739
    %v5850 = vunpack.c.h.b16 %v5739
    %v5851 = vunpack.c.l.b16 %v5740
    %v5852 = vunpack.c.h.b16 %v5740
    %v5853 = vunpack.c.l.b16 %v5741
    %v5854 = vunpack.c.h.b16 %v5741
    %v5855 = vunpack.c.l.b16 %v5742
    %v5856 = vunpack.c.h.b16 %v5742
    %v5857 = vunpack.c.l.b16 %v5743
    %v5858 = vunpack.c.h.b16 %v5743
    %v5859 = vunpack.c.l.b16 %v5744
    %v5860 = vunpack.c.h.b16 %v5744
    %v5861 = vunpack.c.l.b16 %v5745
    %v5862 = vunpack.c.h.b16 %v5745
    %v5863 = vunpack.c.l.b16 %v5746
    %v5864 = vunpack.c.h.b16 %v5746
    %v5865 = vunpack.c.l.b16 %v5747
    %v5866 = vunpack.c.h.b16 %v5747
    %v5867 = vpack.c.b16 %v5807, %v5803
    %v5868 = vpack.c.b16 %v5808, %v5804
    %v5869 = vpack.c.b16 %v5809, %v5805
    %v5870 = vpack.c.b16 %v5810, %v5806
    %v5871 = vpack.c.b16 %v5815, %v5811
    %v5872 = vpack.c.b16 %v5816, %v5812
    %v5873 = vpack.c.b16 %v5817, %v5813
    %v5874 = vpack.c.b16 %v5818, %v5814
    %v5875 = vpack.c.b16 %v5823, %v5819
    %v5876 = vpack.c.b16 %v5824, %v5820
    %v5877 = vpack.c.b16 %v5825, %v5821
    %v5878 = vpack.c.b16 %v5826, %v5822
    %v5879 = vpack.c.b16 %v5831, %v5827
    %v5880 = vpack.c.b16 %v5832, %v5828
    %v5881 = vpack.c.b16 %v5833, %v5829
    %v5882 = vpack.c.b16 %v5834, %v5830
    %v5883 = vpack.c.b16 %v5839, %v5835
    %v5884 = vpack.c.b16 %v5840, %v5836
    %v5885 = vpack.c.b16 %v5841, %v5837
    %v5886 = vpack.c.b16 %v5842, %v5838
    %v5887 = vpack.c.b16 %v5847, %v5843
    %v5888 = vpack.c.b16 %v5848, %v5844
    %v5889 = vpack.c.b16 %v5849, %v5845
    %v5890 = vpack.c.b16 %v5850, %v5846
    %v5891 = vpack.c.b16 %v5855, %v5851
    %v5892 = vpack.c.b16 %v5856, %v5852
    %v5893 = vpack.c.b16 %v5857, %v5853
    %v5894 = vpack.c.b16 %v5858, %v5854
    %v5895 = vpack.c.b16 %v5863, %v5859
    %v5896 = vpack.c.b16 %v5864, %v5860
    %v5897 = vpack.c.b16 %v5865, %v5861
    %v5898 = vpack.c.b16 %v5866, %v5862
    %5931 = vmatprep.subr.bf16.mxu0 %v5896
    %5932 = vmatpush1.bf16.msra.mxu0 %v5895
    %5933 = vmatprep.subr.bf16.mxu0 %v5892
    %5934 = vmatpush1.bf16.msra.mxu0 %v5891
    %5935 = vmatprep.subr.bf16.mxu0 %v5888
    %5936 = vmatpush1.bf16.msra.mxu0 %v5887
    %5937 = vmatprep.subr.bf16.mxu0 %v5884
    %5938 = vmatpush1.bf16.msra.mxu0 %v5883
    %5939 = vmatprep.subr.bf16.mxu0 %v5880
    %5940 = vmatpush1.bf16.msra.mxu0 %v5879
    %5941 = vmatprep.subr.bf16.mxu0 %v5876
    %5942 = vmatpush1.bf16.msra.mxu0 %v5875
    %5943 = vmatprep.subr.bf16.mxu0 %v5872
    %5944 = vmatpush1.bf16.msra.mxu0 %v5871
    %5945 = vmatprep.subr.bf16.mxu0 %v5868
    %5946 = vmatpush1.bf16.msra.mxu0 %v5867
    %5947 = vmatprep.subr.bf16.mxu0 0
    %5948 = vmatpush2.bf16.msra.mxu0 0
    %5949 = vmatprep.subr.bf16.mxu0 0
    %5950 = vmatpush2.bf16.msra.mxu0 0
    %5951 = vmatprep.subr.bf16.mxu0 0
    %5952 = vmatpush2.bf16.msra.mxu0 0
    %5953 = vmatprep.subr.bf16.mxu0 0
    %5954 = vmatpush2.bf16.msra.mxu0 0
    %5955 = vmatprep.subr.bf16.mxu0 0
    %5956 = vmatpush2.bf16.msra.mxu0 0
    %5957 = vmatprep.subr.bf16.mxu0 0
    %5958 = vmatpush2.bf16.msra.mxu0 0
    %5959 = vmatprep.subr.bf16.mxu0 0
    %5960 = vmatpush2.bf16.msra.mxu0 0
    %5961 = vmatprep.subr.bf16.mxu0 0
    %5962 = vmatpush2.bf16.msra.mxu0 0
    %5963 = vmatprep.mubr.bf16.mxu0 0
    %5964 = vmatmul.mubr.bf16.gmra.mxu0 %v5714
    %v5965 = vpop.f32.mrf.mxu0
    %v5966 = vadd.f32 %v5754, %v5965
    %v5967 = vpop.f32.mrf.mxu0
    %v5968 = vadd.f32 %v5758, %v5967
    %v5969 = vpop.f32.mrf.mxu0
    %v5970 = vadd.f32 %v5754, %v5969
    %v5971 = vpop.f32.mrf.mxu0
    %v5972 = vadd.f32 %v5758, %v5971
    %5973 = vmatprep.mubr.bf16.mxu0 0
    %5974 = vmatmul.mubr.bf16.gmra.mxu0 %v5715
    %v5975 = vpop.f32.mrf.mxu0
    %v5976 = vadd.f32 %v5754, %v5975
    %v5977 = vpop.f32.mrf.mxu0
    %v5978 = vadd.f32 %v5758, %v5977
    %v5979 = vpop.f32.mrf.mxu0
    %v5980 = vadd.f32 %v5754, %v5979
    %v5981 = vpop.f32.mrf.mxu0
    %v5982 = vadd.f32 %v5758, %v5981
    %5983 = vdwg.mxu0
    %5984 = vmatprep.subr.bf16.mxu0 %v5898
    %5985 = vmatpush1.bf16.msra.mxu0 %v5897
    %5986 = vmatprep.subr.bf16.mxu0 %v5894
    %5987 = vmatpush1.bf16.msra.mxu0 %v5893
    %5988 = vmatprep.subr.bf16.mxu0 %v5890
    %5989 = vmatpush1.bf16.msra.mxu0 %v5889
    %5990 = vmatprep.subr.bf16.mxu0 %v5886
    %5991 = vmatpush1.bf16.msra.mxu0 %v5885
    %5992 = vmatprep.subr.bf16.mxu0 %v5882
    %5993 = vmatpush1.bf16.msra.mxu0 %v5881
    %5994 = vmatprep.subr.bf16.mxu0 %v5878
    %5995 = vmatpush1.bf16.msra.mxu0 %v5877
    %5996 = vmatprep.subr.bf16.mxu0 %v5874
    %5997 = vmatpush1.bf16.msra.mxu0 %v5873
    %5998 = vmatprep.subr.bf16.mxu0 %v5870
    %5999 = vmatpush1.bf16.msra.mxu0 %v5869
    %6000 = vmatprep.subr.bf16.mxu0 0
    %6001 = vmatpush2.bf16.msra.mxu0 0
    %6002 = vmatprep.subr.bf16.mxu0 0
    %6003 = vmatpush2.bf16.msra.mxu0 0
    %6004 = vmatprep.subr.bf16.mxu0 0
    %6005 = vmatpush2.bf16.msra.mxu0 0
    %6006 = vmatprep.subr.bf16.mxu0 0
    %6007 = vmatpush2.bf16.msra.mxu0 0
    %6008 = vmatprep.subr.bf16.mxu0 0
    %6009 = vmatpush2.bf16.msra.mxu0 0
    %6010 = vmatprep.subr.bf16.mxu0 0
    %6011 = vmatpush2.bf16.msra.mxu0 0
    %6012 = vmatprep.subr.bf16.mxu0 0
    %6013 = vmatpush2.bf16.msra.mxu0 0
    %6014 = vmatprep.subr.bf16.mxu0 0
    %6015 = vmatpush2.bf16.msra.mxu0 0
    %6016 = vmatprep.mubr.bf16.mxu0 0
    %6017 = vmatmul.mubr.bf16.gmra.mxu0 %v5714
    %v6018 = vpop.f32.mrf.mxu0
    %v6019 = vadd.f32 %v5762, %v6018
    %v6020 = vpop.f32.mrf.mxu0
    %v6021 = vadd.f32 %v5766, %v6020
    %v6022 = vpop.f32.mrf.mxu0
    %v6023 = vadd.f32 %v5762, %v6022
    %v6024 = vpop.f32.mrf.mxu0
    %v6025 = vadd.f32 %v5766, %v6024
    %6026 = vmatprep.mubr.bf16.mxu0 0
    %6027 = vmatmul.mubr.bf16.gmra.mxu0 %v5715
    %v6028 = vpop.f32.mrf.mxu0
    %v6029 = vadd.f32 %v5762, %v6028
    %v6030 = vpop.f32.mrf.mxu0
    %v6031 = vadd.f32 %v5766, %v6030
    %v6032 = vpop.f32.mrf.mxu0
    %v6033 = vadd.f32 %v5762, %v6032
    %v6034 = vpop.f32.mrf.mxu0
    %v6035 = vadd.f32 %v5766, %v6034
    %6036 = vdwg.mxu0
    %v6037 = vadd.f32 %v5966, %v5324
    %v6038 = vadd.f32 %v5968, %v5325
    %v6039 = vadd.f32 %v6019, %v5326
    %v6040 = vadd.f32 %v6021, %v5327
    %v6041 = vadd.f32 %v5970, %v5328
    %v6042 = vadd.f32 %v5972, %v5329
    %v6043 = vadd.f32 %v6023, %v5330
    %v6044 = vadd.f32 %v6025, %v5331
    %v6045 = vadd.f32 %v5976, %v5332
    %v6046 = vadd.f32 %v5978, %v5333
    %v6047 = vadd.f32 %v6029, %v5334
    %v6048 = vadd.f32 %v6031, %v5335
    %v6049 = vadd.f32 %v5980, %v5336
    %v6050 = vadd.f32 %v5982, %v5337
    %v6051 = vadd.f32 %v6033, %v5338
    %v6052 = vadd.f32 %v6035, %v5339
    %s6053 = scalar_lea.vmem %s7, 4
    %v6054 = vld [vmem:[%s6053] sm:$0xf]
    %s6055 = scalar_lea.vmem %s8, 4
    %v6056 = vld [vmem:[%s6055] sm:$0xf]
    %v6057 = vadd.f32 %v6037, %v6038
    %v6058 = vadd.f32 %v6057, %v6039
    %v6059 = vadd.f32 %v6058, %v6040
    %6060 = vadd.xlane.f32.xlu0 %v6059
    %v6061 = vpop.xlane.xlu0 %6060
    %v6062 = vadd.f32 %v6041, %v6042
    %v6063 = vadd.f32 %v6062, %v6043
    %v6064 = vadd.f32 %v6063, %v6044
    %6065 = vadd.xlane.f32.xlu0 %v6064
    %v6066 = vpop.xlane.xlu0 %6065
    %v6067 = vadd.f32 %v6045, %v6046
    %v6068 = vadd.f32 %v6067, %v6047
    %v6069 = vadd.f32 %v6068, %v6048
    %6070 = vadd.xlane.f32.xlu0 %v6069
    %v6071 = vpop.xlane.xlu0 %6070
    %v6072 = vadd.f32 %v6049, %v6050
    %v6073 = vadd.f32 %v6072, %v6051
    %v6074 = vadd.f32 %v6073, %v6052
    %6075 = vadd.xlane.f32.xlu0 %v6074
    %v6076 = vpop.xlane.xlu0 %6075
    %v6077 = vmul.f32 %v6061, %v2558
    %v6078 = vmul.f32 %v6066, %v2558
    %v6079 = vmul.f32 %v6071, %v2558
    %v6080 = vmul.f32 %v6076, %v2558
    %v6081 = vsub.f32 %v6037, %v6077
    %v6082 = vsub.f32 %v6038, %v6077
    %v6083 = vsub.f32 %v6039, %v6077
    %v6084 = vsub.f32 %v6040, %v6077
    %v6085 = vsub.f32 %v6041, %v6078
    %v6086 = vsub.f32 %v6042, %v6078
    %v6087 = vsub.f32 %v6043, %v6078
    %v6088 = vsub.f32 %v6044, %v6078
    %v6089 = vsub.f32 %v6045, %v6079
    %v6090 = vsub.f32 %v6046, %v6079
    %v6091 = vsub.f32 %v6047, %v6079
    %v6092 = vsub.f32 %v6048, %v6079
    %v6093 = vsub.f32 %v6049, %v6080
    %v6094 = vsub.f32 %v6050, %v6080
    %v6095 = vsub.f32 %v6051, %v6080
    %v6096 = vsub.f32 %v6052, %v6080
    %v6097 = vmul.f32 %v6081, %v6081
    %v6098 = vmul.f32 %v6082, %v6082
    %v6099 = vmul.f32 %v6083, %v6083
    %v6100 = vmul.f32 %v6084, %v6084
    %v6101 = vmul.f32 %v6085, %v6085
    %v6102 = vmul.f32 %v6086, %v6086
    %v6103 = vmul.f32 %v6087, %v6087
    %v6104 = vmul.f32 %v6088, %v6088
    %v6105 = vmul.f32 %v6089, %v6089
    %v6106 = vmul.f32 %v6090, %v6090
    %v6107 = vmul.f32 %v6091, %v6091
    %v6108 = vmul.f32 %v6092, %v6092
    %v6109 = vmul.f32 %v6093, %v6093
    %v6110 = vmul.f32 %v6094, %v6094
    %v6111 = vmul.f32 %v6095, %v6095
    %v6112 = vmul.f32 %v6096, %v6096
    %v6113 = vadd.f32 %v6097, %v6098
    %v6114 = vadd.f32 %v6113, %v6099
    %v6115 = vadd.f32 %v6114, %v6100
    %6116 = vadd.xlane.f32.xlu0 %v6115
    %v6117 = vpop.xlane.xlu0 %6116
    %v6118 = vadd.f32 %v6101, %v6102
    %v6119 = vadd.f32 %v6118, %v6103
    %v6120 = vadd.f32 %v6119, %v6104
    %6121 = vadd.xlane.f32.xlu0 %v6120
    %v6122 = vpop.xlane.xlu0 %6121
    %v6123 = vadd.f32 %v6105, %v6106
    %v6124 = vadd.f32 %v6123, %v6107
    %v6125 = vadd.f32 %v6124, %v6108
    %6126 = vadd.xlane.f32.xlu0 %v6125
    %v6127 = vpop.xlane.xlu0 %6126
    %v6128 = vadd.f32 %v6109, %v6110
    %v6129 = vadd.f32 %v6128, %v6111
    %v6130 = vadd.f32 %v6129, %v6112
    %6131 = vadd.xlane.f32.xlu0 %v6130
    %v6132 = vpop.xlane.xlu0 %6131
    %v6133 = vmul.f32 %v6117, %v2558
    %v6134 = vmul.f32 %v6122, %v2558
    %v6135 = vmul.f32 %v6127, %v2558
    %v6136 = vmul.f32 %v6132, %v2558
    %v6137 = vadd.f32 %v6133, 1e-06
    %v6138 = vadd.f32 %v6134, 1e-06
    %v6139 = vadd.f32 %v6135, 1e-06
    %v6140 = vadd.f32 %v6136, 1e-06
    %v6141 = vrsqrt.pop %v6137
    %v6142 = vrsqrt.pop %v6138
    %v6143 = vrsqrt.pop %v6139
    %v6144 = vrsqrt.pop %v6140
    %v6145 = vmul.f32 %v6081, %v6141
    %v6146 = vmul.f32 %v6082, %v6141
    %v6147 = vmul.f32 %v6083, %v6141
    %v6148 = vmul.f32 %v6084, %v6141
    %v6149 = vmul.f32 %v6085, %v6142
    %v6150 = vmul.f32 %v6086, %v6142
    %v6151 = vmul.f32 %v6087, %v6142
    %v6152 = vmul.f32 %v6088, %v6142
    %v6153 = vmul.f32 %v6089, %v6143
    %v6154 = vmul.f32 %v6090, %v6143
    %v6155 = vmul.f32 %v6091, %v6143
    %v6156 = vmul.f32 %v6092, %v6143
    %v6157 = vmul.f32 %v6093, %v6144
    %v6158 = vmul.f32 %v6094, %v6144
    %v6159 = vmul.f32 %v6095, %v6144
    %v6160 = vmul.f32 %v6096, %v6144
    %v6162 = vlaneseq
    %v6163 = vshrl.u32 %v6162, 7
    %v6164 = vsub.s32 0, %v6163
    %v6165 = vrot.slane %v6054, %v6164
    %v6166 = vlaneseq
    %v6167 = vshrl.u32 %v6166, 7
    %v6168 = vsub.s32 1, %v6167
    %v6169 = vrot.slane %v6054, %v6168
    %v6170 = vlaneseq
    %v6171 = vshrl.u32 %v6170, 7
    %v6172 = vsub.s32 2, %v6171
    %v6173 = vrot.slane %v6054, %v6172
    %v6174 = vlaneseq
    %v6175 = vshrl.u32 %v6174, 7
    %v6176 = vsub.s32 3, %v6175
    %v6177 = vrot.slane %v6054, %v6176
    %v6182 = vmul.f32 %v6145, %v6165
    %v6183 = vmul.f32 %v6146, %v6169
    %v6184 = vmul.f32 %v6147, %v6173
    %v6185 = vmul.f32 %v6148, %v6177
    %v6186 = vmul.f32 %v6149, %v6165
    %v6187 = vmul.f32 %v6150, %v6169
    %v6188 = vmul.f32 %v6151, %v6173
    %v6189 = vmul.f32 %v6152, %v6177
    %v6190 = vmul.f32 %v6153, %v6165
    %v6191 = vmul.f32 %v6154, %v6169
    %v6192 = vmul.f32 %v6155, %v6173
    %v6193 = vmul.f32 %v6156, %v6177
    %v6194 = vmul.f32 %v6157, %v6165
    %v6195 = vmul.f32 %v6158, %v6169
    %v6196 = vmul.f32 %v6159, %v6173
    %v6197 = vmul.f32 %v6160, %v6177
    %v6199 = vlaneseq
    %v6200 = vshrl.u32 %v6199, 7
    %v6201 = vsub.s32 0, %v6200
    %v6202 = vrot.slane %v6056, %v6201
    %v6203 = vlaneseq
    %v6204 = vshrl.u32 %v6203, 7
    %v6205 = vsub.s32 1, %v6204
    %v6206 = vrot.slane %v6056, %v6205
    %v6207 = vlaneseq
    %v6208 = vshrl.u32 %v6207, 7
    %v6209 = vsub.s32 2, %v6208
    %v6210 = vrot.slane %v6056, %v6209
    %v6211 = vlaneseq
    %v6212 = vshrl.u32 %v6211, 7
    %v6213 = vsub.s32 3, %v6212
    %v6214 = vrot.slane %v6056, %v6213
    %v6219 = vadd.f32 %v6182, %v6202
    %v6220 = vadd.f32 %v6183, %v6206
    %v6221 = vadd.f32 %v6184, %v6210
    %v6222 = vadd.f32 %v6185, %v6214
    %v6223 = vadd.f32 %v6186, %v6202
    %v6224 = vadd.f32 %v6187, %v6206
    %v6225 = vadd.f32 %v6188, %v6210
    %v6226 = vadd.f32 %v6189, %v6214
    %v6227 = vadd.f32 %v6190, %v6202
    %v6228 = vadd.f32 %v6191, %v6206
    %v6229 = vadd.f32 %v6192, %v6210
    %v6230 = vadd.f32 %v6193, %v6214
    %v6231 = vadd.f32 %v6194, %v6202
    %v6232 = vadd.f32 %v6195, %v6206
    %v6233 = vadd.f32 %v6196, %v6210
    %v6234 = vadd.f32 %v6197, %v6214
    %6235 = vst [vmem:[#allocation12] sm:$0xff] %v6219
    %6236 = vst [vmem:[#allocation12 + $0x8] sm:$0xff] %v6220
    %6237 = vst [vmem:[#allocation12 + $0x10] sm:$0xff] %v6221
    %6238 = vst [vmem:[#allocation12 + $0x18] sm:$0xff] %v6222
    %6239 = vst [vmem:[#allocation12 + $0x20] sm:$0xff] %v6223
    %6240 = vst [vmem:[#allocation12 + $0x28] sm:$0xff] %v6224
    %6241 = vst [vmem:[#allocation12 + $0x30] sm:$0xff] %v6225
    %6242 = vst [vmem:[#allocation12 + $0x38] sm:$0xff] %v6226
    %6243 = vst [vmem:[#allocation12 + $0x40] sm:$0xff] %v6227
    %6244 = vst [vmem:[#allocation12 + $0x48] sm:$0xff] %v6228
    %6245 = vst [vmem:[#allocation12 + $0x50] sm:$0xff] %v6229
    %6246 = vst [vmem:[#allocation12 + $0x58] sm:$0xff] %v6230
    %6247 = vst [vmem:[#allocation12 + $0x60] sm:$0xff] %v6231
    %6248 = vst [vmem:[#allocation12 + $0x68] sm:$0xff] %v6232
    %6249 = vst [vmem:[#allocation12 + $0x70] sm:$0xff] %v6233
    %6250 = vst [vmem:[#allocation12 + $0x78] sm:$0xff] %v6234
    // Predicated region
    $region78: #{encoder_forward.1} parent=1 // pred_check
      _
    $region79: #{encoder_forward.1} parent=1 // pred_check_branch
      %6252 = sbr.rel (0) target = $region81
    $region80: #{encoder_forward.1} parent=1 // pred_region
      %s6254 = ssub.s32 2048, 2048
      %6255 = vsyncadd [#allocation9], %s6254
      %s6256 = sshll.u32 [#allocation12], 4
      %s6257 = int_to_ptr.vmem [resolvable:$true] %s6256
      %6262 = dma.vmem_to_hbm [thread:$0]  %s6257, 2048, %s13, [#allocation9], 512, 512, 32
    $region81: #{encoder_forward.1} parent=1 // pred_fallthru
      _
    // Predicated region
    $region82: #{encoder_forward.1} parent=1 // pred_check
      _
    $region83: #{encoder_forward.1} parent=1 // pred_check_branch
      %6264 = sbr.rel (0) target = $region85
    $region84: #{encoder_forward.1} parent=1 // pred_region
      %6265 = dma.done [#allocation9], 2048
    $region85: #{encoder_forward.1} parent=1 // pred_fallthru
      _
    %6266 = vsyncpa [#allocation8], 1
    %6267 = vsyncpa [#allocation11], 1
    %6268 = vsyncpa [#allocation9], 1
  %6269 = vsyncmov [#allocation6]
  %s6270 = vpop.sfrf %6269
  %p6271 = scmp.eq.s32.totalorder %s6270, 0
  %p6272 = pneg %p6271
  %6274 = shalt.err (%p6272)
  %s6275 = scalar_lea.sflag [#allocation6], 1
  %6276 = vsyncmov %s6275
  %s6277 = vpop.sfrf %6276
  %p6278 = scmp.eq.s32.totalorder %s6277, 0
  %p6279 = pneg %p6278
  %6281 = shalt.err (%p6279)
  %s6282 = scalar_lea.sflag [#allocation6], 2
  %6283 = vsyncmov %s6282
  %s6284 = vpop.sfrf %6283
  %p6285 = scmp.eq.s32.totalorder %s6284, 0
  %p6286 = pneg %p6285
  %6288 = shalt.err (%p6286)
  %s6289 = scalar_lea.sflag [#allocation6], 3
  %6290 = vsyncmov %s6289
  %s6291 = vpop.sfrf %6290
  %p6292 = scmp.eq.s32.totalorder %s6291, 0
  %p6293 = pneg %p6292
  %6295 = shalt.err (%p6293)
  %s6296 = scalar_lea.sflag [#allocation6], 4
  %6297 = vsyncmov %s6296
  %s6298 = vpop.sfrf %6297
  %p6299 = scmp.eq.s32.totalorder %s6298, 0
  %p6300 = pneg %p6299
  %6302 = shalt.err (%p6300)
  %s6303 = scalar_lea.sflag [#allocation6], 5
  %6304 = vsyncmov %s6303
  %s6305 = vpop.sfrf %6304
  %p6306 = scmp.eq.s32.totalorder %s6305, 0
  %p6307 = pneg %p6306
  %6309 = shalt.err (%p6307)
  %s6310 = scalar_lea.sflag [#allocation6], 6
  %6311 = vsyncmov %s6310
  %s6312 = vpop.sfrf %6311
  %p6313 = scmp.eq.s32.totalorder %s6312, 0
  %p6314 = pneg %p6313
  %6316 = shalt.err (%p6314)
  %s6317 = scalar_lea.sflag [#allocation6], 7
  %6318 = vsyncmov %s6317
  %s6319 = vpop.sfrf %6318
  %p6320 = scmp.eq.s32.totalorder %s6319, 0
  %p6321 = pneg %p6320
  %6323 = shalt.err (%p6321)

</llo_original>
